<compile_context>
chip_gen: v7x
topology: tpu7x:2x2x1
jax: 0.10.0
libtpu: 0.0.40
codegen_flags: <defaults>
</compile_context>

<pallas_src>
from functools import partial

import jax
import jax.numpy as jnp
import numpy as np
from jax.experimental import pallas as pl
from jax.experimental.pallas import tpu as pltpu


def _is_v6_or_newer():
    """True on TPU v6e / v7x (bf16 VALU + 256-wide MXU); False otherwise/unknown."""
    try:
        kind = jax.devices()[0].device_kind.lower()
    except Exception:
        return False
    return any(tag in kind for tag in ("v6", "v7", "tpu7", "7x"))


def _deform_conv2d_kernel(x_ref, rc_ref, off_ref, wc_ref, out_ref, *,
                          C, H, W, ks, tile, sel_dtype):
    """One batch element x one tile of flattened output pixels.

    x_ref   : VMEM (C, H*W)      input image, flattened spatial (lane-dense)
    rc_ref  : VMEM (2, tile)     (row, col) of each output pixel of this tile
    off_ref : VMEM (2*Np, tile)  p_conv output for these pixels, p_n folded in
    wc_ref  : VMEM (Np, outc, C) main conv weight grouped per tap
    out_ref : VMEM (outc, tile)
    """
    f32 = jnp.float32
    Np = ks * ks
    HW = H * W
    Hp, Wp = H + 2, W + 2

    # Cast once: gather matmuls run in sel_dtype (bf16 on v6e/v7x, f32 on v5e),
    # accumulation stays f32.
    x_sel = x_ref[...].astype(sel_dtype)                    # (C, HW)
    rc = rc_ref[...]                                        # (2, tile) int32
    gi = rc[0:1, :]                                         # (1, tile) output row
    gj = rc[1:2, :]                                         # (1, tile) output col
    off = off_ref[...]                                      # (2*Np, tile) f32

    # Sample positions in padded-image coordinates:
    #   px = (row + 1) + (tap//ks - 1) + offset_x  == row + (tap//ks + offset_x)
    # (tap//ks / tap%ks were folded into `off` on the host).
    px = gi.astype(f32) + off[:Np, :]                       # (Np, tile)
    py = gj.astype(f32) + off[Np:, :]

    # Bilinear corner coords & weights (exact torch clamp-after-floor rules).
    fx = jnp.floor(px)
    fy = jnp.floor(py)
    q_lt_x = jnp.clip(fx, 0.0, Hp - 1.0)
    q_lt_y = jnp.clip(fy, 0.0, Wp - 1.0)
    q_rb_x = jnp.clip(fx + 1.0, 0.0, Hp - 1.0)
    q_rb_y = jnp.clip(fy + 1.0, 0.0, Wp - 1.0)
    pxc = jnp.clip(px, 0.0, Hp - 1.0)
    pyc = jnp.clip(py, 0.0, Wp - 1.0)

    g_lt = (1.0 + (q_lt_x - pxc)) * (1.0 + (q_lt_y - pyc))
    g_rb = (1.0 - (q_rb_x - pxc)) * (1.0 - (q_rb_y - pyc))
    g_lb = (1.0 + (q_lt_x - pxc)) * (1.0 - (q_rb_y - pyc))
    g_rt = (1.0 - (q_rb_x - pxc)) * (1.0 + (q_lt_y - pyc))

    lt_x = q_lt_x.astype(jnp.int32)
    lt_y = q_lt_y.astype(jnp.int32)
    rb_x = q_rb_x.astype(jnp.int32)
    rb_y = q_rb_y.astype(jnp.int32)

    # Flat source-pixel index for the unweighted one-hot selection matrices.
    src = jax.lax.broadcasted_iota(jnp.int32, (HW, tile), 0)
    one = jnp.array(1, dtype=sel_dtype)
    zero = jnp.array(0, dtype=sel_dtype)

    def gather(qx, qy):
        # padded coords -> unpadded coords; corners in the padding read zero
        # (target index -1 never matches src >= 0).
        ux = qx - 1
        uy = qy - 1
        valid = (ux >= 0) & (ux < H) & (uy >= 0) & (uy < W)
        tgt = jnp.where(valid, ux * W + uy, -1)             # (1, tile)
        onehot = jnp.where(src == tgt, one, zero)           # (HW, tile) 0/1, exact
        return jnp.dot(x_sel, onehot, preferred_element_type=f32)   # (C, tile) f32

    wc = wc_ref[...]                                        # (Np, outc, C) f32
    acc = jnp.zeros(out_ref.shape, dtype=f32)               # (outc, tile)
    for n in range(Np):
        ltx = lt_x[n:n + 1]; lty = lt_y[n:n + 1]
        rbx = rb_x[n:n + 1]; rby = rb_y[n:n + 1]
        # Bilinear weight factored out of the one-hot: scale at (C, tile) size.
        samp = (gather(ltx, lty) * g_lt[n:n + 1]
                + gather(rbx, rby) * g_rb[n:n + 1]
                + gather(ltx, rby) * g_lb[n:n + 1]
                + gather(rbx, lty) * g_rt[n:n + 1])          # (C, tile) f32
        # Final conv (kernel_size=ks, stride=ks) as a per-tap accumulation.
        acc = acc + jnp.dot(wc[n], samp, preferred_element_type=f32)
    out_ref[...] = acc.astype(out_ref.dtype)


def deform_conv2d(x, p_conv_weight, p_conv_bias, conv_weight, *, ks=3,
                  use_bf16_gather=None, tile=None):
    """Forward pass of DeformConv2d with the module defaults
    (kernel_size=3, padding=1, stride=1, modulation=False, conv bias=None)."""
    N, C, H, W = x.shape
    Np = ks * ks
    outc = conv_weight.shape[0]
    HW = H * W
    assert p_conv_weight.shape == (2 * Np, C, ks, ks)
    assert p_conv_bias.shape == (2 * Np,)
    assert conv_weight.shape == (outc, C, ks, ks)
    # TODO(synk): only the module defaults are implemented (ks=3, padding=1,
    # stride=1, modulation=False, main-conv bias=None).

    newer = _is_v6_or_newer()
    if use_bf16_gather is None:
        use_bf16_gather = newer            # bf16 selections pay off only on v6e/v7x
    sel_dtype = jnp.bfloat16 if use_bf16_gather else jnp.float32

    # Pad the output-pixel (lane) axis up to a multiple of 128 so stores stay
    # lane-dense; extra columns compute harmless values and are sliced off.
    HW_pad = ((HW + 127) // 128) * 128
    if tile is None:
        tile = 256 if (newer and HW_pad % 256 == 0) else 128   # 256 matches v6e/v7x MXU width
        tile = min(tile, HW_pad)
        # VMEM guard (v7x: 64 MiB total, ~32 MiB scoped): keep the (HW, tile)
        # one-hot transients + x + streamed blocks comfortably inside scope.
        elt = 2 if use_bf16_gather else 4
        while tile > 128 and HW * tile * elt * 6 > (16 << 20):
            tile //= 2
    assert HW_pad % tile == 0

    f32 = jnp.float32
    xf = x.astype(f32)
    x_flat = xf.reshape(N, C, HW)

    # Regular offset conv done by XLA (far cheaper than an in-kernel one-hot
    # im2col); the constant p_0 + p_n term is folded in here.
    offset = jax.lax.conv_general_dilated(
        xf, p_conv_weight.astype(f32), window_strides=(1, 1),
        padding=((1, 1), (1, 1)),
        dimension_numbers=("NCHW", "OIHW", "NCHW"))
    offset = offset + p_conv_bias.astype(f32).reshape(1, 2 * Np, 1, 1)
    taps = jnp.arange(Np, dtype=f32)
    p_n = jnp.concatenate([taps // ks, taps % ks]).reshape(1, 2 * Np, 1, 1)
    off_flat = (offset + p_n).reshape(N, 2 * Np, HW)

    # (row, col) of every output pixel; padded tail clamped to a valid pixel.
    ij = jnp.minimum(jnp.arange(HW_pad, dtype=jnp.int32), HW - 1)
    rc = jnp.stack([ij // W, ij % W], axis=0)                 # (2, HW_pad)
    if HW_pad != HW:
        off_flat = jnp.pad(off_flat, ((0, 0), (0, 0), (0, HW_pad - HW)))

    # Main conv weight grouped per tap: wc3[n] == conv_weight[:, :, n//ks, n%ks].
    wc3 = jnp.transpose(conv_weight.astype(f32), (2, 3, 0, 1)).reshape(Np, outc, C)

    kernel = partial(_deform_conv2d_kernel, C=C, H=H, W=W, ks=ks, tile=tile,
                     sel_dtype=sel_dtype)

    # Advisory cost: 4 corner-gather matmuls per tap per pixel + per-tap fold.
    n_tiles = HW_pad // tile
    flops = int(N * HW_pad * Np * (4 * 2 * C * HW + 2 * outc * C))
    bytes_accessed = int(4 * (N * C * HW * n_tiles + N * 2 * Np * HW_pad
                              + N * outc * HW_pad + 2 * HW_pad))
    cost = pl.CostEstimate(flops=flops, transcendentals=0,
                           bytes_accessed=bytes_accessed)

    out = pl.pallas_call(
        kernel,
        out_shape=jax.ShapeDtypeStruct((N, outc, HW_pad), x.dtype),
        grid=(N, n_tiles),
        in_specs=[
            pl.BlockSpec((None, C, HW), lambda n, t: (n, 0, 0)),          # x, full image
            pl.BlockSpec((2, tile), lambda n, t: (0, t)),                 # (row, col) of tile pixels
            pl.BlockSpec((None, 2 * Np, tile), lambda n, t: (n, 0, t)),   # p_conv output (+p_n)
            pl.BlockSpec((Np, outc, C), lambda n, t: (0, 0, 0)),          # main conv weight
        ],
        out_specs=pl.BlockSpec((None, outc, tile), lambda n, t: (n, 0, t)),
        compiler_params=pltpu.CompilerParams(
            dimension_semantics=("parallel", "parallel")),
        cost_estimate=cost,
    )(x_flat, rc, off_flat, wc3)
    return out[:, :, :HW].reshape(N, outc, H, W)


def _reference(x, p_conv_weight, p_conv_bias, conv_weight, ks=3):
    """Pure-JAX mirror of the PyTorch DeformConv2d.forward (defaults)."""
    N_, C, H, W = x.shape
    Np = ks * ks
    Hp, Wp = H + 2, W + 2

    offset = jax.lax.conv_general_dilated(
        x, p_conv_weight, window_strides=(1, 1), padding=((1, 1), (1, 1)),
        dimension_numbers=("NCHW", "OIHW", "NCHW")) + p_conv_bias.reshape(1, -1, 1, 1)

    xp = jnp.pad(x, ((0, 0), (0, 0), (1, 1), (1, 1)))

    n_idx = jnp.arange(Np)
    p_n_x = (n_idx // ks - (ks - 1) // 2).reshape(1, Np, 1, 1).astype(x.dtype)
    p_n_y = (n_idx % ks - (ks - 1) // 2).reshape(1, Np, 1, 1).astype(x.dtype)
    p_0_x = jnp.arange(1, H + 1).reshape(1, 1, H, 1).astype(x.dtype)
    p_0_y = jnp.arange(1, W + 1).reshape(1, 1, 1, W).astype(x.dtype)
    px = p_0_x + p_n_x + offset[:, :Np]
    py = p_0_y + p_n_y + offset[:, Np:]

    fx, fy = jnp.floor(px), jnp.floor(py)
    q_lt_x = jnp.clip(fx, 0, Hp - 1)
    q_lt_y = jnp.clip(fy, 0, Wp - 1)
    q_rb_x = jnp.clip(fx + 1, 0, Hp - 1)
    q_rb_y = jnp.clip(fy + 1, 0, Wp - 1)
    pxc = jnp.clip(px, 0, Hp - 1)
    pyc = jnp.clip(py, 0, Wp - 1)

    g_lt = (1 + (q_lt_x - pxc)) * (1 + (q_lt_y - pyc))
    g_rb = (1 - (q_rb_x - pxc)) * (1 - (q_rb_y - pyc))
    g_lb = (1 + (q_lt_x - pxc)) * (1 - (q_rb_y - pyc))
    g_rt = (1 - (q_rb_x - pxc)) * (1 + (q_lt_y - pyc))

    xp_flat = xp.reshape(N_, C, Hp * Wp)

    def gather(qx, qy):
        idx = (qx.astype(jnp.int32) * Wp + qy.astype(jnp.int32)).reshape(N_, 1, Np * H * W)
        idx = jnp.broadcast_to(idx, (N_, C, Np * H * W))
        return jnp.take_along_axis(xp_flat, idx, axis=-1).reshape(N_, C, Np, H, W)

    x_off = (g_lt[:, None] * gather(q_lt_x, q_lt_y)
             + g_rb[:, None] * gather(q_rb_x, q_rb_y)
             + g_lb[:, None] * gather(q_lt_x, q_rb_y)
             + g_rt[:, None] * gather(q_rb_x, q_lt_y))        # (N, C, Np, H, W)

    w_r = conv_weight.reshape(conv_weight.shape[0], C, Np)
    return jnp.einsum("ocp,ncpij->noij", w_r, x_off)


if __name__ == "__main__":
    N, C, H, W = 2, 4, 16, 16
    outc, ks = 4, 3

    key = jax.random.PRNGKey(0)
    kx, kp, kb, kc = jax.random.split(key, 4)
    x = jax.random.normal(kx, (N, C, H, W), dtype=jnp.float32)
    # Random (trained-like) parameters; the module's zero-init of p_conv.weight
    # would make offsets spatially constant and under-test the kernel.
    p_conv_weight = 0.3 * jax.random.normal(kp, (2 * ks * ks, C, ks, ks), dtype=jnp.float32)
    p_conv_bias = 0.5 * jax.random.normal(kb, (2 * ks * ks,), dtype=jnp.float32)
    conv_weight = 0.2 * jax.random.normal(kc, (outc, C, ks, ks), dtype=jnp.float32)

    ref = _reference(x, p_conv_weight, p_conv_bias, conv_weight, ks=ks)

    # f32-gather path: exact to tight tolerance on every TPU generation.
    out_f32 = deform_conv2d(x, p_conv_weight, p_conv_bias, conv_weight, ks=ks,
                            use_bf16_gather=False)
    jax.block_until_ready(out_f32)
    np.testing.assert_allclose(np.asarray(out_f32), np.asarray(ref),
                               atol=1e-3, rtol=1e-3)

    # Device-default path (bf16 gather on v6e/v7x): only x drops to bf16, so a
    # correspondingly looser tolerance applies there.
    out = deform_conv2d(x, p_conv_weight, p_conv_bias, conv_weight, ks=ks)
    jax.block_until_ready(out)
    tol = 3e-2 if _is_v6_or_newer() else 1e-3
    np.testing.assert_allclose(np.asarray(out), np.asarray(ref), atol=tol, rtol=tol)

    print("KERNEL_OK")
</pallas_src>

<mosaic_0001>
module attributes {stable_mosaic.version = 11 : i64} {
  func.func @_deform_conv2d_kernel(%arg0: i32, %arg1: i32, %arg2: memref<1x4x256xf32, #tpu.memory_space<vmem>>, %arg3: memref<2x128xi32, #tpu.memory_space<vmem>>, %arg4: memref<1x18x128xf32, #tpu.memory_space<vmem>>, %arg5: memref<9x4x4xf32, #tpu.memory_space<vmem>>, %arg6: memref<1x4x128xf32, #tpu.memory_space<vmem>>) attributes {dimension_semantics = [#tpu.dimension_semantics<parallel>, #tpu.dimension_semantics<parallel>], iteration_bounds = array<i64: 2, 2>, scalar_prefetch = 0 : i64, scratch_operands = 0 : i64, tpu.core_type = #tpu.core_type<tc>, window_params = [{transform_indices = @transform_0, window_bounds = array<i64: 1, 4, 256>}, {transform_indices = @transform_1, window_bounds = array<i64: 2, 128>}, {transform_indices = @transform_2, window_bounds = array<i64: 1, 18, 128>}, {pipeline_mode = #tpu.pipeline_mode<synchronous>, transform_indices = @transform_3, window_bounds = array<i64: 9, 4, 4>}, {transform_indices = @transform_4, window_bounds = array<i64: 1, 4, 128>}]} {
    %c0 = arith.constant 0 : index
    %c0_0 = arith.constant 0 : index
    %c0_1 = arith.constant 0 : index
    %0 = vector.load %arg2[%c0, %c0_0, %c0_1] : memref<1x4x256xf32, #tpu.memory_space<vmem>>, vector<1x4x256xf32>
    %1 = vector.shape_cast %0 : vector<1x4x256xf32> to vector<4x256xf32>
    %c0_2 = arith.constant 0 : index
    %c0_3 = arith.constant 0 : index
    %2 = vector.load %arg3[%c0_2, %c0_3] : memref<2x128xi32, #tpu.memory_space<vmem>>, vector<2x128xi32>
    %3 = vector.extract_strided_slice %2 {offsets = [0, 0], sizes = [1, 128], strides = [1, 1]} : vector<2x128xi32> to vector<1x128xi32>
    %4 = vector.extract_strided_slice %2 {offsets = [1, 0], sizes = [1, 128], strides = [1, 1]} : vector<2x128xi32> to vector<1x128xi32>
    %c0_4 = arith.constant 0 : index
    %c0_5 = arith.constant 0 : index
    %c0_6 = arith.constant 0 : index
    %5 = vector.load %arg4[%c0_4, %c0_5, %c0_6] : memref<1x18x128xf32, #tpu.memory_space<vmem>>, vector<1x18x128xf32>
    %6 = vector.shape_cast %5 : vector<1x18x128xf32> to vector<18x128xf32>
    %7 = arith.sitofp %3 : vector<1x128xi32> to vector<1x128xf32>
    %8 = vector.extract_strided_slice %6 {offsets = [0, 0], sizes = [9, 128], strides = [1, 1]} : vector<18x128xf32> to vector<9x128xf32>
    %9 = vector.broadcast %7 : vector<1x128xf32> to vector<9x128xf32>
    %10 = arith.addf %9, %8 : vector<9x128xf32>
    %11 = arith.sitofp %4 : vector<1x128xi32> to vector<1x128xf32>
    %12 = vector.extract_strided_slice %6 {offsets = [9, 0], sizes = [9, 128], strides = [1, 1]} : vector<18x128xf32> to vector<9x128xf32>
    %13 = vector.broadcast %11 : vector<1x128xf32> to vector<9x128xf32>
    %14 = arith.addf %13, %12 : vector<9x128xf32>
    %15 = math.floor %10 : vector<9x128xf32>
    %16 = math.floor %14 : vector<9x128xf32>
    %cst = arith.constant 0.000000e+00 : f32
    %cst_7 = arith.constant 1.700000e+01 : f32
    %17 = vector.broadcast %cst : f32 to vector<9x128xf32>
    %18 = arith.maximumf %17, %15 : vector<9x128xf32>
    %19 = vector.broadcast %cst_7 : f32 to vector<9x128xf32>
    %20 = arith.minimumf %19, %18 : vector<9x128xf32>
    %cst_8 = arith.constant 0.000000e+00 : f32
    %cst_9 = arith.constant 1.700000e+01 : f32
    %21 = vector.broadcast %cst_8 : f32 to vector<9x128xf32>
    %22 = arith.maximumf %21, %16 : vector<9x128xf32>
    %23 = vector.broadcast %cst_9 : f32 to vector<9x128xf32>
    %24 = arith.minimumf %23, %22 : vector<9x128xf32>
    %cst_10 = arith.constant 1.000000e+00 : f32
    %25 = vector.broadcast %cst_10 : f32 to vector<9x128xf32>
    %26 = arith.addf %15, %25 : vector<9x128xf32>
    %cst_11 = arith.constant 0.000000e+00 : f32
    %cst_12 = arith.constant 1.700000e+01 : f32
    %27 = vector.broadcast %cst_11 : f32 to vector<9x128xf32>
    %28 = arith.maximumf %27, %26 : vector<9x128xf32>
    %29 = vector.broadcast %cst_12 : f32 to vector<9x128xf32>
    %30 = arith.minimumf %29, %28 : vector<9x128xf32>
    %cst_13 = arith.constant 1.000000e+00 : f32
    %31 = vector.broadcast %cst_13 : f32 to vector<9x128xf32>
    %32 = arith.addf %16, %31 : vector<9x128xf32>
    %cst_14 = arith.constant 0.000000e+00 : f32
    %cst_15 = arith.constant 1.700000e+01 : f32
    %33 = vector.broadcast %cst_14 : f32 to vector<9x128xf32>
    %34 = arith.maximumf %33, %32 : vector<9x128xf32>
    %35 = vector.broadcast %cst_15 : f32 to vector<9x128xf32>
    %36 = arith.minimumf %35, %34 : vector<9x128xf32>
    %cst_16 = arith.constant 0.000000e+00 : f32
    %cst_17 = arith.constant 1.700000e+01 : f32
    %37 = vector.broadcast %cst_16 : f32 to vector<9x128xf32>
    %38 = arith.maximumf %37, %10 : vector<9x128xf32>
    %39 = vector.broadcast %cst_17 : f32 to vector<9x128xf32>
    %40 = arith.minimumf %39, %38 : vector<9x128xf32>
    %cst_18 = arith.constant 0.000000e+00 : f32
    %cst_19 = arith.constant 1.700000e+01 : f32
    %41 = vector.broadcast %cst_18 : f32 to vector<9x128xf32>
    %42 = arith.maximumf %41, %14 : vector<9x128xf32>
    %43 = vector.broadcast %cst_19 : f32 to vector<9x128xf32>
    %44 = arith.minimumf %43, %42 : vector<9x128xf32>
    %45 = arith.subf %20, %40 : vector<9x128xf32>
    %cst_20 = arith.constant 1.000000e+00 : f32
    %46 = vector.broadcast %cst_20 : f32 to vector<9x128xf32>
    %47 = arith.addf %46, %45 : vector<9x128xf32>
    %48 = arith.subf %24, %44 : vector<9x128xf32>
    %cst_21 = arith.constant 1.000000e+00 : f32
    %49 = vector.broadcast %cst_21 : f32 to vector<9x128xf32>
    %50 = arith.addf %49, %48 : vector<9x128xf32>
    %51 = arith.mulf %47, %50 : vector<9x128xf32>
    %52 = arith.subf %30, %40 : vector<9x128xf32>
    %cst_22 = arith.constant 1.000000e+00 : f32
    %53 = vector.broadcast %cst_22 : f32 to vector<9x128xf32>
    %54 = arith.subf %53, %52 : vector<9x128xf32>
    %55 = arith.subf %36, %44 : vector<9x128xf32>
    %cst_23 = arith.constant 1.000000e+00 : f32
    %56 = vector.broadcast %cst_23 : f32 to vector<9x128xf32>
    %57 = arith.subf %56, %55 : vector<9x128xf32>
    %58 = arith.mulf %54, %57 : vector<9x128xf32>
    %59 = arith.subf %20, %40 : vector<9x128xf32>
    %cst_24 = arith.constant 1.000000e+00 : f32
    %60 = vector.broadcast %cst_24 : f32 to vector<9x128xf32>
    %61 = arith.addf %60, %59 : vector<9x128xf32>
    %62 = arith.subf %36, %44 : vector<9x128xf32>
    %cst_25 = arith.constant 1.000000e+00 : f32
    %63 = vector.broadcast %cst_25 : f32 to vector<9x128xf32>
    %64 = arith.subf %63, %62 : vector<9x128xf32>
    %65 = arith.mulf %61, %64 : vector<9x128xf32>
    %66 = arith.subf %30, %40 : vector<9x128xf32>
    %cst_26 = arith.constant 1.000000e+00 : f32
    %67 = vector.broadcast %cst_26 : f32 to vector<9x128xf32>
    %68 = arith.subf %67, %66 : vector<9x128xf32>
    %69 = arith.subf %24, %44 : vector<9x128xf32>
    %cst_27 = arith.constant 1.000000e+00 : f32
    %70 = vector.broadcast %cst_27 : f32 to vector<9x128xf32>
    %71 = arith.addf %70, %69 : vector<9x128xf32>
    %72 = arith.mulf %68, %71 : vector<9x128xf32>
    %73 = arith.fptosi %20 : vector<9x128xf32> to vector<9x128xi32>
    %74 = arith.fptosi %24 : vector<9x128xf32> to vector<9x128xi32>
    %75 = arith.fptosi %30 : vector<9x128xf32> to vector<9x128xi32>
    %76 = arith.fptosi %36 : vector<9x128xf32> to vector<9x128xi32>
    %77 = tpu.iota {dimensions = array<i32: 0>} : vector<256x128xi32>
    %c0_28 = arith.constant 0 : index
    %c0_29 = arith.constant 0 : index
    %c0_30 = arith.constant 0 : index
    %78 = vector.load %arg5[%c0_28, %c0_29, %c0_30] : memref<9x4x4xf32, #tpu.memory_space<vmem>>, vector<9x4x4xf32>
    %cst_31 = arith.constant 0.000000e+00 : f32
    %79 = vector.broadcast %cst_31 : f32 to vector<4x128xf32>
    %80 = vector.extract_strided_slice %73 {offsets = [0, 0], sizes = [1, 128], strides = [1, 1]} : vector<9x128xi32> to vector<1x128xi32>
    %81 = vector.extract_strided_slice %74 {offsets = [0, 0], sizes = [1, 128], strides = [1, 1]} : vector<9x128xi32> to vector<1x128xi32>
    %82 = vector.extract_strided_slice %75 {offsets = [0, 0], sizes = [1, 128], strides = [1, 1]} : vector<9x128xi32> to vector<1x128xi32>
    %83 = vector.extract_strided_slice %76 {offsets = [0, 0], sizes = [1, 128], strides = [1, 1]} : vector<9x128xi32> to vector<1x128xi32>
    %c1_i32 = arith.constant 1 : i32
    %84 = vector.broadcast %c1_i32 : i32 to vector<1x128xi32>
    %85 = arith.subi %80, %84 : vector<1x128xi32>
    %c1_i32_32 = arith.constant 1 : i32
    %86 = vector.broadcast %c1_i32_32 : i32 to vector<1x128xi32>
    %87 = arith.subi %81, %86 : vector<1x128xi32>
    %c0_i32 = arith.constant 0 : i32
    %88 = vector.broadcast %c0_i32 : i32 to vector<1x128xi32>
    %89 = arith.cmpi sge, %85, %88 : vector<1x128xi32>
    %c16_i32 = arith.constant 16 : i32
    %90 = vector.broadcast %c16_i32 : i32 to vector<1x128xi32>
    %91 = arith.cmpi slt, %85, %90 : vector<1x128xi32>
    %92 = arith.andi %89, %91 : vector<1x128xi1>
    %c0_i32_33 = arith.constant 0 : i32
    %93 = vector.broadcast %c0_i32_33 : i32 to vector<1x128xi32>
    %94 = arith.cmpi sge, %87, %93 : vector<1x128xi32>
    %95 = arith.andi %92, %94 : vector<1x128xi1>
    %c16_i32_34 = arith.constant 16 : i32
    %96 = vector.broadcast %c16_i32_34 : i32 to vector<1x128xi32>
    %97 = arith.cmpi slt, %87, %96 : vector<1x128xi32>
    %98 = arith.andi %95, %97 : vector<1x128xi1>
    %c16_i32_35 = arith.constant 16 : i32
    %99 = vector.broadcast %c16_i32_35 : i32 to vector<1x128xi32>
    %100 = arith.muli %85, %99 : vector<1x128xi32>
    %101 = arith.addi %100, %87 : vector<1x128xi32>
    %c-1_i32 = arith.constant -1 : i32
    %102 = vector.broadcast %c-1_i32 : i32 to vector<1x128xi32>
    %103 = arith.select %98, %101, %102 : vector<1x128xi1>, vector<1x128xi32>
    %104 = vector.broadcast %103 : vector<1x128xi32> to vector<256x128xi32>
    %105 = arith.cmpi eq, %77, %104 : vector<256x128xi32>
    %cst_36 = arith.constant 1.000000e+00 : f32
    %cst_37 = arith.constant 0.000000e+00 : f32
    %106 = vector.broadcast %cst_36 : f32 to vector<256x128xf32>
    %107 = vector.broadcast %cst_37 : f32 to vector<256x128xf32>
    %108 = arith.select %105, %106, %107 : vector<256x128xi1>, vector<256x128xf32>
    %cst_38 = arith.constant dense<0.000000e+00> : vector<4x128xf32>
    %109 = tpu.matmul %1, %108, %cst_38 {dimension_numbers = #tpu.dot_dimension_numbers<[1], [0], [0], [1], [0, 0, 1, 1], [], []>} : vector<4x256xf32>, vector<256x128xf32>, vector<4x128xf32> -> vector<4x128xf32>
    %110 = vector.extract_strided_slice %51 {offsets = [0, 0], sizes = [1, 128], strides = [1, 1]} : vector<9x128xf32> to vector<1x128xf32>
    %111 = vector.broadcast %110 : vector<1x128xf32> to vector<4x128xf32>
    %112 = arith.mulf %109, %111 : vector<4x128xf32>
    %c1_i32_39 = arith.constant 1 : i32
    %113 = vector.broadcast %c1_i32_39 : i32 to vector<1x128xi32>
    %114 = arith.subi %82, %113 : vector<1x128xi32>
    %c1_i32_40 = arith.constant 1 : i32
    %115 = vector.broadcast %c1_i32_40 : i32 to vector<1x128xi32>
    %116 = arith.subi %83, %115 : vector<1x128xi32>
    %c0_i32_41 = arith.constant 0 : i32
    %117 = vector.broadcast %c0_i32_41 : i32 to vector<1x128xi32>
    %118 = arith.cmpi sge, %114, %117 : vector<1x128xi32>
    %c16_i32_42 = arith.constant 16 : i32
    %119 = vector.broadcast %c16_i32_42 : i32 to vector<1x128xi32>
    %120 = arith.cmpi slt, %114, %119 : vector<1x128xi32>
    %121 = arith.andi %118, %120 : vector<1x128xi1>
    %c0_i32_43 = arith.constant 0 : i32
    %122 = vector.broadcast %c0_i32_43 : i32 to vector<1x128xi32>
    %123 = arith.cmpi sge, %116, %122 : vector<1x128xi32>
    %124 = arith.andi %121, %123 : vector<1x128xi1>
    %c16_i32_44 = arith.constant 16 : i32
    %125 = vector.broadcast %c16_i32_44 : i32 to vector<1x128xi32>
    %126 = arith.cmpi slt, %116, %125 : vector<1x128xi32>
    %127 = arith.andi %124, %126 : vector<1x128xi1>
    %c16_i32_45 = arith.constant 16 : i32
    %128 = vector.broadcast %c16_i32_45 : i32 to vector<1x128xi32>
    %129 = arith.muli %114, %128 : vector<1x128xi32>
    %130 = arith.addi %129, %116 : vector<1x128xi32>
    %c-1_i32_46 = arith.constant -1 : i32
    %131 = vector.broadcast %c-1_i32_46 : i32 to vector<1x128xi32>
    %132 = arith.select %127, %130, %131 : vector<1x128xi1>, vector<1x128xi32>
    %133 = vector.broadcast %132 : vector<1x128xi32> to vector<256x128xi32>
    %134 = arith.cmpi eq, %77, %133 : vector<256x128xi32>
    %cst_47 = arith.constant 1.000000e+00 : f32
    %cst_48 = arith.constant 0.000000e+00 : f32
    %135 = vector.broadcast %cst_47 : f32 to vector<256x128xf32>
    %136 = vector.broadcast %cst_48 : f32 to vector<256x128xf32>
    %137 = arith.select %134, %135, %136 : vector<256x128xi1>, vector<256x128xf32>
    %cst_49 = arith.constant dense<0.000000e+00> : vector<4x128xf32>
    %138 = tpu.matmul %1, %137, %cst_49 {dimension_numbers = #tpu.dot_dimension_numbers<[1], [0], [0], [1], [0, 0, 1, 1], [], []>} : vector<4x256xf32>, vector<256x128xf32>, vector<4x128xf32> -> vector<4x128xf32>
    %139 = vector.extract_strided_slice %58 {offsets = [0, 0], sizes = [1, 128], strides = [1, 1]} : vector<9x128xf32> to vector<1x128xf32>
    %140 = vector.broadcast %139 : vector<1x128xf32> to vector<4x128xf32>
    %141 = arith.mulf %138, %140 : vector<4x128xf32>
    %142 = arith.addf %112, %141 : vector<4x128xf32>
    %c1_i32_50 = arith.constant 1 : i32
    %143 = vector.broadcast %c1_i32_50 : i32 to vector<1x128xi32>
    %144 = arith.subi %80, %143 : vector<1x128xi32>
    %c1_i32_51 = arith.constant 1 : i32
    %145 = vector.broadcast %c1_i32_51 : i32 to vector<1x128xi32>
    %146 = arith.subi %83, %145 : vector<1x128xi32>
    %c0_i32_52 = arith.constant 0 : i32
    %147 = vector.broadcast %c0_i32_52 : i32 to vector<1x128xi32>
    %148 = arith.cmpi sge, %144, %147 : vector<1x128xi32>
    %c16_i32_53 = arith.constant 16 : i32
    %149 = vector.broadcast %c16_i32_53 : i32 to vector<1x128xi32>
    %150 = arith.cmpi slt, %144, %149 : vector<1x128xi32>
    %151 = arith.andi %148, %150 : vector<1x128xi1>
    %c0_i32_54 = arith.constant 0 : i32
    %152 = vector.broadcast %c0_i32_54 : i32 to vector<1x128xi32>
    %153 = arith.cmpi sge, %146, %152 : vector<1x128xi32>
    %154 = arith.andi %151, %153 : vector<1x128xi1>
    %c16_i32_55 = arith.constant 16 : i32
    %155 = vector.broadcast %c16_i32_55 : i32 to vector<1x128xi32>
    %156 = arith.cmpi slt, %146, %155 : vector<1x128xi32>
    %157 = arith.andi %154, %156 : vector<1x128xi1>
    %c16_i32_56 = arith.constant 16 : i32
    %158 = vector.broadcast %c16_i32_56 : i32 to vector<1x128xi32>
    %159 = arith.muli %144, %158 : vector<1x128xi32>
    %160 = arith.addi %159, %146 : vector<1x128xi32>
    %c-1_i32_57 = arith.constant -1 : i32
    %161 = vector.broadcast %c-1_i32_57 : i32 to vector<1x128xi32>
    %162 = arith.select %157, %160, %161 : vector<1x128xi1>, vector<1x128xi32>
    %163 = vector.broadcast %162 : vector<1x128xi32> to vector<256x128xi32>
    %164 = arith.cmpi eq, %77, %163 : vector<256x128xi32>
    %cst_58 = arith.constant 1.000000e+00 : f32
    %cst_59 = arith.constant 0.000000e+00 : f32
    %165 = vector.broadcast %cst_58 : f32 to vector<256x128xf32>
    %166 = vector.broadcast %cst_59 : f32 to vector<256x128xf32>
    %167 = arith.select %164, %165, %166 : vector<256x128xi1>, vector<256x128xf32>
    %cst_60 = arith.constant dense<0.000000e+00> : vector<4x128xf32>
    %168 = tpu.matmul %1, %167, %cst_60 {dimension_numbers = #tpu.dot_dimension_numbers<[1], [0], [0], [1], [0, 0, 1, 1], [], []>} : vector<4x256xf32>, vector<256x128xf32>, vector<4x128xf32> -> vector<4x128xf32>
    %169 = vector.extract_strided_slice %65 {offsets = [0, 0], sizes = [1, 128], strides = [1, 1]} : vector<9x128xf32> to vector<1x128xf32>
    %170 = vector.broadcast %169 : vector<1x128xf32> to vector<4x128xf32>
    %171 = arith.mulf %168, %170 : vector<4x128xf32>
    %172 = arith.addf %142, %171 : vector<4x128xf32>
    %c1_i32_61 = arith.constant 1 : i32
    %173 = vector.broadcast %c1_i32_61 : i32 to vector<1x128xi32>
    %174 = arith.subi %82, %173 : vector<1x128xi32>
    %c1_i32_62 = arith.constant 1 : i32
    %175 = vector.broadcast %c1_i32_62 : i32 to vector<1x128xi32>
    %176 = arith.subi %81, %175 : vector<1x128xi32>
    %c0_i32_63 = arith.constant 0 : i32
    %177 = vector.broadcast %c0_i32_63 : i32 to vector<1x128xi32>
    %178 = arith.cmpi sge, %174, %177 : vector<1x128xi32>
    %c16_i32_64 = arith.constant 16 : i32
    %179 = vector.broadcast %c16_i32_64 : i32 to vector<1x128xi32>
    %180 = arith.cmpi slt, %174, %179 : vector<1x128xi32>
    %181 = arith.andi %178, %180 : vector<1x128xi1>
    %c0_i32_65 = arith.constant 0 : i32
    %182 = vector.broadcast %c0_i32_65 : i32 to vector<1x128xi32>
    %183 = arith.cmpi sge, %176, %182 : vector<1x128xi32>
    %184 = arith.andi %181, %183 : vector<1x128xi1>
    %c16_i32_66 = arith.constant 16 : i32
    %185 = vector.broadcast %c16_i32_66 : i32 to vector<1x128xi32>
    %186 = arith.cmpi slt, %176, %185 : vector<1x128xi32>
    %187 = arith.andi %184, %186 : vector<1x128xi1>
    %c16_i32_67 = arith.constant 16 : i32
    %188 = vector.broadcast %c16_i32_67 : i32 to vector<1x128xi32>
    %189 = arith.muli %174, %188 : vector<1x128xi32>
    %190 = arith.addi %189, %176 : vector<1x128xi32>
    %c-1_i32_68 = arith.constant -1 : i32
    %191 = vector.broadcast %c-1_i32_68 : i32 to vector<1x128xi32>
    %192 = arith.select %187, %190, %191 : vector<1x128xi1>, vector<1x128xi32>
    %193 = vector.broadcast %192 : vector<1x128xi32> to vector<256x128xi32>
    %194 = arith.cmpi eq, %77, %193 : vector<256x128xi32>
    %cst_69 = arith.constant 1.000000e+00 : f32
    %cst_70 = arith.constant 0.000000e+00 : f32
    %195 = vector.broadcast %cst_69 : f32 to vector<256x128xf32>
    %196 = vector.broadcast %cst_70 : f32 to vector<256x128xf32>
    %197 = arith.select %194, %195, %196 : vector<256x128xi1>, vector<256x128xf32>
    %cst_71 = arith.constant dense<0.000000e+00> : vector<4x128xf32>
    %198 = tpu.matmul %1, %197, %cst_71 {dimension_numbers = #tpu.dot_dimension_numbers<[1], [0], [0], [1], [0, 0, 1, 1], [], []>} : vector<4x256xf32>, vector<256x128xf32>, vector<4x128xf32> -> vector<4x128xf32>
    %199 = vector.extract_strided_slice %72 {offsets = [0, 0], sizes = [1, 128], strides = [1, 1]} : vector<9x128xf32> to vector<1x128xf32>
    %200 = vector.broadcast %199 : vector<1x128xf32> to vector<4x128xf32>
    %201 = arith.mulf %198, %200 : vector<4x128xf32>
    %202 = arith.addf %172, %201 : vector<4x128xf32>
    %203 = vector.extract_strided_slice %78 {offsets = [0, 0, 0], sizes = [1, 4, 4], strides = [1, 1, 1]} : vector<9x4x4xf32> to vector<1x4x4xf32>
    %204 = vector.shape_cast %203 : vector<1x4x4xf32> to vector<4x4xf32>
    %cst_72 = arith.constant dense<0.000000e+00> : vector<4x128xf32>
    %205 = tpu.matmul %204, %202, %cst_72 {dimension_numbers = #tpu.dot_dimension_numbers<[1], [0], [0], [1], [0, 0, 1, 1], [], []>} : vector<4x4xf32>, vector<4x128xf32>, vector<4x128xf32> -> vector<4x128xf32>
    %206 = arith.addf %79, %205 : vector<4x128xf32>
    %207 = vector.extract_strided_slice %73 {offsets = [1, 0], sizes = [1, 128], strides = [1, 1]} : vector<9x128xi32> to vector<1x128xi32>
    %208 = vector.extract_strided_slice %74 {offsets = [1, 0], sizes = [1, 128], strides = [1, 1]} : vector<9x128xi32> to vector<1x128xi32>
    %209 = vector.extract_strided_slice %75 {offsets = [1, 0], sizes = [1, 128], strides = [1, 1]} : vector<9x128xi32> to vector<1x128xi32>
    %210 = vector.extract_strided_slice %76 {offsets = [1, 0], sizes = [1, 128], strides = [1, 1]} : vector<9x128xi32> to vector<1x128xi32>
    %c1_i32_73 = arith.constant 1 : i32
    %211 = vector.broadcast %c1_i32_73 : i32 to vector<1x128xi32>
    %212 = arith.subi %207, %211 : vector<1x128xi32>
    %c1_i32_74 = arith.constant 1 : i32
    %213 = vector.broadcast %c1_i32_74 : i32 to vector<1x128xi32>
    %214 = arith.subi %208, %213 : vector<1x128xi32>
    %c0_i32_75 = arith.constant 0 : i32
    %215 = vector.broadcast %c0_i32_75 : i32 to vector<1x128xi32>
    %216 = arith.cmpi sge, %212, %215 : vector<1x128xi32>
    %c16_i32_76 = arith.constant 16 : i32
    %217 = vector.broadcast %c16_i32_76 : i32 to vector<1x128xi32>
    %218 = arith.cmpi slt, %212, %217 : vector<1x128xi32>
    %219 = arith.andi %216, %218 : vector<1x128xi1>
    %c0_i32_77 = arith.constant 0 : i32
    %220 = vector.broadcast %c0_i32_77 : i32 to vector<1x128xi32>
    %221 = arith.cmpi sge, %214, %220 : vector<1x128xi32>
    %222 = arith.andi %219, %221 : vector<1x128xi1>
    %c16_i32_78 = arith.constant 16 : i32
    %223 = vector.broadcast %c16_i32_78 : i32 to vector<1x128xi32>
    %224 = arith.cmpi slt, %214, %223 : vector<1x128xi32>
    %225 = arith.andi %222, %224 : vector<1x128xi1>
    %c16_i32_79 = arith.constant 16 : i32
    %226 = vector.broadcast %c16_i32_79 : i32 to vector<1x128xi32>
    %227 = arith.muli %212, %226 : vector<1x128xi32>
    %228 = arith.addi %227, %214 : vector<1x128xi32>
    %c-1_i32_80 = arith.constant -1 : i32
    %229 = vector.broadcast %c-1_i32_80 : i32 to vector<1x128xi32>
    %230 = arith.select %225, %228, %229 : vector<1x128xi1>, vector<1x128xi32>
    %231 = vector.broadcast %230 : vector<1x128xi32> to vector<256x128xi32>
    %232 = arith.cmpi eq, %77, %231 : vector<256x128xi32>
    %cst_81 = arith.constant 1.000000e+00 : f32
    %cst_82 = arith.constant 0.000000e+00 : f32
    %233 = vector.broadcast %cst_81 : f32 to vector<256x128xf32>
    %234 = vector.broadcast %cst_82 : f32 to vector<256x128xf32>
    %235 = arith.select %232, %233, %234 : vector<256x128xi1>, vector<256x128xf32>
    %cst_83 = arith.constant dense<0.000000e+00> : vector<4x128xf32>
    %236 = tpu.matmul %1, %235, %cst_83 {dimension_numbers = #tpu.dot_dimension_numbers<[1], [0], [0], [1], [0, 0, 1, 1], [], []>} : vector<4x256xf32>, vector<256x128xf32>, vector<4x128xf32> -> vector<4x128xf32>
    %237 = vector.extract_strided_slice %51 {offsets = [1, 0], sizes = [1, 128], strides = [1, 1]} : vector<9x128xf32> to vector<1x128xf32>
    %238 = vector.broadcast %237 : vector<1x128xf32> to vector<4x128xf32>
    %239 = arith.mulf %236, %238 : vector<4x128xf32>
    %c1_i32_84 = arith.constant 1 : i32
    %240 = vector.broadcast %c1_i32_84 : i32 to vector<1x128xi32>
    %241 = arith.subi %209, %240 : vector<1x128xi32>
    %c1_i32_85 = arith.constant 1 : i32
    %242 = vector.broadcast %c1_i32_85 : i32 to vector<1x128xi32>
    %243 = arith.subi %210, %242 : vector<1x128xi32>
    %c0_i32_86 = arith.constant 0 : i32
    %244 = vector.broadcast %c0_i32_86 : i32 to vector<1x128xi32>
    %245 = arith.cmpi sge, %241, %244 : vector<1x128xi32>
    %c16_i32_87 = arith.constant 16 : i32
    %246 = vector.broadcast %c16_i32_87 : i32 to vector<1x128xi32>
    %247 = arith.cmpi slt, %241, %246 : vector<1x128xi32>
    %248 = arith.andi %245, %247 : vector<1x128xi1>
    %c0_i32_88 = arith.constant 0 : i32
    %249 = vector.broadcast %c0_i32_88 : i32 to vector<1x128xi32>
    %250 = arith.cmpi sge, %243, %249 : vector<1x128xi32>
    %251 = arith.andi %248, %250 : vector<1x128xi1>
    %c16_i32_89 = arith.constant 16 : i32
    %252 = vector.broadcast %c16_i32_89 : i32 to vector<1x128xi32>
    %253 = arith.cmpi slt, %243, %252 : vector<1x128xi32>
    %254 = arith.andi %251, %253 : vector<1x128xi1>
    %c16_i32_90 = arith.constant 16 : i32
    %255 = vector.broadcast %c16_i32_90 : i32 to vector<1x128xi32>
    %256 = arith.muli %241, %255 : vector<1x128xi32>
    %257 = arith.addi %256, %243 : vector<1x128xi32>
    %c-1_i32_91 = arith.constant -1 : i32
    %258 = vector.broadcast %c-1_i32_91 : i32 to vector<1x128xi32>
    %259 = arith.select %254, %257, %258 : vector<1x128xi1>, vector<1x128xi32>
    %260 = vector.broadcast %259 : vector<1x128xi32> to vector<256x128xi32>
    %261 = arith.cmpi eq, %77, %260 : vector<256x128xi32>
    %cst_92 = arith.constant 1.000000e+00 : f32
    %cst_93 = arith.constant 0.000000e+00 : f32
    %262 = vector.broadcast %cst_92 : f32 to vector<256x128xf32>
    %263 = vector.broadcast %cst_93 : f32 to vector<256x128xf32>
    %264 = arith.select %261, %262, %263 : vector<256x128xi1>, vector<256x128xf32>
    %cst_94 = arith.constant dense<0.000000e+00> : vector<4x128xf32>
    %265 = tpu.matmul %1, %264, %cst_94 {dimension_numbers = #tpu.dot_dimension_numbers<[1], [0], [0], [1], [0, 0, 1, 1], [], []>} : vector<4x256xf32>, vector<256x128xf32>, vector<4x128xf32> -> vector<4x128xf32>
    %266 = vector.extract_strided_slice %58 {offsets = [1, 0], sizes = [1, 128], strides = [1, 1]} : vector<9x128xf32> to vector<1x128xf32>
    %267 = vector.broadcast %266 : vector<1x128xf32> to vector<4x128xf32>
    %268 = arith.mulf %265, %267 : vector<4x128xf32>
    %269 = arith.addf %239, %268 : vector<4x128xf32>
    %c1_i32_95 = arith.constant 1 : i32
    %270 = vector.broadcast %c1_i32_95 : i32 to vector<1x128xi32>
    %271 = arith.subi %207, %270 : vector<1x128xi32>
    %c1_i32_96 = arith.constant 1 : i32
    %272 = vector.broadcast %c1_i32_96 : i32 to vector<1x128xi32>
    %273 = arith.subi %210, %272 : vector<1x128xi32>
    %c0_i32_97 = arith.constant 0 : i32
    %274 = vector.broadcast %c0_i32_97 : i32 to vector<1x128xi32>
    %275 = arith.cmpi sge, %271, %274 : vector<1x128xi32>
    %c16_i32_98 = arith.constant 16 : i32
    %276 = vector.broadcast %c16_i32_98 : i32 to vector<1x128xi32>
    %277 = arith.cmpi slt, %271, %276 : vector<1x128xi32>
    %278 = arith.andi %275, %277 : vector<1x128xi1>
    %c0_i32_99 = arith.constant 0 : i32
    %279 = vector.broadcast %c0_i32_99 : i32 to vector<1x128xi32>
    %280 = arith.cmpi sge, %273, %279 : vector<1x128xi32>
    %281 = arith.andi %278, %280 : vector<1x128xi1>
    %c16_i32_100 = arith.constant 16 : i32
    %282 = vector.broadcast %c16_i32_100 : i32 to vector<1x128xi32>
    %283 = arith.cmpi slt, %273, %282 : vector<1x128xi32>
    %284 = arith.andi %281, %283 : vector<1x128xi1>
    %c16_i32_101 = arith.constant 16 : i32
    %285 = vector.broadcast %c16_i32_101 : i32 to vector<1x128xi32>
    %286 = arith.muli %271, %285 : vector<1x128xi32>
    %287 = arith.addi %286, %273 : vector<1x128xi32>
    %c-1_i32_102 = arith.constant -1 : i32
    %288 = vector.broadcast %c-1_i32_102 : i32 to vector<1x128xi32>
    %289 = arith.select %284, %287, %288 : vector<1x128xi1>, vector<1x128xi32>
    %290 = vector.broadcast %289 : vector<1x128xi32> to vector<256x128xi32>
    %291 = arith.cmpi eq, %77, %290 : vector<256x128xi32>
    %cst_103 = arith.constant 1.000000e+00 : f32
    %cst_104 = arith.constant 0.000000e+00 : f32
    %292 = vector.broadcast %cst_103 : f32 to vector<256x128xf32>
    %293 = vector.broadcast %cst_104 : f32 to vector<256x128xf32>
    %294 = arith.select %291, %292, %293 : vector<256x128xi1>, vector<256x128xf32>
    %cst_105 = arith.constant dense<0.000000e+00> : vector<4x128xf32>
    %295 = tpu.matmul %1, %294, %cst_105 {dimension_numbers = #tpu.dot_dimension_numbers<[1], [0], [0], [1], [0, 0, 1, 1], [], []>} : vector<4x256xf32>, vector<256x128xf32>, vector<4x128xf32> -> vector<4x128xf32>
    %296 = vector.extract_strided_slice %65 {offsets = [1, 0], sizes = [1, 128], strides = [1, 1]} : vector<9x128xf32> to vector<1x128xf32>
    %297 = vector.broadcast %296 : vector<1x128xf32> to vector<4x128xf32>
    %298 = arith.mulf %295, %297 : vector<4x128xf32>
    %299 = arith.addf %269, %298 : vector<4x128xf32>
    %c1_i32_106 = arith.constant 1 : i32
    %300 = vector.broadcast %c1_i32_106 : i32 to vector<1x128xi32>
    %301 = arith.subi %209, %300 : vector<1x128xi32>
    %c1_i32_107 = arith.constant 1 : i32
    %302 = vector.broadcast %c1_i32_107 : i32 to vector<1x128xi32>
    %303 = arith.subi %208, %302 : vector<1x128xi32>
    %c0_i32_108 = arith.constant 0 : i32
    %304 = vector.broadcast %c0_i32_108 : i32 to vector<1x128xi32>
    %305 = arith.cmpi sge, %301, %304 : vector<1x128xi32>
    %c16_i32_109 = arith.constant 16 : i32
    %306 = vector.broadcast %c16_i32_109 : i32 to vector<1x128xi32>
    %307 = arith.cmpi slt, %301, %306 : vector<1x128xi32>
    %308 = arith.andi %305, %307 : vector<1x128xi1>
    %c0_i32_110 = arith.constant 0 : i32
    %309 = vector.broadcast %c0_i32_110 : i32 to vector<1x128xi32>
    %310 = arith.cmpi sge, %303, %309 : vector<1x128xi32>
    %311 = arith.andi %308, %310 : vector<1x128xi1>
    %c16_i32_111 = arith.constant 16 : i32
    %312 = vector.broadcast %c16_i32_111 : i32 to vector<1x128xi32>
    %313 = arith.cmpi slt, %303, %312 : vector<1x128xi32>
    %314 = arith.andi %311, %313 : vector<1x128xi1>
    %c16_i32_112 = arith.constant 16 : i32
    %315 = vector.broadcast %c16_i32_112 : i32 to vector<1x128xi32>
    %316 = arith.muli %301, %315 : vector<1x128xi32>
    %317 = arith.addi %316, %303 : vector<1x128xi32>
    %c-1_i32_113 = arith.constant -1 : i32
    %318 = vector.broadcast %c-1_i32_113 : i32 to vector<1x128xi32>
    %319 = arith.select %314, %317, %318 : vector<1x128xi1>, vector<1x128xi32>
    %320 = vector.broadcast %319 : vector<1x128xi32> to vector<256x128xi32>
    %321 = arith.cmpi eq, %77, %320 : vector<256x128xi32>
    %cst_114 = arith.constant 1.000000e+00 : f32
    %cst_115 = arith.constant 0.000000e+00 : f32
    %322 = vector.broadcast %cst_114 : f32 to vector<256x128xf32>
    %323 = vector.broadcast %cst_115 : f32 to vector<256x128xf32>
    %324 = arith.select %321, %322, %323 : vector<256x128xi1>, vector<256x128xf32>
    %cst_116 = arith.constant dense<0.000000e+00> : vector<4x128xf32>
    %325 = tpu.matmul %1, %324, %cst_116 {dimension_numbers = #tpu.dot_dimension_numbers<[1], [0], [0], [1], [0, 0, 1, 1], [], []>} : vector<4x256xf32>, vector<256x128xf32>, vector<4x128xf32> -> vector<4x128xf32>
    %326 = vector.extract_strided_slice %72 {offsets = [1, 0], sizes = [1, 128], strides = [1, 1]} : vector<9x128xf32> to vector<1x128xf32>
    %327 = vector.broadcast %326 : vector<1x128xf32> to vector<4x128xf32>
    %328 = arith.mulf %325, %327 : vector<4x128xf32>
    %329 = arith.addf %299, %328 : vector<4x128xf32>
    %330 = vector.extract_strided_slice %78 {offsets = [1, 0, 0], sizes = [1, 4, 4], strides = [1, 1, 1]} : vector<9x4x4xf32> to vector<1x4x4xf32>
    %331 = vector.shape_cast %330 : vector<1x4x4xf32> to vector<4x4xf32>
    %cst_117 = arith.constant dense<0.000000e+00> : vector<4x128xf32>
    %332 = tpu.matmul %331, %329, %cst_117 {dimension_numbers = #tpu.dot_dimension_numbers<[1], [0], [0], [1], [0, 0, 1, 1], [], []>} : vector<4x4xf32>, vector<4x128xf32>, vector<4x128xf32> -> vector<4x128xf32>
    %333 = arith.addf %206, %332 : vector<4x128xf32>
    %334 = vector.extract_strided_slice %73 {offsets = [2, 0], sizes = [1, 128], strides = [1, 1]} : vector<9x128xi32> to vector<1x128xi32>
    %335 = vector.extract_strided_slice %74 {offsets = [2, 0], sizes = [1, 128], strides = [1, 1]} : vector<9x128xi32> to vector<1x128xi32>
    %336 = vector.extract_strided_slice %75 {offsets = [2, 0], sizes = [1, 128], strides = [1, 1]} : vector<9x128xi32> to vector<1x128xi32>
    %337 = vector.extract_strided_slice %76 {offsets = [2, 0], sizes = [1, 128], strides = [1, 1]} : vector<9x128xi32> to vector<1x128xi32>
    %c1_i32_118 = arith.constant 1 : i32
    %338 = vector.broadcast %c1_i32_118 : i32 to vector<1x128xi32>
    %339 = arith.subi %334, %338 : vector<1x128xi32>
    %c1_i32_119 = arith.constant 1 : i32
    %340 = vector.broadcast %c1_i32_119 : i32 to vector<1x128xi32>
    %341 = arith.subi %335, %340 : vector<1x128xi32>
    %c0_i32_120 = arith.constant 0 : i32
    %342 = vector.broadcast %c0_i32_120 : i32 to vector<1x128xi32>
    %343 = arith.cmpi sge, %339, %342 : vector<1x128xi32>
    %c16_i32_121 = arith.constant 16 : i32
    %344 = vector.broadcast %c16_i32_121 : i32 to vector<1x128xi32>
    %345 = arith.cmpi slt, %339, %344 : vector<1x128xi32>
    %346 = arith.andi %343, %345 : vector<1x128xi1>
    %c0_i32_122 = arith.constant 0 : i32
    %347 = vector.broadcast %c0_i32_122 : i32 to vector<1x128xi32>
    %348 = arith.cmpi sge, %341, %347 : vector<1x128xi32>
    %349 = arith.andi %346, %348 : vector<1x128xi1>
    %c16_i32_123 = arith.constant 16 : i32
    %350 = vector.broadcast %c16_i32_123 : i32 to vector<1x128xi32>
    %351 = arith.cmpi slt, %341, %350 : vector<1x128xi32>
    %352 = arith.andi %349, %351 : vector<1x128xi1>
    %c16_i32_124 = arith.constant 16 : i32
    %353 = vector.broadcast %c16_i32_124 : i32 to vector<1x128xi32>
    %354 = arith.muli %339, %353 : vector<1x128xi32>
    %355 = arith.addi %354, %341 : vector<1x128xi32>
    %c-1_i32_125 = arith.constant -1 : i32
    %356 = vector.broadcast %c-1_i32_125 : i32 to vector<1x128xi32>
    %357 = arith.select %352, %355, %356 : vector<1x128xi1>, vector<1x128xi32>
    %358 = vector.broadcast %357 : vector<1x128xi32> to vector<256x128xi32>
    %359 = arith.cmpi eq, %77, %358 : vector<256x128xi32>
    %cst_126 = arith.constant 1.000000e+00 : f32
    %cst_127 = arith.constant 0.000000e+00 : f32
    %360 = vector.broadcast %cst_126 : f32 to vector<256x128xf32>
    %361 = vector.broadcast %cst_127 : f32 to vector<256x128xf32>
    %362 = arith.select %359, %360, %361 : vector<256x128xi1>, vector<256x128xf32>
    %cst_128 = arith.constant dense<0.000000e+00> : vector<4x128xf32>
    %363 = tpu.matmul %1, %362, %cst_128 {dimension_numbers = #tpu.dot_dimension_numbers<[1], [0], [0], [1], [0, 0, 1, 1], [], []>} : vector<4x256xf32>, vector<256x128xf32>, vector<4x128xf32> -> vector<4x128xf32>
    %364 = vector.extract_strided_slice %51 {offsets = [2, 0], sizes = [1, 128], strides = [1, 1]} : vector<9x128xf32> to vector<1x128xf32>
    %365 = vector.broadcast %364 : vector<1x128xf32> to vector<4x128xf32>
    %366 = arith.mulf %363, %365 : vector<4x128xf32>
    %c1_i32_129 = arith.constant 1 : i32
    %367 = vector.broadcast %c1_i32_129 : i32 to vector<1x128xi32>
    %368 = arith.subi %336, %367 : vector<1x128xi32>
    %c1_i32_130 = arith.constant 1 : i32
    %369 = vector.broadcast %c1_i32_130 : i32 to vector<1x128xi32>
    %370 = arith.subi %337, %369 : vector<1x128xi32>
    %c0_i32_131 = arith.constant 0 : i32
    %371 = vector.broadcast %c0_i32_131 : i32 to vector<1x128xi32>
    %372 = arith.cmpi sge, %368, %371 : vector<1x128xi32>
    %c16_i32_132 = arith.constant 16 : i32
    %373 = vector.broadcast %c16_i32_132 : i32 to vector<1x128xi32>
    %374 = arith.cmpi slt, %368, %373 : vector<1x128xi32>
    %375 = arith.andi %372, %374 : vector<1x128xi1>
    %c0_i32_133 = arith.constant 0 : i32
    %376 = vector.broadcast %c0_i32_133 : i32 to vector<1x128xi32>
    %377 = arith.cmpi sge, %370, %376 : vector<1x128xi32>
    %378 = arith.andi %375, %377 : vector<1x128xi1>
    %c16_i32_134 = arith.constant 16 : i32
    %379 = vector.broadcast %c16_i32_134 : i32 to vector<1x128xi32>
    %380 = arith.cmpi slt, %370, %379 : vector<1x128xi32>
    %381 = arith.andi %378, %380 : vector<1x128xi1>
    %c16_i32_135 = arith.constant 16 : i32
    %382 = vector.broadcast %c16_i32_135 : i32 to vector<1x128xi32>
    %383 = arith.muli %368, %382 : vector<1x128xi32>
    %384 = arith.addi %383, %370 : vector<1x128xi32>
    %c-1_i32_136 = arith.constant -1 : i32
    %385 = vector.broadcast %c-1_i32_136 : i32 to vector<1x128xi32>
    %386 = arith.select %381, %384, %385 : vector<1x128xi1>, vector<1x128xi32>
    %387 = vector.broadcast %386 : vector<1x128xi32> to vector<256x128xi32>
    %388 = arith.cmpi eq, %77, %387 : vector<256x128xi32>
    %cst_137 = arith.constant 1.000000e+00 : f32
    %cst_138 = arith.constant 0.000000e+00 : f32
    %389 = vector.broadcast %cst_137 : f32 to vector<256x128xf32>
    %390 = vector.broadcast %cst_138 : f32 to vector<256x128xf32>
    %391 = arith.select %388, %389, %390 : vector<256x128xi1>, vector<256x128xf32>
    %cst_139 = arith.constant dense<0.000000e+00> : vector<4x128xf32>
    %392 = tpu.matmul %1, %391, %cst_139 {dimension_numbers = #tpu.dot_dimension_numbers<[1], [0], [0], [1], [0, 0, 1, 1], [], []>} : vector<4x256xf32>, vector<256x128xf32>, vector<4x128xf32> -> vector<4x128xf32>
    %393 = vector.extract_strided_slice %58 {offsets = [2, 0], sizes = [1, 128], strides = [1, 1]} : vector<9x128xf32> to vector<1x128xf32>
    %394 = vector.broadcast %393 : vector<1x128xf32> to vector<4x128xf32>
    %395 = arith.mulf %392, %394 : vector<4x128xf32>
    %396 = arith.addf %366, %395 : vector<4x128xf32>
    %c1_i32_140 = arith.constant 1 : i32
    %397 = vector.broadcast %c1_i32_140 : i32 to vector<1x128xi32>
    %398 = arith.subi %334, %397 : vector<1x128xi32>
    %c1_i32_141 = arith.constant 1 : i32
    %399 = vector.broadcast %c1_i32_141 : i32 to vector<1x128xi32>
    %400 = arith.subi %337, %399 : vector<1x128xi32>
    %c0_i32_142 = arith.constant 0 : i32
    %401 = vector.broadcast %c0_i32_142 : i32 to vector<1x128xi32>
    %402 = arith.cmpi sge, %398, %401 : vector<1x128xi32>
    %c16_i32_143 = arith.constant 16 : i32
    %403 = vector.broadcast %c16_i32_143 : i32 to vector<1x128xi32>
    %404 = arith.cmpi slt, %398, %403 : vector<1x128xi32>
    %405 = arith.andi %402, %404 : vector<1x128xi1>
    %c0_i32_144 = arith.constant 0 : i32
    %406 = vector.broadcast %c0_i32_144 : i32 to vector<1x128xi32>
    %407 = arith.cmpi sge, %400, %406 : vector<1x128xi32>
    %408 = arith.andi %405, %407 : vector<1x128xi1>
    %c16_i32_145 = arith.constant 16 : i32
    %409 = vector.broadcast %c16_i32_145 : i32 to vector<1x128xi32>
    %410 = arith.cmpi slt, %400, %409 : vector<1x128xi32>
    %411 = arith.andi %408, %410 : vector<1x128xi1>
    %c16_i32_146 = arith.constant 16 : i32
    %412 = vector.broadcast %c16_i32_146 : i32 to vector<1x128xi32>
    %413 = arith.muli %398, %412 : vector<1x128xi32>
    %414 = arith.addi %413, %400 : vector<1x128xi32>
    %c-1_i32_147 = arith.constant -1 : i32
    %415 = vector.broadcast %c-1_i32_147 : i32 to vector<1x128xi32>
    %416 = arith.select %411, %414, %415 : vector<1x128xi1>, vector<1x128xi32>
    %417 = vector.broadcast %416 : vector<1x128xi32> to vector<256x128xi32>
    %418 = arith.cmpi eq, %77, %417 : vector<256x128xi32>
    %cst_148 = arith.constant 1.000000e+00 : f32
    %cst_149 = arith.constant 0.000000e+00 : f32
    %419 = vector.broadcast %cst_148 : f32 to vector<256x128xf32>
    %420 = vector.broadcast %cst_149 : f32 to vector<256x128xf32>
    %421 = arith.select %418, %419, %420 : vector<256x128xi1>, vector<256x128xf32>
    %cst_150 = arith.constant dense<0.000000e+00> : vector<4x128xf32>
    %422 = tpu.matmul %1, %421, %cst_150 {dimension_numbers = #tpu.dot_dimension_numbers<[1], [0], [0], [1], [0, 0, 1, 1], [], []>} : vector<4x256xf32>, vector<256x128xf32>, vector<4x128xf32> -> vector<4x128xf32>
    %423 = vector.extract_strided_slice %65 {offsets = [2, 0], sizes = [1, 128], strides = [1, 1]} : vector<9x128xf32> to vector<1x128xf32>
    %424 = vector.broadcast %423 : vector<1x128xf32> to vector<4x128xf32>
    %425 = arith.mulf %422, %424 : vector<4x128xf32>
    %426 = arith.addf %396, %425 : vector<4x128xf32>
    %c1_i32_151 = arith.constant 1 : i32
    %427 = vector.broadcast %c1_i32_151 : i32 to vector<1x128xi32>
    %428 = arith.subi %336, %427 : vector<1x128xi32>
    %c1_i32_152 = arith.constant 1 : i32
    %429 = vector.broadcast %c1_i32_152 : i32 to vector<1x128xi32>
    %430 = arith.subi %335, %429 : vector<1x128xi32>
    %c0_i32_153 = arith.constant 0 : i32
    %431 = vector.broadcast %c0_i32_153 : i32 to vector<1x128xi32>
    %432 = arith.cmpi sge, %428, %431 : vector<1x128xi32>
    %c16_i32_154 = arith.constant 16 : i32
    %433 = vector.broadcast %c16_i32_154 : i32 to vector<1x128xi32>
    %434 = arith.cmpi slt, %428, %433 : vector<1x128xi32>
    %435 = arith.andi %432, %434 : vector<1x128xi1>
    %c0_i32_155 = arith.constant 0 : i32
    %436 = vector.broadcast %c0_i32_155 : i32 to vector<1x128xi32>
    %437 = arith.cmpi sge, %430, %436 : vector<1x128xi32>
    %438 = arith.andi %435, %437 : vector<1x128xi1>
    %c16_i32_156 = arith.constant 16 : i32
    %439 = vector.broadcast %c16_i32_156 : i32 to vector<1x128xi32>
    %440 = arith.cmpi slt, %430, %439 : vector<1x128xi32>
    %441 = arith.andi %438, %440 : vector<1x128xi1>
    %c16_i32_157 = arith.constant 16 : i32
    %442 = vector.broadcast %c16_i32_157 : i32 to vector<1x128xi32>
    %443 = arith.muli %428, %442 : vector<1x128xi32>
    %444 = arith.addi %443, %430 : vector<1x128xi32>
    %c-1_i32_158 = arith.constant -1 : i32
    %445 = vector.broadcast %c-1_i32_158 : i32 to vector<1x128xi32>
    %446 = arith.select %441, %444, %445 : vector<1x128xi1>, vector<1x128xi32>
    %447 = vector.broadcast %446 : vector<1x128xi32> to vector<256x128xi32>
    %448 = arith.cmpi eq, %77, %447 : vector<256x128xi32>
    %cst_159 = arith.constant 1.000000e+00 : f32
    %cst_160 = arith.constant 0.000000e+00 : f32
    %449 = vector.broadcast %cst_159 : f32 to vector<256x128xf32>
    %450 = vector.broadcast %cst_160 : f32 to vector<256x128xf32>
    %451 = arith.select %448, %449, %450 : vector<256x128xi1>, vector<256x128xf32>
    %cst_161 = arith.constant dense<0.000000e+00> : vector<4x128xf32>
    %452 = tpu.matmul %1, %451, %cst_161 {dimension_numbers = #tpu.dot_dimension_numbers<[1], [0], [0], [1], [0, 0, 1, 1], [], []>} : vector<4x256xf32>, vector<256x128xf32>, vector<4x128xf32> -> vector<4x128xf32>
    %453 = vector.extract_strided_slice %72 {offsets = [2, 0], sizes = [1, 128], strides = [1, 1]} : vector<9x128xf32> to vector<1x128xf32>
    %454 = vector.broadcast %453 : vector<1x128xf32> to vector<4x128xf32>
    %455 = arith.mulf %452, %454 : vector<4x128xf32>
    %456 = arith.addf %426, %455 : vector<4x128xf32>
    %457 = vector.extract_strided_slice %78 {offsets = [2, 0, 0], sizes = [1, 4, 4], strides = [1, 1, 1]} : vector<9x4x4xf32> to vector<1x4x4xf32>
    %458 = vector.shape_cast %457 : vector<1x4x4xf32> to vector<4x4xf32>
    %cst_162 = arith.constant dense<0.000000e+00> : vector<4x128xf32>
    %459 = tpu.matmul %458, %456, %cst_162 {dimension_numbers = #tpu.dot_dimension_numbers<[1], [0], [0], [1], [0, 0, 1, 1], [], []>} : vector<4x4xf32>, vector<4x128xf32>, vector<4x128xf32> -> vector<4x128xf32>
    %460 = arith.addf %333, %459 : vector<4x128xf32>
    %461 = vector.extract_strided_slice %73 {offsets = [3, 0], sizes = [1, 128], strides = [1, 1]} : vector<9x128xi32> to vector<1x128xi32>
    %462 = vector.extract_strided_slice %74 {offsets = [3, 0], sizes = [1, 128], strides = [1, 1]} : vector<9x128xi32> to vector<1x128xi32>
    %463 = vector.extract_strided_slice %75 {offsets = [3, 0], sizes = [1, 128], strides = [1, 1]} : vector<9x128xi32> to vector<1x128xi32>
    %464 = vector.extract_strided_slice %76 {offsets = [3, 0], sizes = [1, 128], strides = [1, 1]} : vector<9x128xi32> to vector<1x128xi32>
    %c1_i32_163 = arith.constant 1 : i32
    %465 = vector.broadcast %c1_i32_163 : i32 to vector<1x128xi32>
    %466 = arith.subi %461, %465 : vector<1x128xi32>
    %c1_i32_164 = arith.constant 1 : i32
    %467 = vector.broadcast %c1_i32_164 : i32 to vector<1x128xi32>
    %468 = arith.subi %462, %467 : vector<1x128xi32>
    %c0_i32_165 = arith.constant 0 : i32
    %469 = vector.broadcast %c0_i32_165 : i32 to vector<1x128xi32>
    %470 = arith.cmpi sge, %466, %469 : vector<1x128xi32>
    %c16_i32_166 = arith.constant 16 : i32
    %471 = vector.broadcast %c16_i32_166 : i32 to vector<1x128xi32>
    %472 = arith.cmpi slt, %466, %471 : vector<1x128xi32>
    %473 = arith.andi %470, %472 : vector<1x128xi1>
    %c0_i32_167 = arith.constant 0 : i32
    %474 = vector.broadcast %c0_i32_167 : i32 to vector<1x128xi32>
    %475 = arith.cmpi sge, %468, %474 : vector<1x128xi32>
    %476 = arith.andi %473, %475 : vector<1x128xi1>
    %c16_i32_168 = arith.constant 16 : i32
    %477 = vector.broadcast %c16_i32_168 : i32 to vector<1x128xi32>
    %478 = arith.cmpi slt, %468, %477 : vector<1x128xi32>
    %479 = arith.andi %476, %478 : vector<1x128xi1>
    %c16_i32_169 = arith.constant 16 : i32
    %480 = vector.broadcast %c16_i32_169 : i32 to vector<1x128xi32>
    %481 = arith.muli %466, %480 : vector<1x128xi32>
    %482 = arith.addi %481, %468 : vector<1x128xi32>
    %c-1_i32_170 = arith.constant -1 : i32
    %483 = vector.broadcast %c-1_i32_170 : i32 to vector<1x128xi32>
    %484 = arith.select %479, %482, %483 : vector<1x128xi1>, vector<1x128xi32>
    %485 = vector.broadcast %484 : vector<1x128xi32> to vector<256x128xi32>
    %486 = arith.cmpi eq, %77, %485 : vector<256x128xi32>
    %cst_171 = arith.constant 1.000000e+00 : f32
    %cst_172 = arith.constant 0.000000e+00 : f32
    %487 = vector.broadcast %cst_171 : f32 to vector<256x128xf32>
    %488 = vector.broadcast %cst_172 : f32 to vector<256x128xf32>
    %489 = arith.select %486, %487, %488 : vector<256x128xi1>, vector<256x128xf32>
    %cst_173 = arith.constant dense<0.000000e+00> : vector<4x128xf32>
    %490 = tpu.matmul %1, %489, %cst_173 {dimension_numbers = #tpu.dot_dimension_numbers<[1], [0], [0], [1], [0, 0, 1, 1], [], []>} : vector<4x256xf32>, vector<256x128xf32>, vector<4x128xf32> -> vector<4x128xf32>
    %491 = vector.extract_strided_slice %51 {offsets = [3, 0], sizes = [1, 128], strides = [1, 1]} : vector<9x128xf32> to vector<1x128xf32>
    %492 = vector.broadcast %491 : vector<1x128xf32> to vector<4x128xf32>
    %493 = arith.mulf %490, %492 : vector<4x128xf32>
    %c1_i32_174 = arith.constant 1 : i32
    %494 = vector.broadcast %c1_i32_174 : i32 to vector<1x128xi32>
    %495 = arith.subi %463, %494 : vector<1x128xi32>
    %c1_i32_175 = arith.constant 1 : i32
    %496 = vector.broadcast %c1_i32_175 : i32 to vector<1x128xi32>
    %497 = arith.subi %464, %496 : vector<1x128xi32>
    %c0_i32_176 = arith.constant 0 : i32
    %498 = vector.broadcast %c0_i32_176 : i32 to vector<1x128xi32>
    %499 = arith.cmpi sge, %495, %498 : vector<1x128xi32>
    %c16_i32_177 = arith.constant 16 : i32
    %500 = vector.broadcast %c16_i32_177 : i32 to vector<1x128xi32>
    %501 = arith.cmpi slt, %495, %500 : vector<1x128xi32>
    %502 = arith.andi %499, %501 : vector<1x128xi1>
    %c0_i32_178 = arith.constant 0 : i32
    %503 = vector.broadcast %c0_i32_178 : i32 to vector<1x128xi32>
    %504 = arith.cmpi sge, %497, %503 : vector<1x128xi32>
    %505 = arith.andi %502, %504 : vector<1x128xi1>
    %c16_i32_179 = arith.constant 16 : i32
    %506 = vector.broadcast %c16_i32_179 : i32 to vector<1x128xi32>
    %507 = arith.cmpi slt, %497, %506 : vector<1x128xi32>
    %508 = arith.andi %505, %507 : vector<1x128xi1>
    %c16_i32_180 = arith.constant 16 : i32
    %509 = vector.broadcast %c16_i32_180 : i32 to vector<1x128xi32>
    %510 = arith.muli %495, %509 : vector<1x128xi32>
    %511 = arith.addi %510, %497 : vector<1x128xi32>
    %c-1_i32_181 = arith.constant -1 : i32
    %512 = vector.broadcast %c-1_i32_181 : i32 to vector<1x128xi32>
    %513 = arith.select %508, %511, %512 : vector<1x128xi1>, vector<1x128xi32>
    %514 = vector.broadcast %513 : vector<1x128xi32> to vector<256x128xi32>
    %515 = arith.cmpi eq, %77, %514 : vector<256x128xi32>
    %cst_182 = arith.constant 1.000000e+00 : f32
    %cst_183 = arith.constant 0.000000e+00 : f32
    %516 = vector.broadcast %cst_182 : f32 to vector<256x128xf32>
    %517 = vector.broadcast %cst_183 : f32 to vector<256x128xf32>
    %518 = arith.select %515, %516, %517 : vector<256x128xi1>, vector<256x128xf32>
    %cst_184 = arith.constant dense<0.000000e+00> : vector<4x128xf32>
    %519 = tpu.matmul %1, %518, %cst_184 {dimension_numbers = #tpu.dot_dimension_numbers<[1], [0], [0], [1], [0, 0, 1, 1], [], []>} : vector<4x256xf32>, vector<256x128xf32>, vector<4x128xf32> -> vector<4x128xf32>
    %520 = vector.extract_strided_slice %58 {offsets = [3, 0], sizes = [1, 128], strides = [1, 1]} : vector<9x128xf32> to vector<1x128xf32>
    %521 = vector.broadcast %520 : vector<1x128xf32> to vector<4x128xf32>
    %522 = arith.mulf %519, %521 : vector<4x128xf32>
    %523 = arith.addf %493, %522 : vector<4x128xf32>
    %c1_i32_185 = arith.constant 1 : i32
    %524 = vector.broadcast %c1_i32_185 : i32 to vector<1x128xi32>
    %525 = arith.subi %461, %524 : vector<1x128xi32>
    %c1_i32_186 = arith.constant 1 : i32
    %526 = vector.broadcast %c1_i32_186 : i32 to vector<1x128xi32>
    %527 = arith.subi %464, %526 : vector<1x128xi32>
    %c0_i32_187 = arith.constant 0 : i32
    %528 = vector.broadcast %c0_i32_187 : i32 to vector<1x128xi32>
    %529 = arith.cmpi sge, %525, %528 : vector<1x128xi32>
    %c16_i32_188 = arith.constant 16 : i32
    %530 = vector.broadcast %c16_i32_188 : i32 to vector<1x128xi32>
    %531 = arith.cmpi slt, %525, %530 : vector<1x128xi32>
    %532 = arith.andi %529, %531 : vector<1x128xi1>
    %c0_i32_189 = arith.constant 0 : i32
    %533 = vector.broadcast %c0_i32_189 : i32 to vector<1x128xi32>
    %534 = arith.cmpi sge, %527, %533 : vector<1x128xi32>
    %535 = arith.andi %532, %534 : vector<1x128xi1>
    %c16_i32_190 = arith.constant 16 : i32
    %536 = vector.broadcast %c16_i32_190 : i32 to vector<1x128xi32>
    %537 = arith.cmpi slt, %527, %536 : vector<1x128xi32>
    %538 = arith.andi %535, %537 : vector<1x128xi1>
    %c16_i32_191 = arith.constant 16 : i32
    %539 = vector.broadcast %c16_i32_191 : i32 to vector<1x128xi32>
    %540 = arith.muli %525, %539 : vector<1x128xi32>
    %541 = arith.addi %540, %527 : vector<1x128xi32>
    %c-1_i32_192 = arith.constant -1 : i32
    %542 = vector.broadcast %c-1_i32_192 : i32 to vector<1x128xi32>
    %543 = arith.select %538, %541, %542 : vector<1x128xi1>, vector<1x128xi32>
    %544 = vector.broadcast %543 : vector<1x128xi32> to vector<256x128xi32>
    %545 = arith.cmpi eq, %77, %544 : vector<256x128xi32>
    %cst_193 = arith.constant 1.000000e+00 : f32
    %cst_194 = arith.constant 0.000000e+00 : f32
    %546 = vector.broadcast %cst_193 : f32 to vector<256x128xf32>
    %547 = vector.broadcast %cst_194 : f32 to vector<256x128xf32>
    %548 = arith.select %545, %546, %547 : vector<256x128xi1>, vector<256x128xf32>
    %cst_195 = arith.constant dense<0.000000e+00> : vector<4x128xf32>
    %549 = tpu.matmul %1, %548, %cst_195 {dimension_numbers = #tpu.dot_dimension_numbers<[1], [0], [0], [1], [0, 0, 1, 1], [], []>} : vector<4x256xf32>, vector<256x128xf32>, vector<4x128xf32> -> vector<4x128xf32>
    %550 = vector.extract_strided_slice %65 {offsets = [3, 0], sizes = [1, 128], strides = [1, 1]} : vector<9x128xf32> to vector<1x128xf32>
    %551 = vector.broadcast %550 : vector<1x128xf32> to vector<4x128xf32>
    %552 = arith.mulf %549, %551 : vector<4x128xf32>
    %553 = arith.addf %523, %552 : vector<4x128xf32>
    %c1_i32_196 = arith.constant 1 : i32
    %554 = vector.broadcast %c1_i32_196 : i32 to vector<1x128xi32>
    %555 = arith.subi %463, %554 : vector<1x128xi32>
    %c1_i32_197 = arith.constant 1 : i32
    %556 = vector.broadcast %c1_i32_197 : i32 to vector<1x128xi32>
    %557 = arith.subi %462, %556 : vector<1x128xi32>
    %c0_i32_198 = arith.constant 0 : i32
    %558 = vector.broadcast %c0_i32_198 : i32 to vector<1x128xi32>
    %559 = arith.cmpi sge, %555, %558 : vector<1x128xi32>
    %c16_i32_199 = arith.constant 16 : i32
    %560 = vector.broadcast %c16_i32_199 : i32 to vector<1x128xi32>
    %561 = arith.cmpi slt, %555, %560 : vector<1x128xi32>
    %562 = arith.andi %559, %561 : vector<1x128xi1>
    %c0_i32_200 = arith.constant 0 : i32
    %563 = vector.broadcast %c0_i32_200 : i32 to vector<1x128xi32>
    %564 = arith.cmpi sge, %557, %563 : vector<1x128xi32>
    %565 = arith.andi %562, %564 : vector<1x128xi1>
    %c16_i32_201 = arith.constant 16 : i32
    %566 = vector.broadcast %c16_i32_201 : i32 to vector<1x128xi32>
    %567 = arith.cmpi slt, %557, %566 : vector<1x128xi32>
    %568 = arith.andi %565, %567 : vector<1x128xi1>
    %c16_i32_202 = arith.constant 16 : i32
    %569 = vector.broadcast %c16_i32_202 : i32 to vector<1x128xi32>
    %570 = arith.muli %555, %569 : vector<1x128xi32>
    %571 = arith.addi %570, %557 : vector<1x128xi32>
    %c-1_i32_203 = arith.constant -1 : i32
    %572 = vector.broadcast %c-1_i32_203 : i32 to vector<1x128xi32>
    %573 = arith.select %568, %571, %572 : vector<1x128xi1>, vector<1x128xi32>
    %574 = vector.broadcast %573 : vector<1x128xi32> to vector<256x128xi32>
    %575 = arith.cmpi eq, %77, %574 : vector<256x128xi32>
    %cst_204 = arith.constant 1.000000e+00 : f32
    %cst_205 = arith.constant 0.000000e+00 : f32
    %576 = vector.broadcast %cst_204 : f32 to vector<256x128xf32>
    %577 = vector.broadcast %cst_205 : f32 to vector<256x128xf32>
    %578 = arith.select %575, %576, %577 : vector<256x128xi1>, vector<256x128xf32>
    %cst_206 = arith.constant dense<0.000000e+00> : vector<4x128xf32>
    %579 = tpu.matmul %1, %578, %cst_206 {dimension_numbers = #tpu.dot_dimension_numbers<[1], [0], [0], [1], [0, 0, 1, 1], [], []>} : vector<4x256xf32>, vector<256x128xf32>, vector<4x128xf32> -> vector<4x128xf32>
    %580 = vector.extract_strided_slice %72 {offsets = [3, 0], sizes = [1, 128], strides = [1, 1]} : vector<9x128xf32> to vector<1x128xf32>
    %581 = vector.broadcast %580 : vector<1x128xf32> to vector<4x128xf32>
    %582 = arith.mulf %579, %581 : vector<4x128xf32>
    %583 = arith.addf %553, %582 : vector<4x128xf32>
    %584 = vector.extract_strided_slice %78 {offsets = [3, 0, 0], sizes = [1, 4, 4], strides = [1, 1, 1]} : vector<9x4x4xf32> to vector<1x4x4xf32>
    %585 = vector.shape_cast %584 : vector<1x4x4xf32> to vector<4x4xf32>
    %cst_207 = arith.constant dense<0.000000e+00> : vector<4x128xf32>
    %586 = tpu.matmul %585, %583, %cst_207 {dimension_numbers = #tpu.dot_dimension_numbers<[1], [0], [0], [1], [0, 0, 1, 1], [], []>} : vector<4x4xf32>, vector<4x128xf32>, vector<4x128xf32> -> vector<4x128xf32>
    %587 = arith.addf %460, %586 : vector<4x128xf32>
    %588 = vector.extract_strided_slice %73 {offsets = [4, 0], sizes = [1, 128], strides = [1, 1]} : vector<9x128xi32> to vector<1x128xi32>
    %589 = vector.extract_strided_slice %74 {offsets = [4, 0], sizes = [1, 128], strides = [1, 1]} : vector<9x128xi32> to vector<1x128xi32>
    %590 = vector.extract_strided_slice %75 {offsets = [4, 0], sizes = [1, 128], strides = [1, 1]} : vector<9x128xi32> to vector<1x128xi32>
    %591 = vector.extract_strided_slice %76 {offsets = [4, 0], sizes = [1, 128], strides = [1, 1]} : vector<9x128xi32> to vector<1x128xi32>
    %c1_i32_208 = arith.constant 1 : i32
    %592 = vector.broadcast %c1_i32_208 : i32 to vector<1x128xi32>
    %593 = arith.subi %588, %592 : vector<1x128xi32>
    %c1_i32_209 = arith.constant 1 : i32
    %594 = vector.broadcast %c1_i32_209 : i32 to vector<1x128xi32>
    %595 = arith.subi %589, %594 : vector<1x128xi32>
    %c0_i32_210 = arith.constant 0 : i32
    %596 = vector.broadcast %c0_i32_210 : i32 to vector<1x128xi32>
    %597 = arith.cmpi sge, %593, %596 : vector<1x128xi32>
    %c16_i32_211 = arith.constant 16 : i32
    %598 = vector.broadcast %c16_i32_211 : i32 to vector<1x128xi32>
    %599 = arith.cmpi slt, %593, %598 : vector<1x128xi32>
    %600 = arith.andi %597, %599 : vector<1x128xi1>
    %c0_i32_212 = arith.constant 0 : i32
    %601 = vector.broadcast %c0_i32_212 : i32 to vector<1x128xi32>
    %602 = arith.cmpi sge, %595, %601 : vector<1x128xi32>
    %603 = arith.andi %600, %602 : vector<1x128xi1>
    %c16_i32_213 = arith.constant 16 : i32
    %604 = vector.broadcast %c16_i32_213 : i32 to vector<1x128xi32>
    %605 = arith.cmpi slt, %595, %604 : vector<1x128xi32>
    %606 = arith.andi %603, %605 : vector<1x128xi1>
    %c16_i32_214 = arith.constant 16 : i32
    %607 = vector.broadcast %c16_i32_214 : i32 to vector<1x128xi32>
    %608 = arith.muli %593, %607 : vector<1x128xi32>
    %609 = arith.addi %608, %595 : vector<1x128xi32>
    %c-1_i32_215 = arith.constant -1 : i32
    %610 = vector.broadcast %c-1_i32_215 : i32 to vector<1x128xi32>
    %611 = arith.select %606, %609, %610 : vector<1x128xi1>, vector<1x128xi32>
    %612 = vector.broadcast %611 : vector<1x128xi32> to vector<256x128xi32>
    %613 = arith.cmpi eq, %77, %612 : vector<256x128xi32>
    %cst_216 = arith.constant 1.000000e+00 : f32
    %cst_217 = arith.constant 0.000000e+00 : f32
    %614 = vector.broadcast %cst_216 : f32 to vector<256x128xf32>
    %615 = vector.broadcast %cst_217 : f32 to vector<256x128xf32>
    %616 = arith.select %613, %614, %615 : vector<256x128xi1>, vector<256x128xf32>
    %cst_218 = arith.constant dense<0.000000e+00> : vector<4x128xf32>
    %617 = tpu.matmul %1, %616, %cst_218 {dimension_numbers = #tpu.dot_dimension_numbers<[1], [0], [0], [1], [0, 0, 1, 1], [], []>} : vector<4x256xf32>, vector<256x128xf32>, vector<4x128xf32> -> vector<4x128xf32>
    %618 = vector.extract_strided_slice %51 {offsets = [4, 0], sizes = [1, 128], strides = [1, 1]} : vector<9x128xf32> to vector<1x128xf32>
    %619 = vector.broadcast %618 : vector<1x128xf32> to vector<4x128xf32>
    %620 = arith.mulf %617, %619 : vector<4x128xf32>
    %c1_i32_219 = arith.constant 1 : i32
    %621 = vector.broadcast %c1_i32_219 : i32 to vector<1x128xi32>
    %622 = arith.subi %590, %621 : vector<1x128xi32>
    %c1_i32_220 = arith.constant 1 : i32
    %623 = vector.broadcast %c1_i32_220 : i32 to vector<1x128xi32>
    %624 = arith.subi %591, %623 : vector<1x128xi32>
    %c0_i32_221 = arith.constant 0 : i32
    %625 = vector.broadcast %c0_i32_221 : i32 to vector<1x128xi32>
    %626 = arith.cmpi sge, %622, %625 : vector<1x128xi32>
    %c16_i32_222 = arith.constant 16 : i32
    %627 = vector.broadcast %c16_i32_222 : i32 to vector<1x128xi32>
    %628 = arith.cmpi slt, %622, %627 : vector<1x128xi32>
    %629 = arith.andi %626, %628 : vector<1x128xi1>
    %c0_i32_223 = arith.constant 0 : i32
    %630 = vector.broadcast %c0_i32_223 : i32 to vector<1x128xi32>
    %631 = arith.cmpi sge, %624, %630 : vector<1x128xi32>
    %632 = arith.andi %629, %631 : vector<1x128xi1>
    %c16_i32_224 = arith.constant 16 : i32
    %633 = vector.broadcast %c16_i32_224 : i32 to vector<1x128xi32>
    %634 = arith.cmpi slt, %624, %633 : vector<1x128xi32>
    %635 = arith.andi %632, %634 : vector<1x128xi1>
    %c16_i32_225 = arith.constant 16 : i32
    %636 = vector.broadcast %c16_i32_225 : i32 to vector<1x128xi32>
    %637 = arith.muli %622, %636 : vector<1x128xi32>
    %638 = arith.addi %637, %624 : vector<1x128xi32>
    %c-1_i32_226 = arith.constant -1 : i32
    %639 = vector.broadcast %c-1_i32_226 : i32 to vector<1x128xi32>
    %640 = arith.select %635, %638, %639 : vector<1x128xi1>, vector<1x128xi32>
    %641 = vector.broadcast %640 : vector<1x128xi32> to vector<256x128xi32>
    %642 = arith.cmpi eq, %77, %641 : vector<256x128xi32>
    %cst_227 = arith.constant 1.000000e+00 : f32
    %cst_228 = arith.constant 0.000000e+00 : f32
    %643 = vector.broadcast %cst_227 : f32 to vector<256x128xf32>
    %644 = vector.broadcast %cst_228 : f32 to vector<256x128xf32>
    %645 = arith.select %642, %643, %644 : vector<256x128xi1>, vector<256x128xf32>
    %cst_229 = arith.constant dense<0.000000e+00> : vector<4x128xf32>
    %646 = tpu.matmul %1, %645, %cst_229 {dimension_numbers = #tpu.dot_dimension_numbers<[1], [0], [0], [1], [0, 0, 1, 1], [], []>} : vector<4x256xf32>, vector<256x128xf32>, vector<4x128xf32> -> vector<4x128xf32>
    %647 = vector.extract_strided_slice %58 {offsets = [4, 0], sizes = [1, 128], strides = [1, 1]} : vector<9x128xf32> to vector<1x128xf32>
    %648 = vector.broadcast %647 : vector<1x128xf32> to vector<4x128xf32>
    %649 = arith.mulf %646, %648 : vector<4x128xf32>
    %650 = arith.addf %620, %649 : vector<4x128xf32>
    %c1_i32_230 = arith.constant 1 : i32
    %651 = vector.broadcast %c1_i32_230 : i32 to vector<1x128xi32>
    %652 = arith.subi %588, %651 : vector<1x128xi32>
    %c1_i32_231 = arith.constant 1 : i32
    %653 = vector.broadcast %c1_i32_231 : i32 to vector<1x128xi32>
    %654 = arith.subi %591, %653 : vector<1x128xi32>
    %c0_i32_232 = arith.constant 0 : i32
    %655 = vector.broadcast %c0_i32_232 : i32 to vector<1x128xi32>
    %656 = arith.cmpi sge, %652, %655 : vector<1x128xi32>
    %c16_i32_233 = arith.constant 16 : i32
    %657 = vector.broadcast %c16_i32_233 : i32 to vector<1x128xi32>
    %658 = arith.cmpi slt, %652, %657 : vector<1x128xi32>
    %659 = arith.andi %656, %658 : vector<1x128xi1>
    %c0_i32_234 = arith.constant 0 : i32
    %660 = vector.broadcast %c0_i32_234 : i32 to vector<1x128xi32>
    %661 = arith.cmpi sge, %654, %660 : vector<1x128xi32>
    %662 = arith.andi %659, %661 : vector<1x128xi1>
    %c16_i32_235 = arith.constant 16 : i32
    %663 = vector.broadcast %c16_i32_235 : i32 to vector<1x128xi32>
    %664 = arith.cmpi slt, %654, %663 : vector<1x128xi32>
    %665 = arith.andi %662, %664 : vector<1x128xi1>
    %c16_i32_236 = arith.constant 16 : i32
    %666 = vector.broadcast %c16_i32_236 : i32 to vector<1x128xi32>
    %667 = arith.muli %652, %666 : vector<1x128xi32>
    %668 = arith.addi %667, %654 : vector<1x128xi32>
    %c-1_i32_237 = arith.constant -1 : i32
    %669 = vector.broadcast %c-1_i32_237 : i32 to vector<1x128xi32>
    %670 = arith.select %665, %668, %669 : vector<1x128xi1>, vector<1x128xi32>
    %671 = vector.broadcast %670 : vector<1x128xi32> to vector<256x128xi32>
    %672 = arith.cmpi eq, %77, %671 : vector<256x128xi32>
    %cst_238 = arith.constant 1.000000e+00 : f32
    %cst_239 = arith.constant 0.000000e+00 : f32
    %673 = vector.broadcast %cst_238 : f32 to vector<256x128xf32>
    %674 = vector.broadcast %cst_239 : f32 to vector<256x128xf32>
    %675 = arith.select %672, %673, %674 : vector<256x128xi1>, vector<256x128xf32>
    %cst_240 = arith.constant dense<0.000000e+00> : vector<4x128xf32>
    %676 = tpu.matmul %1, %675, %cst_240 {dimension_numbers = #tpu.dot_dimension_numbers<[1], [0], [0], [1], [0, 0, 1, 1], [], []>} : vector<4x256xf32>, vector<256x128xf32>, vector<4x128xf32> -> vector<4x128xf32>
    %677 = vector.extract_strided_slice %65 {offsets = [4, 0], sizes = [1, 128], strides = [1, 1]} : vector<9x128xf32> to vector<1x128xf32>
    %678 = vector.broadcast %677 : vector<1x128xf32> to vector<4x128xf32>
    %679 = arith.mulf %676, %678 : vector<4x128xf32>
    %680 = arith.addf %650, %679 : vector<4x128xf32>
    %c1_i32_241 = arith.constant 1 : i32
    %681 = vector.broadcast %c1_i32_241 : i32 to vector<1x128xi32>
    %682 = arith.subi %590, %681 : vector<1x128xi32>
    %c1_i32_242 = arith.constant 1 : i32
    %683 = vector.broadcast %c1_i32_242 : i32 to vector<1x128xi32>
    %684 = arith.subi %589, %683 : vector<1x128xi32>
    %c0_i32_243 = arith.constant 0 : i32
    %685 = vector.broadcast %c0_i32_243 : i32 to vector<1x128xi32>
    %686 = arith.cmpi sge, %682, %685 : vector<1x128xi32>
    %c16_i32_244 = arith.constant 16 : i32
    %687 = vector.broadcast %c16_i32_244 : i32 to vector<1x128xi32>
    %688 = arith.cmpi slt, %682, %687 : vector<1x128xi32>
    %689 = arith.andi %686, %688 : vector<1x128xi1>
    %c0_i32_245 = arith.constant 0 : i32
    %690 = vector.broadcast %c0_i32_245 : i32 to vector<1x128xi32>
    %691 = arith.cmpi sge, %684, %690 : vector<1x128xi32>
    %692 = arith.andi %689, %691 : vector<1x128xi1>
    %c16_i32_246 = arith.constant 16 : i32
    %693 = vector.broadcast %c16_i32_246 : i32 to vector<1x128xi32>
    %694 = arith.cmpi slt, %684, %693 : vector<1x128xi32>
    %695 = arith.andi %692, %694 : vector<1x128xi1>
    %c16_i32_247 = arith.constant 16 : i32
    %696 = vector.broadcast %c16_i32_247 : i32 to vector<1x128xi32>
    %697 = arith.muli %682, %696 : vector<1x128xi32>
    %698 = arith.addi %697, %684 : vector<1x128xi32>
    %c-1_i32_248 = arith.constant -1 : i32
    %699 = vector.broadcast %c-1_i32_248 : i32 to vector<1x128xi32>
    %700 = arith.select %695, %698, %699 : vector<1x128xi1>, vector<1x128xi32>
    %701 = vector.broadcast %700 : vector<1x128xi32> to vector<256x128xi32>
    %702 = arith.cmpi eq, %77, %701 : vector<256x128xi32>
    %cst_249 = arith.constant 1.000000e+00 : f32
    %cst_250 = arith.constant 0.000000e+00 : f32
    %703 = vector.broadcast %cst_249 : f32 to vector<256x128xf32>
    %704 = vector.broadcast %cst_250 : f32 to vector<256x128xf32>
    %705 = arith.select %702, %703, %704 : vector<256x128xi1>, vector<256x128xf32>
    %cst_251 = arith.constant dense<0.000000e+00> : vector<4x128xf32>
    %706 = tpu.matmul %1, %705, %cst_251 {dimension_numbers = #tpu.dot_dimension_numbers<[1], [0], [0], [1], [0, 0, 1, 1], [], []>} : vector<4x256xf32>, vector<256x128xf32>, vector<4x128xf32> -> vector<4x128xf32>
    %707 = vector.extract_strided_slice %72 {offsets = [4, 0], sizes = [1, 128], strides = [1, 1]} : vector<9x128xf32> to vector<1x128xf32>
    %708 = vector.broadcast %707 : vector<1x128xf32> to vector<4x128xf32>
    %709 = arith.mulf %706, %708 : vector<4x128xf32>
    %710 = arith.addf %680, %709 : vector<4x128xf32>
    %711 = vector.extract_strided_slice %78 {offsets = [4, 0, 0], sizes = [1, 4, 4], strides = [1, 1, 1]} : vector<9x4x4xf32> to vector<1x4x4xf32>
    %712 = vector.shape_cast %711 : vector<1x4x4xf32> to vector<4x4xf32>
    %cst_252 = arith.constant dense<0.000000e+00> : vector<4x128xf32>
    %713 = tpu.matmul %712, %710, %cst_252 {dimension_numbers = #tpu.dot_dimension_numbers<[1], [0], [0], [1], [0, 0, 1, 1], [], []>} : vector<4x4xf32>, vector<4x128xf32>, vector<4x128xf32> -> vector<4x128xf32>
    %714 = arith.addf %587, %713 : vector<4x128xf32>
    %715 = vector.extract_strided_slice %73 {offsets = [5, 0], sizes = [1, 128], strides = [1, 1]} : vector<9x128xi32> to vector<1x128xi32>
    %716 = vector.extract_strided_slice %74 {offsets = [5, 0], sizes = [1, 128], strides = [1, 1]} : vector<9x128xi32> to vector<1x128xi32>
    %717 = vector.extract_strided_slice %75 {offsets = [5, 0], sizes = [1, 128], strides = [1, 1]} : vector<9x128xi32> to vector<1x128xi32>
    %718 = vector.extract_strided_slice %76 {offsets = [5, 0], sizes = [1, 128], strides = [1, 1]} : vector<9x128xi32> to vector<1x128xi32>
    %c1_i32_253 = arith.constant 1 : i32
    %719 = vector.broadcast %c1_i32_253 : i32 to vector<1x128xi32>
    %720 = arith.subi %715, %719 : vector<1x128xi32>
    %c1_i32_254 = arith.constant 1 : i32
    %721 = vector.broadcast %c1_i32_254 : i32 to vector<1x128xi32>
    %722 = arith.subi %716, %721 : vector<1x128xi32>
    %c0_i32_255 = arith.constant 0 : i32
    %723 = vector.broadcast %c0_i32_255 : i32 to vector<1x128xi32>
    %724 = arith.cmpi sge, %720, %723 : vector<1x128xi32>
    %c16_i32_256 = arith.constant 16 : i32
    %725 = vector.broadcast %c16_i32_256 : i32 to vector<1x128xi32>
    %726 = arith.cmpi slt, %720, %725 : vector<1x128xi32>
    %727 = arith.andi %724, %726 : vector<1x128xi1>
    %c0_i32_257 = arith.constant 0 : i32
    %728 = vector.broadcast %c0_i32_257 : i32 to vector<1x128xi32>
    %729 = arith.cmpi sge, %722, %728 : vector<1x128xi32>
    %730 = arith.andi %727, %729 : vector<1x128xi1>
    %c16_i32_258 = arith.constant 16 : i32
    %731 = vector.broadcast %c16_i32_258 : i32 to vector<1x128xi32>
    %732 = arith.cmpi slt, %722, %731 : vector<1x128xi32>
    %733 = arith.andi %730, %732 : vector<1x128xi1>
    %c16_i32_259 = arith.constant 16 : i32
    %734 = vector.broadcast %c16_i32_259 : i32 to vector<1x128xi32>
    %735 = arith.muli %720, %734 : vector<1x128xi32>
    %736 = arith.addi %735, %722 : vector<1x128xi32>
    %c-1_i32_260 = arith.constant -1 : i32
    %737 = vector.broadcast %c-1_i32_260 : i32 to vector<1x128xi32>
    %738 = arith.select %733, %736, %737 : vector<1x128xi1>, vector<1x128xi32>
    %739 = vector.broadcast %738 : vector<1x128xi32> to vector<256x128xi32>
    %740 = arith.cmpi eq, %77, %739 : vector<256x128xi32>
    %cst_261 = arith.constant 1.000000e+00 : f32
    %cst_262 = arith.constant 0.000000e+00 : f32
    %741 = vector.broadcast %cst_261 : f32 to vector<256x128xf32>
    %742 = vector.broadcast %cst_262 : f32 to vector<256x128xf32>
    %743 = arith.select %740, %741, %742 : vector<256x128xi1>, vector<256x128xf32>
    %cst_263 = arith.constant dense<0.000000e+00> : vector<4x128xf32>
    %744 = tpu.matmul %1, %743, %cst_263 {dimension_numbers = #tpu.dot_dimension_numbers<[1], [0], [0], [1], [0, 0, 1, 1], [], []>} : vector<4x256xf32>, vector<256x128xf32>, vector<4x128xf32> -> vector<4x128xf32>
    %745 = vector.extract_strided_slice %51 {offsets = [5, 0], sizes = [1, 128], strides = [1, 1]} : vector<9x128xf32> to vector<1x128xf32>
    %746 = vector.broadcast %745 : vector<1x128xf32> to vector<4x128xf32>
    %747 = arith.mulf %744, %746 : vector<4x128xf32>
    %c1_i32_264 = arith.constant 1 : i32
    %748 = vector.broadcast %c1_i32_264 : i32 to vector<1x128xi32>
    %749 = arith.subi %717, %748 : vector<1x128xi32>
    %c1_i32_265 = arith.constant 1 : i32
    %750 = vector.broadcast %c1_i32_265 : i32 to vector<1x128xi32>
    %751 = arith.subi %718, %750 : vector<1x128xi32>
    %c0_i32_266 = arith.constant 0 : i32
    %752 = vector.broadcast %c0_i32_266 : i32 to vector<1x128xi32>
    %753 = arith.cmpi sge, %749, %752 : vector<1x128xi32>
    %c16_i32_267 = arith.constant 16 : i32
    %754 = vector.broadcast %c16_i32_267 : i32 to vector<1x128xi32>
    %755 = arith.cmpi slt, %749, %754 : vector<1x128xi32>
    %756 = arith.andi %753, %755 : vector<1x128xi1>
    %c0_i32_268 = arith.constant 0 : i32
    %757 = vector.broadcast %c0_i32_268 : i32 to vector<1x128xi32>
    %758 = arith.cmpi sge, %751, %757 : vector<1x128xi32>
    %759 = arith.andi %756, %758 : vector<1x128xi1>
    %c16_i32_269 = arith.constant 16 : i32
    %760 = vector.broadcast %c16_i32_269 : i32 to vector<1x128xi32>
    %761 = arith.cmpi slt, %751, %760 : vector<1x128xi32>
    %762 = arith.andi %759, %761 : vector<1x128xi1>
    %c16_i32_270 = arith.constant 16 : i32
    %763 = vector.broadcast %c16_i32_270 : i32 to vector<1x128xi32>
    %764 = arith.muli %749, %763 : vector<1x128xi32>
    %765 = arith.addi %764, %751 : vector<1x128xi32>
    %c-1_i32_271 = arith.constant -1 : i32
    %766 = vector.broadcast %c-1_i32_271 : i32 to vector<1x128xi32>
    %767 = arith.select %762, %765, %766 : vector<1x128xi1>, vector<1x128xi32>
    %768 = vector.broadcast %767 : vector<1x128xi32> to vector<256x128xi32>
    %769 = arith.cmpi eq, %77, %768 : vector<256x128xi32>
    %cst_272 = arith.constant 1.000000e+00 : f32
    %cst_273 = arith.constant 0.000000e+00 : f32
    %770 = vector.broadcast %cst_272 : f32 to vector<256x128xf32>
    %771 = vector.broadcast %cst_273 : f32 to vector<256x128xf32>
    %772 = arith.select %769, %770, %771 : vector<256x128xi1>, vector<256x128xf32>
    %cst_274 = arith.constant dense<0.000000e+00> : vector<4x128xf32>
    %773 = tpu.matmul %1, %772, %cst_274 {dimension_numbers = #tpu.dot_dimension_numbers<[1], [0], [0], [1], [0, 0, 1, 1], [], []>} : vector<4x256xf32>, vector<256x128xf32>, vector<4x128xf32> -> vector<4x128xf32>
    %774 = vector.extract_strided_slice %58 {offsets = [5, 0], sizes = [1, 128], strides = [1, 1]} : vector<9x128xf32> to vector<1x128xf32>
    %775 = vector.broadcast %774 : vector<1x128xf32> to vector<4x128xf32>
    %776 = arith.mulf %773, %775 : vector<4x128xf32>
    %777 = arith.addf %747, %776 : vector<4x128xf32>
    %c1_i32_275 = arith.constant 1 : i32
    %778 = vector.broadcast %c1_i32_275 : i32 to vector<1x128xi32>
    %779 = arith.subi %715, %778 : vector<1x128xi32>
    %c1_i32_276 = arith.constant 1 : i32
    %780 = vector.broadcast %c1_i32_276 : i32 to vector<1x128xi32>
    %781 = arith.subi %718, %780 : vector<1x128xi32>
    %c0_i32_277 = arith.constant 0 : i32
    %782 = vector.broadcast %c0_i32_277 : i32 to vector<1x128xi32>
    %783 = arith.cmpi sge, %779, %782 : vector<1x128xi32>
    %c16_i32_278 = arith.constant 16 : i32
    %784 = vector.broadcast %c16_i32_278 : i32 to vector<1x128xi32>
    %785 = arith.cmpi slt, %779, %784 : vector<1x128xi32>
    %786 = arith.andi %783, %785 : vector<1x128xi1>
    %c0_i32_279 = arith.constant 0 : i32
    %787 = vector.broadcast %c0_i32_279 : i32 to vector<1x128xi32>
    %788 = arith.cmpi sge, %781, %787 : vector<1x128xi32>
    %789 = arith.andi %786, %788 : vector<1x128xi1>
    %c16_i32_280 = arith.constant 16 : i32
    %790 = vector.broadcast %c16_i32_280 : i32 to vector<1x128xi32>
    %791 = arith.cmpi slt, %781, %790 : vector<1x128xi32>
    %792 = arith.andi %789, %791 : vector<1x128xi1>
    %c16_i32_281 = arith.constant 16 : i32
    %793 = vector.broadcast %c16_i32_281 : i32 to vector<1x128xi32>
    %794 = arith.muli %779, %793 : vector<1x128xi32>
    %795 = arith.addi %794, %781 : vector<1x128xi32>
    %c-1_i32_282 = arith.constant -1 : i32
    %796 = vector.broadcast %c-1_i32_282 : i32 to vector<1x128xi32>
    %797 = arith.select %792, %795, %796 : vector<1x128xi1>, vector<1x128xi32>
    %798 = vector.broadcast %797 : vector<1x128xi32> to vector<256x128xi32>
    %799 = arith.cmpi eq, %77, %798 : vector<256x128xi32>
    %cst_283 = arith.constant 1.000000e+00 : f32
    %cst_284 = arith.constant 0.000000e+00 : f32
    %800 = vector.broadcast %cst_283 : f32 to vector<256x128xf32>
    %801 = vector.broadcast %cst_284 : f32 to vector<256x128xf32>
    %802 = arith.select %799, %800, %801 : vector<256x128xi1>, vector<256x128xf32>
    %cst_285 = arith.constant dense<0.000000e+00> : vector<4x128xf32>
    %803 = tpu.matmul %1, %802, %cst_285 {dimension_numbers = #tpu.dot_dimension_numbers<[1], [0], [0], [1], [0, 0, 1, 1], [], []>} : vector<4x256xf32>, vector<256x128xf32>, vector<4x128xf32> -> vector<4x128xf32>
    %804 = vector.extract_strided_slice %65 {offsets = [5, 0], sizes = [1, 128], strides = [1, 1]} : vector<9x128xf32> to vector<1x128xf32>
    %805 = vector.broadcast %804 : vector<1x128xf32> to vector<4x128xf32>
    %806 = arith.mulf %803, %805 : vector<4x128xf32>
    %807 = arith.addf %777, %806 : vector<4x128xf32>
    %c1_i32_286 = arith.constant 1 : i32
    %808 = vector.broadcast %c1_i32_286 : i32 to vector<1x128xi32>
    %809 = arith.subi %717, %808 : vector<1x128xi32>
    %c1_i32_287 = arith.constant 1 : i32
    %810 = vector.broadcast %c1_i32_287 : i32 to vector<1x128xi32>
    %811 = arith.subi %716, %810 : vector<1x128xi32>
    %c0_i32_288 = arith.constant 0 : i32
    %812 = vector.broadcast %c0_i32_288 : i32 to vector<1x128xi32>
    %813 = arith.cmpi sge, %809, %812 : vector<1x128xi32>
    %c16_i32_289 = arith.constant 16 : i32
    %814 = vector.broadcast %c16_i32_289 : i32 to vector<1x128xi32>
    %815 = arith.cmpi slt, %809, %814 : vector<1x128xi32>
    %816 = arith.andi %813, %815 : vector<1x128xi1>
    %c0_i32_290 = arith.constant 0 : i32
    %817 = vector.broadcast %c0_i32_290 : i32 to vector<1x128xi32>
    %818 = arith.cmpi sge, %811, %817 : vector<1x128xi32>
    %819 = arith.andi %816, %818 : vector<1x128xi1>
    %c16_i32_291 = arith.constant 16 : i32
    %820 = vector.broadcast %c16_i32_291 : i32 to vector<1x128xi32>
    %821 = arith.cmpi slt, %811, %820 : vector<1x128xi32>
    %822 = arith.andi %819, %821 : vector<1x128xi1>
    %c16_i32_292 = arith.constant 16 : i32
    %823 = vector.broadcast %c16_i32_292 : i32 to vector<1x128xi32>
    %824 = arith.muli %809, %823 : vector<1x128xi32>
    %825 = arith.addi %824, %811 : vector<1x128xi32>
    %c-1_i32_293 = arith.constant -1 : i32
    %826 = vector.broadcast %c-1_i32_293 : i32 to vector<1x128xi32>
    %827 = arith.select %822, %825, %826 : vector<1x128xi1>, vector<1x128xi32>
    %828 = vector.broadcast %827 : vector<1x128xi32> to vector<256x128xi32>
    %829 = arith.cmpi eq, %77, %828 : vector<256x128xi32>
    %cst_294 = arith.constant 1.000000e+00 : f32
    %cst_295 = arith.constant 0.000000e+00 : f32
    %830 = vector.broadcast %cst_294 : f32 to vector<256x128xf32>
    %831 = vector.broadcast %cst_295 : f32 to vector<256x128xf32>
    %832 = arith.select %829, %830, %831 : vector<256x128xi1>, vector<256x128xf32>
    %cst_296 = arith.constant dense<0.000000e+00> : vector<4x128xf32>
    %833 = tpu.matmul %1, %832, %cst_296 {dimension_numbers = #tpu.dot_dimension_numbers<[1], [0], [0], [1], [0, 0, 1, 1], [], []>} : vector<4x256xf32>, vector<256x128xf32>, vector<4x128xf32> -> vector<4x128xf32>
    %834 = vector.extract_strided_slice %72 {offsets = [5, 0], sizes = [1, 128], strides = [1, 1]} : vector<9x128xf32> to vector<1x128xf32>
    %835 = vector.broadcast %834 : vector<1x128xf32> to vector<4x128xf32>
    %836 = arith.mulf %833, %835 : vector<4x128xf32>
    %837 = arith.addf %807, %836 : vector<4x128xf32>
    %838 = vector.extract_strided_slice %78 {offsets = [5, 0, 0], sizes = [1, 4, 4], strides = [1, 1, 1]} : vector<9x4x4xf32> to vector<1x4x4xf32>
    %839 = vector.shape_cast %838 : vector<1x4x4xf32> to vector<4x4xf32>
    %cst_297 = arith.constant dense<0.000000e+00> : vector<4x128xf32>
    %840 = tpu.matmul %839, %837, %cst_297 {dimension_numbers = #tpu.dot_dimension_numbers<[1], [0], [0], [1], [0, 0, 1, 1], [], []>} : vector<4x4xf32>, vector<4x128xf32>, vector<4x128xf32> -> vector<4x128xf32>
    %841 = arith.addf %714, %840 : vector<4x128xf32>
    %842 = vector.extract_strided_slice %73 {offsets = [6, 0], sizes = [1, 128], strides = [1, 1]} : vector<9x128xi32> to vector<1x128xi32>
    %843 = vector.extract_strided_slice %74 {offsets = [6, 0], sizes = [1, 128], strides = [1, 1]} : vector<9x128xi32> to vector<1x128xi32>
    %844 = vector.extract_strided_slice %75 {offsets = [6, 0], sizes = [1, 128], strides = [1, 1]} : vector<9x128xi32> to vector<1x128xi32>
    %845 = vector.extract_strided_slice %76 {offsets = [6, 0], sizes = [1, 128], strides = [1, 1]} : vector<9x128xi32> to vector<1x128xi32>
    %c1_i32_298 = arith.constant 1 : i32
    %846 = vector.broadcast %c1_i32_298 : i32 to vector<1x128xi32>
    %847 = arith.subi %842, %846 : vector<1x128xi32>
    %c1_i32_299 = arith.constant 1 : i32
    %848 = vector.broadcast %c1_i32_299 : i32 to vector<1x128xi32>
    %849 = arith.subi %843, %848 : vector<1x128xi32>
    %c0_i32_300 = arith.constant 0 : i32
    %850 = vector.broadcast %c0_i32_300 : i32 to vector<1x128xi32>
    %851 = arith.cmpi sge, %847, %850 : vector<1x128xi32>
    %c16_i32_301 = arith.constant 16 : i32
    %852 = vector.broadcast %c16_i32_301 : i32 to vector<1x128xi32>
    %853 = arith.cmpi slt, %847, %852 : vector<1x128xi32>
    %854 = arith.andi %851, %853 : vector<1x128xi1>
    %c0_i32_302 = arith.constant 0 : i32
    %855 = vector.broadcast %c0_i32_302 : i32 to vector<1x128xi32>
    %856 = arith.cmpi sge, %849, %855 : vector<1x128xi32>
    %857 = arith.andi %854, %856 : vector<1x128xi1>
    %c16_i32_303 = arith.constant 16 : i32
    %858 = vector.broadcast %c16_i32_303 : i32 to vector<1x128xi32>
    %859 = arith.cmpi slt, %849, %858 : vector<1x128xi32>
    %860 = arith.andi %857, %859 : vector<1x128xi1>
    %c16_i32_304 = arith.constant 16 : i32
    %861 = vector.broadcast %c16_i32_304 : i32 to vector<1x128xi32>
    %862 = arith.muli %847, %861 : vector<1x128xi32>
    %863 = arith.addi %862, %849 : vector<1x128xi32>
    %c-1_i32_305 = arith.constant -1 : i32
    %864 = vector.broadcast %c-1_i32_305 : i32 to vector<1x128xi32>
    %865 = arith.select %860, %863, %864 : vector<1x128xi1>, vector<1x128xi32>
    %866 = vector.broadcast %865 : vector<1x128xi32> to vector<256x128xi32>
    %867 = arith.cmpi eq, %77, %866 : vector<256x128xi32>
    %cst_306 = arith.constant 1.000000e+00 : f32
    %cst_307 = arith.constant 0.000000e+00 : f32
    %868 = vector.broadcast %cst_306 : f32 to vector<256x128xf32>
    %869 = vector.broadcast %cst_307 : f32 to vector<256x128xf32>
    %870 = arith.select %867, %868, %869 : vector<256x128xi1>, vector<256x128xf32>
    %cst_308 = arith.constant dense<0.000000e+00> : vector<4x128xf32>
    %871 = tpu.matmul %1, %870, %cst_308 {dimension_numbers = #tpu.dot_dimension_numbers<[1], [0], [0], [1], [0, 0, 1, 1], [], []>} : vector<4x256xf32>, vector<256x128xf32>, vector<4x128xf32> -> vector<4x128xf32>
    %872 = vector.extract_strided_slice %51 {offsets = [6, 0], sizes = [1, 128], strides = [1, 1]} : vector<9x128xf32> to vector<1x128xf32>
    %873 = vector.broadcast %872 : vector<1x128xf32> to vector<4x128xf32>
    %874 = arith.mulf %871, %873 : vector<4x128xf32>
    %c1_i32_309 = arith.constant 1 : i32
    %875 = vector.broadcast %c1_i32_309 : i32 to vector<1x128xi32>
    %876 = arith.subi %844, %875 : vector<1x128xi32>
    %c1_i32_310 = arith.constant 1 : i32
    %877 = vector.broadcast %c1_i32_310 : i32 to vector<1x128xi32>
    %878 = arith.subi %845, %877 : vector<1x128xi32>
    %c0_i32_311 = arith.constant 0 : i32
    %879 = vector.broadcast %c0_i32_311 : i32 to vector<1x128xi32>
    %880 = arith.cmpi sge, %876, %879 : vector<1x128xi32>
    %c16_i32_312 = arith.constant 16 : i32
    %881 = vector.broadcast %c16_i32_312 : i32 to vector<1x128xi32>
    %882 = arith.cmpi slt, %876, %881 : vector<1x128xi32>
    %883 = arith.andi %880, %882 : vector<1x128xi1>
    %c0_i32_313 = arith.constant 0 : i32
    %884 = vector.broadcast %c0_i32_313 : i32 to vector<1x128xi32>
    %885 = arith.cmpi sge, %878, %884 : vector<1x128xi32>
    %886 = arith.andi %883, %885 : vector<1x128xi1>
    %c16_i32_314 = arith.constant 16 : i32
    %887 = vector.broadcast %c16_i32_314 : i32 to vector<1x128xi32>
    %888 = arith.cmpi slt, %878, %887 : vector<1x128xi32>
    %889 = arith.andi %886, %888 : vector<1x128xi1>
    %c16_i32_315 = arith.constant 16 : i32
    %890 = vector.broadcast %c16_i32_315 : i32 to vector<1x128xi32>
    %891 = arith.muli %876, %890 : vector<1x128xi32>
    %892 = arith.addi %891, %878 : vector<1x128xi32>
    %c-1_i32_316 = arith.constant -1 : i32
    %893 = vector.broadcast %c-1_i32_316 : i32 to vector<1x128xi32>
    %894 = arith.select %889, %892, %893 : vector<1x128xi1>, vector<1x128xi32>
    %895 = vector.broadcast %894 : vector<1x128xi32> to vector<256x128xi32>
    %896 = arith.cmpi eq, %77, %895 : vector<256x128xi32>
    %cst_317 = arith.constant 1.000000e+00 : f32
    %cst_318 = arith.constant 0.000000e+00 : f32
    %897 = vector.broadcast %cst_317 : f32 to vector<256x128xf32>
    %898 = vector.broadcast %cst_318 : f32 to vector<256x128xf32>
    %899 = arith.select %896, %897, %898 : vector<256x128xi1>, vector<256x128xf32>
    %cst_319 = arith.constant dense<0.000000e+00> : vector<4x128xf32>
    %900 = tpu.matmul %1, %899, %cst_319 {dimension_numbers = #tpu.dot_dimension_numbers<[1], [0], [0], [1], [0, 0, 1, 1], [], []>} : vector<4x256xf32>, vector<256x128xf32>, vector<4x128xf32> -> vector<4x128xf32>
    %901 = vector.extract_strided_slice %58 {offsets = [6, 0], sizes = [1, 128], strides = [1, 1]} : vector<9x128xf32> to vector<1x128xf32>
    %902 = vector.broadcast %901 : vector<1x128xf32> to vector<4x128xf32>
    %903 = arith.mulf %900, %902 : vector<4x128xf32>
    %904 = arith.addf %874, %903 : vector<4x128xf32>
    %c1_i32_320 = arith.constant 1 : i32
    %905 = vector.broadcast %c1_i32_320 : i32 to vector<1x128xi32>
    %906 = arith.subi %842, %905 : vector<1x128xi32>
    %c1_i32_321 = arith.constant 1 : i32
    %907 = vector.broadcast %c1_i32_321 : i32 to vector<1x128xi32>
    %908 = arith.subi %845, %907 : vector<1x128xi32>
    %c0_i32_322 = arith.constant 0 : i32
    %909 = vector.broadcast %c0_i32_322 : i32 to vector<1x128xi32>
    %910 = arith.cmpi sge, %906, %909 : vector<1x128xi32>
    %c16_i32_323 = arith.constant 16 : i32
    %911 = vector.broadcast %c16_i32_323 : i32 to vector<1x128xi32>
    %912 = arith.cmpi slt, %906, %911 : vector<1x128xi32>
    %913 = arith.andi %910, %912 : vector<1x128xi1>
    %c0_i32_324 = arith.constant 0 : i32
    %914 = vector.broadcast %c0_i32_324 : i32 to vector<1x128xi32>
    %915 = arith.cmpi sge, %908, %914 : vector<1x128xi32>
    %916 = arith.andi %913, %915 : vector<1x128xi1>
    %c16_i32_325 = arith.constant 16 : i32
    %917 = vector.broadcast %c16_i32_325 : i32 to vector<1x128xi32>
    %918 = arith.cmpi slt, %908, %917 : vector<1x128xi32>
    %919 = arith.andi %916, %918 : vector<1x128xi1>
    %c16_i32_326 = arith.constant 16 : i32
    %920 = vector.broadcast %c16_i32_326 : i32 to vector<1x128xi32>
    %921 = arith.muli %906, %920 : vector<1x128xi32>
    %922 = arith.addi %921, %908 : vector<1x128xi32>
    %c-1_i32_327 = arith.constant -1 : i32
    %923 = vector.broadcast %c-1_i32_327 : i32 to vector<1x128xi32>
    %924 = arith.select %919, %922, %923 : vector<1x128xi1>, vector<1x128xi32>
    %925 = vector.broadcast %924 : vector<1x128xi32> to vector<256x128xi32>
    %926 = arith.cmpi eq, %77, %925 : vector<256x128xi32>
    %cst_328 = arith.constant 1.000000e+00 : f32
    %cst_329 = arith.constant 0.000000e+00 : f32
    %927 = vector.broadcast %cst_328 : f32 to vector<256x128xf32>
    %928 = vector.broadcast %cst_329 : f32 to vector<256x128xf32>
    %929 = arith.select %926, %927, %928 : vector<256x128xi1>, vector<256x128xf32>
    %cst_330 = arith.constant dense<0.000000e+00> : vector<4x128xf32>
    %930 = tpu.matmul %1, %929, %cst_330 {dimension_numbers = #tpu.dot_dimension_numbers<[1], [0], [0], [1], [0, 0, 1, 1], [], []>} : vector<4x256xf32>, vector<256x128xf32>, vector<4x128xf32> -> vector<4x128xf32>
    %931 = vector.extract_strided_slice %65 {offsets = [6, 0], sizes = [1, 128], strides = [1, 1]} : vector<9x128xf32> to vector<1x128xf32>
    %932 = vector.broadcast %931 : vector<1x128xf32> to vector<4x128xf32>
    %933 = arith.mulf %930, %932 : vector<4x128xf32>
    %934 = arith.addf %904, %933 : vector<4x128xf32>
    %c1_i32_331 = arith.constant 1 : i32
    %935 = vector.broadcast %c1_i32_331 : i32 to vector<1x128xi32>
    %936 = arith.subi %844, %935 : vector<1x128xi32>
    %c1_i32_332 = arith.constant 1 : i32
    %937 = vector.broadcast %c1_i32_332 : i32 to vector<1x128xi32>
    %938 = arith.subi %843, %937 : vector<1x128xi32>
    %c0_i32_333 = arith.constant 0 : i32
    %939 = vector.broadcast %c0_i32_333 : i32 to vector<1x128xi32>
    %940 = arith.cmpi sge, %936, %939 : vector<1x128xi32>
    %c16_i32_334 = arith.constant 16 : i32
    %941 = vector.broadcast %c16_i32_334 : i32 to vector<1x128xi32>
    %942 = arith.cmpi slt, %936, %941 : vector<1x128xi32>
    %943 = arith.andi %940, %942 : vector<1x128xi1>
    %c0_i32_335 = arith.constant 0 : i32
    %944 = vector.broadcast %c0_i32_335 : i32 to vector<1x128xi32>
    %945 = arith.cmpi sge, %938, %944 : vector<1x128xi32>
    %946 = arith.andi %943, %945 : vector<1x128xi1>
    %c16_i32_336 = arith.constant 16 : i32
    %947 = vector.broadcast %c16_i32_336 : i32 to vector<1x128xi32>
    %948 = arith.cmpi slt, %938, %947 : vector<1x128xi32>
    %949 = arith.andi %946, %948 : vector<1x128xi1>
    %c16_i32_337 = arith.constant 16 : i32
    %950 = vector.broadcast %c16_i32_337 : i32 to vector<1x128xi32>
    %951 = arith.muli %936, %950 : vector<1x128xi32>
    %952 = arith.addi %951, %938 : vector<1x128xi32>
    %c-1_i32_338 = arith.constant -1 : i32
    %953 = vector.broadcast %c-1_i32_338 : i32 to vector<1x128xi32>
    %954 = arith.select %949, %952, %953 : vector<1x128xi1>, vector<1x128xi32>
    %955 = vector.broadcast %954 : vector<1x128xi32> to vector<256x128xi32>
    %956 = arith.cmpi eq, %77, %955 : vector<256x128xi32>
    %cst_339 = arith.constant 1.000000e+00 : f32
    %cst_340 = arith.constant 0.000000e+00 : f32
    %957 = vector.broadcast %cst_339 : f32 to vector<256x128xf32>
    %958 = vector.broadcast %cst_340 : f32 to vector<256x128xf32>
    %959 = arith.select %956, %957, %958 : vector<256x128xi1>, vector<256x128xf32>
    %cst_341 = arith.constant dense<0.000000e+00> : vector<4x128xf32>
    %960 = tpu.matmul %1, %959, %cst_341 {dimension_numbers = #tpu.dot_dimension_numbers<[1], [0], [0], [1], [0, 0, 1, 1], [], []>} : vector<4x256xf32>, vector<256x128xf32>, vector<4x128xf32> -> vector<4x128xf32>
    %961 = vector.extract_strided_slice %72 {offsets = [6, 0], sizes = [1, 128], strides = [1, 1]} : vector<9x128xf32> to vector<1x128xf32>
    %962 = vector.broadcast %961 : vector<1x128xf32> to vector<4x128xf32>
    %963 = arith.mulf %960, %962 : vector<4x128xf32>
    %964 = arith.addf %934, %963 : vector<4x128xf32>
    %965 = vector.extract_strided_slice %78 {offsets = [6, 0, 0], sizes = [1, 4, 4], strides = [1, 1, 1]} : vector<9x4x4xf32> to vector<1x4x4xf32>
    %966 = vector.shape_cast %965 : vector<1x4x4xf32> to vector<4x4xf32>
    %cst_342 = arith.constant dense<0.000000e+00> : vector<4x128xf32>
    %967 = tpu.matmul %966, %964, %cst_342 {dimension_numbers = #tpu.dot_dimension_numbers<[1], [0], [0], [1], [0, 0, 1, 1], [], []>} : vector<4x4xf32>, vector<4x128xf32>, vector<4x128xf32> -> vector<4x128xf32>
    %968 = arith.addf %841, %967 : vector<4x128xf32>
    %969 = vector.extract_strided_slice %73 {offsets = [7, 0], sizes = [1, 128], strides = [1, 1]} : vector<9x128xi32> to vector<1x128xi32>
    %970 = vector.extract_strided_slice %74 {offsets = [7, 0], sizes = [1, 128], strides = [1, 1]} : vector<9x128xi32> to vector<1x128xi32>
    %971 = vector.extract_strided_slice %75 {offsets = [7, 0], sizes = [1, 128], strides = [1, 1]} : vector<9x128xi32> to vector<1x128xi32>
    %972 = vector.extract_strided_slice %76 {offsets = [7, 0], sizes = [1, 128], strides = [1, 1]} : vector<9x128xi32> to vector<1x128xi32>
    %c1_i32_343 = arith.constant 1 : i32
    %973 = vector.broadcast %c1_i32_343 : i32 to vector<1x128xi32>
    %974 = arith.subi %969, %973 : vector<1x128xi32>
    %c1_i32_344 = arith.constant 1 : i32
    %975 = vector.broadcast %c1_i32_344 : i32 to vector<1x128xi32>
    %976 = arith.subi %970, %975 : vector<1x128xi32>
    %c0_i32_345 = arith.constant 0 : i32
    %977 = vector.broadcast %c0_i32_345 : i32 to vector<1x128xi32>
    %978 = arith.cmpi sge, %974, %977 : vector<1x128xi32>
    %c16_i32_346 = arith.constant 16 : i32
    %979 = vector.broadcast %c16_i32_346 : i32 to vector<1x128xi32>
    %980 = arith.cmpi slt, %974, %979 : vector<1x128xi32>
    %981 = arith.andi %978, %980 : vector<1x128xi1>
    %c0_i32_347 = arith.constant 0 : i32
    %982 = vector.broadcast %c0_i32_347 : i32 to vector<1x128xi32>
    %983 = arith.cmpi sge, %976, %982 : vector<1x128xi32>
    %984 = arith.andi %981, %983 : vector<1x128xi1>
    %c16_i32_348 = arith.constant 16 : i32
    %985 = vector.broadcast %c16_i32_348 : i32 to vector<1x128xi32>
    %986 = arith.cmpi slt, %976, %985 : vector<1x128xi32>
    %987 = arith.andi %984, %986 : vector<1x128xi1>
    %c16_i32_349 = arith.constant 16 : i32
    %988 = vector.broadcast %c16_i32_349 : i32 to vector<1x128xi32>
    %989 = arith.muli %974, %988 : vector<1x128xi32>
    %990 = arith.addi %989, %976 : vector<1x128xi32>
    %c-1_i32_350 = arith.constant -1 : i32
    %991 = vector.broadcast %c-1_i32_350 : i32 to vector<1x128xi32>
    %992 = arith.select %987, %990, %991 : vector<1x128xi1>, vector<1x128xi32>
    %993 = vector.broadcast %992 : vector<1x128xi32> to vector<256x128xi32>
    %994 = arith.cmpi eq, %77, %993 : vector<256x128xi32>
    %cst_351 = arith.constant 1.000000e+00 : f32
    %cst_352 = arith.constant 0.000000e+00 : f32
    %995 = vector.broadcast %cst_351 : f32 to vector<256x128xf32>
    %996 = vector.broadcast %cst_352 : f32 to vector<256x128xf32>
    %997 = arith.select %994, %995, %996 : vector<256x128xi1>, vector<256x128xf32>
    %cst_353 = arith.constant dense<0.000000e+00> : vector<4x128xf32>
    %998 = tpu.matmul %1, %997, %cst_353 {dimension_numbers = #tpu.dot_dimension_numbers<[1], [0], [0], [1], [0, 0, 1, 1], [], []>} : vector<4x256xf32>, vector<256x128xf32>, vector<4x128xf32> -> vector<4x128xf32>
    %999 = vector.extract_strided_slice %51 {offsets = [7, 0], sizes = [1, 128], strides = [1, 1]} : vector<9x128xf32> to vector<1x128xf32>
    %1000 = vector.broadcast %999 : vector<1x128xf32> to vector<4x128xf32>
    %1001 = arith.mulf %998, %1000 : vector<4x128xf32>
    %c1_i32_354 = arith.constant 1 : i32
    %1002 = vector.broadcast %c1_i32_354 : i32 to vector<1x128xi32>
    %1003 = arith.subi %971, %1002 : vector<1x128xi32>
    %c1_i32_355 = arith.constant 1 : i32
    %1004 = vector.broadcast %c1_i32_355 : i32 to vector<1x128xi32>
    %1005 = arith.subi %972, %1004 : vector<1x128xi32>
    %c0_i32_356 = arith.constant 0 : i32
    %1006 = vector.broadcast %c0_i32_356 : i32 to vector<1x128xi32>
    %1007 = arith.cmpi sge, %1003, %1006 : vector<1x128xi32>
    %c16_i32_357 = arith.constant 16 : i32
    %1008 = vector.broadcast %c16_i32_357 : i32 to vector<1x128xi32>
    %1009 = arith.cmpi slt, %1003, %1008 : vector<1x128xi32>
    %1010 = arith.andi %1007, %1009 : vector<1x128xi1>
    %c0_i32_358 = arith.constant 0 : i32
    %1011 = vector.broadcast %c0_i32_358 : i32 to vector<1x128xi32>
    %1012 = arith.cmpi sge, %1005, %1011 : vector<1x128xi32>
    %1013 = arith.andi %1010, %1012 : vector<1x128xi1>
    %c16_i32_359 = arith.constant 16 : i32
    %1014 = vector.broadcast %c16_i32_359 : i32 to vector<1x128xi32>
    %1015 = arith.cmpi slt, %1005, %1014 : vector<1x128xi32>
    %1016 = arith.andi %1013, %1015 : vector<1x128xi1>
    %c16_i32_360 = arith.constant 16 : i32
    %1017 = vector.broadcast %c16_i32_360 : i32 to vector<1x128xi32>
    %1018 = arith.muli %1003, %1017 : vector<1x128xi32>
    %1019 = arith.addi %1018, %1005 : vector<1x128xi32>
    %c-1_i32_361 = arith.constant -1 : i32
    %1020 = vector.broadcast %c-1_i32_361 : i32 to vector<1x128xi32>
    %1021 = arith.select %1016, %1019, %1020 : vector<1x128xi1>, vector<1x128xi32>
    %1022 = vector.broadcast %1021 : vector<1x128xi32> to vector<256x128xi32>
    %1023 = arith.cmpi eq, %77, %1022 : vector<256x128xi32>
    %cst_362 = arith.constant 1.000000e+00 : f32
    %cst_363 = arith.constant 0.000000e+00 : f32
    %1024 = vector.broadcast %cst_362 : f32 to vector<256x128xf32>
    %1025 = vector.broadcast %cst_363 : f32 to vector<256x128xf32>
    %1026 = arith.select %1023, %1024, %1025 : vector<256x128xi1>, vector<256x128xf32>
    %cst_364 = arith.constant dense<0.000000e+00> : vector<4x128xf32>
    %1027 = tpu.matmul %1, %1026, %cst_364 {dimension_numbers = #tpu.dot_dimension_numbers<[1], [0], [0], [1], [0, 0, 1, 1], [], []>} : vector<4x256xf32>, vector<256x128xf32>, vector<4x128xf32> -> vector<4x128xf32>
    %1028 = vector.extract_strided_slice %58 {offsets = [7, 0], sizes = [1, 128], strides = [1, 1]} : vector<9x128xf32> to vector<1x128xf32>
    %1029 = vector.broadcast %1028 : vector<1x128xf32> to vector<4x128xf32>
    %1030 = arith.mulf %1027, %1029 : vector<4x128xf32>
    %1031 = arith.addf %1001, %1030 : vector<4x128xf32>
    %c1_i32_365 = arith.constant 1 : i32
    %1032 = vector.broadcast %c1_i32_365 : i32 to vector<1x128xi32>
    %1033 = arith.subi %969, %1032 : vector<1x128xi32>
    %c1_i32_366 = arith.constant 1 : i32
    %1034 = vector.broadcast %c1_i32_366 : i32 to vector<1x128xi32>
    %1035 = arith.subi %972, %1034 : vector<1x128xi32>
    %c0_i32_367 = arith.constant 0 : i32
    %1036 = vector.broadcast %c0_i32_367 : i32 to vector<1x128xi32>
    %1037 = arith.cmpi sge, %1033, %1036 : vector<1x128xi32>
    %c16_i32_368 = arith.constant 16 : i32
    %1038 = vector.broadcast %c16_i32_368 : i32 to vector<1x128xi32>
    %1039 = arith.cmpi slt, %1033, %1038 : vector<1x128xi32>
    %1040 = arith.andi %1037, %1039 : vector<1x128xi1>
    %c0_i32_369 = arith.constant 0 : i32
    %1041 = vector.broadcast %c0_i32_369 : i32 to vector<1x128xi32>
    %1042 = arith.cmpi sge, %1035, %1041 : vector<1x128xi32>
    %1043 = arith.andi %1040, %1042 : vector<1x128xi1>
    %c16_i32_370 = arith.constant 16 : i32
    %1044 = vector.broadcast %c16_i32_370 : i32 to vector<1x128xi32>
    %1045 = arith.cmpi slt, %1035, %1044 : vector<1x128xi32>
    %1046 = arith.andi %1043, %1045 : vector<1x128xi1>
    %c16_i32_371 = arith.constant 16 : i32
    %1047 = vector.broadcast %c16_i32_371 : i32 to vector<1x128xi32>
    %1048 = arith.muli %1033, %1047 : vector<1x128xi32>
    %1049 = arith.addi %1048, %1035 : vector<1x128xi32>
    %c-1_i32_372 = arith.constant -1 : i32
    %1050 = vector.broadcast %c-1_i32_372 : i32 to vector<1x128xi32>
    %1051 = arith.select %1046, %1049, %1050 : vector<1x128xi1>, vector<1x128xi32>
    %1052 = vector.broadcast %1051 : vector<1x128xi32> to vector<256x128xi32>
    %1053 = arith.cmpi eq, %77, %1052 : vector<256x128xi32>
    %cst_373 = arith.constant 1.000000e+00 : f32
    %cst_374 = arith.constant 0.000000e+00 : f32
    %1054 = vector.broadcast %cst_373 : f32 to vector<256x128xf32>
    %1055 = vector.broadcast %cst_374 : f32 to vector<256x128xf32>
    %1056 = arith.select %1053, %1054, %1055 : vector<256x128xi1>, vector<256x128xf32>
    %cst_375 = arith.constant dense<0.000000e+00> : vector<4x128xf32>
    %1057 = tpu.matmul %1, %1056, %cst_375 {dimension_numbers = #tpu.dot_dimension_numbers<[1], [0], [0], [1], [0, 0, 1, 1], [], []>} : vector<4x256xf32>, vector<256x128xf32>, vector<4x128xf32> -> vector<4x128xf32>
    %1058 = vector.extract_strided_slice %65 {offsets = [7, 0], sizes = [1, 128], strides = [1, 1]} : vector<9x128xf32> to vector<1x128xf32>
    %1059 = vector.broadcast %1058 : vector<1x128xf32> to vector<4x128xf32>
    %1060 = arith.mulf %1057, %1059 : vector<4x128xf32>
    %1061 = arith.addf %1031, %1060 : vector<4x128xf32>
    %c1_i32_376 = arith.constant 1 : i32
    %1062 = vector.broadcast %c1_i32_376 : i32 to vector<1x128xi32>
    %1063 = arith.subi %971, %1062 : vector<1x128xi32>
    %c1_i32_377 = arith.constant 1 : i32
    %1064 = vector.broadcast %c1_i32_377 : i32 to vector<1x128xi32>
    %1065 = arith.subi %970, %1064 : vector<1x128xi32>
    %c0_i32_378 = arith.constant 0 : i32
    %1066 = vector.broadcast %c0_i32_378 : i32 to vector<1x128xi32>
    %1067 = arith.cmpi sge, %1063, %1066 : vector<1x128xi32>
    %c16_i32_379 = arith.constant 16 : i32
    %1068 = vector.broadcast %c16_i32_379 : i32 to vector<1x128xi32>
    %1069 = arith.cmpi slt, %1063, %1068 : vector<1x128xi32>
    %1070 = arith.andi %1067, %1069 : vector<1x128xi1>
    %c0_i32_380 = arith.constant 0 : i32
    %1071 = vector.broadcast %c0_i32_380 : i32 to vector<1x128xi32>
    %1072 = arith.cmpi sge, %1065, %1071 : vector<1x128xi32>
    %1073 = arith.andi %1070, %1072 : vector<1x128xi1>
    %c16_i32_381 = arith.constant 16 : i32
    %1074 = vector.broadcast %c16_i32_381 : i32 to vector<1x128xi32>
    %1075 = arith.cmpi slt, %1065, %1074 : vector<1x128xi32>
    %1076 = arith.andi %1073, %1075 : vector<1x128xi1>
    %c16_i32_382 = arith.constant 16 : i32
    %1077 = vector.broadcast %c16_i32_382 : i32 to vector<1x128xi32>
    %1078 = arith.muli %1063, %1077 : vector<1x128xi32>
    %1079 = arith.addi %1078, %1065 : vector<1x128xi32>
    %c-1_i32_383 = arith.constant -1 : i32
    %1080 = vector.broadcast %c-1_i32_383 : i32 to vector<1x128xi32>
    %1081 = arith.select %1076, %1079, %1080 : vector<1x128xi1>, vector<1x128xi32>
    %1082 = vector.broadcast %1081 : vector<1x128xi32> to vector<256x128xi32>
    %1083 = arith.cmpi eq, %77, %1082 : vector<256x128xi32>
    %cst_384 = arith.constant 1.000000e+00 : f32
    %cst_385 = arith.constant 0.000000e+00 : f32
    %1084 = vector.broadcast %cst_384 : f32 to vector<256x128xf32>
    %1085 = vector.broadcast %cst_385 : f32 to vector<256x128xf32>
    %1086 = arith.select %1083, %1084, %1085 : vector<256x128xi1>, vector<256x128xf32>
    %cst_386 = arith.constant dense<0.000000e+00> : vector<4x128xf32>
    %1087 = tpu.matmul %1, %1086, %cst_386 {dimension_numbers = #tpu.dot_dimension_numbers<[1], [0], [0], [1], [0, 0, 1, 1], [], []>} : vector<4x256xf32>, vector<256x128xf32>, vector<4x128xf32> -> vector<4x128xf32>
    %1088 = vector.extract_strided_slice %72 {offsets = [7, 0], sizes = [1, 128], strides = [1, 1]} : vector<9x128xf32> to vector<1x128xf32>
    %1089 = vector.broadcast %1088 : vector<1x128xf32> to vector<4x128xf32>
    %1090 = arith.mulf %1087, %1089 : vector<4x128xf32>
    %1091 = arith.addf %1061, %1090 : vector<4x128xf32>
    %1092 = vector.extract_strided_slice %78 {offsets = [7, 0, 0], sizes = [1, 4, 4], strides = [1, 1, 1]} : vector<9x4x4xf32> to vector<1x4x4xf32>
    %1093 = vector.shape_cast %1092 : vector<1x4x4xf32> to vector<4x4xf32>
    %cst_387 = arith.constant dense<0.000000e+00> : vector<4x128xf32>
    %1094 = tpu.matmul %1093, %1091, %cst_387 {dimension_numbers = #tpu.dot_dimension_numbers<[1], [0], [0], [1], [0, 0, 1, 1], [], []>} : vector<4x4xf32>, vector<4x128xf32>, vector<4x128xf32> -> vector<4x128xf32>
    %1095 = arith.addf %968, %1094 : vector<4x128xf32>
    %1096 = vector.extract_strided_slice %73 {offsets = [8, 0], sizes = [1, 128], strides = [1, 1]} : vector<9x128xi32> to vector<1x128xi32>
    %1097 = vector.extract_strided_slice %74 {offsets = [8, 0], sizes = [1, 128], strides = [1, 1]} : vector<9x128xi32> to vector<1x128xi32>
    %1098 = vector.extract_strided_slice %75 {offsets = [8, 0], sizes = [1, 128], strides = [1, 1]} : vector<9x128xi32> to vector<1x128xi32>
    %1099 = vector.extract_strided_slice %76 {offsets = [8, 0], sizes = [1, 128], strides = [1, 1]} : vector<9x128xi32> to vector<1x128xi32>
    %c1_i32_388 = arith.constant 1 : i32
    %1100 = vector.broadcast %c1_i32_388 : i32 to vector<1x128xi32>
    %1101 = arith.subi %1096, %1100 : vector<1x128xi32>
    %c1_i32_389 = arith.constant 1 : i32
    %1102 = vector.broadcast %c1_i32_389 : i32 to vector<1x128xi32>
    %1103 = arith.subi %1097, %1102 : vector<1x128xi32>
    %c0_i32_390 = arith.constant 0 : i32
    %1104 = vector.broadcast %c0_i32_390 : i32 to vector<1x128xi32>
    %1105 = arith.cmpi sge, %1101, %1104 : vector<1x128xi32>
    %c16_i32_391 = arith.constant 16 : i32
    %1106 = vector.broadcast %c16_i32_391 : i32 to vector<1x128xi32>
    %1107 = arith.cmpi slt, %1101, %1106 : vector<1x128xi32>
    %1108 = arith.andi %1105, %1107 : vector<1x128xi1>
    %c0_i32_392 = arith.constant 0 : i32
    %1109 = vector.broadcast %c0_i32_392 : i32 to vector<1x128xi32>
    %1110 = arith.cmpi sge, %1103, %1109 : vector<1x128xi32>
    %1111 = arith.andi %1108, %1110 : vector<1x128xi1>
    %c16_i32_393 = arith.constant 16 : i32
    %1112 = vector.broadcast %c16_i32_393 : i32 to vector<1x128xi32>
    %1113 = arith.cmpi slt, %1103, %1112 : vector<1x128xi32>
    %1114 = arith.andi %1111, %1113 : vector<1x128xi1>
    %c16_i32_394 = arith.constant 16 : i32
    %1115 = vector.broadcast %c16_i32_394 : i32 to vector<1x128xi32>
    %1116 = arith.muli %1101, %1115 : vector<1x128xi32>
    %1117 = arith.addi %1116, %1103 : vector<1x128xi32>
    %c-1_i32_395 = arith.constant -1 : i32
    %1118 = vector.broadcast %c-1_i32_395 : i32 to vector<1x128xi32>
    %1119 = arith.select %1114, %1117, %1118 : vector<1x128xi1>, vector<1x128xi32>
    %1120 = vector.broadcast %1119 : vector<1x128xi32> to vector<256x128xi32>
    %1121 = arith.cmpi eq, %77, %1120 : vector<256x128xi32>
    %cst_396 = arith.constant 1.000000e+00 : f32
    %cst_397 = arith.constant 0.000000e+00 : f32
    %1122 = vector.broadcast %cst_396 : f32 to vector<256x128xf32>
    %1123 = vector.broadcast %cst_397 : f32 to vector<256x128xf32>
    %1124 = arith.select %1121, %1122, %1123 : vector<256x128xi1>, vector<256x128xf32>
    %cst_398 = arith.constant dense<0.000000e+00> : vector<4x128xf32>
    %1125 = tpu.matmul %1, %1124, %cst_398 {dimension_numbers = #tpu.dot_dimension_numbers<[1], [0], [0], [1], [0, 0, 1, 1], [], []>} : vector<4x256xf32>, vector<256x128xf32>, vector<4x128xf32> -> vector<4x128xf32>
    %1126 = vector.extract_strided_slice %51 {offsets = [8, 0], sizes = [1, 128], strides = [1, 1]} : vector<9x128xf32> to vector<1x128xf32>
    %1127 = vector.broadcast %1126 : vector<1x128xf32> to vector<4x128xf32>
    %1128 = arith.mulf %1125, %1127 : vector<4x128xf32>
    %c1_i32_399 = arith.constant 1 : i32
    %1129 = vector.broadcast %c1_i32_399 : i32 to vector<1x128xi32>
    %1130 = arith.subi %1098, %1129 : vector<1x128xi32>
    %c1_i32_400 = arith.constant 1 : i32
    %1131 = vector.broadcast %c1_i32_400 : i32 to vector<1x128xi32>
    %1132 = arith.subi %1099, %1131 : vector<1x128xi32>
    %c0_i32_401 = arith.constant 0 : i32
    %1133 = vector.broadcast %c0_i32_401 : i32 to vector<1x128xi32>
    %1134 = arith.cmpi sge, %1130, %1133 : vector<1x128xi32>
    %c16_i32_402 = arith.constant 16 : i32
    %1135 = vector.broadcast %c16_i32_402 : i32 to vector<1x128xi32>
    %1136 = arith.cmpi slt, %1130, %1135 : vector<1x128xi32>
    %1137 = arith.andi %1134, %1136 : vector<1x128xi1>
    %c0_i32_403 = arith.constant 0 : i32
    %1138 = vector.broadcast %c0_i32_403 : i32 to vector<1x128xi32>
    %1139 = arith.cmpi sge, %1132, %1138 : vector<1x128xi32>
    %1140 = arith.andi %1137, %1139 : vector<1x128xi1>
    %c16_i32_404 = arith.constant 16 : i32
    %1141 = vector.broadcast %c16_i32_404 : i32 to vector<1x128xi32>
    %1142 = arith.cmpi slt, %1132, %1141 : vector<1x128xi32>
    %1143 = arith.andi %1140, %1142 : vector<1x128xi1>
    %c16_i32_405 = arith.constant 16 : i32
    %1144 = vector.broadcast %c16_i32_405 : i32 to vector<1x128xi32>
    %1145 = arith.muli %1130, %1144 : vector<1x128xi32>
    %1146 = arith.addi %1145, %1132 : vector<1x128xi32>
    %c-1_i32_406 = arith.constant -1 : i32
    %1147 = vector.broadcast %c-1_i32_406 : i32 to vector<1x128xi32>
    %1148 = arith.select %1143, %1146, %1147 : vector<1x128xi1>, vector<1x128xi32>
    %1149 = vector.broadcast %1148 : vector<1x128xi32> to vector<256x128xi32>
    %1150 = arith.cmpi eq, %77, %1149 : vector<256x128xi32>
    %cst_407 = arith.constant 1.000000e+00 : f32
    %cst_408 = arith.constant 0.000000e+00 : f32
    %1151 = vector.broadcast %cst_407 : f32 to vector<256x128xf32>
    %1152 = vector.broadcast %cst_408 : f32 to vector<256x128xf32>
    %1153 = arith.select %1150, %1151, %1152 : vector<256x128xi1>, vector<256x128xf32>
    %cst_409 = arith.constant dense<0.000000e+00> : vector<4x128xf32>
    %1154 = tpu.matmul %1, %1153, %cst_409 {dimension_numbers = #tpu.dot_dimension_numbers<[1], [0], [0], [1], [0, 0, 1, 1], [], []>} : vector<4x256xf32>, vector<256x128xf32>, vector<4x128xf32> -> vector<4x128xf32>
    %1155 = vector.extract_strided_slice %58 {offsets = [8, 0], sizes = [1, 128], strides = [1, 1]} : vector<9x128xf32> to vector<1x128xf32>
    %1156 = vector.broadcast %1155 : vector<1x128xf32> to vector<4x128xf32>
    %1157 = arith.mulf %1154, %1156 : vector<4x128xf32>
    %1158 = arith.addf %1128, %1157 : vector<4x128xf32>
    %c1_i32_410 = arith.constant 1 : i32
    %1159 = vector.broadcast %c1_i32_410 : i32 to vector<1x128xi32>
    %1160 = arith.subi %1096, %1159 : vector<1x128xi32>
    %c1_i32_411 = arith.constant 1 : i32
    %1161 = vector.broadcast %c1_i32_411 : i32 to vector<1x128xi32>
    %1162 = arith.subi %1099, %1161 : vector<1x128xi32>
    %c0_i32_412 = arith.constant 0 : i32
    %1163 = vector.broadcast %c0_i32_412 : i32 to vector<1x128xi32>
    %1164 = arith.cmpi sge, %1160, %1163 : vector<1x128xi32>
    %c16_i32_413 = arith.constant 16 : i32
    %1165 = vector.broadcast %c16_i32_413 : i32 to vector<1x128xi32>
    %1166 = arith.cmpi slt, %1160, %1165 : vector<1x128xi32>
    %1167 = arith.andi %1164, %1166 : vector<1x128xi1>
    %c0_i32_414 = arith.constant 0 : i32
    %1168 = vector.broadcast %c0_i32_414 : i32 to vector<1x128xi32>
    %1169 = arith.cmpi sge, %1162, %1168 : vector<1x128xi32>
    %1170 = arith.andi %1167, %1169 : vector<1x128xi1>
    %c16_i32_415 = arith.constant 16 : i32
    %1171 = vector.broadcast %c16_i32_415 : i32 to vector<1x128xi32>
    %1172 = arith.cmpi slt, %1162, %1171 : vector<1x128xi32>
    %1173 = arith.andi %1170, %1172 : vector<1x128xi1>
    %c16_i32_416 = arith.constant 16 : i32
    %1174 = vector.broadcast %c16_i32_416 : i32 to vector<1x128xi32>
    %1175 = arith.muli %1160, %1174 : vector<1x128xi32>
    %1176 = arith.addi %1175, %1162 : vector<1x128xi32>
    %c-1_i32_417 = arith.constant -1 : i32
    %1177 = vector.broadcast %c-1_i32_417 : i32 to vector<1x128xi32>
    %1178 = arith.select %1173, %1176, %1177 : vector<1x128xi1>, vector<1x128xi32>
    %1179 = vector.broadcast %1178 : vector<1x128xi32> to vector<256x128xi32>
    %1180 = arith.cmpi eq, %77, %1179 : vector<256x128xi32>
    %cst_418 = arith.constant 1.000000e+00 : f32
    %cst_419 = arith.constant 0.000000e+00 : f32
    %1181 = vector.broadcast %cst_418 : f32 to vector<256x128xf32>
    %1182 = vector.broadcast %cst_419 : f32 to vector<256x128xf32>
    %1183 = arith.select %1180, %1181, %1182 : vector<256x128xi1>, vector<256x128xf32>
    %cst_420 = arith.constant dense<0.000000e+00> : vector<4x128xf32>
    %1184 = tpu.matmul %1, %1183, %cst_420 {dimension_numbers = #tpu.dot_dimension_numbers<[1], [0], [0], [1], [0, 0, 1, 1], [], []>} : vector<4x256xf32>, vector<256x128xf32>, vector<4x128xf32> -> vector<4x128xf32>
    %1185 = vector.extract_strided_slice %65 {offsets = [8, 0], sizes = [1, 128], strides = [1, 1]} : vector<9x128xf32> to vector<1x128xf32>
    %1186 = vector.broadcast %1185 : vector<1x128xf32> to vector<4x128xf32>
    %1187 = arith.mulf %1184, %1186 : vector<4x128xf32>
    %1188 = arith.addf %1158, %1187 : vector<4x128xf32>
    %c1_i32_421 = arith.constant 1 : i32
    %1189 = vector.broadcast %c1_i32_421 : i32 to vector<1x128xi32>
    %1190 = arith.subi %1098, %1189 : vector<1x128xi32>
    %c1_i32_422 = arith.constant 1 : i32
    %1191 = vector.broadcast %c1_i32_422 : i32 to vector<1x128xi32>
    %1192 = arith.subi %1097, %1191 : vector<1x128xi32>
    %c0_i32_423 = arith.constant 0 : i32
    %1193 = vector.broadcast %c0_i32_423 : i32 to vector<1x128xi32>
    %1194 = arith.cmpi sge, %1190, %1193 : vector<1x128xi32>
    %c16_i32_424 = arith.constant 16 : i32
    %1195 = vector.broadcast %c16_i32_424 : i32 to vector<1x128xi32>
    %1196 = arith.cmpi slt, %1190, %1195 : vector<1x128xi32>
    %1197 = arith.andi %1194, %1196 : vector<1x128xi1>
    %c0_i32_425 = arith.constant 0 : i32
    %1198 = vector.broadcast %c0_i32_425 : i32 to vector<1x128xi32>
    %1199 = arith.cmpi sge, %1192, %1198 : vector<1x128xi32>
    %1200 = arith.andi %1197, %1199 : vector<1x128xi1>
    %c16_i32_426 = arith.constant 16 : i32
    %1201 = vector.broadcast %c16_i32_426 : i32 to vector<1x128xi32>
    %1202 = arith.cmpi slt, %1192, %1201 : vector<1x128xi32>
    %1203 = arith.andi %1200, %1202 : vector<1x128xi1>
    %c16_i32_427 = arith.constant 16 : i32
    %1204 = vector.broadcast %c16_i32_427 : i32 to vector<1x128xi32>
    %1205 = arith.muli %1190, %1204 : vector<1x128xi32>
    %1206 = arith.addi %1205, %1192 : vector<1x128xi32>
    %c-1_i32_428 = arith.constant -1 : i32
    %1207 = vector.broadcast %c-1_i32_428 : i32 to vector<1x128xi32>
    %1208 = arith.select %1203, %1206, %1207 : vector<1x128xi1>, vector<1x128xi32>
    %1209 = vector.broadcast %1208 : vector<1x128xi32> to vector<256x128xi32>
    %1210 = arith.cmpi eq, %77, %1209 : vector<256x128xi32>
    %cst_429 = arith.constant 1.000000e+00 : f32
    %cst_430 = arith.constant 0.000000e+00 : f32
    %1211 = vector.broadcast %cst_429 : f32 to vector<256x128xf32>
    %1212 = vector.broadcast %cst_430 : f32 to vector<256x128xf32>
    %1213 = arith.select %1210, %1211, %1212 : vector<256x128xi1>, vector<256x128xf32>
    %cst_431 = arith.constant dense<0.000000e+00> : vector<4x128xf32>
    %1214 = tpu.matmul %1, %1213, %cst_431 {dimension_numbers = #tpu.dot_dimension_numbers<[1], [0], [0], [1], [0, 0, 1, 1], [], []>} : vector<4x256xf32>, vector<256x128xf32>, vector<4x128xf32> -> vector<4x128xf32>
    %1215 = vector.extract_strided_slice %72 {offsets = [8, 0], sizes = [1, 128], strides = [1, 1]} : vector<9x128xf32> to vector<1x128xf32>
    %1216 = vector.broadcast %1215 : vector<1x128xf32> to vector<4x128xf32>
    %1217 = arith.mulf %1214, %1216 : vector<4x128xf32>
    %1218 = arith.addf %1188, %1217 : vector<4x128xf32>
    %1219 = vector.extract_strided_slice %78 {offsets = [8, 0, 0], sizes = [1, 4, 4], strides = [1, 1, 1]} : vector<9x4x4xf32> to vector<1x4x4xf32>
    %1220 = vector.shape_cast %1219 : vector<1x4x4xf32> to vector<4x4xf32>
    %cst_432 = arith.constant dense<0.000000e+00> : vector<4x128xf32>
    %1221 = tpu.matmul %1220, %1218, %cst_432 {dimension_numbers = #tpu.dot_dimension_numbers<[1], [0], [0], [1], [0, 0, 1, 1], [], []>} : vector<4x4xf32>, vector<4x128xf32>, vector<4x128xf32> -> vector<4x128xf32>
    %1222 = arith.addf %1095, %1221 : vector<4x128xf32>
    %c0_433 = arith.constant 0 : index
    %c0_434 = arith.constant 0 : index
    %c0_435 = arith.constant 0 : index
    %1223 = vector.load %arg6[%c0_433, %c0_434, %c0_435] : memref<1x4x128xf32, #tpu.memory_space<vmem>>, vector<1x4x128xf32>
    %1224 = vector.shape_cast %1223 : vector<1x4x128xf32> to vector<4x128xf32>
    %1225 = vector.shape_cast %1222 : vector<4x128xf32> to vector<1x4x128xf32>
    tpu.vector_store %arg6[%c0_433, %c0_434, %c0_435], %1225 {strides = array<i32>} : memref<1x4x128xf32, #tpu.memory_space<vmem>>, vector<1x4x128xf32>,
    return
  }
  func.func @transform_0(%arg0: i32, %arg1: i32) -> (i32, i32, i32) {
    %c0_i32 = arith.constant 0 : i32
    %c0_i32_0 = arith.constant 0 : i32
    %c0_i32_1 = arith.constant 0 : i32
    return %arg0, %c0_i32, %c0_i32_0 : i32, i32, i32
  }
  func.func @transform_1(%arg0: i32, %arg1: i32) -> (i32, i32) {
    %c0_i32 = arith.constant 0 : i32
    %c0_i32_0 = arith.constant 0 : i32
    return %c0_i32, %arg1 : i32, i32
  }
  func.func @transform_2(%arg0: i32, %arg1: i32) -> (i32, i32, i32) {
    %c0_i32 = arith.constant 0 : i32
    %c0_i32_0 = arith.constant 0 : i32
    return %arg0, %c0_i32, %arg1 : i32, i32, i32
  }
  func.func @transform_3(%arg0: i32, %arg1: i32) -> (i32, i32, i32) {
    %c0_i32 = arith.constant 0 : i32
    %c0_i32_0 = arith.constant 0 : i32
    %c0_i32_1 = arith.constant 0 : i32
    %c0_i32_2 = arith.constant 0 : i32
    return %c0_i32, %c0_i32_0, %c0_i32_1 : i32, i32, i32
  }
  func.func @transform_4(%arg0: i32, %arg1: i32) -> (i32, i32, i32) {
    %c0_i32 = arith.constant 0 : i32
    %c0_i32_0 = arith.constant 0 : i32
    return %arg0, %c0_i32, %arg1 : i32, i32, i32
  }
}

</mosaic_0001>

<llo_original>
// kernel: tpu_custom_call.1
$region0: #{tpu_custom_call.1}
  #allocation0 [shape = 'u32[]', space=smem, size = 0x4, offset = 0x4, fixed_abs, tag = 'smem constant byte address 0x4 - core index']
  #allocation1 [shape = 'u32[144,128]{1,0:T(1,128)}', space=vmem, size = 0x12000, scoped, tag = 'internal scratch']
  %s0 = inlined_call_operand.vmem [shape: f32[2,4,256], index: 0, kind: input, shape index: {}]
  %s1 = inlined_call_operand.vmem [shape: s32[2,256], index: 1, kind: input, shape index: {}]
  %s2 = inlined_call_operand.vmem [shape: f32[2,18,256], index: 2, kind: input, shape index: {}]
  %s3 = inlined_call_operand.vmem [shape: f32[9,4,4], index: 3, kind: input, shape index: {}]
  %s4 = inlined_call_operand.hbm [shape: f32[2,4,256], index: 4, kind: output, shape index: {}]
  %s5 = sld [smem:[#allocation0]]
  $region87: #{tpu_custom_call.1} parent=0
    _
  %s7 = ssub.s32 1, %s5
  %s8 = scalar_select 0, %s7, %s5
  $region1: #{tpu_custom_call.1} parent=0
    #allocation2 [shape = 'u8[24576]{0}', space=vmem, size = 0x6000, scoped, tag = 'input window, operand 2']
    #allocation3 [shape = 'u8[4096]{0}', space=vmem, size = 0x1000, scoped, tag = 'output window, operand 0']
    #allocation4 [shape = 's32[2]{0}', space=sflag, size = 0x8, scoped, tag = 'scoped memory for tpu_custom_call.1']
    %9 = vsyncpa [#allocation4], 0
    %s10 = scalar_lea.sflag [#allocation4], 1
    %11 = vsyncpa %s10, 0
    loop: start=0, step=1, limit=6
    $region2: #{tpu_custom_call.1} parent=1 // loop_pre_header
      _
    $region3: #{tpu_custom_call.1} parent=1 // loop_header
      %s13 = sphi 0, %s17
      %p14 = scmp.ge.s32.totalorder %s13, 6
      %s20 = sphi 0, %s32
      %s21 = sphi 0, %s28
      %s22 = sphi 0, %s20
      %s23 = sphi 0, %s21
      %s24 = sphi 0, %s22
      %s25 = sphi 0, %s23
      %s35 = sphi 0, %s37
      %s38 = sphi 0, %s35
      %s39 = sphi 0, %s38
      %s55 = sphi 0, %s39
      %s61 = sphi 0, %s63
      %s64 = sphi 0, %s61
      %s65 = sphi 0, %s64
      %s81 = sphi 0, %s65
      %s89 = sphi 0, %s91
      %s92 = sphi 0, %s89
      %s93 = sphi 0, %s92
      %s109 = sphi 0, %s93
      %s113 = sphi 0, %s113
      %s115 = sphi 0, %s113
      %s116 = sphi 0, %s115
      %s130 = sphi 0, %s116
      %s138 = sphi 0, %s140
      %s141 = sphi 0, %s138
      %s142 = sphi 0, %s141
      %s158 = sphi 0, %s142
    $region4: #{tpu_custom_call.1} parent=1 // loop_header_branch
      %16 = sbr.rel (%p14) target = $region8
    $region5: #{tpu_custom_call.1} parent=1 // loop_body
      %s18 = ssub.s32 %s13, 1
      %s19 = ssub.s32 %s13, 2
      %s26 = sadd.s32 1, %s21
      %p27 = scmp.ge.s32.totalorder %s26, 2
      %s28 = scalar_select %p27, 0, %s26
      %s29 = sadd.s32 1, %s20
      %s30 = scalar_select %p27, %s29, %s20
      %p31 = scmp.ge.s32.totalorder %s30, 2
      %s32 = scalar_select %p31, 0, %s30
      %s33 = ssub.s32 %s20, %s32
      %p34 = scmp.eq.s32.totalorder %s33, 0
      %s36 = sadd.s32 %s35, 1
      %s37 = scalar_select %p34, %s35, %s36
      %p40 = pneg %p34
      %p41 = scmp.eq.s32.totalorder %s13, 3
      %p42 = por %p40, %p41
      %p43 = scmp.ne.s32.totalorder %s35, %s38
      %p44 = scmp.eq.s32.totalorder %s13, 0
      %p45 = por %p43, %p44
      %p46 = scmp.ne.s32.totalorder %s35, %s38
      %p47 = scmp.eq.s32.totalorder %s18, 3
      %p48 = por %p46, %p47
      %p49 = scmp.ne.s32.totalorder %s38, %s39
      %p50 = scmp.eq.s32.totalorder %s18, 0
      %p51 = por %p49, %p50
      %p52 = scmp.ne.s32.totalorder %s38, %s39
      %p53 = scmp.eq.s32.totalorder %s19, 3
      %p54 = por %p52, %p53
      %p56 = scmp.ne.s32.totalorder %s39, %s55
      %p57 = scmp.eq.s32.totalorder %s19, 0
      %p58 = por %p56, %p57
      %s59 = ssub.s32 %s21, %s28
      %p60 = scmp.eq.s32.totalorder %s59, 0
      %s62 = sadd.s32 %s61, 1
      %s63 = scalar_select %p60, %s61, %s62
      %p66 = pneg %p60
      %p67 = scmp.eq.s32.totalorder %s13, 3
      %p68 = por %p66, %p67
      %p69 = scmp.ne.s32.totalorder %s61, %s64
      %p70 = scmp.eq.s32.totalorder %s13, 0
      %p71 = por %p69, %p70
      %p72 = scmp.ne.s32.totalorder %s61, %s64
      %p73 = scmp.eq.s32.totalorder %s18, 3
      %p74 = por %p72, %p73
      %p75 = scmp.ne.s32.totalorder %s64, %s65
      %p76 = scmp.eq.s32.totalorder %s18, 0
      %p77 = por %p75, %p76
      %p78 = scmp.ne.s32.totalorder %s64, %s65
      %p79 = scmp.eq.s32.totalorder %s19, 3
      %p80 = por %p78, %p79
      %p82 = scmp.ne.s32.totalorder %s65, %s81
      %p83 = scmp.eq.s32.totalorder %s19, 0
      %p84 = por %p82, %p83
      %s85 = ssub.s32 %s20, %s32
      %s86 = ssub.s32 %s21, %s28
      %s87 = sor.u32 %s85, %s86
      %p88 = scmp.eq.s32.totalorder %s87, 0
      %s90 = sadd.s32 %s89, 1
      %s91 = scalar_select %p88, %s89, %s90
      %p94 = pneg %p88
      %p95 = scmp.eq.s32.totalorder %s13, 3
      %p96 = por %p94, %p95
      %p97 = scmp.ne.s32.totalorder %s89, %s92
      %p98 = scmp.eq.s32.totalorder %s13, 0
      %p99 = por %p97, %p98
      %p100 = scmp.ne.s32.totalorder %s89, %s92
      %p101 = scmp.eq.s32.totalorder %s18, 3
      %p102 = por %p100, %p101
      %p103 = scmp.ne.s32.totalorder %s92, %s93
      %p104 = scmp.eq.s32.totalorder %s18, 0
      %p105 = por %p103, %p104
      %p106 = scmp.ne.s32.totalorder %s92, %s93
      %p107 = scmp.eq.s32.totalorder %s19, 3
      %p108 = por %p106, %p107
      %p110 = scmp.ne.s32.totalorder %s93, %s109
      %p111 = scmp.eq.s32.totalorder %s19, 0
      %p112 = por %p110, %p111
      %s114 = sadd.s32 %s113, 1
      %p117 = scmp.eq.s32.totalorder %s13, 3
      %p118 = scmp.ne.s32.totalorder %s113, %s115
      %p119 = scmp.eq.s32.totalorder %s13, 0
      %p120 = por %p118, %p119
      %p121 = scmp.ne.s32.totalorder %s113, %s115
      %p122 = scmp.eq.s32.totalorder %s18, 3
      %p123 = por %p121, %p122
      %p124 = scmp.ne.s32.totalorder %s115, %s116
      %p125 = scmp.eq.s32.totalorder %s18, 0
      %p126 = por %p124, %p125
      %p127 = scmp.ne.s32.totalorder %s115, %s116
      %p128 = scmp.eq.s32.totalorder %s19, 3
      %p129 = por %p127, %p128
      %p131 = scmp.ne.s32.totalorder %s116, %s130
      %p132 = scmp.eq.s32.totalorder %s19, 0
      %p133 = por %p131, %p132
      %s134 = ssub.s32 %s20, %s32
      %s135 = ssub.s32 %s21, %s28
      %s136 = sor.u32 %s134, %s135
      %p137 = scmp.eq.s32.totalorder %s136, 0
      %s139 = sadd.s32 %s138, 1
      %s140 = scalar_select %p137, %s138, %s139
      %p143 = pneg %p137
      %p144 = scmp.eq.s32.totalorder %s13, 3
      %p145 = por %p143, %p144
      %p146 = scmp.ne.s32.totalorder %s138, %s141
      %p147 = scmp.eq.s32.totalorder %s13, 0
      %p148 = por %p146, %p147
      %p149 = scmp.ne.s32.totalorder %s138, %s141
      %p150 = scmp.eq.s32.totalorder %s18, 3
      %p151 = por %p149, %p150
      %p152 = scmp.ne.s32.totalorder %s141, %s142
      %p153 = scmp.eq.s32.totalorder %s18, 0
      %p154 = por %p152, %p153
      %p155 = scmp.ne.s32.totalorder %s141, %s142
      %p156 = scmp.eq.s32.totalorder %s19, 3
      %p157 = por %p155, %p156
      %p159 = scmp.ne.s32.totalorder %s142, %s158
      %p160 = scmp.eq.s32.totalorder %s19, 0
      %p161 = por %p159, %p160
      %p162 = scmp.le.s32.totalorder 1, %s13
      %p163 = scmp.lt.s32.totalorder %s13, 5
      %p164 = pnand %p162, %p163
      %p165 = pneg %p164
      // Predicated region
      $region9: #{tpu_custom_call.1} parent=5 // pred_check
        _
      $region10: #{tpu_custom_call.1} parent=5 // pred_check_branch
        %167 = sbr.rel (%p164) target = $region12
      $region11: #{tpu_custom_call.1} parent=5 // pred_region
        %s168 = ssub.s32 %s13, 1
        // Predicated region
        $region13: #{tpu_custom_call.1} parent=11 // pred_check
          %p169 = pneg %p126
        $region14: #{tpu_custom_call.1} parent=11 // pred_check_branch
          %171 = sbr.rel (%p169) target = $region16
        $region15: #{tpu_custom_call.1} parent=11 // pred_region
          _
        $region16: #{tpu_custom_call.1} parent=11 // pred_fallthru
          _
      $region12: #{tpu_custom_call.1} parent=5 // pred_fallthru
        _
      %p172 = scmp.lt.s32.totalorder %s13, 4
      // Predicated region
      $region17: #{tpu_custom_call.1} parent=5 // pred_check
        %p173 = pneg %p172
      $region18: #{tpu_custom_call.1} parent=5 // pred_check_branch
        %175 = sbr.rel (%p173) target = $region20
      $region19: #{tpu_custom_call.1} parent=5 // pred_region
        // Predicated region
        $region21: #{tpu_custom_call.1} parent=19 // pred_check
          %p176 = pneg %p45
        $region22: #{tpu_custom_call.1} parent=19 // pred_check_branch
          %178 = sbr.rel (%p176) target = $region24
        $region23: #{tpu_custom_call.1} parent=19 // pred_region
          %p179 = scmp.lt.s32.totalorder %s20, 1
          %s180 = scalar_select %p179, %s20, 1
          %s181 = smul.addr %s180, 2
          %s182 = smul.addr %s181, 4
          %s183 = scalar_lea.vmem %s0, %s182
        $region24: #{tpu_custom_call.1} parent=19 // pred_fallthru
          _
        // Predicated region
        $region25: #{tpu_custom_call.1} parent=19 // pred_check
          %p184 = pneg %p71
        $region26: #{tpu_custom_call.1} parent=19 // pred_check_branch
          %186 = sbr.rel (%p184) target = $region28
        $region27: #{tpu_custom_call.1} parent=19 // pred_region
          %p187 = scmp.lt.s32.totalorder %s21, 1
          %s188 = scalar_select %p187, %s21, 1
          %s189 = smul.addr %s188, 2
          %s190 = scalar_lea.vmem %s1, %s189
        $region28: #{tpu_custom_call.1} parent=19 // pred_fallthru
          _
        // Predicated region
        $region29: #{tpu_custom_call.1} parent=19 // pred_check
          %p191 = pneg %p99
        $region30: #{tpu_custom_call.1} parent=19 // pred_check_branch
          %193 = sbr.rel (%p191) target = $region32
        $region31: #{tpu_custom_call.1} parent=19 // pred_region
          %s194 = sand.u32 %s89, 1
          %s195 = sand.u32 %s89, 1
          %s196 = smul.addr %s195, 24
          %s197 = scalar_lea.vmem [#allocation2], %s196
          %s198 = smul.addr %s20, 6
          %s199 = sadd.s32 %s21, %s198
          %s200 = smul.addr %s199, 8
          %s201 = scalar_lea.vmem %s2, %s200
          // Predicated region
          $region33: #{tpu_custom_call.1} parent=31 // pred_check
            _
          $region34: #{tpu_custom_call.1} parent=31 // pred_check_branch
            %203 = sbr.rel (0) target = $region36
          $region35: #{tpu_custom_call.1} parent=31 // pred_region
            // Predicated region
            $region37: #{tpu_custom_call.1} parent=35 // pred_check
              _
            $region38: #{tpu_custom_call.1} parent=35 // pred_check_branch
              %205 = sbr.rel (0) target = $region40
            $region39: #{tpu_custom_call.1} parent=35 // pred_region
              // Predicated region
              $region52: #{tpu_custom_call.1} parent=39 // pred_check
                _
              $region53: #{tpu_custom_call.1} parent=39 // pred_check_branch
                %224 = sbr.rel (0) target = $region55
              $region54: #{tpu_custom_call.1} parent=39 // pred_region
                loop: start=0, step=1, limit=1
                $region56: #{tpu_custom_call.1} parent=54 // loop_pre_header
                  _
                $region57: #{tpu_custom_call.1} parent=54 // loop_header
                  %s226 = sphi 0, %s230
                  %p227 = scmp.ge.s32.totalorder %s226, 1
                  %s231 = sphi %s201, %s201
                  %s232 = sphi %s197, %s197
                $region58: #{tpu_custom_call.1} parent=54 // loop_header_branch
                  %229 = sbr.rel (%p227) target = $region62
                $region59: #{tpu_custom_call.1} parent=54 // loop_body
                  %v233 = vld [vmem:[%s231] sm:$0xff]
                  %234 = vst [vmem:[%s232] sm:$0xff] %v233
                  %v235 = vld [vmem:[%s231 + $0x10] sm:$0xff]
                  %236 = vst [vmem:[%s232 + $0x8] sm:$0xff] %v235
                  %v237 = vld [vmem:[%s231 + $0x20] sm:$0xff]
                  %238 = vst [vmem:[%s232 + $0x10] sm:$0xff] %v237
                $region60: #{tpu_custom_call.1} parent=54 // loop_footer
                  %s230 = sadd.s32 1, %s226
                $region61: #{tpu_custom_call.1} parent=54 // loop_footer_branch
                  %225 = sbr.rel target = $region57
                $region62: #{tpu_custom_call.1} parent=54 // loop_exit
                  _
              $region55: #{tpu_custom_call.1} parent=39 // pred_fallthru
                _
              // Predicated region
              $region63: #{tpu_custom_call.1} parent=39 // pred_check
                _
              $region64: #{tpu_custom_call.1} parent=39 // pred_check_branch
                %240 = sbr.rel target = $region66
              $region65: #{tpu_custom_call.1} parent=39 // pred_region
                _
              $region66: #{tpu_custom_call.1} parent=39 // pred_fallthru
                _
            $region40: #{tpu_custom_call.1} parent=35 // pred_fallthru
              _
            // Predicated region
            $region41: #{tpu_custom_call.1} parent=35 // pred_check
              _
            $region42: #{tpu_custom_call.1} parent=35 // pred_check_branch
              %207 = sbr.rel target = $region44
            $region43: #{tpu_custom_call.1} parent=35 // pred_region
              loop: start=0, step=1, limit=1
              $region45: #{tpu_custom_call.1} parent=43 // loop_pre_header
                _
              $region46: #{tpu_custom_call.1} parent=43 // loop_header
                %s210 = sphi 0, %s214
                %p211 = scmp.ge.s32.totalorder %s210, 1
                %s215 = sphi %s201, %s201
                %s216 = sphi %s197, %s197
              $region47: #{tpu_custom_call.1} parent=43 // loop_header_branch
                %213 = sbr.rel (%p211) target = $region51
              $region48: #{tpu_custom_call.1} parent=43 // loop_body
                %v217 = vld [vmem:[%s215] sm:$0xff]
                %218 = vst [vmem:[%s216] sm:$0xff] %v217
                %v219 = vld [vmem:[%s215 + $0x10] sm:$0xff]
                %220 = vst [vmem:[%s216 + $0x8] sm:$0xff] %v219
                %v221 = vld [vmem:[%s215 + $0x20] sm:$0xff]
                %222 = vst [vmem:[%s216 + $0x10] sm:$0xff] %v221
              $region49: #{tpu_custom_call.1} parent=43 // loop_footer
                %s214 = sadd.s32 1, %s210
              $region50: #{tpu_custom_call.1} parent=43 // loop_footer_branch
                %209 = sbr.rel target = $region46
              $region51: #{tpu_custom_call.1} parent=43 // loop_exit
                _
            $region44: #{tpu_custom_call.1} parent=35 // pred_fallthru
              _
          $region36: #{tpu_custom_call.1} parent=31 // pred_fallthru
            _
          %241 = vnop
        $region32: #{tpu_custom_call.1} parent=19 // pred_fallthru
          _
      $region20: #{tpu_custom_call.1} parent=5 // pred_fallthru
        _
      %p242 = scmp.le.s32.totalorder 1, %s13
      %p243 = scmp.lt.s32.totalorder %s13, 5
      %p244 = pnand %p242, %p243
      %p245 = pneg %p244
      // Predicated region
      $region67: #{tpu_custom_call.1} parent=5 // pred_check
        _
      $region68: #{tpu_custom_call.1} parent=5 // pred_check_branch
        %247 = sbr.rel (%p244) target = $region70
      $region69: #{tpu_custom_call.1} parent=5 // pred_region
        %s248 = ssub.s32 %s13, 1
        %s249 = sand.u32 %s92, 1
        %s250 = sand.u32 %s92, 1
        %s251 = smul.addr %s250, 24
        %s252 = scalar_lea.vmem [#allocation2], %s251
        // Predicated region
        $region71: #{tpu_custom_call.1} parent=69 // pred_check
          %p253 = pneg %p105
        $region72: #{tpu_custom_call.1} parent=69 // pred_check_branch
          %255 = sbr.rel (%p253) target = $region74
        $region73: #{tpu_custom_call.1} parent=69 // pred_region
          _
        $region74: #{tpu_custom_call.1} parent=69 // pred_fallthru
          _
        %p256 = scmp.lt.s32.totalorder %s22, 1
        %s257 = scalar_select %p256, %s22, 1
        %s258 = smul.addr %s257, 2
        %s259 = smul.addr %s258, 4
        %s260 = scalar_lea.vmem %s0, %s259
        %p261 = pneg %p51
        %p262 = pneg %p48
        %p263 = scmp.lt.s32.totalorder %s23, 1
        %s264 = scalar_select %p263, %s23, 1
        %s265 = smul.addr %s264, 2
        %s266 = scalar_lea.vmem %s1, %s265
        %p267 = pneg %p77
        %p268 = pneg %p74
        %s269 = sand.u32 %s92, 1
        %s270 = sand.u32 %s92, 1
        %s271 = smul.addr %s270, 24
        %s272 = scalar_lea.vmem [#allocation2], %s271
        %p273 = pneg %p105
        %p274 = pneg %p102
        %p275 = pneg %p126
        %p276 = pneg %p123
        %p277 = pneg %p154
        %p278 = pneg %p151
        %s279 = sand.u32 %s141, 1
        %s280 = scalar_lea.sflag [#allocation4], %s279
        %s281 = sand.u32 %s141, 1
        %s282 = smul.addr %s281, 4
        %s283 = scalar_lea.vmem [#allocation3], %s282
        %p284 = scmp.lt.s32.totalorder %s22, 1
        %s285 = scalar_select %p284, %s22, 1
        %s286 = smul.addr %s285, 2
        %s287 = smul.addr %s286, 4
        %s288 = scalar_lea.vmem %s0, %s287
        %p289 = scmp.lt.s32.totalorder %s23, 1
        %s290 = scalar_select %p289, %s23, 1
        %s291 = smul.addr %s290, 2
        %s292 = scalar_lea.vmem %s1, %s291
        %v293 = vld [vmem:[%s288] sm:$0xff]
        %v294 = vld [vmem:[%s292] sm:$0x3]
        %v295 = vld [vmem:[%s252] sm:$0xff]
        %v296 = vld [vmem:[%s252 + $0x8] sm:$0xff]
        %v297 = vld [vmem:[%s252 + $0x10] sm:$0x3]
        %v298 = vcvt.s32.f32 %v294
        %v299 = vlaneseq
        %v300 = vshrl.u32 %v299, 7
        %v301 = vsub.s32 0, %v300
        %v302 = vrot.slane %v298, %v301
        %v303 = vadd.f32 %v302, %v295
        %v304 = vadd.f32 %v302, %v296
        %v305 = vlaneseq
        %v306 = vshrl.u32 %v305, 7
        %v307 = vsub.s32 1, %v306
        %v308 = vrot.slane %v298, %v307
        %v309 = vadd.f32 %v308, %v296
        %v310 = vadd.f32 %v308, %v297
        %v311 = vfloor.f32 %v303
        %v312 = vfloor.f32 %v304
        %v313 = vfloor.f32 %v309
        %v314 = vfloor.f32 %v310
        %v315 = vmax.f32 %v311, 0.0
        %v316 = vmax.f32 %v312, 0.0
        %v317 = vmin.f32 %v315, 17.0
        %v318 = vmin.f32 %v316, 17.0
        %v319 = vmax.f32 %v313, 0.0
        %v320 = vmax.f32 %v314, 0.0
        %v321 = vmin.f32 %v319, 17.0
        %v322 = vmin.f32 %v320, 17.0
        %v323 = vadd.f32 %v311, 1.0
        %v324 = vadd.f32 %v312, 1.0
        %v325 = vmax.f32 %v323, 0.0
        %v326 = vmax.f32 %v324, 0.0
        %v327 = vmin.f32 %v325, 17.0
        %v328 = vmin.f32 %v326, 17.0
        %v329 = vadd.f32 %v313, 1.0
        %v330 = vadd.f32 %v314, 1.0
        %v331 = vmax.f32 %v329, 0.0
        %v332 = vmax.f32 %v330, 0.0
        %v333 = vmin.f32 %v331, 17.0
        %v334 = vmin.f32 %v332, 17.0
        %v335 = vmax.f32 %v303, 0.0
        %v336 = vmax.f32 %v304, 0.0
        %v337 = vmin.f32 %v335, 17.0
        %v338 = vmin.f32 %v336, 17.0
        %v339 = vmax.f32 %v309, 0.0
        %v340 = vmax.f32 %v310, 0.0
        %v341 = vmin.f32 %v339, 17.0
        %v342 = vmin.f32 %v340, 17.0
        %v343 = vsub.f32 %v317, %v337
        %v344 = vsub.f32 %v318, %v338
        %v345 = vadd.f32 %v343, 1.0
        %v346 = vadd.f32 %v344, 1.0
        %v347 = vsub.f32 %v321, %v341
        %v348 = vsub.f32 %v322, %v342
        %v349 = vadd.f32 %v347, 1.0
        %v350 = vadd.f32 %v348, 1.0
        %vm353 = vcmask 1046528
        %v354 = vrot.slane %v349, 1
        %v355 = vrot.slane %v350, 1
        %v356 = vsel %vm353, %v354, %v355
        %v359 = vmul.f32 %v345, %v356
        %v360 = vmul.f32 %v346, %v355
        %v361 = vsub.f32 %v327, %v337
        %v362 = vsub.f32 %v328, %v338
        %v363 = vsub.f32 1.0, %v361
        %v364 = vsub.f32 1.0, %v362
        %v365 = vsub.f32 %v333, %v341
        %v366 = vsub.f32 %v334, %v342
        %v367 = vsub.f32 1.0, %v365
        %v368 = vsub.f32 1.0, %v366
        %v371 = vrot.slane %v367, 1
        %v372 = vrot.slane %v368, 1
        %v373 = vsel %vm353, %v371, %v372
        %v376 = vmul.f32 %v363, %v373
        %v377 = vmul.f32 %v364, %v372
        %v378 = vmul.f32 %v345, %v373
        %v379 = vmul.f32 %v346, %v372
        %v380 = vmul.f32 %v363, %v356
        %v381 = vmul.f32 %v364, %v355
        %v382 = vcvt.f32.s32.to.zero.pseudo %v317
        %v383 = vcvt.f32.s32.to.zero.pseudo %v318
        %v384 = vcvt.f32.s32.to.zero.pseudo %v321
        %v385 = vcvt.f32.s32.to.zero.pseudo %v322
        %v386 = vcvt.f32.s32.to.zero.pseudo %v327
        %v387 = vcvt.f32.s32.to.zero.pseudo %v328
        %v388 = vcvt.f32.s32.to.zero.pseudo %v333
        %v389 = vcvt.f32.s32.to.zero.pseudo %v334
        %v390 = vlaneseq
        %v391 = vshrl.u32 %v390, 7
        %v392 = vadd.s32 %v391, 8
        %v393 = vadd.s32 %v391, 16
        %v394 = vadd.s32 %v391, 24
        %v395 = vadd.s32 %v391, 32
        %v396 = vadd.s32 %v391, 40
        %v397 = vadd.s32 %v391, 48
        %v398 = vadd.s32 %v391, 56
        %v399 = vadd.s32 %v391, 64
        %v400 = vadd.s32 %v391, 72
        %v401 = vadd.s32 %v391, 80
        %v402 = vadd.s32 %v391, 88
        %v403 = vadd.s32 %v391, 96
        %v404 = vadd.s32 %v391, 104
        %v405 = vadd.s32 %v391, 112
        %v406 = vadd.s32 %v391, 120
        %v407 = vadd.s32 %v391, 128
        %v408 = vadd.s32 %v391, 136
        %v409 = vadd.s32 %v391, 144
        %v410 = vadd.s32 %v391, 152
        %v411 = vadd.s32 %v391, 160
        %v412 = vadd.s32 %v391, 168
        %v413 = vadd.s32 %v391, 176
        %v414 = vadd.s32 %v391, 184
        %v415 = vadd.s32 %v391, 192
        %v416 = vadd.s32 %v391, 200
        %v417 = vadd.s32 %v391, 208
        %v418 = vadd.s32 %v391, 216
        %v419 = vadd.s32 %v391, 224
        %v420 = vadd.s32 %v391, 232
        %v421 = vadd.s32 %v391, 240
        %v422 = vadd.s32 %v391, 248
        %v423 = vld [vmem:[%s3] sm:$0xf]
        %v424 = vld [vmem:[%s3 + $0x4] sm:$0xf]
        %v425 = vld [vmem:[%s3 + $0x8] sm:$0xf]
        %v426 = vld [vmem:[%s3 + $0xc] sm:$0xf]
        %v427 = vld [vmem:[%s3 + $0x10] sm:$0xf]
        %v428 = vld [vmem:[%s3 + $0x14] sm:$0xf]
        %v429 = vld [vmem:[%s3 + $0x18] sm:$0xf]
        %v430 = vld [vmem:[%s3 + $0x1c] sm:$0xf]
        %v431 = vld [vmem:[%s3 + $0x20] sm:$0xf]
        %v432 = vsub.s32 %v382, 1
        %v433 = vsub.s32 %v384, 1
        %vm434 = vcmp.ge.s32.totalorder %v432, 0
        %vm435 = vcmp.lt.s32.totalorder %v432, 16
        %vm436 = vmand %vm434, %vm435
        %vm437 = vcmp.ge.s32.totalorder %v433, 0
        %v438 = vsel %vm437, 1, 0
        %v439 = vrot.slane %v438, 1
        %vm440 = vcmp.ne.s32.totalorder %v439, 0
        %vm441 = vmand %vm436, %vm440
        %vm442 = vcmp.lt.s32.totalorder %v433, 16
        %v443 = vsel %vm442, 1, 0
        %v444 = vrot.slane %v443, 1
        %vm445 = vcmp.ne.s32.totalorder %v444, 0
        %vm446 = vmand %vm441, %vm445
        %v447 = vmul.u32 %v432, 16
        %v448 = vrot.slane %v433, 1
        %v449 = vadd.s32 %v447, %v448
        %v450 = vsel %vm446, %v449, 4294967295
        %v451 = vlaneseq
        %v452 = vshrl.u32 %v451, 7
        %v453 = vsub.s32 0, %v452
        %v454 = vrot.slane %v450, %v453
        %vm455 = vcmp.eq.s32.totalorder %v391, %v454
        %vm456 = vcmp.eq.s32.totalorder %v392, %v454
        %vm457 = vcmp.eq.s32.totalorder %v393, %v454
        %vm458 = vcmp.eq.s32.totalorder %v394, %v454
        %vm459 = vcmp.eq.s32.totalorder %v395, %v454
        %vm460 = vcmp.eq.s32.totalorder %v396, %v454
        %vm461 = vcmp.eq.s32.totalorder %v397, %v454
        %vm462 = vcmp.eq.s32.totalorder %v398, %v454
        %vm463 = vcmp.eq.s32.totalorder %v399, %v454
        %vm464 = vcmp.eq.s32.totalorder %v400, %v454
        %vm465 = vcmp.eq.s32.totalorder %v401, %v454
        %vm466 = vcmp.eq.s32.totalorder %v402, %v454
        %vm467 = vcmp.eq.s32.totalorder %v403, %v454
        %vm468 = vcmp.eq.s32.totalorder %v404, %v454
        %vm469 = vcmp.eq.s32.totalorder %v405, %v454
        %vm470 = vcmp.eq.s32.totalorder %v406, %v454
        %vm471 = vcmp.eq.s32.totalorder %v407, %v454
        %vm472 = vcmp.eq.s32.totalorder %v408, %v454
        %vm473 = vcmp.eq.s32.totalorder %v409, %v454
        %vm474 = vcmp.eq.s32.totalorder %v410, %v454
        %vm475 = vcmp.eq.s32.totalorder %v411, %v454
        %vm476 = vcmp.eq.s32.totalorder %v412, %v454
        %vm477 = vcmp.eq.s32.totalorder %v413, %v454
        %vm478 = vcmp.eq.s32.totalorder %v414, %v454
        %vm479 = vcmp.eq.s32.totalorder %v415, %v454
        %vm480 = vcmp.eq.s32.totalorder %v416, %v454
        %vm481 = vcmp.eq.s32.totalorder %v417, %v454
        %vm482 = vcmp.eq.s32.totalorder %v418, %v454
        %vm483 = vcmp.eq.s32.totalorder %v419, %v454
        %vm484 = vcmp.eq.s32.totalorder %v420, %v454
        %vm485 = vcmp.eq.s32.totalorder %v421, %v454
        %vm486 = vcmp.eq.s32.totalorder %v422, %v454
        %v487 = vsel %vm455, 1.0, 0.0
        %v488 = vsel %vm456, 1.0, 0.0
        %v489 = vsel %vm457, 1.0, 0.0
        %v490 = vsel %vm458, 1.0, 0.0
        %v491 = vsel %vm459, 1.0, 0.0
        %v492 = vsel %vm460, 1.0, 0.0
        %v493 = vsel %vm461, 1.0, 0.0
        %v494 = vsel %vm462, 1.0, 0.0
        %v495 = vsel %vm463, 1.0, 0.0
        %v496 = vsel %vm464, 1.0, 0.0
        %v497 = vsel %vm465, 1.0, 0.0
        %v498 = vsel %vm466, 1.0, 0.0
        %v499 = vsel %vm467, 1.0, 0.0
        %v500 = vsel %vm468, 1.0, 0.0
        %v501 = vsel %vm469, 1.0, 0.0
        %v502 = vsel %vm470, 1.0, 0.0
        %v503 = vsel %vm471, 1.0, 0.0
        %v504 = vsel %vm472, 1.0, 0.0
        %v505 = vsel %vm473, 1.0, 0.0
        %v506 = vsel %vm474, 1.0, 0.0
        %v507 = vsel %vm475, 1.0, 0.0
        %v508 = vsel %vm476, 1.0, 0.0
        %v509 = vsel %vm477, 1.0, 0.0
        %v510 = vsel %vm478, 1.0, 0.0
        %v511 = vsel %vm479, 1.0, 0.0
        %v512 = vsel %vm480, 1.0, 0.0
        %v513 = vsel %vm481, 1.0, 0.0
        %v514 = vsel %vm482, 1.0, 0.0
        %v515 = vsel %vm483, 1.0, 0.0
        %v516 = vsel %vm484, 1.0, 0.0
        %v517 = vsel %vm485, 1.0, 0.0
        %v518 = vsel %vm486, 1.0, 0.0
        %v520 = vcombine.high %v293, %v293
        %522 = vmatprep.subr.mxu0 0.0
        %523 = vmatpush1.msra.mxu0 %v487
        %524 = vmatprep.subr.mxu0 0.0
        %525 = vmatpush1.msra.mxu0 %v488
        %526 = vmatprep.subr.mxu0 0.0
        %527 = vmatpush1.msra.mxu0 %v489
        %528 = vmatprep.subr.mxu0 0.0
        %529 = vmatpush1.msra.mxu0 %v490
        %530 = vmatprep.subr.mxu0 0.0
        %531 = vmatpush1.msra.mxu0 %v491
        %532 = vmatprep.subr.mxu0 0.0
        %533 = vmatpush1.msra.mxu0 %v492
        %534 = vmatprep.subr.mxu0 0.0
        %535 = vmatpush1.msra.mxu0 %v493
        %536 = vmatprep.subr.mxu0 0.0
        %537 = vmatpush1.msra.mxu0 %v494
        %538 = vmatprep.subr.mxu0 0.0
        %539 = vmatpush1.msra.mxu0 %v495
        %540 = vmatprep.subr.mxu0 0.0
        %541 = vmatpush1.msra.mxu0 %v496
        %542 = vmatprep.subr.mxu0 0.0
        %543 = vmatpush1.msra.mxu0 %v497
        %544 = vmatprep.subr.mxu0 0.0
        %545 = vmatpush1.msra.mxu0 %v498
        %546 = vmatprep.subr.mxu0 0.0
        %547 = vmatpush1.msra.mxu0 %v499
        %548 = vmatprep.subr.mxu0 0.0
        %549 = vmatpush1.msra.mxu0 %v500
        %550 = vmatprep.subr.mxu0 0.0
        %551 = vmatpush1.msra.mxu0 %v501
        %552 = vmatprep.subr.mxu0 0.0
        %553 = vmatpush1.msra.mxu0 %v502
        %554 = vmatprep.subr.mxu0 0.0
        %555 = vmatpush1.msra.mxu0 %v503
        %556 = vmatprep.subr.mxu0 0.0
        %557 = vmatpush1.msra.mxu0 %v504
        %558 = vmatprep.subr.mxu0 0.0
        %559 = vmatpush1.msra.mxu0 %v505
        %560 = vmatprep.subr.mxu0 0.0
        %561 = vmatpush1.msra.mxu0 %v506
        %562 = vmatprep.subr.mxu0 0.0
        %563 = vmatpush1.msra.mxu0 %v507
        %564 = vmatprep.subr.mxu0 0.0
        %565 = vmatpush1.msra.mxu0 %v508
        %566 = vmatprep.subr.mxu0 0.0
        %567 = vmatpush1.msra.mxu0 %v509
        %568 = vmatprep.subr.mxu0 0.0
        %569 = vmatpush1.msra.mxu0 %v510
        %570 = vmatprep.subr.mxu0 0.0
        %571 = vmatpush1.msra.mxu0 %v511
        %572 = vmatprep.subr.mxu0 0.0
        %573 = vmatpush1.msra.mxu0 %v512
        %574 = vmatprep.subr.mxu0 0.0
        %575 = vmatpush1.msra.mxu0 %v513
        %576 = vmatprep.subr.mxu0 0.0
        %577 = vmatpush1.msra.mxu0 %v514
        %578 = vmatprep.subr.mxu0 0.0
        %579 = vmatpush1.msra.mxu0 %v515
        %580 = vmatprep.subr.mxu0 0.0
        %581 = vmatpush1.msra.mxu0 %v516
        %582 = vmatprep.subr.mxu0 0.0
        %583 = vmatpush1.msra.mxu0 %v517
        %584 = vmatprep.subr.mxu0 0.0
        %585 = vmatpush1.msra.mxu0 %v518
        %586 = vmatprep.mubr.f32.mxu0 %v520
        %587 = vmatmul.mubr.f32.gmra.mrb[0].mxu0 %v293
        %v588 = vpop.f32.mrb[0].mxu0
        %v589 = vadd.f32 0.0, %v588
        %v590 = vpop.f32.mrb[0].mxu0
        %591 = vdwg.mxu0
        %v592 = vlaneseq
        %v593 = vshrl.u32 %v592, 7
        %v594 = vsub.s32 0, %v593
        %v595 = vrot.slane %v359, %v594
        %v596 = vmul.f32 %v589, %v595
        %v597 = vsub.s32 %v386, 1
        %v598 = vsub.s32 %v388, 1
        %vm599 = vcmp.ge.s32.totalorder %v597, 0
        %vm600 = vcmp.lt.s32.totalorder %v597, 16
        %vm601 = vmand %vm599, %vm600
        %vm602 = vcmp.ge.s32.totalorder %v598, 0
        %v603 = vsel %vm602, 1, 0
        %v604 = vrot.slane %v603, 1
        %vm605 = vcmp.ne.s32.totalorder %v604, 0
        %vm606 = vmand %vm601, %vm605
        %vm607 = vcmp.lt.s32.totalorder %v598, 16
        %v608 = vsel %vm607, 1, 0
        %v609 = vrot.slane %v608, 1
        %vm610 = vcmp.ne.s32.totalorder %v609, 0
        %vm611 = vmand %vm606, %vm610
        %v612 = vmul.u32 %v597, 16
        %v613 = vrot.slane %v598, 1
        %v614 = vadd.s32 %v612, %v613
        %v615 = vsel %vm611, %v614, 4294967295
        %v616 = vlaneseq
        %v617 = vshrl.u32 %v616, 7
        %v618 = vsub.s32 0, %v617
        %v619 = vrot.slane %v615, %v618
        %vm620 = vcmp.eq.s32.totalorder %v391, %v619
        %vm621 = vcmp.eq.s32.totalorder %v392, %v619
        %vm622 = vcmp.eq.s32.totalorder %v393, %v619
        %vm623 = vcmp.eq.s32.totalorder %v394, %v619
        %vm624 = vcmp.eq.s32.totalorder %v395, %v619
        %vm625 = vcmp.eq.s32.totalorder %v396, %v619
        %vm626 = vcmp.eq.s32.totalorder %v397, %v619
        %vm627 = vcmp.eq.s32.totalorder %v398, %v619
        %vm628 = vcmp.eq.s32.totalorder %v399, %v619
        %vm629 = vcmp.eq.s32.totalorder %v400, %v619
        %vm630 = vcmp.eq.s32.totalorder %v401, %v619
        %vm631 = vcmp.eq.s32.totalorder %v402, %v619
        %vm632 = vcmp.eq.s32.totalorder %v403, %v619
        %vm633 = vcmp.eq.s32.totalorder %v404, %v619
        %vm634 = vcmp.eq.s32.totalorder %v405, %v619
        %vm635 = vcmp.eq.s32.totalorder %v406, %v619
        %vm636 = vcmp.eq.s32.totalorder %v407, %v619
        %vm637 = vcmp.eq.s32.totalorder %v408, %v619
        %vm638 = vcmp.eq.s32.totalorder %v409, %v619
        %vm639 = vcmp.eq.s32.totalorder %v410, %v619
        %vm640 = vcmp.eq.s32.totalorder %v411, %v619
        %vm641 = vcmp.eq.s32.totalorder %v412, %v619
        %vm642 = vcmp.eq.s32.totalorder %v413, %v619
        %vm643 = vcmp.eq.s32.totalorder %v414, %v619
        %vm644 = vcmp.eq.s32.totalorder %v415, %v619
        %vm645 = vcmp.eq.s32.totalorder %v416, %v619
        %vm646 = vcmp.eq.s32.totalorder %v417, %v619
        %vm647 = vcmp.eq.s32.totalorder %v418, %v619
        %vm648 = vcmp.eq.s32.totalorder %v419, %v619
        %vm649 = vcmp.eq.s32.totalorder %v420, %v619
        %vm650 = vcmp.eq.s32.totalorder %v421, %v619
        %vm651 = vcmp.eq.s32.totalorder %v422, %v619
        %v652 = vsel %vm620, 1.0, 0.0
        %v653 = vsel %vm621, 1.0, 0.0
        %v654 = vsel %vm622, 1.0, 0.0
        %v655 = vsel %vm623, 1.0, 0.0
        %v656 = vsel %vm624, 1.0, 0.0
        %v657 = vsel %vm625, 1.0, 0.0
        %v658 = vsel %vm626, 1.0, 0.0
        %v659 = vsel %vm627, 1.0, 0.0
        %v660 = vsel %vm628, 1.0, 0.0
        %v661 = vsel %vm629, 1.0, 0.0
        %v662 = vsel %vm630, 1.0, 0.0
        %v663 = vsel %vm631, 1.0, 0.0
        %v664 = vsel %vm632, 1.0, 0.0
        %v665 = vsel %vm633, 1.0, 0.0
        %v666 = vsel %vm634, 1.0, 0.0
        %v667 = vsel %vm635, 1.0, 0.0
        %v668 = vsel %vm636, 1.0, 0.0
        %v669 = vsel %vm637, 1.0, 0.0
        %v670 = vsel %vm638, 1.0, 0.0
        %v671 = vsel %vm639, 1.0, 0.0
        %v672 = vsel %vm640, 1.0, 0.0
        %v673 = vsel %vm641, 1.0, 0.0
        %v674 = vsel %vm642, 1.0, 0.0
        %v675 = vsel %vm643, 1.0, 0.0
        %v676 = vsel %vm644, 1.0, 0.0
        %v677 = vsel %vm645, 1.0, 0.0
        %v678 = vsel %vm646, 1.0, 0.0
        %v679 = vsel %vm647, 1.0, 0.0
        %v680 = vsel %vm648, 1.0, 0.0
        %v681 = vsel %vm649, 1.0, 0.0
        %v682 = vsel %vm650, 1.0, 0.0
        %v683 = vsel %vm651, 1.0, 0.0
        %684 = vmatprep.subr.mxu0 0.0
        %685 = vmatpush1.msra.mxu0 %v652
        %686 = vmatprep.subr.mxu0 0.0
        %687 = vmatpush1.msra.mxu0 %v653
        %688 = vmatprep.subr.mxu0 0.0
        %689 = vmatpush1.msra.mxu0 %v654
        %690 = vmatprep.subr.mxu0 0.0
        %691 = vmatpush1.msra.mxu0 %v655
        %692 = vmatprep.subr.mxu0 0.0
        %693 = vmatpush1.msra.mxu0 %v656
        %694 = vmatprep.subr.mxu0 0.0
        %695 = vmatpush1.msra.mxu0 %v657
        %696 = vmatprep.subr.mxu0 0.0
        %697 = vmatpush1.msra.mxu0 %v658
        %698 = vmatprep.subr.mxu0 0.0
        %699 = vmatpush1.msra.mxu0 %v659
        %700 = vmatprep.subr.mxu0 0.0
        %701 = vmatpush1.msra.mxu0 %v660
        %702 = vmatprep.subr.mxu0 0.0
        %703 = vmatpush1.msra.mxu0 %v661
        %704 = vmatprep.subr.mxu0 0.0
        %705 = vmatpush1.msra.mxu0 %v662
        %706 = vmatprep.subr.mxu0 0.0
        %707 = vmatpush1.msra.mxu0 %v663
        %708 = vmatprep.subr.mxu0 0.0
        %709 = vmatpush1.msra.mxu0 %v664
        %710 = vmatprep.subr.mxu0 0.0
        %711 = vmatpush1.msra.mxu0 %v665
        %712 = vmatprep.subr.mxu0 0.0
        %713 = vmatpush1.msra.mxu0 %v666
        %714 = vmatprep.subr.mxu0 0.0
        %715 = vmatpush1.msra.mxu0 %v667
        %716 = vmatprep.subr.mxu0 0.0
        %717 = vmatpush1.msra.mxu0 %v668
        %718 = vmatprep.subr.mxu0 0.0
        %719 = vmatpush1.msra.mxu0 %v669
        %720 = vmatprep.subr.mxu0 0.0
        %721 = vmatpush1.msra.mxu0 %v670
        %722 = vmatprep.subr.mxu0 0.0
        %723 = vmatpush1.msra.mxu0 %v671
        %724 = vmatprep.subr.mxu0 0.0
        %725 = vmatpush1.msra.mxu0 %v672
        %726 = vmatprep.subr.mxu0 0.0
        %727 = vmatpush1.msra.mxu0 %v673
        %728 = vmatprep.subr.mxu0 0.0
        %729 = vmatpush1.msra.mxu0 %v674
        %730 = vmatprep.subr.mxu0 0.0
        %731 = vmatpush1.msra.mxu0 %v675
        %732 = vmatprep.subr.mxu0 0.0
        %733 = vmatpush1.msra.mxu0 %v676
        %734 = vmatprep.subr.mxu0 0.0
        %735 = vmatpush1.msra.mxu0 %v677
        %736 = vmatprep.subr.mxu0 0.0
        %737 = vmatpush1.msra.mxu0 %v678
        %738 = vmatprep.subr.mxu0 0.0
        %739 = vmatpush1.msra.mxu0 %v679
        %740 = vmatprep.subr.mxu0 0.0
        %741 = vmatpush1.msra.mxu0 %v680
        %742 = vmatprep.subr.mxu0 0.0
        %743 = vmatpush1.msra.mxu0 %v681
        %744 = vmatprep.subr.mxu0 0.0
        %745 = vmatpush1.msra.mxu0 %v682
        %746 = vmatprep.subr.mxu0 0.0
        %747 = vmatpush1.msra.mxu0 %v683
        %748 = vmatprep.mubr.f32.mxu0 %v520
        %749 = vmatmul.mubr.f32.gmra.mrb[0].mxu0 %v293
        %v750 = vpop.f32.mrb[0].mxu0
        %v751 = vadd.f32 0.0, %v750
        %v752 = vpop.f32.mrb[0].mxu0
        %753 = vdwg.mxu0
        %v754 = vlaneseq
        %v755 = vshrl.u32 %v754, 7
        %v756 = vsub.s32 0, %v755
        %v757 = vrot.slane %v376, %v756
        %v758 = vmul.f32 %v751, %v757
        %v759 = vadd.f32 %v596, %v758
        %vm760 = vmand %vm436, %vm605
        %vm761 = vmand %vm760, %vm610
        %v762 = vadd.s32 %v447, %v613
        %v763 = vsel %vm761, %v762, 4294967295
        %v764 = vlaneseq
        %v765 = vshrl.u32 %v764, 7
        %v766 = vsub.s32 0, %v765
        %v767 = vrot.slane %v763, %v766
        %vm768 = vcmp.eq.s32.totalorder %v391, %v767
        %vm769 = vcmp.eq.s32.totalorder %v392, %v767
        %vm770 = vcmp.eq.s32.totalorder %v393, %v767
        %vm771 = vcmp.eq.s32.totalorder %v394, %v767
        %vm772 = vcmp.eq.s32.totalorder %v395, %v767
        %vm773 = vcmp.eq.s32.totalorder %v396, %v767
        %vm774 = vcmp.eq.s32.totalorder %v397, %v767
        %vm775 = vcmp.eq.s32.totalorder %v398, %v767
        %vm776 = vcmp.eq.s32.totalorder %v399, %v767
        %vm777 = vcmp.eq.s32.totalorder %v400, %v767
        %vm778 = vcmp.eq.s32.totalorder %v401, %v767
        %vm779 = vcmp.eq.s32.totalorder %v402, %v767
        %vm780 = vcmp.eq.s32.totalorder %v403, %v767
        %vm781 = vcmp.eq.s32.totalorder %v404, %v767
        %vm782 = vcmp.eq.s32.totalorder %v405, %v767
        %vm783 = vcmp.eq.s32.totalorder %v406, %v767
        %vm784 = vcmp.eq.s32.totalorder %v407, %v767
        %vm785 = vcmp.eq.s32.totalorder %v408, %v767
        %vm786 = vcmp.eq.s32.totalorder %v409, %v767
        %vm787 = vcmp.eq.s32.totalorder %v410, %v767
        %vm788 = vcmp.eq.s32.totalorder %v411, %v767
        %vm789 = vcmp.eq.s32.totalorder %v412, %v767
        %vm790 = vcmp.eq.s32.totalorder %v413, %v767
        %vm791 = vcmp.eq.s32.totalorder %v414, %v767
        %vm792 = vcmp.eq.s32.totalorder %v415, %v767
        %vm793 = vcmp.eq.s32.totalorder %v416, %v767
        %vm794 = vcmp.eq.s32.totalorder %v417, %v767
        %vm795 = vcmp.eq.s32.totalorder %v418, %v767
        %vm796 = vcmp.eq.s32.totalorder %v419, %v767
        %vm797 = vcmp.eq.s32.totalorder %v420, %v767
        %vm798 = vcmp.eq.s32.totalorder %v421, %v767
        %vm799 = vcmp.eq.s32.totalorder %v422, %v767
        %v800 = vsel %vm768, 1.0, 0.0
        %v801 = vsel %vm769, 1.0, 0.0
        %v802 = vsel %vm770, 1.0, 0.0
        %v803 = vsel %vm771, 1.0, 0.0
        %v804 = vsel %vm772, 1.0, 0.0
        %v805 = vsel %vm773, 1.0, 0.0
        %v806 = vsel %vm774, 1.0, 0.0
        %v807 = vsel %vm775, 1.0, 0.0
        %v808 = vsel %vm776, 1.0, 0.0
        %v809 = vsel %vm777, 1.0, 0.0
        %v810 = vsel %vm778, 1.0, 0.0
        %v811 = vsel %vm779, 1.0, 0.0
        %v812 = vsel %vm780, 1.0, 0.0
        %v813 = vsel %vm781, 1.0, 0.0
        %v814 = vsel %vm782, 1.0, 0.0
        %v815 = vsel %vm783, 1.0, 0.0
        %v816 = vsel %vm784, 1.0, 0.0
        %v817 = vsel %vm785, 1.0, 0.0
        %v818 = vsel %vm786, 1.0, 0.0
        %v819 = vsel %vm787, 1.0, 0.0
        %v820 = vsel %vm788, 1.0, 0.0
        %v821 = vsel %vm789, 1.0, 0.0
        %v822 = vsel %vm790, 1.0, 0.0
        %v823 = vsel %vm791, 1.0, 0.0
        %v824 = vsel %vm792, 1.0, 0.0
        %v825 = vsel %vm793, 1.0, 0.0
        %v826 = vsel %vm794, 1.0, 0.0
        %v827 = vsel %vm795, 1.0, 0.0
        %v828 = vsel %vm796, 1.0, 0.0
        %v829 = vsel %vm797, 1.0, 0.0
        %v830 = vsel %vm798, 1.0, 0.0
        %v831 = vsel %vm799, 1.0, 0.0
        %832 = vmatprep.subr.mxu0 0.0
        %833 = vmatpush1.msra.mxu0 %v800
        %834 = vmatprep.subr.mxu0 0.0
        %835 = vmatpush1.msra.mxu0 %v801
        %836 = vmatprep.subr.mxu0 0.0
        %837 = vmatpush1.msra.mxu0 %v802
        %838 = vmatprep.subr.mxu0 0.0
        %839 = vmatpush1.msra.mxu0 %v803
        %840 = vmatprep.subr.mxu0 0.0
        %841 = vmatpush1.msra.mxu0 %v804
        %842 = vmatprep.subr.mxu0 0.0
        %843 = vmatpush1.msra.mxu0 %v805
        %844 = vmatprep.subr.mxu0 0.0
        %845 = vmatpush1.msra.mxu0 %v806
        %846 = vmatprep.subr.mxu0 0.0
        %847 = vmatpush1.msra.mxu0 %v807
        %848 = vmatprep.subr.mxu0 0.0
        %849 = vmatpush1.msra.mxu0 %v808
        %850 = vmatprep.subr.mxu0 0.0
        %851 = vmatpush1.msra.mxu0 %v809
        %852 = vmatprep.subr.mxu0 0.0
        %853 = vmatpush1.msra.mxu0 %v810
        %854 = vmatprep.subr.mxu0 0.0
        %855 = vmatpush1.msra.mxu0 %v811
        %856 = vmatprep.subr.mxu0 0.0
        %857 = vmatpush1.msra.mxu0 %v812
        %858 = vmatprep.subr.mxu0 0.0
        %859 = vmatpush1.msra.mxu0 %v813
        %860 = vmatprep.subr.mxu0 0.0
        %861 = vmatpush1.msra.mxu0 %v814
        %862 = vmatprep.subr.mxu0 0.0
        %863 = vmatpush1.msra.mxu0 %v815
        %864 = vmatprep.subr.mxu0 0.0
        %865 = vmatpush1.msra.mxu0 %v816
        %866 = vmatprep.subr.mxu0 0.0
        %867 = vmatpush1.msra.mxu0 %v817
        %868 = vmatprep.subr.mxu0 0.0
        %869 = vmatpush1.msra.mxu0 %v818
        %870 = vmatprep.subr.mxu0 0.0
        %871 = vmatpush1.msra.mxu0 %v819
        %872 = vmatprep.subr.mxu0 0.0
        %873 = vmatpush1.msra.mxu0 %v820
        %874 = vmatprep.subr.mxu0 0.0
        %875 = vmatpush1.msra.mxu0 %v821
        %876 = vmatprep.subr.mxu0 0.0
        %877 = vmatpush1.msra.mxu0 %v822
        %878 = vmatprep.subr.mxu0 0.0
        %879 = vmatpush1.msra.mxu0 %v823
        %880 = vmatprep.subr.mxu0 0.0
        %881 = vmatpush1.msra.mxu0 %v824
        %882 = vmatprep.subr.mxu0 0.0
        %883 = vmatpush1.msra.mxu0 %v825
        %884 = vmatprep.subr.mxu0 0.0
        %885 = vmatpush1.msra.mxu0 %v826
        %886 = vmatprep.subr.mxu0 0.0
        %887 = vmatpush1.msra.mxu0 %v827
        %888 = vmatprep.subr.mxu0 0.0
        %889 = vmatpush1.msra.mxu0 %v828
        %890 = vmatprep.subr.mxu0 0.0
        %891 = vmatpush1.msra.mxu0 %v829
        %892 = vmatprep.subr.mxu0 0.0
        %893 = vmatpush1.msra.mxu0 %v830
        %894 = vmatprep.subr.mxu0 0.0
        %895 = vmatpush1.msra.mxu0 %v831
        %896 = vmatprep.mubr.f32.mxu0 %v520
        %897 = vmatmul.mubr.f32.gmra.mrb[0].mxu0 %v293
        %v898 = vpop.f32.mrb[0].mxu0
        %v899 = vadd.f32 0.0, %v898
        %v900 = vpop.f32.mrb[0].mxu0
        %901 = vdwg.mxu0
        %v902 = vlaneseq
        %v903 = vshrl.u32 %v902, 7
        %v904 = vsub.s32 0, %v903
        %v905 = vrot.slane %v378, %v904
        %v906 = vmul.f32 %v899, %v905
        %v907 = vadd.f32 %v759, %v906
        %vm908 = vmand %vm601, %vm440
        %vm909 = vmand %vm908, %vm445
        %v910 = vadd.s32 %v612, %v448
        %v911 = vsel %vm909, %v910, 4294967295
        %v912 = vlaneseq
        %v913 = vshrl.u32 %v912, 7
        %v914 = vsub.s32 0, %v913
        %v915 = vrot.slane %v911, %v914
        %vm916 = vcmp.eq.s32.totalorder %v391, %v915
        %vm917 = vcmp.eq.s32.totalorder %v392, %v915
        %vm918 = vcmp.eq.s32.totalorder %v393, %v915
        %vm919 = vcmp.eq.s32.totalorder %v394, %v915
        %vm920 = vcmp.eq.s32.totalorder %v395, %v915
        %vm921 = vcmp.eq.s32.totalorder %v396, %v915
        %vm922 = vcmp.eq.s32.totalorder %v397, %v915
        %vm923 = vcmp.eq.s32.totalorder %v398, %v915
        %vm924 = vcmp.eq.s32.totalorder %v399, %v915
        %vm925 = vcmp.eq.s32.totalorder %v400, %v915
        %vm926 = vcmp.eq.s32.totalorder %v401, %v915
        %vm927 = vcmp.eq.s32.totalorder %v402, %v915
        %vm928 = vcmp.eq.s32.totalorder %v403, %v915
        %vm929 = vcmp.eq.s32.totalorder %v404, %v915
        %vm930 = vcmp.eq.s32.totalorder %v405, %v915
        %vm931 = vcmp.eq.s32.totalorder %v406, %v915
        %vm932 = vcmp.eq.s32.totalorder %v407, %v915
        %vm933 = vcmp.eq.s32.totalorder %v408, %v915
        %vm934 = vcmp.eq.s32.totalorder %v409, %v915
        %vm935 = vcmp.eq.s32.totalorder %v410, %v915
        %vm936 = vcmp.eq.s32.totalorder %v411, %v915
        %vm937 = vcmp.eq.s32.totalorder %v412, %v915
        %vm938 = vcmp.eq.s32.totalorder %v413, %v915
        %vm939 = vcmp.eq.s32.totalorder %v414, %v915
        %vm940 = vcmp.eq.s32.totalorder %v415, %v915
        %vm941 = vcmp.eq.s32.totalorder %v416, %v915
        %vm942 = vcmp.eq.s32.totalorder %v417, %v915
        %vm943 = vcmp.eq.s32.totalorder %v418, %v915
        %vm944 = vcmp.eq.s32.totalorder %v419, %v915
        %vm945 = vcmp.eq.s32.totalorder %v420, %v915
        %vm946 = vcmp.eq.s32.totalorder %v421, %v915
        %vm947 = vcmp.eq.s32.totalorder %v422, %v915
        %v948 = vsel %vm916, 1.0, 0.0
        %v949 = vsel %vm917, 1.0, 0.0
        %v950 = vsel %vm918, 1.0, 0.0
        %v951 = vsel %vm919, 1.0, 0.0
        %v952 = vsel %vm920, 1.0, 0.0
        %v953 = vsel %vm921, 1.0, 0.0
        %v954 = vsel %vm922, 1.0, 0.0
        %v955 = vsel %vm923, 1.0, 0.0
        %v956 = vsel %vm924, 1.0, 0.0
        %v957 = vsel %vm925, 1.0, 0.0
        %v958 = vsel %vm926, 1.0, 0.0
        %v959 = vsel %vm927, 1.0, 0.0
        %v960 = vsel %vm928, 1.0, 0.0
        %v961 = vsel %vm929, 1.0, 0.0
        %v962 = vsel %vm930, 1.0, 0.0
        %v963 = vsel %vm931, 1.0, 0.0
        %v964 = vsel %vm932, 1.0, 0.0
        %v965 = vsel %vm933, 1.0, 0.0
        %v966 = vsel %vm934, 1.0, 0.0
        %v967 = vsel %vm935, 1.0, 0.0
        %v968 = vsel %vm936, 1.0, 0.0
        %v969 = vsel %vm937, 1.0, 0.0
        %v970 = vsel %vm938, 1.0, 0.0
        %v971 = vsel %vm939, 1.0, 0.0
        %v972 = vsel %vm940, 1.0, 0.0
        %v973 = vsel %vm941, 1.0, 0.0
        %v974 = vsel %vm942, 1.0, 0.0
        %v975 = vsel %vm943, 1.0, 0.0
        %v976 = vsel %vm944, 1.0, 0.0
        %v977 = vsel %vm945, 1.0, 0.0
        %v978 = vsel %vm946, 1.0, 0.0
        %v979 = vsel %vm947, 1.0, 0.0
        %980 = vmatprep.subr.mxu0 0.0
        %981 = vmatpush1.msra.mxu0 %v948
        %982 = vmatprep.subr.mxu0 0.0
        %983 = vmatpush1.msra.mxu0 %v949
        %984 = vmatprep.subr.mxu0 0.0
        %985 = vmatpush1.msra.mxu0 %v950
        %986 = vmatprep.subr.mxu0 0.0
        %987 = vmatpush1.msra.mxu0 %v951
        %988 = vmatprep.subr.mxu0 0.0
        %989 = vmatpush1.msra.mxu0 %v952
        %990 = vmatprep.subr.mxu0 0.0
        %991 = vmatpush1.msra.mxu0 %v953
        %992 = vmatprep.subr.mxu0 0.0
        %993 = vmatpush1.msra.mxu0 %v954
        %994 = vmatprep.subr.mxu0 0.0
        %995 = vmatpush1.msra.mxu0 %v955
        %996 = vmatprep.subr.mxu0 0.0
        %997 = vmatpush1.msra.mxu0 %v956
        %998 = vmatprep.subr.mxu0 0.0
        %999 = vmatpush1.msra.mxu0 %v957
        %1000 = vmatprep.subr.mxu0 0.0
        %1001 = vmatpush1.msra.mxu0 %v958
        %1002 = vmatprep.subr.mxu0 0.0
        %1003 = vmatpush1.msra.mxu0 %v959
        %1004 = vmatprep.subr.mxu0 0.0
        %1005 = vmatpush1.msra.mxu0 %v960
        %1006 = vmatprep.subr.mxu0 0.0
        %1007 = vmatpush1.msra.mxu0 %v961
        %1008 = vmatprep.subr.mxu0 0.0
        %1009 = vmatpush1.msra.mxu0 %v962
        %1010 = vmatprep.subr.mxu0 0.0
        %1011 = vmatpush1.msra.mxu0 %v963
        %1012 = vmatprep.subr.mxu0 0.0
        %1013 = vmatpush1.msra.mxu0 %v964
        %1014 = vmatprep.subr.mxu0 0.0
        %1015 = vmatpush1.msra.mxu0 %v965
        %1016 = vmatprep.subr.mxu0 0.0
        %1017 = vmatpush1.msra.mxu0 %v966
        %1018 = vmatprep.subr.mxu0 0.0
        %1019 = vmatpush1.msra.mxu0 %v967
        %1020 = vmatprep.subr.mxu0 0.0
        %1021 = vmatpush1.msra.mxu0 %v968
        %1022 = vmatprep.subr.mxu0 0.0
        %1023 = vmatpush1.msra.mxu0 %v969
        %1024 = vmatprep.subr.mxu0 0.0
        %1025 = vmatpush1.msra.mxu0 %v970
        %1026 = vmatprep.subr.mxu0 0.0
        %1027 = vmatpush1.msra.mxu0 %v971
        %1028 = vmatprep.subr.mxu0 0.0
        %1029 = vmatpush1.msra.mxu0 %v972
        %1030 = vmatprep.subr.mxu0 0.0
        %1031 = vmatpush1.msra.mxu0 %v973
        %1032 = vmatprep.subr.mxu0 0.0
        %1033 = vmatpush1.msra.mxu0 %v974
        %1034 = vmatprep.subr.mxu0 0.0
        %1035 = vmatpush1.msra.mxu0 %v975
        %1036 = vmatprep.subr.mxu0 0.0
        %1037 = vmatpush1.msra.mxu0 %v976
        %1038 = vmatprep.subr.mxu0 0.0
        %1039 = vmatpush1.msra.mxu0 %v977
        %1040 = vmatprep.subr.mxu0 0.0
        %1041 = vmatpush1.msra.mxu0 %v978
        %1042 = vmatprep.subr.mxu0 0.0
        %1043 = vmatpush1.msra.mxu0 %v979
        %1044 = vmatprep.mubr.f32.mxu0 %v520
        %1045 = vmatmul.mubr.f32.gmra.mrb[0].mxu0 %v293
        %v1046 = vpop.f32.mrb[0].mxu0
        %v1047 = vadd.f32 0.0, %v1046
        %v1048 = vpop.f32.mrb[0].mxu0
        %1049 = vdwg.mxu0
        %v1050 = vlaneseq
        %v1051 = vshrl.u32 %v1050, 7
        %v1052 = vsub.s32 0, %v1051
        %v1053 = vrot.slane %v380, %v1052
        %v1054 = vmul.f32 %v1047, %v1053
        %v1055 = vadd.f32 %v907, %v1054
        %v1056 = vlaneseq
        %v1057 = vshrl.u32 %v1056, 7
        %v1058 = vsub.s32 1, %v1057
        %v1059 = vrot.slane %v450, %v1058
        %vm1060 = vcmp.eq.s32.totalorder %v391, %v1059
        %vm1061 = vcmp.eq.s32.totalorder %v392, %v1059
        %vm1062 = vcmp.eq.s32.totalorder %v393, %v1059
        %vm1063 = vcmp.eq.s32.totalorder %v394, %v1059
        %vm1064 = vcmp.eq.s32.totalorder %v395, %v1059
        %vm1065 = vcmp.eq.s32.totalorder %v396, %v1059
        %vm1066 = vcmp.eq.s32.totalorder %v397, %v1059
        %vm1067 = vcmp.eq.s32.totalorder %v398, %v1059
        %vm1068 = vcmp.eq.s32.totalorder %v399, %v1059
        %vm1069 = vcmp.eq.s32.totalorder %v400, %v1059
        %vm1070 = vcmp.eq.s32.totalorder %v401, %v1059
        %vm1071 = vcmp.eq.s32.totalorder %v402, %v1059
        %vm1072 = vcmp.eq.s32.totalorder %v403, %v1059
        %vm1073 = vcmp.eq.s32.totalorder %v404, %v1059
        %vm1074 = vcmp.eq.s32.totalorder %v405, %v1059
        %vm1075 = vcmp.eq.s32.totalorder %v406, %v1059
        %vm1076 = vcmp.eq.s32.totalorder %v407, %v1059
        %vm1077 = vcmp.eq.s32.totalorder %v408, %v1059
        %vm1078 = vcmp.eq.s32.totalorder %v409, %v1059
        %vm1079 = vcmp.eq.s32.totalorder %v410, %v1059
        %vm1080 = vcmp.eq.s32.totalorder %v411, %v1059
        %vm1081 = vcmp.eq.s32.totalorder %v412, %v1059
        %vm1082 = vcmp.eq.s32.totalorder %v413, %v1059
        %vm1083 = vcmp.eq.s32.totalorder %v414, %v1059
        %vm1084 = vcmp.eq.s32.totalorder %v415, %v1059
        %vm1085 = vcmp.eq.s32.totalorder %v416, %v1059
        %vm1086 = vcmp.eq.s32.totalorder %v417, %v1059
        %vm1087 = vcmp.eq.s32.totalorder %v418, %v1059
        %vm1088 = vcmp.eq.s32.totalorder %v419, %v1059
        %vm1089 = vcmp.eq.s32.totalorder %v420, %v1059
        %vm1090 = vcmp.eq.s32.totalorder %v421, %v1059
        %vm1091 = vcmp.eq.s32.totalorder %v422, %v1059
        %v1092 = vsel %vm1060, 1.0, 0.0
        %v1093 = vsel %vm1061, 1.0, 0.0
        %v1094 = vsel %vm1062, 1.0, 0.0
        %v1095 = vsel %vm1063, 1.0, 0.0
        %v1096 = vsel %vm1064, 1.0, 0.0
        %v1097 = vsel %vm1065, 1.0, 0.0
        %v1098 = vsel %vm1066, 1.0, 0.0
        %v1099 = vsel %vm1067, 1.0, 0.0
        %v1100 = vsel %vm1068, 1.0, 0.0
        %v1101 = vsel %vm1069, 1.0, 0.0
        %v1102 = vsel %vm1070, 1.0, 0.0
        %v1103 = vsel %vm1071, 1.0, 0.0
        %v1104 = vsel %vm1072, 1.0, 0.0
        %v1105 = vsel %vm1073, 1.0, 0.0
        %v1106 = vsel %vm1074, 1.0, 0.0
        %v1107 = vsel %vm1075, 1.0, 0.0
        %v1108 = vsel %vm1076, 1.0, 0.0
        %v1109 = vsel %vm1077, 1.0, 0.0
        %v1110 = vsel %vm1078, 1.0, 0.0
        %v1111 = vsel %vm1079, 1.0, 0.0
        %v1112 = vsel %vm1080, 1.0, 0.0
        %v1113 = vsel %vm1081, 1.0, 0.0
        %v1114 = vsel %vm1082, 1.0, 0.0
        %v1115 = vsel %vm1083, 1.0, 0.0
        %v1116 = vsel %vm1084, 1.0, 0.0
        %v1117 = vsel %vm1085, 1.0, 0.0
        %v1118 = vsel %vm1086, 1.0, 0.0
        %v1119 = vsel %vm1087, 1.0, 0.0
        %v1120 = vsel %vm1088, 1.0, 0.0
        %v1121 = vsel %vm1089, 1.0, 0.0
        %v1122 = vsel %vm1090, 1.0, 0.0
        %v1123 = vsel %vm1091, 1.0, 0.0
        %1124 = vmatprep.subr.mxu0 0.0
        %1125 = vmatpush1.msra.mxu0 %v1092
        %1126 = vmatprep.subr.mxu0 0.0
        %1127 = vmatpush1.msra.mxu0 %v1093
        %1128 = vmatprep.subr.mxu0 0.0
        %1129 = vmatpush1.msra.mxu0 %v1094
        %1130 = vmatprep.subr.mxu0 0.0
        %1131 = vmatpush1.msra.mxu0 %v1095
        %1132 = vmatprep.subr.mxu0 0.0
        %1133 = vmatpush1.msra.mxu0 %v1096
        %1134 = vmatprep.subr.mxu0 0.0
        %1135 = vmatpush1.msra.mxu0 %v1097
        %1136 = vmatprep.subr.mxu0 0.0
        %1137 = vmatpush1.msra.mxu0 %v1098
        %1138 = vmatprep.subr.mxu0 0.0
        %1139 = vmatpush1.msra.mxu0 %v1099
        %1140 = vmatprep.subr.mxu0 0.0
        %1141 = vmatpush1.msra.mxu0 %v1100
        %1142 = vmatprep.subr.mxu0 0.0
        %1143 = vmatpush1.msra.mxu0 %v1101
        %1144 = vmatprep.subr.mxu0 0.0
        %1145 = vmatpush1.msra.mxu0 %v1102
        %1146 = vmatprep.subr.mxu0 0.0
        %1147 = vmatpush1.msra.mxu0 %v1103
        %1148 = vmatprep.subr.mxu0 0.0
        %1149 = vmatpush1.msra.mxu0 %v1104
        %1150 = vmatprep.subr.mxu0 0.0
        %1151 = vmatpush1.msra.mxu0 %v1105
        %1152 = vmatprep.subr.mxu0 0.0
        %1153 = vmatpush1.msra.mxu0 %v1106
        %1154 = vmatprep.subr.mxu0 0.0
        %1155 = vmatpush1.msra.mxu0 %v1107
        %1156 = vmatprep.subr.mxu0 0.0
        %1157 = vmatpush1.msra.mxu0 %v1108
        %1158 = vmatprep.subr.mxu0 0.0
        %1159 = vmatpush1.msra.mxu0 %v1109
        %1160 = vmatprep.subr.mxu0 0.0
        %1161 = vmatpush1.msra.mxu0 %v1110
        %1162 = vmatprep.subr.mxu0 0.0
        %1163 = vmatpush1.msra.mxu0 %v1111
        %1164 = vmatprep.subr.mxu0 0.0
        %1165 = vmatpush1.msra.mxu0 %v1112
        %1166 = vmatprep.subr.mxu0 0.0
        %1167 = vmatpush1.msra.mxu0 %v1113
        %1168 = vmatprep.subr.mxu0 0.0
        %1169 = vmatpush1.msra.mxu0 %v1114
        %1170 = vmatprep.subr.mxu0 0.0
        %1171 = vmatpush1.msra.mxu0 %v1115
        %1172 = vmatprep.subr.mxu0 0.0
        %1173 = vmatpush1.msra.mxu0 %v1116
        %1174 = vmatprep.subr.mxu0 0.0
        %1175 = vmatpush1.msra.mxu0 %v1117
        %1176 = vmatprep.subr.mxu0 0.0
        %1177 = vmatpush1.msra.mxu0 %v1118
        %1178 = vmatprep.subr.mxu0 0.0
        %1179 = vmatpush1.msra.mxu0 %v1119
        %1180 = vmatprep.subr.mxu0 0.0
        %1181 = vmatpush1.msra.mxu0 %v1120
        %1182 = vmatprep.subr.mxu0 0.0
        %1183 = vmatpush1.msra.mxu0 %v1121
        %1184 = vmatprep.subr.mxu0 0.0
        %1185 = vmatpush1.msra.mxu0 %v1122
        %1186 = vmatprep.subr.mxu0 0.0
        %1187 = vmatpush1.msra.mxu0 %v1123
        %1188 = vmatprep.mubr.f32.mxu0 %v520
        %1189 = vmatmul.mubr.f32.gmra.mrb[0].mxu0 %v293
        %v1190 = vpop.f32.mrb[0].mxu0
        %v1191 = vadd.f32 0.0, %v1190
        %v1192 = vpop.f32.mrb[0].mxu0
        %1193 = vdwg.mxu0
        %v1194 = vlaneseq
        %v1195 = vshrl.u32 %v1194, 7
        %v1196 = vsub.s32 1, %v1195
        %v1197 = vrot.slane %v359, %v1196
        %v1198 = vmul.f32 %v1191, %v1197
        %v1199 = vlaneseq
        %v1200 = vshrl.u32 %v1199, 7
        %v1201 = vsub.s32 1, %v1200
        %v1202 = vrot.slane %v615, %v1201
        %vm1203 = vcmp.eq.s32.totalorder %v391, %v1202
        %vm1204 = vcmp.eq.s32.totalorder %v392, %v1202
        %vm1205 = vcmp.eq.s32.totalorder %v393, %v1202
        %vm1206 = vcmp.eq.s32.totalorder %v394, %v1202
        %vm1207 = vcmp.eq.s32.totalorder %v395, %v1202
        %vm1208 = vcmp.eq.s32.totalorder %v396, %v1202
        %vm1209 = vcmp.eq.s32.totalorder %v397, %v1202
        %vm1210 = vcmp.eq.s32.totalorder %v398, %v1202
        %vm1211 = vcmp.eq.s32.totalorder %v399, %v1202
        %vm1212 = vcmp.eq.s32.totalorder %v400, %v1202
        %vm1213 = vcmp.eq.s32.totalorder %v401, %v1202
        %vm1214 = vcmp.eq.s32.totalorder %v402, %v1202
        %vm1215 = vcmp.eq.s32.totalorder %v403, %v1202
        %vm1216 = vcmp.eq.s32.totalorder %v404, %v1202
        %vm1217 = vcmp.eq.s32.totalorder %v405, %v1202
        %vm1218 = vcmp.eq.s32.totalorder %v406, %v1202
        %vm1219 = vcmp.eq.s32.totalorder %v407, %v1202
        %vm1220 = vcmp.eq.s32.totalorder %v408, %v1202
        %vm1221 = vcmp.eq.s32.totalorder %v409, %v1202
        %vm1222 = vcmp.eq.s32.totalorder %v410, %v1202
        %vm1223 = vcmp.eq.s32.totalorder %v411, %v1202
        %vm1224 = vcmp.eq.s32.totalorder %v412, %v1202
        %vm1225 = vcmp.eq.s32.totalorder %v413, %v1202
        %vm1226 = vcmp.eq.s32.totalorder %v414, %v1202
        %vm1227 = vcmp.eq.s32.totalorder %v415, %v1202
        %vm1228 = vcmp.eq.s32.totalorder %v416, %v1202
        %vm1229 = vcmp.eq.s32.totalorder %v417, %v1202
        %vm1230 = vcmp.eq.s32.totalorder %v418, %v1202
        %vm1231 = vcmp.eq.s32.totalorder %v419, %v1202
        %vm1232 = vcmp.eq.s32.totalorder %v420, %v1202
        %vm1233 = vcmp.eq.s32.totalorder %v421, %v1202
        %vm1234 = vcmp.eq.s32.totalorder %v422, %v1202
        %v1235 = vsel %vm1203, 1.0, 0.0
        %v1236 = vsel %vm1204, 1.0, 0.0
        %v1237 = vsel %vm1205, 1.0, 0.0
        %v1238 = vsel %vm1206, 1.0, 0.0
        %v1239 = vsel %vm1207, 1.0, 0.0
        %v1240 = vsel %vm1208, 1.0, 0.0
        %v1241 = vsel %vm1209, 1.0, 0.0
        %v1242 = vsel %vm1210, 1.0, 0.0
        %v1243 = vsel %vm1211, 1.0, 0.0
        %v1244 = vsel %vm1212, 1.0, 0.0
        %v1245 = vsel %vm1213, 1.0, 0.0
        %v1246 = vsel %vm1214, 1.0, 0.0
        %v1247 = vsel %vm1215, 1.0, 0.0
        %v1248 = vsel %vm1216, 1.0, 0.0
        %v1249 = vsel %vm1217, 1.0, 0.0
        %v1250 = vsel %vm1218, 1.0, 0.0
        %v1251 = vsel %vm1219, 1.0, 0.0
        %v1252 = vsel %vm1220, 1.0, 0.0
        %v1253 = vsel %vm1221, 1.0, 0.0
        %v1254 = vsel %vm1222, 1.0, 0.0
        %v1255 = vsel %vm1223, 1.0, 0.0
        %v1256 = vsel %vm1224, 1.0, 0.0
        %v1257 = vsel %vm1225, 1.0, 0.0
        %v1258 = vsel %vm1226, 1.0, 0.0
        %v1259 = vsel %vm1227, 1.0, 0.0
        %v1260 = vsel %vm1228, 1.0, 0.0
        %v1261 = vsel %vm1229, 1.0, 0.0
        %v1262 = vsel %vm1230, 1.0, 0.0
        %v1263 = vsel %vm1231, 1.0, 0.0
        %v1264 = vsel %vm1232, 1.0, 0.0
        %v1265 = vsel %vm1233, 1.0, 0.0
        %v1266 = vsel %vm1234, 1.0, 0.0
        %1267 = vmatprep.subr.mxu0 0.0
        %1268 = vmatpush1.msra.mxu0 %v1235
        %1269 = vmatprep.subr.mxu0 0.0
        %1270 = vmatpush1.msra.mxu0 %v1236
        %1271 = vmatprep.subr.mxu0 0.0
        %1272 = vmatpush1.msra.mxu0 %v1237
        %1273 = vmatprep.subr.mxu0 0.0
        %1274 = vmatpush1.msra.mxu0 %v1238
        %1275 = vmatprep.subr.mxu0 0.0
        %1276 = vmatpush1.msra.mxu0 %v1239
        %1277 = vmatprep.subr.mxu0 0.0
        %1278 = vmatpush1.msra.mxu0 %v1240
        %1279 = vmatprep.subr.mxu0 0.0
        %1280 = vmatpush1.msra.mxu0 %v1241
        %1281 = vmatprep.subr.mxu0 0.0
        %1282 = vmatpush1.msra.mxu0 %v1242
        %1283 = vmatprep.subr.mxu0 0.0
        %1284 = vmatpush1.msra.mxu0 %v1243
        %1285 = vmatprep.subr.mxu0 0.0
        %1286 = vmatpush1.msra.mxu0 %v1244
        %1287 = vmatprep.subr.mxu0 0.0
        %1288 = vmatpush1.msra.mxu0 %v1245
        %1289 = vmatprep.subr.mxu0 0.0
        %1290 = vmatpush1.msra.mxu0 %v1246
        %1291 = vmatprep.subr.mxu0 0.0
        %1292 = vmatpush1.msra.mxu0 %v1247
        %1293 = vmatprep.subr.mxu0 0.0
        %1294 = vmatpush1.msra.mxu0 %v1248
        %1295 = vmatprep.subr.mxu0 0.0
        %1296 = vmatpush1.msra.mxu0 %v1249
        %1297 = vmatprep.subr.mxu0 0.0
        %1298 = vmatpush1.msra.mxu0 %v1250
        %1299 = vmatprep.subr.mxu0 0.0
        %1300 = vmatpush1.msra.mxu0 %v1251
        %1301 = vmatprep.subr.mxu0 0.0
        %1302 = vmatpush1.msra.mxu0 %v1252
        %1303 = vmatprep.subr.mxu0 0.0
        %1304 = vmatpush1.msra.mxu0 %v1253
        %1305 = vmatprep.subr.mxu0 0.0
        %1306 = vmatpush1.msra.mxu0 %v1254
        %1307 = vmatprep.subr.mxu0 0.0
        %1308 = vmatpush1.msra.mxu0 %v1255
        %1309 = vmatprep.subr.mxu0 0.0
        %1310 = vmatpush1.msra.mxu0 %v1256
        %1311 = vmatprep.subr.mxu0 0.0
        %1312 = vmatpush1.msra.mxu0 %v1257
        %1313 = vmatprep.subr.mxu0 0.0
        %1314 = vmatpush1.msra.mxu0 %v1258
        %1315 = vmatprep.subr.mxu0 0.0
        %1316 = vmatpush1.msra.mxu0 %v1259
        %1317 = vmatprep.subr.mxu0 0.0
        %1318 = vmatpush1.msra.mxu0 %v1260
        %1319 = vmatprep.subr.mxu0 0.0
        %1320 = vmatpush1.msra.mxu0 %v1261
        %1321 = vmatprep.subr.mxu0 0.0
        %1322 = vmatpush1.msra.mxu0 %v1262
        %1323 = vmatprep.subr.mxu0 0.0
        %1324 = vmatpush1.msra.mxu0 %v1263
        %1325 = vmatprep.subr.mxu0 0.0
        %1326 = vmatpush1.msra.mxu0 %v1264
        %1327 = vmatprep.subr.mxu0 0.0
        %1328 = vmatpush1.msra.mxu0 %v1265
        %1329 = vmatprep.subr.mxu0 0.0
        %1330 = vmatpush1.msra.mxu0 %v1266
        %1331 = vmatprep.mubr.f32.mxu0 %v520
        %1332 = vmatmul.mubr.f32.gmra.mrb[0].mxu0 %v293
        %v1333 = vpop.f32.mrb[0].mxu0
        %v1334 = vadd.f32 0.0, %v1333
        %v1335 = vpop.f32.mrb[0].mxu0
        %1336 = vdwg.mxu0
        %v1337 = vlaneseq
        %v1338 = vshrl.u32 %v1337, 7
        %v1339 = vsub.s32 1, %v1338
        %v1340 = vrot.slane %v376, %v1339
        %v1341 = vmul.f32 %v1334, %v1340
        %v1342 = vadd.f32 %v1198, %v1341
        %v1343 = vlaneseq
        %v1344 = vshrl.u32 %v1343, 7
        %v1345 = vsub.s32 1, %v1344
        %v1346 = vrot.slane %v763, %v1345
        %vm1347 = vcmp.eq.s32.totalorder %v391, %v1346
        %vm1348 = vcmp.eq.s32.totalorder %v392, %v1346
        %vm1349 = vcmp.eq.s32.totalorder %v393, %v1346
        %vm1350 = vcmp.eq.s32.totalorder %v394, %v1346
        %vm1351 = vcmp.eq.s32.totalorder %v395, %v1346
        %vm1352 = vcmp.eq.s32.totalorder %v396, %v1346
        %vm1353 = vcmp.eq.s32.totalorder %v397, %v1346
        %vm1354 = vcmp.eq.s32.totalorder %v398, %v1346
        %vm1355 = vcmp.eq.s32.totalorder %v399, %v1346
        %vm1356 = vcmp.eq.s32.totalorder %v400, %v1346
        %vm1357 = vcmp.eq.s32.totalorder %v401, %v1346
        %vm1358 = vcmp.eq.s32.totalorder %v402, %v1346
        %vm1359 = vcmp.eq.s32.totalorder %v403, %v1346
        %vm1360 = vcmp.eq.s32.totalorder %v404, %v1346
        %vm1361 = vcmp.eq.s32.totalorder %v405, %v1346
        %vm1362 = vcmp.eq.s32.totalorder %v406, %v1346
        %vm1363 = vcmp.eq.s32.totalorder %v407, %v1346
        %vm1364 = vcmp.eq.s32.totalorder %v408, %v1346
        %vm1365 = vcmp.eq.s32.totalorder %v409, %v1346
        %vm1366 = vcmp.eq.s32.totalorder %v410, %v1346
        %vm1367 = vcmp.eq.s32.totalorder %v411, %v1346
        %vm1368 = vcmp.eq.s32.totalorder %v412, %v1346
        %vm1369 = vcmp.eq.s32.totalorder %v413, %v1346
        %vm1370 = vcmp.eq.s32.totalorder %v414, %v1346
        %vm1371 = vcmp.eq.s32.totalorder %v415, %v1346
        %vm1372 = vcmp.eq.s32.totalorder %v416, %v1346
        %vm1373 = vcmp.eq.s32.totalorder %v417, %v1346
        %vm1374 = vcmp.eq.s32.totalorder %v418, %v1346
        %vm1375 = vcmp.eq.s32.totalorder %v419, %v1346
        %vm1376 = vcmp.eq.s32.totalorder %v420, %v1346
        %vm1377 = vcmp.eq.s32.totalorder %v421, %v1346
        %vm1378 = vcmp.eq.s32.totalorder %v422, %v1346
        %v1379 = vsel %vm1347, 1.0, 0.0
        %v1380 = vsel %vm1348, 1.0, 0.0
        %v1381 = vsel %vm1349, 1.0, 0.0
        %v1382 = vsel %vm1350, 1.0, 0.0
        %v1383 = vsel %vm1351, 1.0, 0.0
        %v1384 = vsel %vm1352, 1.0, 0.0
        %v1385 = vsel %vm1353, 1.0, 0.0
        %v1386 = vsel %vm1354, 1.0, 0.0
        %v1387 = vsel %vm1355, 1.0, 0.0
        %v1388 = vsel %vm1356, 1.0, 0.0
        %v1389 = vsel %vm1357, 1.0, 0.0
        %v1390 = vsel %vm1358, 1.0, 0.0
        %v1391 = vsel %vm1359, 1.0, 0.0
        %v1392 = vsel %vm1360, 1.0, 0.0
        %v1393 = vsel %vm1361, 1.0, 0.0
        %v1394 = vsel %vm1362, 1.0, 0.0
        %v1395 = vsel %vm1363, 1.0, 0.0
        %v1396 = vsel %vm1364, 1.0, 0.0
        %v1397 = vsel %vm1365, 1.0, 0.0
        %v1398 = vsel %vm1366, 1.0, 0.0
        %v1399 = vsel %vm1367, 1.0, 0.0
        %v1400 = vsel %vm1368, 1.0, 0.0
        %v1401 = vsel %vm1369, 1.0, 0.0
        %v1402 = vsel %vm1370, 1.0, 0.0
        %v1403 = vsel %vm1371, 1.0, 0.0
        %v1404 = vsel %vm1372, 1.0, 0.0
        %v1405 = vsel %vm1373, 1.0, 0.0
        %v1406 = vsel %vm1374, 1.0, 0.0
        %v1407 = vsel %vm1375, 1.0, 0.0
        %v1408 = vsel %vm1376, 1.0, 0.0
        %v1409 = vsel %vm1377, 1.0, 0.0
        %v1410 = vsel %vm1378, 1.0, 0.0
        %1411 = vmatprep.subr.mxu0 0.0
        %1412 = vmatpush1.msra.mxu0 %v1379
        %1413 = vmatprep.subr.mxu0 0.0
        %1414 = vmatpush1.msra.mxu0 %v1380
        %1415 = vmatprep.subr.mxu0 0.0
        %1416 = vmatpush1.msra.mxu0 %v1381
        %1417 = vmatprep.subr.mxu0 0.0
        %1418 = vmatpush1.msra.mxu0 %v1382
        %1419 = vmatprep.subr.mxu0 0.0
        %1420 = vmatpush1.msra.mxu0 %v1383
        %1421 = vmatprep.subr.mxu0 0.0
        %1422 = vmatpush1.msra.mxu0 %v1384
        %1423 = vmatprep.subr.mxu0 0.0
        %1424 = vmatpush1.msra.mxu0 %v1385
        %1425 = vmatprep.subr.mxu0 0.0
        %1426 = vmatpush1.msra.mxu0 %v1386
        %1427 = vmatprep.subr.mxu0 0.0
        %1428 = vmatpush1.msra.mxu0 %v1387
        %1429 = vmatprep.subr.mxu0 0.0
        %1430 = vmatpush1.msra.mxu0 %v1388
        %1431 = vmatprep.subr.mxu0 0.0
        %1432 = vmatpush1.msra.mxu0 %v1389
        %1433 = vmatprep.subr.mxu0 0.0
        %1434 = vmatpush1.msra.mxu0 %v1390
        %1435 = vmatprep.subr.mxu0 0.0
        %1436 = vmatpush1.msra.mxu0 %v1391
        %1437 = vmatprep.subr.mxu0 0.0
        %1438 = vmatpush1.msra.mxu0 %v1392
        %1439 = vmatprep.subr.mxu0 0.0
        %1440 = vmatpush1.msra.mxu0 %v1393
        %1441 = vmatprep.subr.mxu0 0.0
        %1442 = vmatpush1.msra.mxu0 %v1394
        %1443 = vmatprep.subr.mxu0 0.0
        %1444 = vmatpush1.msra.mxu0 %v1395
        %1445 = vmatprep.subr.mxu0 0.0
        %1446 = vmatpush1.msra.mxu0 %v1396
        %1447 = vmatprep.subr.mxu0 0.0
        %1448 = vmatpush1.msra.mxu0 %v1397
        %1449 = vmatprep.subr.mxu0 0.0
        %1450 = vmatpush1.msra.mxu0 %v1398
        %1451 = vmatprep.subr.mxu0 0.0
        %1452 = vmatpush1.msra.mxu0 %v1399
        %1453 = vmatprep.subr.mxu0 0.0
        %1454 = vmatpush1.msra.mxu0 %v1400
        %1455 = vmatprep.subr.mxu0 0.0
        %1456 = vmatpush1.msra.mxu0 %v1401
        %1457 = vmatprep.subr.mxu0 0.0
        %1458 = vmatpush1.msra.mxu0 %v1402
        %1459 = vmatprep.subr.mxu0 0.0
        %1460 = vmatpush1.msra.mxu0 %v1403
        %1461 = vmatprep.subr.mxu0 0.0
        %1462 = vmatpush1.msra.mxu0 %v1404
        %1463 = vmatprep.subr.mxu0 0.0
        %1464 = vmatpush1.msra.mxu0 %v1405
        %1465 = vmatprep.subr.mxu0 0.0
        %1466 = vmatpush1.msra.mxu0 %v1406
        %1467 = vmatprep.subr.mxu0 0.0
        %1468 = vmatpush1.msra.mxu0 %v1407
        %1469 = vmatprep.subr.mxu0 0.0
        %1470 = vmatpush1.msra.mxu0 %v1408
        %1471 = vmatprep.subr.mxu0 0.0
        %1472 = vmatpush1.msra.mxu0 %v1409
        %1473 = vmatprep.subr.mxu0 0.0
        %1474 = vmatpush1.msra.mxu0 %v1410
        %1475 = vmatprep.mubr.f32.mxu0 %v520
        %1476 = vmatmul.mubr.f32.gmra.mrb[0].mxu0 %v293
        %v1477 = vpop.f32.mrb[0].mxu0
        %v1478 = vadd.f32 0.0, %v1477
        %v1479 = vpop.f32.mrb[0].mxu0
        %1480 = vdwg.mxu0
        %v1481 = vlaneseq
        %v1482 = vshrl.u32 %v1481, 7
        %v1483 = vsub.s32 1, %v1482
        %v1484 = vrot.slane %v378, %v1483
        %v1485 = vmul.f32 %v1478, %v1484
        %v1486 = vadd.f32 %v1342, %v1485
        %v1487 = vlaneseq
        %v1488 = vshrl.u32 %v1487, 7
        %v1489 = vsub.s32 1, %v1488
        %v1490 = vrot.slane %v911, %v1489
        %vm1491 = vcmp.eq.s32.totalorder %v391, %v1490
        %vm1492 = vcmp.eq.s32.totalorder %v392, %v1490
        %vm1493 = vcmp.eq.s32.totalorder %v393, %v1490
        %vm1494 = vcmp.eq.s32.totalorder %v394, %v1490
        %vm1495 = vcmp.eq.s32.totalorder %v395, %v1490
        %vm1496 = vcmp.eq.s32.totalorder %v396, %v1490
        %vm1497 = vcmp.eq.s32.totalorder %v397, %v1490
        %vm1498 = vcmp.eq.s32.totalorder %v398, %v1490
        %vm1499 = vcmp.eq.s32.totalorder %v399, %v1490
        %vm1500 = vcmp.eq.s32.totalorder %v400, %v1490
        %vm1501 = vcmp.eq.s32.totalorder %v401, %v1490
        %vm1502 = vcmp.eq.s32.totalorder %v402, %v1490
        %vm1503 = vcmp.eq.s32.totalorder %v403, %v1490
        %vm1504 = vcmp.eq.s32.totalorder %v404, %v1490
        %vm1505 = vcmp.eq.s32.totalorder %v405, %v1490
        %vm1506 = vcmp.eq.s32.totalorder %v406, %v1490
        %vm1507 = vcmp.eq.s32.totalorder %v407, %v1490
        %vm1508 = vcmp.eq.s32.totalorder %v408, %v1490
        %vm1509 = vcmp.eq.s32.totalorder %v409, %v1490
        %vm1510 = vcmp.eq.s32.totalorder %v410, %v1490
        %vm1511 = vcmp.eq.s32.totalorder %v411, %v1490
        %vm1512 = vcmp.eq.s32.totalorder %v412, %v1490
        %vm1513 = vcmp.eq.s32.totalorder %v413, %v1490
        %vm1514 = vcmp.eq.s32.totalorder %v414, %v1490
        %vm1515 = vcmp.eq.s32.totalorder %v415, %v1490
        %vm1516 = vcmp.eq.s32.totalorder %v416, %v1490
        %vm1517 = vcmp.eq.s32.totalorder %v417, %v1490
        %vm1518 = vcmp.eq.s32.totalorder %v418, %v1490
        %vm1519 = vcmp.eq.s32.totalorder %v419, %v1490
        %vm1520 = vcmp.eq.s32.totalorder %v420, %v1490
        %vm1521 = vcmp.eq.s32.totalorder %v421, %v1490
        %vm1522 = vcmp.eq.s32.totalorder %v422, %v1490
        %v1523 = vsel %vm1491, 1.0, 0.0
        %v1524 = vsel %vm1492, 1.0, 0.0
        %v1525 = vsel %vm1493, 1.0, 0.0
        %v1526 = vsel %vm1494, 1.0, 0.0
        %v1527 = vsel %vm1495, 1.0, 0.0
        %v1528 = vsel %vm1496, 1.0, 0.0
        %v1529 = vsel %vm1497, 1.0, 0.0
        %v1530 = vsel %vm1498, 1.0, 0.0
        %v1531 = vsel %vm1499, 1.0, 0.0
        %v1532 = vsel %vm1500, 1.0, 0.0
        %v1533 = vsel %vm1501, 1.0, 0.0
        %v1534 = vsel %vm1502, 1.0, 0.0
        %v1535 = vsel %vm1503, 1.0, 0.0
        %v1536 = vsel %vm1504, 1.0, 0.0
        %v1537 = vsel %vm1505, 1.0, 0.0
        %v1538 = vsel %vm1506, 1.0, 0.0
        %v1539 = vsel %vm1507, 1.0, 0.0
        %v1540 = vsel %vm1508, 1.0, 0.0
        %v1541 = vsel %vm1509, 1.0, 0.0
        %v1542 = vsel %vm1510, 1.0, 0.0
        %v1543 = vsel %vm1511, 1.0, 0.0
        %v1544 = vsel %vm1512, 1.0, 0.0
        %v1545 = vsel %vm1513, 1.0, 0.0
        %v1546 = vsel %vm1514, 1.0, 0.0
        %v1547 = vsel %vm1515, 1.0, 0.0
        %v1548 = vsel %vm1516, 1.0, 0.0
        %v1549 = vsel %vm1517, 1.0, 0.0
        %v1550 = vsel %vm1518, 1.0, 0.0
        %v1551 = vsel %vm1519, 1.0, 0.0
        %v1552 = vsel %vm1520, 1.0, 0.0
        %v1553 = vsel %vm1521, 1.0, 0.0
        %v1554 = vsel %vm1522, 1.0, 0.0
        %1555 = vmatprep.subr.mxu0 0.0
        %1556 = vmatpush1.msra.mxu0 %v1523
        %1557 = vmatprep.subr.mxu0 0.0
        %1558 = vmatpush1.msra.mxu0 %v1524
        %1559 = vmatprep.subr.mxu0 0.0
        %1560 = vmatpush1.msra.mxu0 %v1525
        %1561 = vmatprep.subr.mxu0 0.0
        %1562 = vmatpush1.msra.mxu0 %v1526
        %1563 = vmatprep.subr.mxu0 0.0
        %1564 = vmatpush1.msra.mxu0 %v1527
        %1565 = vmatprep.subr.mxu0 0.0
        %1566 = vmatpush1.msra.mxu0 %v1528
        %1567 = vmatprep.subr.mxu0 0.0
        %1568 = vmatpush1.msra.mxu0 %v1529
        %1569 = vmatprep.subr.mxu0 0.0
        %1570 = vmatpush1.msra.mxu0 %v1530
        %1571 = vmatprep.subr.mxu0 0.0
        %1572 = vmatpush1.msra.mxu0 %v1531
        %1573 = vmatprep.subr.mxu0 0.0
        %1574 = vmatpush1.msra.mxu0 %v1532
        %1575 = vmatprep.subr.mxu0 0.0
        %1576 = vmatpush1.msra.mxu0 %v1533
        %1577 = vmatprep.subr.mxu0 0.0
        %1578 = vmatpush1.msra.mxu0 %v1534
        %1579 = vmatprep.subr.mxu0 0.0
        %1580 = vmatpush1.msra.mxu0 %v1535
        %1581 = vmatprep.subr.mxu0 0.0
        %1582 = vmatpush1.msra.mxu0 %v1536
        %1583 = vmatprep.subr.mxu0 0.0
        %1584 = vmatpush1.msra.mxu0 %v1537
        %1585 = vmatprep.subr.mxu0 0.0
        %1586 = vmatpush1.msra.mxu0 %v1538
        %1587 = vmatprep.subr.mxu0 0.0
        %1588 = vmatpush1.msra.mxu0 %v1539
        %1589 = vmatprep.subr.mxu0 0.0
        %1590 = vmatpush1.msra.mxu0 %v1540
        %1591 = vmatprep.subr.mxu0 0.0
        %1592 = vmatpush1.msra.mxu0 %v1541
        %1593 = vmatprep.subr.mxu0 0.0
        %1594 = vmatpush1.msra.mxu0 %v1542
        %1595 = vmatprep.subr.mxu0 0.0
        %1596 = vmatpush1.msra.mxu0 %v1543
        %1597 = vmatprep.subr.mxu0 0.0
        %1598 = vmatpush1.msra.mxu0 %v1544
        %1599 = vmatprep.subr.mxu0 0.0
        %1600 = vmatpush1.msra.mxu0 %v1545
        %1601 = vmatprep.subr.mxu0 0.0
        %1602 = vmatpush1.msra.mxu0 %v1546
        %1603 = vmatprep.subr.mxu0 0.0
        %1604 = vmatpush1.msra.mxu0 %v1547
        %1605 = vmatprep.subr.mxu0 0.0
        %1606 = vmatpush1.msra.mxu0 %v1548
        %1607 = vmatprep.subr.mxu0 0.0
        %1608 = vmatpush1.msra.mxu0 %v1549
        %1609 = vmatprep.subr.mxu0 0.0
        %1610 = vmatpush1.msra.mxu0 %v1550
        %1611 = vmatprep.subr.mxu0 0.0
        %1612 = vmatpush1.msra.mxu0 %v1551
        %1613 = vmatprep.subr.mxu0 0.0
        %1614 = vmatpush1.msra.mxu0 %v1552
        %1615 = vmatprep.subr.mxu0 0.0
        %1616 = vmatpush1.msra.mxu0 %v1553
        %1617 = vmatprep.subr.mxu0 0.0
        %1618 = vmatpush1.msra.mxu0 %v1554
        %1619 = vmatprep.mubr.f32.mxu0 %v520
        %1620 = vmatmul.mubr.f32.gmra.mrb[0].mxu0 %v293
        %v1621 = vpop.f32.mrb[0].mxu0
        %v1622 = vadd.f32 0.0, %v1621
        %v1623 = vpop.f32.mrb[0].mxu0
        %1624 = vdwg.mxu0
        %v1625 = vlaneseq
        %v1626 = vshrl.u32 %v1625, 7
        %v1627 = vsub.s32 1, %v1626
        %v1628 = vrot.slane %v380, %v1627
        %v1629 = vmul.f32 %v1622, %v1628
        %v1630 = vadd.f32 %v1486, %v1629
        %vm1631 = vcmask 31744
        %v1633 = vsel %vm1631, %v424, 0
        %vm1635 = vcmask 1043456
        %v1637 = vsel %vm1635, %v1630, 0
        %1639 = vmatprep.subr.mxu0 0.0
        %1640 = vmatpush1.msra.mxu0 %v1637
        %1641 = vmatprep.subr.mxu0 0.0
        %1642 = vmatpush1.msra.mxu0 0.0
        %1643 = vmatprep.subr.mxu0 0.0
        %1644 = vmatpush1.msra.mxu0 0.0
        %1645 = vmatprep.subr.mxu0 0.0
        %1646 = vmatpush1.msra.mxu0 0.0
        %1647 = vmatprep.subr.mxu0 0.0
        %1648 = vmatpush1.msra.mxu0 0.0
        %1649 = vmatprep.subr.mxu0 0.0
        %1650 = vmatpush1.msra.mxu0 0.0
        %1651 = vmatprep.subr.mxu0 0.0
        %1652 = vmatpush1.msra.mxu0 0.0
        %1653 = vmatprep.subr.mxu0 0.0
        %1654 = vmatpush1.msra.mxu0 0.0
        %1655 = vmatprep.subr.mxu0 0.0
        %1656 = vmatpush1.msra.mxu0 0.0
        %1657 = vmatprep.subr.mxu0 0.0
        %1658 = vmatpush1.msra.mxu0 0.0
        %1659 = vmatprep.subr.mxu0 0.0
        %1660 = vmatpush1.msra.mxu0 0.0
        %1661 = vmatprep.subr.mxu0 0.0
        %1662 = vmatpush1.msra.mxu0 0.0
        %1663 = vmatprep.subr.mxu0 0.0
        %1664 = vmatpush1.msra.mxu0 0.0
        %1665 = vmatprep.subr.mxu0 0.0
        %1666 = vmatpush1.msra.mxu0 0.0
        %1667 = vmatprep.subr.mxu0 0.0
        %1668 = vmatpush1.msra.mxu0 0.0
        %1669 = vmatprep.subr.mxu0 0.0
        %1670 = vmatpush1.msra.mxu0 0.0
        %1671 = vmatprep.subr.mxu0 0.0
        %1672 = vmatpush1.msra.mxu0 0.0
        %1673 = vmatprep.subr.mxu0 0.0
        %1674 = vmatpush1.msra.mxu0 0.0
        %1675 = vmatprep.subr.mxu0 0.0
        %1676 = vmatpush1.msra.mxu0 0.0
        %1677 = vmatprep.subr.mxu0 0.0
        %1678 = vmatpush1.msra.mxu0 0.0
        %1679 = vmatprep.subr.mxu0 0.0
        %1680 = vmatpush1.msra.mxu0 0.0
        %1681 = vmatprep.subr.mxu0 0.0
        %1682 = vmatpush1.msra.mxu0 0.0
        %1683 = vmatprep.subr.mxu0 0.0
        %1684 = vmatpush1.msra.mxu0 0.0
        %1685 = vmatprep.subr.mxu0 0.0
        %1686 = vmatpush1.msra.mxu0 0.0
        %1687 = vmatprep.subr.mxu0 0.0
        %1688 = vmatpush1.msra.mxu0 0.0
        %1689 = vmatprep.subr.mxu0 0.0
        %1690 = vmatpush1.msra.mxu0 0.0
        %1691 = vmatprep.subr.mxu0 0.0
        %1692 = vmatpush1.msra.mxu0 0.0
        %1693 = vmatprep.subr.mxu0 0.0
        %1694 = vmatpush1.msra.mxu0 0.0
        %1695 = vmatprep.subr.mxu0 0.0
        %1696 = vmatpush1.msra.mxu0 0.0
        %1697 = vmatprep.subr.mxu0 0.0
        %1698 = vmatpush1.msra.mxu0 0.0
        %1699 = vmatprep.subr.mxu0 0.0
        %1700 = vmatpush1.msra.mxu0 0.0
        %1701 = vmatprep.subr.mxu0 0.0
        %1702 = vmatpush1.msra.mxu0 0.0
        %1703 = vmatprep.mubr.f32.mxu0 0.0
        %1704 = vmatmul.mubr.f32.gmra.mrb[0].mxu0 %v1633
        %v1705 = vpop.f32.mrb[0].mxu0
        %v1706 = vadd.f32 0.0, %v1705
        %v1707 = vpop.f32.mrb[0].mxu0
        %1708 = vdwg.mxu0
        %v1710 = vsel %vm1631, %v423, 0
        %v1713 = vsel %vm1635, %v1055, 0
        %1715 = vmatprep.subr.mxu0 0.0
        %1716 = vmatpush1.msra.mxu0 %v1713
        %1717 = vmatprep.subr.mxu0 0.0
        %1718 = vmatpush1.msra.mxu0 0.0
        %1719 = vmatprep.subr.mxu0 0.0
        %1720 = vmatpush1.msra.mxu0 0.0
        %1721 = vmatprep.subr.mxu0 0.0
        %1722 = vmatpush1.msra.mxu0 0.0
        %1723 = vmatprep.subr.mxu0 0.0
        %1724 = vmatpush1.msra.mxu0 0.0
        %1725 = vmatprep.subr.mxu0 0.0
        %1726 = vmatpush1.msra.mxu0 0.0
        %1727 = vmatprep.subr.mxu0 0.0
        %1728 = vmatpush1.msra.mxu0 0.0
        %1729 = vmatprep.subr.mxu0 0.0
        %1730 = vmatpush1.msra.mxu0 0.0
        %1731 = vmatprep.subr.mxu0 0.0
        %1732 = vmatpush1.msra.mxu0 0.0
        %1733 = vmatprep.subr.mxu0 0.0
        %1734 = vmatpush1.msra.mxu0 0.0
        %1735 = vmatprep.subr.mxu0 0.0
        %1736 = vmatpush1.msra.mxu0 0.0
        %1737 = vmatprep.subr.mxu0 0.0
        %1738 = vmatpush1.msra.mxu0 0.0
        %1739 = vmatprep.subr.mxu0 0.0
        %1740 = vmatpush1.msra.mxu0 0.0
        %1741 = vmatprep.subr.mxu0 0.0
        %1742 = vmatpush1.msra.mxu0 0.0
        %1743 = vmatprep.subr.mxu0 0.0
        %1744 = vmatpush1.msra.mxu0 0.0
        %1745 = vmatprep.subr.mxu0 0.0
        %1746 = vmatpush1.msra.mxu0 0.0
        %1747 = vmatprep.subr.mxu0 0.0
        %1748 = vmatpush1.msra.mxu0 0.0
        %1749 = vmatprep.subr.mxu0 0.0
        %1750 = vmatpush1.msra.mxu0 0.0
        %1751 = vmatprep.subr.mxu0 0.0
        %1752 = vmatpush1.msra.mxu0 0.0
        %1753 = vmatprep.subr.mxu0 0.0
        %1754 = vmatpush1.msra.mxu0 0.0
        %1755 = vmatprep.subr.mxu0 0.0
        %1756 = vmatpush1.msra.mxu0 0.0
        %1757 = vmatprep.subr.mxu0 0.0
        %1758 = vmatpush1.msra.mxu0 0.0
        %1759 = vmatprep.subr.mxu0 0.0
        %1760 = vmatpush1.msra.mxu0 0.0
        %1761 = vmatprep.subr.mxu0 0.0
        %1762 = vmatpush1.msra.mxu0 0.0
        %1763 = vmatprep.subr.mxu0 0.0
        %1764 = vmatpush1.msra.mxu0 0.0
        %1765 = vmatprep.subr.mxu0 0.0
        %1766 = vmatpush1.msra.mxu0 0.0
        %1767 = vmatprep.subr.mxu0 0.0
        %1768 = vmatpush1.msra.mxu0 0.0
        %1769 = vmatprep.subr.mxu0 0.0
        %1770 = vmatpush1.msra.mxu0 0.0
        %1771 = vmatprep.subr.mxu0 0.0
        %1772 = vmatpush1.msra.mxu0 0.0
        %1773 = vmatprep.subr.mxu0 0.0
        %1774 = vmatpush1.msra.mxu0 0.0
        %1775 = vmatprep.subr.mxu0 0.0
        %1776 = vmatpush1.msra.mxu0 0.0
        %1777 = vmatprep.subr.mxu0 0.0
        %1778 = vmatpush1.msra.mxu0 0.0
        %1779 = vmatprep.mubr.f32.mxu0 0.0
        %1780 = vmatmul.mubr.f32.gmra.mrb[0].mxu0 %v1710
        %v1781 = vpop.f32.mrb[0].mxu0
        %v1782 = vadd.f32 %v1706, %v1781
        %v1783 = vpop.f32.mrb[0].mxu0
        %1784 = vdwg.mxu0
        %v1785 = vlaneseq
        %v1786 = vshrl.u32 %v1785, 7
        %v1787 = vsub.s32 2, %v1786
        %v1788 = vrot.slane %v450, %v1787
        %vm1789 = vcmp.eq.s32.totalorder %v391, %v1788
        %vm1790 = vcmp.eq.s32.totalorder %v392, %v1788
        %vm1791 = vcmp.eq.s32.totalorder %v393, %v1788
        %vm1792 = vcmp.eq.s32.totalorder %v394, %v1788
        %vm1793 = vcmp.eq.s32.totalorder %v395, %v1788
        %vm1794 = vcmp.eq.s32.totalorder %v396, %v1788
        %vm1795 = vcmp.eq.s32.totalorder %v397, %v1788
        %vm1796 = vcmp.eq.s32.totalorder %v398, %v1788
        %vm1797 = vcmp.eq.s32.totalorder %v399, %v1788
        %vm1798 = vcmp.eq.s32.totalorder %v400, %v1788
        %vm1799 = vcmp.eq.s32.totalorder %v401, %v1788
        %vm1800 = vcmp.eq.s32.totalorder %v402, %v1788
        %vm1801 = vcmp.eq.s32.totalorder %v403, %v1788
        %vm1802 = vcmp.eq.s32.totalorder %v404, %v1788
        %vm1803 = vcmp.eq.s32.totalorder %v405, %v1788
        %vm1804 = vcmp.eq.s32.totalorder %v406, %v1788
        %vm1805 = vcmp.eq.s32.totalorder %v407, %v1788
        %vm1806 = vcmp.eq.s32.totalorder %v408, %v1788
        %vm1807 = vcmp.eq.s32.totalorder %v409, %v1788
        %vm1808 = vcmp.eq.s32.totalorder %v410, %v1788
        %vm1809 = vcmp.eq.s32.totalorder %v411, %v1788
        %vm1810 = vcmp.eq.s32.totalorder %v412, %v1788
        %vm1811 = vcmp.eq.s32.totalorder %v413, %v1788
        %vm1812 = vcmp.eq.s32.totalorder %v414, %v1788
        %vm1813 = vcmp.eq.s32.totalorder %v415, %v1788
        %vm1814 = vcmp.eq.s32.totalorder %v416, %v1788
        %vm1815 = vcmp.eq.s32.totalorder %v417, %v1788
        %vm1816 = vcmp.eq.s32.totalorder %v418, %v1788
        %vm1817 = vcmp.eq.s32.totalorder %v419, %v1788
        %vm1818 = vcmp.eq.s32.totalorder %v420, %v1788
        %vm1819 = vcmp.eq.s32.totalorder %v421, %v1788
        %vm1820 = vcmp.eq.s32.totalorder %v422, %v1788
        %v1821 = vsel %vm1789, 1.0, 0.0
        %v1822 = vsel %vm1790, 1.0, 0.0
        %v1823 = vsel %vm1791, 1.0, 0.0
        %v1824 = vsel %vm1792, 1.0, 0.0
        %v1825 = vsel %vm1793, 1.0, 0.0
        %v1826 = vsel %vm1794, 1.0, 0.0
        %v1827 = vsel %vm1795, 1.0, 0.0
        %v1828 = vsel %vm1796, 1.0, 0.0
        %v1829 = vsel %vm1797, 1.0, 0.0
        %v1830 = vsel %vm1798, 1.0, 0.0
        %v1831 = vsel %vm1799, 1.0, 0.0
        %v1832 = vsel %vm1800, 1.0, 0.0
        %v1833 = vsel %vm1801, 1.0, 0.0
        %v1834 = vsel %vm1802, 1.0, 0.0
        %v1835 = vsel %vm1803, 1.0, 0.0
        %v1836 = vsel %vm1804, 1.0, 0.0
        %v1837 = vsel %vm1805, 1.0, 0.0
        %v1838 = vsel %vm1806, 1.0, 0.0
        %v1839 = vsel %vm1807, 1.0, 0.0
        %v1840 = vsel %vm1808, 1.0, 0.0
        %v1841 = vsel %vm1809, 1.0, 0.0
        %v1842 = vsel %vm1810, 1.0, 0.0
        %v1843 = vsel %vm1811, 1.0, 0.0
        %v1844 = vsel %vm1812, 1.0, 0.0
        %v1845 = vsel %vm1813, 1.0, 0.0
        %v1846 = vsel %vm1814, 1.0, 0.0
        %v1847 = vsel %vm1815, 1.0, 0.0
        %v1848 = vsel %vm1816, 1.0, 0.0
        %v1849 = vsel %vm1817, 1.0, 0.0
        %v1850 = vsel %vm1818, 1.0, 0.0
        %v1851 = vsel %vm1819, 1.0, 0.0
        %v1852 = vsel %vm1820, 1.0, 0.0
        %1853 = vmatprep.subr.mxu0 0.0
        %1854 = vmatpush1.msra.mxu0 %v1821
        %1855 = vmatprep.subr.mxu0 0.0
        %1856 = vmatpush1.msra.mxu0 %v1822
        %1857 = vmatprep.subr.mxu0 0.0
        %1858 = vmatpush1.msra.mxu0 %v1823
        %1859 = vmatprep.subr.mxu0 0.0
        %1860 = vmatpush1.msra.mxu0 %v1824
        %1861 = vmatprep.subr.mxu0 0.0
        %1862 = vmatpush1.msra.mxu0 %v1825
        %1863 = vmatprep.subr.mxu0 0.0
        %1864 = vmatpush1.msra.mxu0 %v1826
        %1865 = vmatprep.subr.mxu0 0.0
        %1866 = vmatpush1.msra.mxu0 %v1827
        %1867 = vmatprep.subr.mxu0 0.0
        %1868 = vmatpush1.msra.mxu0 %v1828
        %1869 = vmatprep.subr.mxu0 0.0
        %1870 = vmatpush1.msra.mxu0 %v1829
        %1871 = vmatprep.subr.mxu0 0.0
        %1872 = vmatpush1.msra.mxu0 %v1830
        %1873 = vmatprep.subr.mxu0 0.0
        %1874 = vmatpush1.msra.mxu0 %v1831
        %1875 = vmatprep.subr.mxu0 0.0
        %1876 = vmatpush1.msra.mxu0 %v1832
        %1877 = vmatprep.subr.mxu0 0.0
        %1878 = vmatpush1.msra.mxu0 %v1833
        %1879 = vmatprep.subr.mxu0 0.0
        %1880 = vmatpush1.msra.mxu0 %v1834
        %1881 = vmatprep.subr.mxu0 0.0
        %1882 = vmatpush1.msra.mxu0 %v1835
        %1883 = vmatprep.subr.mxu0 0.0
        %1884 = vmatpush1.msra.mxu0 %v1836
        %1885 = vmatprep.subr.mxu0 0.0
        %1886 = vmatpush1.msra.mxu0 %v1837
        %1887 = vmatprep.subr.mxu0 0.0
        %1888 = vmatpush1.msra.mxu0 %v1838
        %1889 = vmatprep.subr.mxu0 0.0
        %1890 = vmatpush1.msra.mxu0 %v1839
        %1891 = vmatprep.subr.mxu0 0.0
        %1892 = vmatpush1.msra.mxu0 %v1840
        %1893 = vmatprep.subr.mxu0 0.0
        %1894 = vmatpush1.msra.mxu0 %v1841
        %1895 = vmatprep.subr.mxu0 0.0
        %1896 = vmatpush1.msra.mxu0 %v1842
        %1897 = vmatprep.subr.mxu0 0.0
        %1898 = vmatpush1.msra.mxu0 %v1843
        %1899 = vmatprep.subr.mxu0 0.0
        %1900 = vmatpush1.msra.mxu0 %v1844
        %1901 = vmatprep.subr.mxu0 0.0
        %1902 = vmatpush1.msra.mxu0 %v1845
        %1903 = vmatprep.subr.mxu0 0.0
        %1904 = vmatpush1.msra.mxu0 %v1846
        %1905 = vmatprep.subr.mxu0 0.0
        %1906 = vmatpush1.msra.mxu0 %v1847
        %1907 = vmatprep.subr.mxu0 0.0
        %1908 = vmatpush1.msra.mxu0 %v1848
        %1909 = vmatprep.subr.mxu0 0.0
        %1910 = vmatpush1.msra.mxu0 %v1849
        %1911 = vmatprep.subr.mxu0 0.0
        %1912 = vmatpush1.msra.mxu0 %v1850
        %1913 = vmatprep.subr.mxu0 0.0
        %1914 = vmatpush1.msra.mxu0 %v1851
        %1915 = vmatprep.subr.mxu0 0.0
        %1916 = vmatpush1.msra.mxu0 %v1852
        %1917 = vmatprep.mubr.f32.mxu0 %v520
        %1918 = vmatmul.mubr.f32.gmra.mrb[0].mxu0 %v293
        %v1919 = vpop.f32.mrb[0].mxu0
        %v1920 = vadd.f32 0.0, %v1919
        %v1921 = vpop.f32.mrb[0].mxu0
        %1922 = vdwg.mxu0
        %v1923 = vlaneseq
        %v1924 = vshrl.u32 %v1923, 7
        %v1925 = vsub.s32 2, %v1924
        %v1926 = vrot.slane %v359, %v1925
        %v1927 = vmul.f32 %v1920, %v1926
        %v1928 = vlaneseq
        %v1929 = vshrl.u32 %v1928, 7
        %v1930 = vsub.s32 2, %v1929
        %v1931 = vrot.slane %v615, %v1930
        %vm1932 = vcmp.eq.s32.totalorder %v391, %v1931
        %vm1933 = vcmp.eq.s32.totalorder %v392, %v1931
        %vm1934 = vcmp.eq.s32.totalorder %v393, %v1931
        %vm1935 = vcmp.eq.s32.totalorder %v394, %v1931
        %vm1936 = vcmp.eq.s32.totalorder %v395, %v1931
        %vm1937 = vcmp.eq.s32.totalorder %v396, %v1931
        %vm1938 = vcmp.eq.s32.totalorder %v397, %v1931
        %vm1939 = vcmp.eq.s32.totalorder %v398, %v1931
        %vm1940 = vcmp.eq.s32.totalorder %v399, %v1931
        %vm1941 = vcmp.eq.s32.totalorder %v400, %v1931
        %vm1942 = vcmp.eq.s32.totalorder %v401, %v1931
        %vm1943 = vcmp.eq.s32.totalorder %v402, %v1931
        %vm1944 = vcmp.eq.s32.totalorder %v403, %v1931
        %vm1945 = vcmp.eq.s32.totalorder %v404, %v1931
        %vm1946 = vcmp.eq.s32.totalorder %v405, %v1931
        %vm1947 = vcmp.eq.s32.totalorder %v406, %v1931
        %vm1948 = vcmp.eq.s32.totalorder %v407, %v1931
        %vm1949 = vcmp.eq.s32.totalorder %v408, %v1931
        %vm1950 = vcmp.eq.s32.totalorder %v409, %v1931
        %vm1951 = vcmp.eq.s32.totalorder %v410, %v1931
        %vm1952 = vcmp.eq.s32.totalorder %v411, %v1931
        %vm1953 = vcmp.eq.s32.totalorder %v412, %v1931
        %vm1954 = vcmp.eq.s32.totalorder %v413, %v1931
        %vm1955 = vcmp.eq.s32.totalorder %v414, %v1931
        %vm1956 = vcmp.eq.s32.totalorder %v415, %v1931
        %vm1957 = vcmp.eq.s32.totalorder %v416, %v1931
        %vm1958 = vcmp.eq.s32.totalorder %v417, %v1931
        %vm1959 = vcmp.eq.s32.totalorder %v418, %v1931
        %vm1960 = vcmp.eq.s32.totalorder %v419, %v1931
        %vm1961 = vcmp.eq.s32.totalorder %v420, %v1931
        %vm1962 = vcmp.eq.s32.totalorder %v421, %v1931
        %vm1963 = vcmp.eq.s32.totalorder %v422, %v1931
        %v1964 = vsel %vm1932, 1.0, 0.0
        %v1965 = vsel %vm1933, 1.0, 0.0
        %v1966 = vsel %vm1934, 1.0, 0.0
        %v1967 = vsel %vm1935, 1.0, 0.0
        %v1968 = vsel %vm1936, 1.0, 0.0
        %v1969 = vsel %vm1937, 1.0, 0.0
        %v1970 = vsel %vm1938, 1.0, 0.0
        %v1971 = vsel %vm1939, 1.0, 0.0
        %v1972 = vsel %vm1940, 1.0, 0.0
        %v1973 = vsel %vm1941, 1.0, 0.0
        %v1974 = vsel %vm1942, 1.0, 0.0
        %v1975 = vsel %vm1943, 1.0, 0.0
        %v1976 = vsel %vm1944, 1.0, 0.0
        %v1977 = vsel %vm1945, 1.0, 0.0
        %v1978 = vsel %vm1946, 1.0, 0.0
        %v1979 = vsel %vm1947, 1.0, 0.0
        %v1980 = vsel %vm1948, 1.0, 0.0
        %v1981 = vsel %vm1949, 1.0, 0.0
        %v1982 = vsel %vm1950, 1.0, 0.0
        %v1983 = vsel %vm1951, 1.0, 0.0
        %v1984 = vsel %vm1952, 1.0, 0.0
        %v1985 = vsel %vm1953, 1.0, 0.0
        %v1986 = vsel %vm1954, 1.0, 0.0
        %v1987 = vsel %vm1955, 1.0, 0.0
        %v1988 = vsel %vm1956, 1.0, 0.0
        %v1989 = vsel %vm1957, 1.0, 0.0
        %v1990 = vsel %vm1958, 1.0, 0.0
        %v1991 = vsel %vm1959, 1.0, 0.0
        %v1992 = vsel %vm1960, 1.0, 0.0
        %v1993 = vsel %vm1961, 1.0, 0.0
        %v1994 = vsel %vm1962, 1.0, 0.0
        %v1995 = vsel %vm1963, 1.0, 0.0
        %1996 = vmatprep.subr.mxu0 0.0
        %1997 = vmatpush1.msra.mxu0 %v1964
        %1998 = vmatprep.subr.mxu0 0.0
        %1999 = vmatpush1.msra.mxu0 %v1965
        %2000 = vmatprep.subr.mxu0 0.0
        %2001 = vmatpush1.msra.mxu0 %v1966
        %2002 = vmatprep.subr.mxu0 0.0
        %2003 = vmatpush1.msra.mxu0 %v1967
        %2004 = vmatprep.subr.mxu0 0.0
        %2005 = vmatpush1.msra.mxu0 %v1968
        %2006 = vmatprep.subr.mxu0 0.0
        %2007 = vmatpush1.msra.mxu0 %v1969
        %2008 = vmatprep.subr.mxu0 0.0
        %2009 = vmatpush1.msra.mxu0 %v1970
        %2010 = vmatprep.subr.mxu0 0.0
        %2011 = vmatpush1.msra.mxu0 %v1971
        %2012 = vmatprep.subr.mxu0 0.0
        %2013 = vmatpush1.msra.mxu0 %v1972
        %2014 = vmatprep.subr.mxu0 0.0
        %2015 = vmatpush1.msra.mxu0 %v1973
        %2016 = vmatprep.subr.mxu0 0.0
        %2017 = vmatpush1.msra.mxu0 %v1974
        %2018 = vmatprep.subr.mxu0 0.0
        %2019 = vmatpush1.msra.mxu0 %v1975
        %2020 = vmatprep.subr.mxu0 0.0
        %2021 = vmatpush1.msra.mxu0 %v1976
        %2022 = vmatprep.subr.mxu0 0.0
        %2023 = vmatpush1.msra.mxu0 %v1977
        %2024 = vmatprep.subr.mxu0 0.0
        %2025 = vmatpush1.msra.mxu0 %v1978
        %2026 = vmatprep.subr.mxu0 0.0
        %2027 = vmatpush1.msra.mxu0 %v1979
        %2028 = vmatprep.subr.mxu0 0.0
        %2029 = vmatpush1.msra.mxu0 %v1980
        %2030 = vmatprep.subr.mxu0 0.0
        %2031 = vmatpush1.msra.mxu0 %v1981
        %2032 = vmatprep.subr.mxu0 0.0
        %2033 = vmatpush1.msra.mxu0 %v1982
        %2034 = vmatprep.subr.mxu0 0.0
        %2035 = vmatpush1.msra.mxu0 %v1983
        %2036 = vmatprep.subr.mxu0 0.0
        %2037 = vmatpush1.msra.mxu0 %v1984
        %2038 = vmatprep.subr.mxu0 0.0
        %2039 = vmatpush1.msra.mxu0 %v1985
        %2040 = vmatprep.subr.mxu0 0.0
        %2041 = vmatpush1.msra.mxu0 %v1986
        %2042 = vmatprep.subr.mxu0 0.0
        %2043 = vmatpush1.msra.mxu0 %v1987
        %2044 = vmatprep.subr.mxu0 0.0
        %2045 = vmatpush1.msra.mxu0 %v1988
        %2046 = vmatprep.subr.mxu0 0.0
        %2047 = vmatpush1.msra.mxu0 %v1989
        %2048 = vmatprep.subr.mxu0 0.0
        %2049 = vmatpush1.msra.mxu0 %v1990
        %2050 = vmatprep.subr.mxu0 0.0
        %2051 = vmatpush1.msra.mxu0 %v1991
        %2052 = vmatprep.subr.mxu0 0.0
        %2053 = vmatpush1.msra.mxu0 %v1992
        %2054 = vmatprep.subr.mxu0 0.0
        %2055 = vmatpush1.msra.mxu0 %v1993
        %2056 = vmatprep.subr.mxu0 0.0
        %2057 = vmatpush1.msra.mxu0 %v1994
        %2058 = vmatprep.subr.mxu0 0.0
        %2059 = vmatpush1.msra.mxu0 %v1995
        %2060 = vmatprep.mubr.f32.mxu0 %v520
        %2061 = vmatmul.mubr.f32.gmra.mrb[0].mxu0 %v293
        %v2062 = vpop.f32.mrb[0].mxu0
        %v2063 = vadd.f32 0.0, %v2062
        %v2064 = vpop.f32.mrb[0].mxu0
        %2065 = vdwg.mxu0
        %v2066 = vlaneseq
        %v2067 = vshrl.u32 %v2066, 7
        %v2068 = vsub.s32 2, %v2067
        %v2069 = vrot.slane %v376, %v2068
        %v2070 = vmul.f32 %v2063, %v2069
        %v2071 = vadd.f32 %v1927, %v2070
        %v2072 = vlaneseq
        %v2073 = vshrl.u32 %v2072, 7
        %v2074 = vsub.s32 2, %v2073
        %v2075 = vrot.slane %v763, %v2074
        %vm2076 = vcmp.eq.s32.totalorder %v391, %v2075
        %vm2077 = vcmp.eq.s32.totalorder %v392, %v2075
        %vm2078 = vcmp.eq.s32.totalorder %v393, %v2075
        %vm2079 = vcmp.eq.s32.totalorder %v394, %v2075
        %vm2080 = vcmp.eq.s32.totalorder %v395, %v2075
        %vm2081 = vcmp.eq.s32.totalorder %v396, %v2075
        %vm2082 = vcmp.eq.s32.totalorder %v397, %v2075
        %vm2083 = vcmp.eq.s32.totalorder %v398, %v2075
        %vm2084 = vcmp.eq.s32.totalorder %v399, %v2075
        %vm2085 = vcmp.eq.s32.totalorder %v400, %v2075
        %vm2086 = vcmp.eq.s32.totalorder %v401, %v2075
        %vm2087 = vcmp.eq.s32.totalorder %v402, %v2075
        %vm2088 = vcmp.eq.s32.totalorder %v403, %v2075
        %vm2089 = vcmp.eq.s32.totalorder %v404, %v2075
        %vm2090 = vcmp.eq.s32.totalorder %v405, %v2075
        %vm2091 = vcmp.eq.s32.totalorder %v406, %v2075
        %vm2092 = vcmp.eq.s32.totalorder %v407, %v2075
        %vm2093 = vcmp.eq.s32.totalorder %v408, %v2075
        %vm2094 = vcmp.eq.s32.totalorder %v409, %v2075
        %vm2095 = vcmp.eq.s32.totalorder %v410, %v2075
        %vm2096 = vcmp.eq.s32.totalorder %v411, %v2075
        %vm2097 = vcmp.eq.s32.totalorder %v412, %v2075
        %vm2098 = vcmp.eq.s32.totalorder %v413, %v2075
        %vm2099 = vcmp.eq.s32.totalorder %v414, %v2075
        %vm2100 = vcmp.eq.s32.totalorder %v415, %v2075
        %vm2101 = vcmp.eq.s32.totalorder %v416, %v2075
        %vm2102 = vcmp.eq.s32.totalorder %v417, %v2075
        %vm2103 = vcmp.eq.s32.totalorder %v418, %v2075
        %vm2104 = vcmp.eq.s32.totalorder %v419, %v2075
        %vm2105 = vcmp.eq.s32.totalorder %v420, %v2075
        %vm2106 = vcmp.eq.s32.totalorder %v421, %v2075
        %vm2107 = vcmp.eq.s32.totalorder %v422, %v2075
        %v2108 = vsel %vm2076, 1.0, 0.0
        %v2109 = vsel %vm2077, 1.0, 0.0
        %v2110 = vsel %vm2078, 1.0, 0.0
        %v2111 = vsel %vm2079, 1.0, 0.0
        %v2112 = vsel %vm2080, 1.0, 0.0
        %v2113 = vsel %vm2081, 1.0, 0.0
        %v2114 = vsel %vm2082, 1.0, 0.0
        %v2115 = vsel %vm2083, 1.0, 0.0
        %v2116 = vsel %vm2084, 1.0, 0.0
        %v2117 = vsel %vm2085, 1.0, 0.0
        %v2118 = vsel %vm2086, 1.0, 0.0
        %v2119 = vsel %vm2087, 1.0, 0.0
        %v2120 = vsel %vm2088, 1.0, 0.0
        %v2121 = vsel %vm2089, 1.0, 0.0
        %v2122 = vsel %vm2090, 1.0, 0.0
        %v2123 = vsel %vm2091, 1.0, 0.0
        %v2124 = vsel %vm2092, 1.0, 0.0
        %v2125 = vsel %vm2093, 1.0, 0.0
        %v2126 = vsel %vm2094, 1.0, 0.0
        %v2127 = vsel %vm2095, 1.0, 0.0
        %v2128 = vsel %vm2096, 1.0, 0.0
        %v2129 = vsel %vm2097, 1.0, 0.0
        %v2130 = vsel %vm2098, 1.0, 0.0
        %v2131 = vsel %vm2099, 1.0, 0.0
        %v2132 = vsel %vm2100, 1.0, 0.0
        %v2133 = vsel %vm2101, 1.0, 0.0
        %v2134 = vsel %vm2102, 1.0, 0.0
        %v2135 = vsel %vm2103, 1.0, 0.0
        %v2136 = vsel %vm2104, 1.0, 0.0
        %v2137 = vsel %vm2105, 1.0, 0.0
        %v2138 = vsel %vm2106, 1.0, 0.0
        %v2139 = vsel %vm2107, 1.0, 0.0
        %2140 = vmatprep.subr.mxu0 0.0
        %2141 = vmatpush1.msra.mxu0 %v2108
        %2142 = vmatprep.subr.mxu0 0.0
        %2143 = vmatpush1.msra.mxu0 %v2109
        %2144 = vmatprep.subr.mxu0 0.0
        %2145 = vmatpush1.msra.mxu0 %v2110
        %2146 = vmatprep.subr.mxu0 0.0
        %2147 = vmatpush1.msra.mxu0 %v2111
        %2148 = vmatprep.subr.mxu0 0.0
        %2149 = vmatpush1.msra.mxu0 %v2112
        %2150 = vmatprep.subr.mxu0 0.0
        %2151 = vmatpush1.msra.mxu0 %v2113
        %2152 = vmatprep.subr.mxu0 0.0
        %2153 = vmatpush1.msra.mxu0 %v2114
        %2154 = vmatprep.subr.mxu0 0.0
        %2155 = vmatpush1.msra.mxu0 %v2115
        %2156 = vmatprep.subr.mxu0 0.0
        %2157 = vmatpush1.msra.mxu0 %v2116
        %2158 = vmatprep.subr.mxu0 0.0
        %2159 = vmatpush1.msra.mxu0 %v2117
        %2160 = vmatprep.subr.mxu0 0.0
        %2161 = vmatpush1.msra.mxu0 %v2118
        %2162 = vmatprep.subr.mxu0 0.0
        %2163 = vmatpush1.msra.mxu0 %v2119
        %2164 = vmatprep.subr.mxu0 0.0
        %2165 = vmatpush1.msra.mxu0 %v2120
        %2166 = vmatprep.subr.mxu0 0.0
        %2167 = vmatpush1.msra.mxu0 %v2121
        %2168 = vmatprep.subr.mxu0 0.0
        %2169 = vmatpush1.msra.mxu0 %v2122
        %2170 = vmatprep.subr.mxu0 0.0
        %2171 = vmatpush1.msra.mxu0 %v2123
        %2172 = vmatprep.subr.mxu0 0.0
        %2173 = vmatpush1.msra.mxu0 %v2124
        %2174 = vmatprep.subr.mxu0 0.0
        %2175 = vmatpush1.msra.mxu0 %v2125
        %2176 = vmatprep.subr.mxu0 0.0
        %2177 = vmatpush1.msra.mxu0 %v2126
        %2178 = vmatprep.subr.mxu0 0.0
        %2179 = vmatpush1.msra.mxu0 %v2127
        %2180 = vmatprep.subr.mxu0 0.0
        %2181 = vmatpush1.msra.mxu0 %v2128
        %2182 = vmatprep.subr.mxu0 0.0
        %2183 = vmatpush1.msra.mxu0 %v2129
        %2184 = vmatprep.subr.mxu0 0.0
        %2185 = vmatpush1.msra.mxu0 %v2130
        %2186 = vmatprep.subr.mxu0 0.0
        %2187 = vmatpush1.msra.mxu0 %v2131
        %2188 = vmatprep.subr.mxu0 0.0
        %2189 = vmatpush1.msra.mxu0 %v2132
        %2190 = vmatprep.subr.mxu0 0.0
        %2191 = vmatpush1.msra.mxu0 %v2133
        %2192 = vmatprep.subr.mxu0 0.0
        %2193 = vmatpush1.msra.mxu0 %v2134
        %2194 = vmatprep.subr.mxu0 0.0
        %2195 = vmatpush1.msra.mxu0 %v2135
        %2196 = vmatprep.subr.mxu0 0.0
        %2197 = vmatpush1.msra.mxu0 %v2136
        %2198 = vmatprep.subr.mxu0 0.0
        %2199 = vmatpush1.msra.mxu0 %v2137
        %2200 = vmatprep.subr.mxu0 0.0
        %2201 = vmatpush1.msra.mxu0 %v2138
        %2202 = vmatprep.subr.mxu0 0.0
        %2203 = vmatpush1.msra.mxu0 %v2139
        %2204 = vmatprep.mubr.f32.mxu0 %v520
        %2205 = vmatmul.mubr.f32.gmra.mrb[0].mxu0 %v293
        %v2206 = vpop.f32.mrb[0].mxu0
        %v2207 = vadd.f32 0.0, %v2206
        %v2208 = vpop.f32.mrb[0].mxu0
        %2209 = vdwg.mxu0
        %v2210 = vlaneseq
        %v2211 = vshrl.u32 %v2210, 7
        %v2212 = vsub.s32 2, %v2211
        %v2213 = vrot.slane %v378, %v2212
        %v2214 = vmul.f32 %v2207, %v2213
        %v2215 = vadd.f32 %v2071, %v2214
        %v2216 = vlaneseq
        %v2217 = vshrl.u32 %v2216, 7
        %v2218 = vsub.s32 2, %v2217
        %v2219 = vrot.slane %v911, %v2218
        %vm2220 = vcmp.eq.s32.totalorder %v391, %v2219
        %vm2221 = vcmp.eq.s32.totalorder %v392, %v2219
        %vm2222 = vcmp.eq.s32.totalorder %v393, %v2219
        %vm2223 = vcmp.eq.s32.totalorder %v394, %v2219
        %vm2224 = vcmp.eq.s32.totalorder %v395, %v2219
        %vm2225 = vcmp.eq.s32.totalorder %v396, %v2219
        %vm2226 = vcmp.eq.s32.totalorder %v397, %v2219
        %vm2227 = vcmp.eq.s32.totalorder %v398, %v2219
        %vm2228 = vcmp.eq.s32.totalorder %v399, %v2219
        %vm2229 = vcmp.eq.s32.totalorder %v400, %v2219
        %vm2230 = vcmp.eq.s32.totalorder %v401, %v2219
        %vm2231 = vcmp.eq.s32.totalorder %v402, %v2219
        %vm2232 = vcmp.eq.s32.totalorder %v403, %v2219
        %vm2233 = vcmp.eq.s32.totalorder %v404, %v2219
        %vm2234 = vcmp.eq.s32.totalorder %v405, %v2219
        %vm2235 = vcmp.eq.s32.totalorder %v406, %v2219
        %vm2236 = vcmp.eq.s32.totalorder %v407, %v2219
        %vm2237 = vcmp.eq.s32.totalorder %v408, %v2219
        %vm2238 = vcmp.eq.s32.totalorder %v409, %v2219
        %vm2239 = vcmp.eq.s32.totalorder %v410, %v2219
        %vm2240 = vcmp.eq.s32.totalorder %v411, %v2219
        %vm2241 = vcmp.eq.s32.totalorder %v412, %v2219
        %vm2242 = vcmp.eq.s32.totalorder %v413, %v2219
        %vm2243 = vcmp.eq.s32.totalorder %v414, %v2219
        %vm2244 = vcmp.eq.s32.totalorder %v415, %v2219
        %vm2245 = vcmp.eq.s32.totalorder %v416, %v2219
        %vm2246 = vcmp.eq.s32.totalorder %v417, %v2219
        %vm2247 = vcmp.eq.s32.totalorder %v418, %v2219
        %vm2248 = vcmp.eq.s32.totalorder %v419, %v2219
        %vm2249 = vcmp.eq.s32.totalorder %v420, %v2219
        %vm2250 = vcmp.eq.s32.totalorder %v421, %v2219
        %vm2251 = vcmp.eq.s32.totalorder %v422, %v2219
        %v2252 = vsel %vm2220, 1.0, 0.0
        %v2253 = vsel %vm2221, 1.0, 0.0
        %v2254 = vsel %vm2222, 1.0, 0.0
        %v2255 = vsel %vm2223, 1.0, 0.0
        %v2256 = vsel %vm2224, 1.0, 0.0
        %v2257 = vsel %vm2225, 1.0, 0.0
        %v2258 = vsel %vm2226, 1.0, 0.0
        %v2259 = vsel %vm2227, 1.0, 0.0
        %v2260 = vsel %vm2228, 1.0, 0.0
        %v2261 = vsel %vm2229, 1.0, 0.0
        %v2262 = vsel %vm2230, 1.0, 0.0
        %v2263 = vsel %vm2231, 1.0, 0.0
        %v2264 = vsel %vm2232, 1.0, 0.0
        %v2265 = vsel %vm2233, 1.0, 0.0
        %v2266 = vsel %vm2234, 1.0, 0.0
        %v2267 = vsel %vm2235, 1.0, 0.0
        %v2268 = vsel %vm2236, 1.0, 0.0
        %v2269 = vsel %vm2237, 1.0, 0.0
        %v2270 = vsel %vm2238, 1.0, 0.0
        %v2271 = vsel %vm2239, 1.0, 0.0
        %v2272 = vsel %vm2240, 1.0, 0.0
        %v2273 = vsel %vm2241, 1.0, 0.0
        %v2274 = vsel %vm2242, 1.0, 0.0
        %v2275 = vsel %vm2243, 1.0, 0.0
        %v2276 = vsel %vm2244, 1.0, 0.0
        %v2277 = vsel %vm2245, 1.0, 0.0
        %v2278 = vsel %vm2246, 1.0, 0.0
        %v2279 = vsel %vm2247, 1.0, 0.0
        %v2280 = vsel %vm2248, 1.0, 0.0
        %v2281 = vsel %vm2249, 1.0, 0.0
        %v2282 = vsel %vm2250, 1.0, 0.0
        %v2283 = vsel %vm2251, 1.0, 0.0
        %2284 = vmatprep.subr.mxu0 0.0
        %2285 = vmatpush1.msra.mxu0 %v2252
        %2286 = vmatprep.subr.mxu0 0.0
        %2287 = vmatpush1.msra.mxu0 %v2253
        %2288 = vmatprep.subr.mxu0 0.0
        %2289 = vmatpush1.msra.mxu0 %v2254
        %2290 = vmatprep.subr.mxu0 0.0
        %2291 = vmatpush1.msra.mxu0 %v2255
        %2292 = vmatprep.subr.mxu0 0.0
        %2293 = vmatpush1.msra.mxu0 %v2256
        %2294 = vmatprep.subr.mxu0 0.0
        %2295 = vmatpush1.msra.mxu0 %v2257
        %2296 = vmatprep.subr.mxu0 0.0
        %2297 = vmatpush1.msra.mxu0 %v2258
        %2298 = vmatprep.subr.mxu0 0.0
        %2299 = vmatpush1.msra.mxu0 %v2259
        %2300 = vmatprep.subr.mxu0 0.0
        %2301 = vmatpush1.msra.mxu0 %v2260
        %2302 = vmatprep.subr.mxu0 0.0
        %2303 = vmatpush1.msra.mxu0 %v2261
        %2304 = vmatprep.subr.mxu0 0.0
        %2305 = vmatpush1.msra.mxu0 %v2262
        %2306 = vmatprep.subr.mxu0 0.0
        %2307 = vmatpush1.msra.mxu0 %v2263
        %2308 = vmatprep.subr.mxu0 0.0
        %2309 = vmatpush1.msra.mxu0 %v2264
        %2310 = vmatprep.subr.mxu0 0.0
        %2311 = vmatpush1.msra.mxu0 %v2265
        %2312 = vmatprep.subr.mxu0 0.0
        %2313 = vmatpush1.msra.mxu0 %v2266
        %2314 = vmatprep.subr.mxu0 0.0
        %2315 = vmatpush1.msra.mxu0 %v2267
        %2316 = vmatprep.subr.mxu0 0.0
        %2317 = vmatpush1.msra.mxu0 %v2268
        %2318 = vmatprep.subr.mxu0 0.0
        %2319 = vmatpush1.msra.mxu0 %v2269
        %2320 = vmatprep.subr.mxu0 0.0
        %2321 = vmatpush1.msra.mxu0 %v2270
        %2322 = vmatprep.subr.mxu0 0.0
        %2323 = vmatpush1.msra.mxu0 %v2271
        %2324 = vmatprep.subr.mxu0 0.0
        %2325 = vmatpush1.msra.mxu0 %v2272
        %2326 = vmatprep.subr.mxu0 0.0
        %2327 = vmatpush1.msra.mxu0 %v2273
        %2328 = vmatprep.subr.mxu0 0.0
        %2329 = vmatpush1.msra.mxu0 %v2274
        %2330 = vmatprep.subr.mxu0 0.0
        %2331 = vmatpush1.msra.mxu0 %v2275
        %2332 = vmatprep.subr.mxu0 0.0
        %2333 = vmatpush1.msra.mxu0 %v2276
        %2334 = vmatprep.subr.mxu0 0.0
        %2335 = vmatpush1.msra.mxu0 %v2277
        %2336 = vmatprep.subr.mxu0 0.0
        %2337 = vmatpush1.msra.mxu0 %v2278
        %2338 = vmatprep.subr.mxu0 0.0
        %2339 = vmatpush1.msra.mxu0 %v2279
        %2340 = vmatprep.subr.mxu0 0.0
        %2341 = vmatpush1.msra.mxu0 %v2280
        %2342 = vmatprep.subr.mxu0 0.0
        %2343 = vmatpush1.msra.mxu0 %v2281
        %2344 = vmatprep.subr.mxu0 0.0
        %2345 = vmatpush1.msra.mxu0 %v2282
        %2346 = vmatprep.subr.mxu0 0.0
        %2347 = vmatpush1.msra.mxu0 %v2283
        %2348 = vmatprep.mubr.f32.mxu0 %v520
        %2349 = vmatmul.mubr.f32.gmra.mrb[0].mxu0 %v293
        %v2350 = vpop.f32.mrb[0].mxu0
        %v2351 = vadd.f32 0.0, %v2350
        %v2352 = vpop.f32.mrb[0].mxu0
        %2353 = vdwg.mxu0
        %v2354 = vlaneseq
        %v2355 = vshrl.u32 %v2354, 7
        %v2356 = vsub.s32 2, %v2355
        %v2357 = vrot.slane %v380, %v2356
        %v2358 = vmul.f32 %v2351, %v2357
        %v2359 = vadd.f32 %v2215, %v2358
        %v2361 = vsel %vm1631, %v425, 0
        %v2364 = vsel %vm1635, %v2359, 0
        %2366 = vmatprep.subr.mxu0 0.0
        %2367 = vmatpush1.msra.mxu0 %v2364
        %2368 = vmatprep.subr.mxu0 0.0
        %2369 = vmatpush1.msra.mxu0 0.0
        %2370 = vmatprep.subr.mxu0 0.0
        %2371 = vmatpush1.msra.mxu0 0.0
        %2372 = vmatprep.subr.mxu0 0.0
        %2373 = vmatpush1.msra.mxu0 0.0
        %2374 = vmatprep.subr.mxu0 0.0
        %2375 = vmatpush1.msra.mxu0 0.0
        %2376 = vmatprep.subr.mxu0 0.0
        %2377 = vmatpush1.msra.mxu0 0.0
        %2378 = vmatprep.subr.mxu0 0.0
        %2379 = vmatpush1.msra.mxu0 0.0
        %2380 = vmatprep.subr.mxu0 0.0
        %2381 = vmatpush1.msra.mxu0 0.0
        %2382 = vmatprep.subr.mxu0 0.0
        %2383 = vmatpush1.msra.mxu0 0.0
        %2384 = vmatprep.subr.mxu0 0.0
        %2385 = vmatpush1.msra.mxu0 0.0
        %2386 = vmatprep.subr.mxu0 0.0
        %2387 = vmatpush1.msra.mxu0 0.0
        %2388 = vmatprep.subr.mxu0 0.0
        %2389 = vmatpush1.msra.mxu0 0.0
        %2390 = vmatprep.subr.mxu0 0.0
        %2391 = vmatpush1.msra.mxu0 0.0
        %2392 = vmatprep.subr.mxu0 0.0
        %2393 = vmatpush1.msra.mxu0 0.0
        %2394 = vmatprep.subr.mxu0 0.0
        %2395 = vmatpush1.msra.mxu0 0.0
        %2396 = vmatprep.subr.mxu0 0.0
        %2397 = vmatpush1.msra.mxu0 0.0
        %2398 = vmatprep.subr.mxu0 0.0
        %2399 = vmatpush1.msra.mxu0 0.0
        %2400 = vmatprep.subr.mxu0 0.0
        %2401 = vmatpush1.msra.mxu0 0.0
        %2402 = vmatprep.subr.mxu0 0.0
        %2403 = vmatpush1.msra.mxu0 0.0
        %2404 = vmatprep.subr.mxu0 0.0
        %2405 = vmatpush1.msra.mxu0 0.0
        %2406 = vmatprep.subr.mxu0 0.0
        %2407 = vmatpush1.msra.mxu0 0.0
        %2408 = vmatprep.subr.mxu0 0.0
        %2409 = vmatpush1.msra.mxu0 0.0
        %2410 = vmatprep.subr.mxu0 0.0
        %2411 = vmatpush1.msra.mxu0 0.0
        %2412 = vmatprep.subr.mxu0 0.0
        %2413 = vmatpush1.msra.mxu0 0.0
        %2414 = vmatprep.subr.mxu0 0.0
        %2415 = vmatpush1.msra.mxu0 0.0
        %2416 = vmatprep.subr.mxu0 0.0
        %2417 = vmatpush1.msra.mxu0 0.0
        %2418 = vmatprep.subr.mxu0 0.0
        %2419 = vmatpush1.msra.mxu0 0.0
        %2420 = vmatprep.subr.mxu0 0.0
        %2421 = vmatpush1.msra.mxu0 0.0
        %2422 = vmatprep.subr.mxu0 0.0
        %2423 = vmatpush1.msra.mxu0 0.0
        %2424 = vmatprep.subr.mxu0 0.0
        %2425 = vmatpush1.msra.mxu0 0.0
        %2426 = vmatprep.subr.mxu0 0.0
        %2427 = vmatpush1.msra.mxu0 0.0
        %2428 = vmatprep.subr.mxu0 0.0
        %2429 = vmatpush1.msra.mxu0 0.0
        %2430 = vmatprep.mubr.f32.mxu0 0.0
        %2431 = vmatmul.mubr.f32.gmra.mrb[0].mxu0 %v2361
        %v2432 = vpop.f32.mrb[0].mxu0
        %v2433 = vadd.f32 0.0, %v2432
        %v2434 = vpop.f32.mrb[0].mxu0
        %2435 = vdwg.mxu0
        %v2436 = vadd.f32 %v1782, %v2433
        %v2437 = vlaneseq
        %v2438 = vshrl.u32 %v2437, 7
        %v2439 = vsub.s32 3, %v2438
        %v2440 = vrot.slane %v450, %v2439
        %vm2441 = vcmp.eq.s32.totalorder %v391, %v2440
        %vm2442 = vcmp.eq.s32.totalorder %v392, %v2440
        %vm2443 = vcmp.eq.s32.totalorder %v393, %v2440
        %vm2444 = vcmp.eq.s32.totalorder %v394, %v2440
        %vm2445 = vcmp.eq.s32.totalorder %v395, %v2440
        %vm2446 = vcmp.eq.s32.totalorder %v396, %v2440
        %vm2447 = vcmp.eq.s32.totalorder %v397, %v2440
        %vm2448 = vcmp.eq.s32.totalorder %v398, %v2440
        %vm2449 = vcmp.eq.s32.totalorder %v399, %v2440
        %vm2450 = vcmp.eq.s32.totalorder %v400, %v2440
        %vm2451 = vcmp.eq.s32.totalorder %v401, %v2440
        %vm2452 = vcmp.eq.s32.totalorder %v402, %v2440
        %vm2453 = vcmp.eq.s32.totalorder %v403, %v2440
        %vm2454 = vcmp.eq.s32.totalorder %v404, %v2440
        %vm2455 = vcmp.eq.s32.totalorder %v405, %v2440
        %vm2456 = vcmp.eq.s32.totalorder %v406, %v2440
        %vm2457 = vcmp.eq.s32.totalorder %v407, %v2440
        %vm2458 = vcmp.eq.s32.totalorder %v408, %v2440
        %vm2459 = vcmp.eq.s32.totalorder %v409, %v2440
        %vm2460 = vcmp.eq.s32.totalorder %v410, %v2440
        %vm2461 = vcmp.eq.s32.totalorder %v411, %v2440
        %vm2462 = vcmp.eq.s32.totalorder %v412, %v2440
        %vm2463 = vcmp.eq.s32.totalorder %v413, %v2440
        %vm2464 = vcmp.eq.s32.totalorder %v414, %v2440
        %vm2465 = vcmp.eq.s32.totalorder %v415, %v2440
        %vm2466 = vcmp.eq.s32.totalorder %v416, %v2440
        %vm2467 = vcmp.eq.s32.totalorder %v417, %v2440
        %vm2468 = vcmp.eq.s32.totalorder %v418, %v2440
        %vm2469 = vcmp.eq.s32.totalorder %v419, %v2440
        %vm2470 = vcmp.eq.s32.totalorder %v420, %v2440
        %vm2471 = vcmp.eq.s32.totalorder %v421, %v2440
        %vm2472 = vcmp.eq.s32.totalorder %v422, %v2440
        %v2473 = vsel %vm2441, 1.0, 0.0
        %v2474 = vsel %vm2442, 1.0, 0.0
        %v2475 = vsel %vm2443, 1.0, 0.0
        %v2476 = vsel %vm2444, 1.0, 0.0
        %v2477 = vsel %vm2445, 1.0, 0.0
        %v2478 = vsel %vm2446, 1.0, 0.0
        %v2479 = vsel %vm2447, 1.0, 0.0
        %v2480 = vsel %vm2448, 1.0, 0.0
        %v2481 = vsel %vm2449, 1.0, 0.0
        %v2482 = vsel %vm2450, 1.0, 0.0
        %v2483 = vsel %vm2451, 1.0, 0.0
        %v2484 = vsel %vm2452, 1.0, 0.0
        %v2485 = vsel %vm2453, 1.0, 0.0
        %v2486 = vsel %vm2454, 1.0, 0.0
        %v2487 = vsel %vm2455, 1.0, 0.0
        %v2488 = vsel %vm2456, 1.0, 0.0
        %v2489 = vsel %vm2457, 1.0, 0.0
        %v2490 = vsel %vm2458, 1.0, 0.0
        %v2491 = vsel %vm2459, 1.0, 0.0
        %v2492 = vsel %vm2460, 1.0, 0.0
        %v2493 = vsel %vm2461, 1.0, 0.0
        %v2494 = vsel %vm2462, 1.0, 0.0
        %v2495 = vsel %vm2463, 1.0, 0.0
        %v2496 = vsel %vm2464, 1.0, 0.0
        %v2497 = vsel %vm2465, 1.0, 0.0
        %v2498 = vsel %vm2466, 1.0, 0.0
        %v2499 = vsel %vm2467, 1.0, 0.0
        %v2500 = vsel %vm2468, 1.0, 0.0
        %v2501 = vsel %vm2469, 1.0, 0.0
        %v2502 = vsel %vm2470, 1.0, 0.0
        %v2503 = vsel %vm2471, 1.0, 0.0
        %v2504 = vsel %vm2472, 1.0, 0.0
        %2505 = vmatprep.subr.mxu0 0.0
        %2506 = vmatpush1.msra.mxu0 %v2473
        %2507 = vmatprep.subr.mxu0 0.0
        %2508 = vmatpush1.msra.mxu0 %v2474
        %2509 = vmatprep.subr.mxu0 0.0
        %2510 = vmatpush1.msra.mxu0 %v2475
        %2511 = vmatprep.subr.mxu0 0.0
        %2512 = vmatpush1.msra.mxu0 %v2476
        %2513 = vmatprep.subr.mxu0 0.0
        %2514 = vmatpush1.msra.mxu0 %v2477
        %2515 = vmatprep.subr.mxu0 0.0
        %2516 = vmatpush1.msra.mxu0 %v2478
        %2517 = vmatprep.subr.mxu0 0.0
        %2518 = vmatpush1.msra.mxu0 %v2479
        %2519 = vmatprep.subr.mxu0 0.0
        %2520 = vmatpush1.msra.mxu0 %v2480
        %2521 = vmatprep.subr.mxu0 0.0
        %2522 = vmatpush1.msra.mxu0 %v2481
        %2523 = vmatprep.subr.mxu0 0.0
        %2524 = vmatpush1.msra.mxu0 %v2482
        %2525 = vmatprep.subr.mxu0 0.0
        %2526 = vmatpush1.msra.mxu0 %v2483
        %2527 = vmatprep.subr.mxu0 0.0
        %2528 = vmatpush1.msra.mxu0 %v2484
        %2529 = vmatprep.subr.mxu0 0.0
        %2530 = vmatpush1.msra.mxu0 %v2485
        %2531 = vmatprep.subr.mxu0 0.0
        %2532 = vmatpush1.msra.mxu0 %v2486
        %2533 = vmatprep.subr.mxu0 0.0
        %2534 = vmatpush1.msra.mxu0 %v2487
        %2535 = vmatprep.subr.mxu0 0.0
        %2536 = vmatpush1.msra.mxu0 %v2488
        %2537 = vmatprep.subr.mxu0 0.0
        %2538 = vmatpush1.msra.mxu0 %v2489
        %2539 = vmatprep.subr.mxu0 0.0
        %2540 = vmatpush1.msra.mxu0 %v2490
        %2541 = vmatprep.subr.mxu0 0.0
        %2542 = vmatpush1.msra.mxu0 %v2491
        %2543 = vmatprep.subr.mxu0 0.0
        %2544 = vmatpush1.msra.mxu0 %v2492
        %2545 = vmatprep.subr.mxu0 0.0
        %2546 = vmatpush1.msra.mxu0 %v2493
        %2547 = vmatprep.subr.mxu0 0.0
        %2548 = vmatpush1.msra.mxu0 %v2494
        %2549 = vmatprep.subr.mxu0 0.0
        %2550 = vmatpush1.msra.mxu0 %v2495
        %2551 = vmatprep.subr.mxu0 0.0
        %2552 = vmatpush1.msra.mxu0 %v2496
        %2553 = vmatprep.subr.mxu0 0.0
        %2554 = vmatpush1.msra.mxu0 %v2497
        %2555 = vmatprep.subr.mxu0 0.0
        %2556 = vmatpush1.msra.mxu0 %v2498
        %2557 = vmatprep.subr.mxu0 0.0
        %2558 = vmatpush1.msra.mxu0 %v2499
        %2559 = vmatprep.subr.mxu0 0.0
        %2560 = vmatpush1.msra.mxu0 %v2500
        %2561 = vmatprep.subr.mxu0 0.0
        %2562 = vmatpush1.msra.mxu0 %v2501
        %2563 = vmatprep.subr.mxu0 0.0
        %2564 = vmatpush1.msra.mxu0 %v2502
        %2565 = vmatprep.subr.mxu0 0.0
        %2566 = vmatpush1.msra.mxu0 %v2503
        %2567 = vmatprep.subr.mxu0 0.0
        %2568 = vmatpush1.msra.mxu0 %v2504
        %2569 = vmatprep.mubr.f32.mxu0 %v520
        %2570 = vmatmul.mubr.f32.gmra.mrb[0].mxu0 %v293
        %v2571 = vpop.f32.mrb[0].mxu0
        %v2572 = vadd.f32 0.0, %v2571
        %v2573 = vpop.f32.mrb[0].mxu0
        %2574 = vdwg.mxu0
        %v2575 = vlaneseq
        %v2576 = vshrl.u32 %v2575, 7
        %v2577 = vsub.s32 3, %v2576
        %v2578 = vrot.slane %v359, %v2577
        %v2579 = vmul.f32 %v2572, %v2578
        %v2580 = vlaneseq
        %v2581 = vshrl.u32 %v2580, 7
        %v2582 = vsub.s32 3, %v2581
        %v2583 = vrot.slane %v615, %v2582
        %vm2584 = vcmp.eq.s32.totalorder %v391, %v2583
        %vm2585 = vcmp.eq.s32.totalorder %v392, %v2583
        %vm2586 = vcmp.eq.s32.totalorder %v393, %v2583
        %vm2587 = vcmp.eq.s32.totalorder %v394, %v2583
        %vm2588 = vcmp.eq.s32.totalorder %v395, %v2583
        %vm2589 = vcmp.eq.s32.totalorder %v396, %v2583
        %vm2590 = vcmp.eq.s32.totalorder %v397, %v2583
        %vm2591 = vcmp.eq.s32.totalorder %v398, %v2583
        %vm2592 = vcmp.eq.s32.totalorder %v399, %v2583
        %vm2593 = vcmp.eq.s32.totalorder %v400, %v2583
        %vm2594 = vcmp.eq.s32.totalorder %v401, %v2583
        %vm2595 = vcmp.eq.s32.totalorder %v402, %v2583
        %vm2596 = vcmp.eq.s32.totalorder %v403, %v2583
        %vm2597 = vcmp.eq.s32.totalorder %v404, %v2583
        %vm2598 = vcmp.eq.s32.totalorder %v405, %v2583
        %vm2599 = vcmp.eq.s32.totalorder %v406, %v2583
        %vm2600 = vcmp.eq.s32.totalorder %v407, %v2583
        %vm2601 = vcmp.eq.s32.totalorder %v408, %v2583
        %vm2602 = vcmp.eq.s32.totalorder %v409, %v2583
        %vm2603 = vcmp.eq.s32.totalorder %v410, %v2583
        %vm2604 = vcmp.eq.s32.totalorder %v411, %v2583
        %vm2605 = vcmp.eq.s32.totalorder %v412, %v2583
        %vm2606 = vcmp.eq.s32.totalorder %v413, %v2583
        %vm2607 = vcmp.eq.s32.totalorder %v414, %v2583
        %vm2608 = vcmp.eq.s32.totalorder %v415, %v2583
        %vm2609 = vcmp.eq.s32.totalorder %v416, %v2583
        %vm2610 = vcmp.eq.s32.totalorder %v417, %v2583
        %vm2611 = vcmp.eq.s32.totalorder %v418, %v2583
        %vm2612 = vcmp.eq.s32.totalorder %v419, %v2583
        %vm2613 = vcmp.eq.s32.totalorder %v420, %v2583
        %vm2614 = vcmp.eq.s32.totalorder %v421, %v2583
        %vm2615 = vcmp.eq.s32.totalorder %v422, %v2583
        %v2616 = vsel %vm2584, 1.0, 0.0
        %v2617 = vsel %vm2585, 1.0, 0.0
        %v2618 = vsel %vm2586, 1.0, 0.0
        %v2619 = vsel %vm2587, 1.0, 0.0
        %v2620 = vsel %vm2588, 1.0, 0.0
        %v2621 = vsel %vm2589, 1.0, 0.0
        %v2622 = vsel %vm2590, 1.0, 0.0
        %v2623 = vsel %vm2591, 1.0, 0.0
        %v2624 = vsel %vm2592, 1.0, 0.0
        %v2625 = vsel %vm2593, 1.0, 0.0
        %v2626 = vsel %vm2594, 1.0, 0.0
        %v2627 = vsel %vm2595, 1.0, 0.0
        %v2628 = vsel %vm2596, 1.0, 0.0
        %v2629 = vsel %vm2597, 1.0, 0.0
        %v2630 = vsel %vm2598, 1.0, 0.0
        %v2631 = vsel %vm2599, 1.0, 0.0
        %v2632 = vsel %vm2600, 1.0, 0.0
        %v2633 = vsel %vm2601, 1.0, 0.0
        %v2634 = vsel %vm2602, 1.0, 0.0
        %v2635 = vsel %vm2603, 1.0, 0.0
        %v2636 = vsel %vm2604, 1.0, 0.0
        %v2637 = vsel %vm2605, 1.0, 0.0
        %v2638 = vsel %vm2606, 1.0, 0.0
        %v2639 = vsel %vm2607, 1.0, 0.0
        %v2640 = vsel %vm2608, 1.0, 0.0
        %v2641 = vsel %vm2609, 1.0, 0.0
        %v2642 = vsel %vm2610, 1.0, 0.0
        %v2643 = vsel %vm2611, 1.0, 0.0
        %v2644 = vsel %vm2612, 1.0, 0.0
        %v2645 = vsel %vm2613, 1.0, 0.0
        %v2646 = vsel %vm2614, 1.0, 0.0
        %v2647 = vsel %vm2615, 1.0, 0.0
        %2648 = vmatprep.subr.mxu0 0.0
        %2649 = vmatpush1.msra.mxu0 %v2616
        %2650 = vmatprep.subr.mxu0 0.0
        %2651 = vmatpush1.msra.mxu0 %v2617
        %2652 = vmatprep.subr.mxu0 0.0
        %2653 = vmatpush1.msra.mxu0 %v2618
        %2654 = vmatprep.subr.mxu0 0.0
        %2655 = vmatpush1.msra.mxu0 %v2619
        %2656 = vmatprep.subr.mxu0 0.0
        %2657 = vmatpush1.msra.mxu0 %v2620
        %2658 = vmatprep.subr.mxu0 0.0
        %2659 = vmatpush1.msra.mxu0 %v2621
        %2660 = vmatprep.subr.mxu0 0.0
        %2661 = vmatpush1.msra.mxu0 %v2622
        %2662 = vmatprep.subr.mxu0 0.0
        %2663 = vmatpush1.msra.mxu0 %v2623
        %2664 = vmatprep.subr.mxu0 0.0
        %2665 = vmatpush1.msra.mxu0 %v2624
        %2666 = vmatprep.subr.mxu0 0.0
        %2667 = vmatpush1.msra.mxu0 %v2625
        %2668 = vmatprep.subr.mxu0 0.0
        %2669 = vmatpush1.msra.mxu0 %v2626
        %2670 = vmatprep.subr.mxu0 0.0
        %2671 = vmatpush1.msra.mxu0 %v2627
        %2672 = vmatprep.subr.mxu0 0.0
        %2673 = vmatpush1.msra.mxu0 %v2628
        %2674 = vmatprep.subr.mxu0 0.0
        %2675 = vmatpush1.msra.mxu0 %v2629
        %2676 = vmatprep.subr.mxu0 0.0
        %2677 = vmatpush1.msra.mxu0 %v2630
        %2678 = vmatprep.subr.mxu0 0.0
        %2679 = vmatpush1.msra.mxu0 %v2631
        %2680 = vmatprep.subr.mxu0 0.0
        %2681 = vmatpush1.msra.mxu0 %v2632
        %2682 = vmatprep.subr.mxu0 0.0
        %2683 = vmatpush1.msra.mxu0 %v2633
        %2684 = vmatprep.subr.mxu0 0.0
        %2685 = vmatpush1.msra.mxu0 %v2634
        %2686 = vmatprep.subr.mxu0 0.0
        %2687 = vmatpush1.msra.mxu0 %v2635
        %2688 = vmatprep.subr.mxu0 0.0
        %2689 = vmatpush1.msra.mxu0 %v2636
        %2690 = vmatprep.subr.mxu0 0.0
        %2691 = vmatpush1.msra.mxu0 %v2637
        %2692 = vmatprep.subr.mxu0 0.0
        %2693 = vmatpush1.msra.mxu0 %v2638
        %2694 = vmatprep.subr.mxu0 0.0
        %2695 = vmatpush1.msra.mxu0 %v2639
        %2696 = vmatprep.subr.mxu0 0.0
        %2697 = vmatpush1.msra.mxu0 %v2640
        %2698 = vmatprep.subr.mxu0 0.0
        %2699 = vmatpush1.msra.mxu0 %v2641
        %2700 = vmatprep.subr.mxu0 0.0
        %2701 = vmatpush1.msra.mxu0 %v2642
        %2702 = vmatprep.subr.mxu0 0.0
        %2703 = vmatpush1.msra.mxu0 %v2643
        %2704 = vmatprep.subr.mxu0 0.0
        %2705 = vmatpush1.msra.mxu0 %v2644
        %2706 = vmatprep.subr.mxu0 0.0
        %2707 = vmatpush1.msra.mxu0 %v2645
        %2708 = vmatprep.subr.mxu0 0.0
        %2709 = vmatpush1.msra.mxu0 %v2646
        %2710 = vmatprep.subr.mxu0 0.0
        %2711 = vmatpush1.msra.mxu0 %v2647
        %2712 = vmatprep.mubr.f32.mxu0 %v520
        %2713 = vmatmul.mubr.f32.gmra.mrb[0].mxu0 %v293
        %v2714 = vpop.f32.mrb[0].mxu0
        %v2715 = vadd.f32 0.0, %v2714
        %v2716 = vpop.f32.mrb[0].mxu0
        %2717 = vdwg.mxu0
        %v2718 = vlaneseq
        %v2719 = vshrl.u32 %v2718, 7
        %v2720 = vsub.s32 3, %v2719
        %v2721 = vrot.slane %v376, %v2720
        %v2722 = vmul.f32 %v2715, %v2721
        %v2723 = vadd.f32 %v2579, %v2722
        %v2724 = vlaneseq
        %v2725 = vshrl.u32 %v2724, 7
        %v2726 = vsub.s32 3, %v2725
        %v2727 = vrot.slane %v763, %v2726
        %vm2728 = vcmp.eq.s32.totalorder %v391, %v2727
        %vm2729 = vcmp.eq.s32.totalorder %v392, %v2727
        %vm2730 = vcmp.eq.s32.totalorder %v393, %v2727
        %vm2731 = vcmp.eq.s32.totalorder %v394, %v2727
        %vm2732 = vcmp.eq.s32.totalorder %v395, %v2727
        %vm2733 = vcmp.eq.s32.totalorder %v396, %v2727
        %vm2734 = vcmp.eq.s32.totalorder %v397, %v2727
        %vm2735 = vcmp.eq.s32.totalorder %v398, %v2727
        %vm2736 = vcmp.eq.s32.totalorder %v399, %v2727
        %vm2737 = vcmp.eq.s32.totalorder %v400, %v2727
        %vm2738 = vcmp.eq.s32.totalorder %v401, %v2727
        %vm2739 = vcmp.eq.s32.totalorder %v402, %v2727
        %vm2740 = vcmp.eq.s32.totalorder %v403, %v2727
        %vm2741 = vcmp.eq.s32.totalorder %v404, %v2727
        %vm2742 = vcmp.eq.s32.totalorder %v405, %v2727
        %vm2743 = vcmp.eq.s32.totalorder %v406, %v2727
        %vm2744 = vcmp.eq.s32.totalorder %v407, %v2727
        %vm2745 = vcmp.eq.s32.totalorder %v408, %v2727
        %vm2746 = vcmp.eq.s32.totalorder %v409, %v2727
        %vm2747 = vcmp.eq.s32.totalorder %v410, %v2727
        %vm2748 = vcmp.eq.s32.totalorder %v411, %v2727
        %vm2749 = vcmp.eq.s32.totalorder %v412, %v2727
        %vm2750 = vcmp.eq.s32.totalorder %v413, %v2727
        %vm2751 = vcmp.eq.s32.totalorder %v414, %v2727
        %vm2752 = vcmp.eq.s32.totalorder %v415, %v2727
        %vm2753 = vcmp.eq.s32.totalorder %v416, %v2727
        %vm2754 = vcmp.eq.s32.totalorder %v417, %v2727
        %vm2755 = vcmp.eq.s32.totalorder %v418, %v2727
        %vm2756 = vcmp.eq.s32.totalorder %v419, %v2727
        %vm2757 = vcmp.eq.s32.totalorder %v420, %v2727
        %vm2758 = vcmp.eq.s32.totalorder %v421, %v2727
        %vm2759 = vcmp.eq.s32.totalorder %v422, %v2727
        %v2760 = vsel %vm2728, 1.0, 0.0
        %v2761 = vsel %vm2729, 1.0, 0.0
        %v2762 = vsel %vm2730, 1.0, 0.0
        %v2763 = vsel %vm2731, 1.0, 0.0
        %v2764 = vsel %vm2732, 1.0, 0.0
        %v2765 = vsel %vm2733, 1.0, 0.0
        %v2766 = vsel %vm2734, 1.0, 0.0
        %v2767 = vsel %vm2735, 1.0, 0.0
        %v2768 = vsel %vm2736, 1.0, 0.0
        %v2769 = vsel %vm2737, 1.0, 0.0
        %v2770 = vsel %vm2738, 1.0, 0.0
        %v2771 = vsel %vm2739, 1.0, 0.0
        %v2772 = vsel %vm2740, 1.0, 0.0
        %v2773 = vsel %vm2741, 1.0, 0.0
        %v2774 = vsel %vm2742, 1.0, 0.0
        %v2775 = vsel %vm2743, 1.0, 0.0
        %v2776 = vsel %vm2744, 1.0, 0.0
        %v2777 = vsel %vm2745, 1.0, 0.0
        %v2778 = vsel %vm2746, 1.0, 0.0
        %v2779 = vsel %vm2747, 1.0, 0.0
        %v2780 = vsel %vm2748, 1.0, 0.0
        %v2781 = vsel %vm2749, 1.0, 0.0
        %v2782 = vsel %vm2750, 1.0, 0.0
        %v2783 = vsel %vm2751, 1.0, 0.0
        %v2784 = vsel %vm2752, 1.0, 0.0
        %v2785 = vsel %vm2753, 1.0, 0.0
        %v2786 = vsel %vm2754, 1.0, 0.0
        %v2787 = vsel %vm2755, 1.0, 0.0
        %v2788 = vsel %vm2756, 1.0, 0.0
        %v2789 = vsel %vm2757, 1.0, 0.0
        %v2790 = vsel %vm2758, 1.0, 0.0
        %v2791 = vsel %vm2759, 1.0, 0.0
        %2792 = vmatprep.subr.mxu0 0.0
        %2793 = vmatpush1.msra.mxu0 %v2760
        %2794 = vmatprep.subr.mxu0 0.0
        %2795 = vmatpush1.msra.mxu0 %v2761
        %2796 = vmatprep.subr.mxu0 0.0
        %2797 = vmatpush1.msra.mxu0 %v2762
        %2798 = vmatprep.subr.mxu0 0.0
        %2799 = vmatpush1.msra.mxu0 %v2763
        %2800 = vmatprep.subr.mxu0 0.0
        %2801 = vmatpush1.msra.mxu0 %v2764
        %2802 = vmatprep.subr.mxu0 0.0
        %2803 = vmatpush1.msra.mxu0 %v2765
        %2804 = vmatprep.subr.mxu0 0.0
        %2805 = vmatpush1.msra.mxu0 %v2766
        %2806 = vmatprep.subr.mxu0 0.0
        %2807 = vmatpush1.msra.mxu0 %v2767
        %2808 = vmatprep.subr.mxu0 0.0
        %2809 = vmatpush1.msra.mxu0 %v2768
        %2810 = vmatprep.subr.mxu0 0.0
        %2811 = vmatpush1.msra.mxu0 %v2769
        %2812 = vmatprep.subr.mxu0 0.0
        %2813 = vmatpush1.msra.mxu0 %v2770
        %2814 = vmatprep.subr.mxu0 0.0
        %2815 = vmatpush1.msra.mxu0 %v2771
        %2816 = vmatprep.subr.mxu0 0.0
        %2817 = vmatpush1.msra.mxu0 %v2772
        %2818 = vmatprep.subr.mxu0 0.0
        %2819 = vmatpush1.msra.mxu0 %v2773
        %2820 = vmatprep.subr.mxu0 0.0
        %2821 = vmatpush1.msra.mxu0 %v2774
        %2822 = vmatprep.subr.mxu0 0.0
        %2823 = vmatpush1.msra.mxu0 %v2775
        %2824 = vmatprep.subr.mxu0 0.0
        %2825 = vmatpush1.msra.mxu0 %v2776
        %2826 = vmatprep.subr.mxu0 0.0
        %2827 = vmatpush1.msra.mxu0 %v2777
        %2828 = vmatprep.subr.mxu0 0.0
        %2829 = vmatpush1.msra.mxu0 %v2778
        %2830 = vmatprep.subr.mxu0 0.0
        %2831 = vmatpush1.msra.mxu0 %v2779
        %2832 = vmatprep.subr.mxu0 0.0
        %2833 = vmatpush1.msra.mxu0 %v2780
        %2834 = vmatprep.subr.mxu0 0.0
        %2835 = vmatpush1.msra.mxu0 %v2781
        %2836 = vmatprep.subr.mxu0 0.0
        %2837 = vmatpush1.msra.mxu0 %v2782
        %2838 = vmatprep.subr.mxu0 0.0
        %2839 = vmatpush1.msra.mxu0 %v2783
        %2840 = vmatprep.subr.mxu0 0.0
        %2841 = vmatpush1.msra.mxu0 %v2784
        %2842 = vmatprep.subr.mxu0 0.0
        %2843 = vmatpush1.msra.mxu0 %v2785
        %2844 = vmatprep.subr.mxu0 0.0
        %2845 = vmatpush1.msra.mxu0 %v2786
        %2846 = vmatprep.subr.mxu0 0.0
        %2847 = vmatpush1.msra.mxu0 %v2787
        %2848 = vmatprep.subr.mxu0 0.0
        %2849 = vmatpush1.msra.mxu0 %v2788
        %2850 = vmatprep.subr.mxu0 0.0
        %2851 = vmatpush1.msra.mxu0 %v2789
        %2852 = vmatprep.subr.mxu0 0.0
        %2853 = vmatpush1.msra.mxu0 %v2790
        %2854 = vmatprep.subr.mxu0 0.0
        %2855 = vmatpush1.msra.mxu0 %v2791
        %2856 = vmatprep.mubr.f32.mxu0 %v520
        %2857 = vmatmul.mubr.f32.gmra.mrb[0].mxu0 %v293
        %v2858 = vpop.f32.mrb[0].mxu0
        %v2859 = vadd.f32 0.0, %v2858
        %v2860 = vpop.f32.mrb[0].mxu0
        %2861 = vdwg.mxu0
        %v2862 = vlaneseq
        %v2863 = vshrl.u32 %v2862, 7
        %v2864 = vsub.s32 3, %v2863
        %v2865 = vrot.slane %v378, %v2864
        %v2866 = vmul.f32 %v2859, %v2865
        %v2867 = vadd.f32 %v2723, %v2866
        %v2868 = vlaneseq
        %v2869 = vshrl.u32 %v2868, 7
        %v2870 = vsub.s32 3, %v2869
        %v2871 = vrot.slane %v911, %v2870
        %vm2872 = vcmp.eq.s32.totalorder %v391, %v2871
        %vm2873 = vcmp.eq.s32.totalorder %v392, %v2871
        %vm2874 = vcmp.eq.s32.totalorder %v393, %v2871
        %vm2875 = vcmp.eq.s32.totalorder %v394, %v2871
        %vm2876 = vcmp.eq.s32.totalorder %v395, %v2871
        %vm2877 = vcmp.eq.s32.totalorder %v396, %v2871
        %vm2878 = vcmp.eq.s32.totalorder %v397, %v2871
        %vm2879 = vcmp.eq.s32.totalorder %v398, %v2871
        %vm2880 = vcmp.eq.s32.totalorder %v399, %v2871
        %vm2881 = vcmp.eq.s32.totalorder %v400, %v2871
        %vm2882 = vcmp.eq.s32.totalorder %v401, %v2871
        %vm2883 = vcmp.eq.s32.totalorder %v402, %v2871
        %vm2884 = vcmp.eq.s32.totalorder %v403, %v2871
        %vm2885 = vcmp.eq.s32.totalorder %v404, %v2871
        %vm2886 = vcmp.eq.s32.totalorder %v405, %v2871
        %vm2887 = vcmp.eq.s32.totalorder %v406, %v2871
        %vm2888 = vcmp.eq.s32.totalorder %v407, %v2871
        %vm2889 = vcmp.eq.s32.totalorder %v408, %v2871
        %vm2890 = vcmp.eq.s32.totalorder %v409, %v2871
        %vm2891 = vcmp.eq.s32.totalorder %v410, %v2871
        %vm2892 = vcmp.eq.s32.totalorder %v411, %v2871
        %vm2893 = vcmp.eq.s32.totalorder %v412, %v2871
        %vm2894 = vcmp.eq.s32.totalorder %v413, %v2871
        %vm2895 = vcmp.eq.s32.totalorder %v414, %v2871
        %vm2896 = vcmp.eq.s32.totalorder %v415, %v2871
        %vm2897 = vcmp.eq.s32.totalorder %v416, %v2871
        %vm2898 = vcmp.eq.s32.totalorder %v417, %v2871
        %vm2899 = vcmp.eq.s32.totalorder %v418, %v2871
        %vm2900 = vcmp.eq.s32.totalorder %v419, %v2871
        %vm2901 = vcmp.eq.s32.totalorder %v420, %v2871
        %vm2902 = vcmp.eq.s32.totalorder %v421, %v2871
        %vm2903 = vcmp.eq.s32.totalorder %v422, %v2871
        %v2904 = vsel %vm2872, 1.0, 0.0
        %v2905 = vsel %vm2873, 1.0, 0.0
        %v2906 = vsel %vm2874, 1.0, 0.0
        %v2907 = vsel %vm2875, 1.0, 0.0
        %v2908 = vsel %vm2876, 1.0, 0.0
        %v2909 = vsel %vm2877, 1.0, 0.0
        %v2910 = vsel %vm2878, 1.0, 0.0
        %v2911 = vsel %vm2879, 1.0, 0.0
        %v2912 = vsel %vm2880, 1.0, 0.0
        %v2913 = vsel %vm2881, 1.0, 0.0
        %v2914 = vsel %vm2882, 1.0, 0.0
        %v2915 = vsel %vm2883, 1.0, 0.0
        %v2916 = vsel %vm2884, 1.0, 0.0
        %v2917 = vsel %vm2885, 1.0, 0.0
        %v2918 = vsel %vm2886, 1.0, 0.0
        %v2919 = vsel %vm2887, 1.0, 0.0
        %v2920 = vsel %vm2888, 1.0, 0.0
        %v2921 = vsel %vm2889, 1.0, 0.0
        %v2922 = vsel %vm2890, 1.0, 0.0
        %v2923 = vsel %vm2891, 1.0, 0.0
        %v2924 = vsel %vm2892, 1.0, 0.0
        %v2925 = vsel %vm2893, 1.0, 0.0
        %v2926 = vsel %vm2894, 1.0, 0.0
        %v2927 = vsel %vm2895, 1.0, 0.0
        %v2928 = vsel %vm2896, 1.0, 0.0
        %v2929 = vsel %vm2897, 1.0, 0.0
        %v2930 = vsel %vm2898, 1.0, 0.0
        %v2931 = vsel %vm2899, 1.0, 0.0
        %v2932 = vsel %vm2900, 1.0, 0.0
        %v2933 = vsel %vm2901, 1.0, 0.0
        %v2934 = vsel %vm2902, 1.0, 0.0
        %v2935 = vsel %vm2903, 1.0, 0.0
        %2936 = vmatprep.subr.mxu0 0.0
        %2937 = vmatpush1.msra.mxu0 %v2904
        %2938 = vmatprep.subr.mxu0 0.0
        %2939 = vmatpush1.msra.mxu0 %v2905
        %2940 = vmatprep.subr.mxu0 0.0
        %2941 = vmatpush1.msra.mxu0 %v2906
        %2942 = vmatprep.subr.mxu0 0.0
        %2943 = vmatpush1.msra.mxu0 %v2907
        %2944 = vmatprep.subr.mxu0 0.0
        %2945 = vmatpush1.msra.mxu0 %v2908
        %2946 = vmatprep.subr.mxu0 0.0
        %2947 = vmatpush1.msra.mxu0 %v2909
        %2948 = vmatprep.subr.mxu0 0.0
        %2949 = vmatpush1.msra.mxu0 %v2910
        %2950 = vmatprep.subr.mxu0 0.0
        %2951 = vmatpush1.msra.mxu0 %v2911
        %2952 = vmatprep.subr.mxu0 0.0
        %2953 = vmatpush1.msra.mxu0 %v2912
        %2954 = vmatprep.subr.mxu0 0.0
        %2955 = vmatpush1.msra.mxu0 %v2913
        %2956 = vmatprep.subr.mxu0 0.0
        %2957 = vmatpush1.msra.mxu0 %v2914
        %2958 = vmatprep.subr.mxu0 0.0
        %2959 = vmatpush1.msra.mxu0 %v2915
        %2960 = vmatprep.subr.mxu0 0.0
        %2961 = vmatpush1.msra.mxu0 %v2916
        %2962 = vmatprep.subr.mxu0 0.0
        %2963 = vmatpush1.msra.mxu0 %v2917
        %2964 = vmatprep.subr.mxu0 0.0
        %2965 = vmatpush1.msra.mxu0 %v2918
        %2966 = vmatprep.subr.mxu0 0.0
        %2967 = vmatpush1.msra.mxu0 %v2919
        %2968 = vmatprep.subr.mxu0 0.0
        %2969 = vmatpush1.msra.mxu0 %v2920
        %2970 = vmatprep.subr.mxu0 0.0
        %2971 = vmatpush1.msra.mxu0 %v2921
        %2972 = vmatprep.subr.mxu0 0.0
        %2973 = vmatpush1.msra.mxu0 %v2922
        %2974 = vmatprep.subr.mxu0 0.0
        %2975 = vmatpush1.msra.mxu0 %v2923
        %2976 = vmatprep.subr.mxu0 0.0
        %2977 = vmatpush1.msra.mxu0 %v2924
        %2978 = vmatprep.subr.mxu0 0.0
        %2979 = vmatpush1.msra.mxu0 %v2925
        %2980 = vmatprep.subr.mxu0 0.0
        %2981 = vmatpush1.msra.mxu0 %v2926
        %2982 = vmatprep.subr.mxu0 0.0
        %2983 = vmatpush1.msra.mxu0 %v2927
        %2984 = vmatprep.subr.mxu0 0.0
        %2985 = vmatpush1.msra.mxu0 %v2928
        %2986 = vmatprep.subr.mxu0 0.0
        %2987 = vmatpush1.msra.mxu0 %v2929
        %2988 = vmatprep.subr.mxu0 0.0
        %2989 = vmatpush1.msra.mxu0 %v2930
        %2990 = vmatprep.subr.mxu0 0.0
        %2991 = vmatpush1.msra.mxu0 %v2931
        %2992 = vmatprep.subr.mxu0 0.0
        %2993 = vmatpush1.msra.mxu0 %v2932
        %2994 = vmatprep.subr.mxu0 0.0
        %2995 = vmatpush1.msra.mxu0 %v2933
        %2996 = vmatprep.subr.mxu0 0.0
        %2997 = vmatpush1.msra.mxu0 %v2934
        %2998 = vmatprep.subr.mxu0 0.0
        %2999 = vmatpush1.msra.mxu0 %v2935
        %3000 = vmatprep.mubr.f32.mxu0 %v520
        %3001 = vmatmul.mubr.f32.gmra.mrb[0].mxu0 %v293
        %v3002 = vpop.f32.mrb[0].mxu0
        %v3003 = vadd.f32 0.0, %v3002
        %v3004 = vpop.f32.mrb[0].mxu0
        %3005 = vdwg.mxu0
        %v3006 = vlaneseq
        %v3007 = vshrl.u32 %v3006, 7
        %v3008 = vsub.s32 3, %v3007
        %v3009 = vrot.slane %v380, %v3008
        %v3010 = vmul.f32 %v3003, %v3009
        %v3011 = vadd.f32 %v2867, %v3010
        %v3013 = vsel %vm1631, %v426, 0
        %v3016 = vsel %vm1635, %v3011, 0
        %3018 = vmatprep.subr.mxu0 0.0
        %3019 = vmatpush1.msra.mxu0 %v3016
        %3020 = vmatprep.subr.mxu0 0.0
        %3021 = vmatpush1.msra.mxu0 0.0
        %3022 = vmatprep.subr.mxu0 0.0
        %3023 = vmatpush1.msra.mxu0 0.0
        %3024 = vmatprep.subr.mxu0 0.0
        %3025 = vmatpush1.msra.mxu0 0.0
        %3026 = vmatprep.subr.mxu0 0.0
        %3027 = vmatpush1.msra.mxu0 0.0
        %3028 = vmatprep.subr.mxu0 0.0
        %3029 = vmatpush1.msra.mxu0 0.0
        %3030 = vmatprep.subr.mxu0 0.0
        %3031 = vmatpush1.msra.mxu0 0.0
        %3032 = vmatprep.subr.mxu0 0.0
        %3033 = vmatpush1.msra.mxu0 0.0
        %3034 = vmatprep.subr.mxu0 0.0
        %3035 = vmatpush1.msra.mxu0 0.0
        %3036 = vmatprep.subr.mxu0 0.0
        %3037 = vmatpush1.msra.mxu0 0.0
        %3038 = vmatprep.subr.mxu0 0.0
        %3039 = vmatpush1.msra.mxu0 0.0
        %3040 = vmatprep.subr.mxu0 0.0
        %3041 = vmatpush1.msra.mxu0 0.0
        %3042 = vmatprep.subr.mxu0 0.0
        %3043 = vmatpush1.msra.mxu0 0.0
        %3044 = vmatprep.subr.mxu0 0.0
        %3045 = vmatpush1.msra.mxu0 0.0
        %3046 = vmatprep.subr.mxu0 0.0
        %3047 = vmatpush1.msra.mxu0 0.0
        %3048 = vmatprep.subr.mxu0 0.0
        %3049 = vmatpush1.msra.mxu0 0.0
        %3050 = vmatprep.subr.mxu0 0.0
        %3051 = vmatpush1.msra.mxu0 0.0
        %3052 = vmatprep.subr.mxu0 0.0
        %3053 = vmatpush1.msra.mxu0 0.0
        %3054 = vmatprep.subr.mxu0 0.0
        %3055 = vmatpush1.msra.mxu0 0.0
        %3056 = vmatprep.subr.mxu0 0.0
        %3057 = vmatpush1.msra.mxu0 0.0
        %3058 = vmatprep.subr.mxu0 0.0
        %3059 = vmatpush1.msra.mxu0 0.0
        %3060 = vmatprep.subr.mxu0 0.0
        %3061 = vmatpush1.msra.mxu0 0.0
        %3062 = vmatprep.subr.mxu0 0.0
        %3063 = vmatpush1.msra.mxu0 0.0
        %3064 = vmatprep.subr.mxu0 0.0
        %3065 = vmatpush1.msra.mxu0 0.0
        %3066 = vmatprep.subr.mxu0 0.0
        %3067 = vmatpush1.msra.mxu0 0.0
        %3068 = vmatprep.subr.mxu0 0.0
        %3069 = vmatpush1.msra.mxu0 0.0
        %3070 = vmatprep.subr.mxu0 0.0
        %3071 = vmatpush1.msra.mxu0 0.0
        %3072 = vmatprep.subr.mxu0 0.0
        %3073 = vmatpush1.msra.mxu0 0.0
        %3074 = vmatprep.subr.mxu0 0.0
        %3075 = vmatpush1.msra.mxu0 0.0
        %3076 = vmatprep.subr.mxu0 0.0
        %3077 = vmatpush1.msra.mxu0 0.0
        %3078 = vmatprep.subr.mxu0 0.0
        %3079 = vmatpush1.msra.mxu0 0.0
        %3080 = vmatprep.subr.mxu0 0.0
        %3081 = vmatpush1.msra.mxu0 0.0
        %3082 = vmatprep.mubr.f32.mxu0 0.0
        %3083 = vmatmul.mubr.f32.gmra.mrb[0].mxu0 %v3013
        %v3084 = vpop.f32.mrb[0].mxu0
        %v3085 = vadd.f32 0.0, %v3084
        %v3086 = vpop.f32.mrb[0].mxu0
        %3087 = vdwg.mxu0
        %v3088 = vadd.f32 %v2436, %v3085
        %v3089 = vlaneseq
        %v3090 = vshrl.u32 %v3089, 7
        %v3091 = vsub.s32 4, %v3090
        %v3092 = vrot.slane %v450, %v3091
        %vm3093 = vcmp.eq.s32.totalorder %v391, %v3092
        %vm3094 = vcmp.eq.s32.totalorder %v392, %v3092
        %vm3095 = vcmp.eq.s32.totalorder %v393, %v3092
        %vm3096 = vcmp.eq.s32.totalorder %v394, %v3092
        %vm3097 = vcmp.eq.s32.totalorder %v395, %v3092
        %vm3098 = vcmp.eq.s32.totalorder %v396, %v3092
        %vm3099 = vcmp.eq.s32.totalorder %v397, %v3092
        %vm3100 = vcmp.eq.s32.totalorder %v398, %v3092
        %vm3101 = vcmp.eq.s32.totalorder %v399, %v3092
        %vm3102 = vcmp.eq.s32.totalorder %v400, %v3092
        %vm3103 = vcmp.eq.s32.totalorder %v401, %v3092
        %vm3104 = vcmp.eq.s32.totalorder %v402, %v3092
        %vm3105 = vcmp.eq.s32.totalorder %v403, %v3092
        %vm3106 = vcmp.eq.s32.totalorder %v404, %v3092
        %vm3107 = vcmp.eq.s32.totalorder %v405, %v3092
        %vm3108 = vcmp.eq.s32.totalorder %v406, %v3092
        %vm3109 = vcmp.eq.s32.totalorder %v407, %v3092
        %vm3110 = vcmp.eq.s32.totalorder %v408, %v3092
        %vm3111 = vcmp.eq.s32.totalorder %v409, %v3092
        %vm3112 = vcmp.eq.s32.totalorder %v410, %v3092
        %vm3113 = vcmp.eq.s32.totalorder %v411, %v3092
        %vm3114 = vcmp.eq.s32.totalorder %v412, %v3092
        %vm3115 = vcmp.eq.s32.totalorder %v413, %v3092
        %vm3116 = vcmp.eq.s32.totalorder %v414, %v3092
        %vm3117 = vcmp.eq.s32.totalorder %v415, %v3092
        %vm3118 = vcmp.eq.s32.totalorder %v416, %v3092
        %vm3119 = vcmp.eq.s32.totalorder %v417, %v3092
        %vm3120 = vcmp.eq.s32.totalorder %v418, %v3092
        %vm3121 = vcmp.eq.s32.totalorder %v419, %v3092
        %vm3122 = vcmp.eq.s32.totalorder %v420, %v3092
        %vm3123 = vcmp.eq.s32.totalorder %v421, %v3092
        %vm3124 = vcmp.eq.s32.totalorder %v422, %v3092
        %v3125 = vsel %vm3093, 1.0, 0.0
        %v3126 = vsel %vm3094, 1.0, 0.0
        %v3127 = vsel %vm3095, 1.0, 0.0
        %v3128 = vsel %vm3096, 1.0, 0.0
        %v3129 = vsel %vm3097, 1.0, 0.0
        %v3130 = vsel %vm3098, 1.0, 0.0
        %v3131 = vsel %vm3099, 1.0, 0.0
        %v3132 = vsel %vm3100, 1.0, 0.0
        %v3133 = vsel %vm3101, 1.0, 0.0
        %v3134 = vsel %vm3102, 1.0, 0.0
        %v3135 = vsel %vm3103, 1.0, 0.0
        %v3136 = vsel %vm3104, 1.0, 0.0
        %v3137 = vsel %vm3105, 1.0, 0.0
        %v3138 = vsel %vm3106, 1.0, 0.0
        %v3139 = vsel %vm3107, 1.0, 0.0
        %v3140 = vsel %vm3108, 1.0, 0.0
        %v3141 = vsel %vm3109, 1.0, 0.0
        %v3142 = vsel %vm3110, 1.0, 0.0
        %v3143 = vsel %vm3111, 1.0, 0.0
        %v3144 = vsel %vm3112, 1.0, 0.0
        %v3145 = vsel %vm3113, 1.0, 0.0
        %v3146 = vsel %vm3114, 1.0, 0.0
        %v3147 = vsel %vm3115, 1.0, 0.0
        %v3148 = vsel %vm3116, 1.0, 0.0
        %v3149 = vsel %vm3117, 1.0, 0.0
        %v3150 = vsel %vm3118, 1.0, 0.0
        %v3151 = vsel %vm3119, 1.0, 0.0
        %v3152 = vsel %vm3120, 1.0, 0.0
        %v3153 = vsel %vm3121, 1.0, 0.0
        %v3154 = vsel %vm3122, 1.0, 0.0
        %v3155 = vsel %vm3123, 1.0, 0.0
        %v3156 = vsel %vm3124, 1.0, 0.0
        %3157 = vmatprep.subr.mxu0 0.0
        %3158 = vmatpush1.msra.mxu0 %v3125
        %3159 = vmatprep.subr.mxu0 0.0
        %3160 = vmatpush1.msra.mxu0 %v3126
        %3161 = vmatprep.subr.mxu0 0.0
        %3162 = vmatpush1.msra.mxu0 %v3127
        %3163 = vmatprep.subr.mxu0 0.0
        %3164 = vmatpush1.msra.mxu0 %v3128
        %3165 = vmatprep.subr.mxu0 0.0
        %3166 = vmatpush1.msra.mxu0 %v3129
        %3167 = vmatprep.subr.mxu0 0.0
        %3168 = vmatpush1.msra.mxu0 %v3130
        %3169 = vmatprep.subr.mxu0 0.0
        %3170 = vmatpush1.msra.mxu0 %v3131
        %3171 = vmatprep.subr.mxu0 0.0
        %3172 = vmatpush1.msra.mxu0 %v3132
        %3173 = vmatprep.subr.mxu0 0.0
        %3174 = vmatpush1.msra.mxu0 %v3133
        %3175 = vmatprep.subr.mxu0 0.0
        %3176 = vmatpush1.msra.mxu0 %v3134
        %3177 = vmatprep.subr.mxu0 0.0
        %3178 = vmatpush1.msra.mxu0 %v3135
        %3179 = vmatprep.subr.mxu0 0.0
        %3180 = vmatpush1.msra.mxu0 %v3136
        %3181 = vmatprep.subr.mxu0 0.0
        %3182 = vmatpush1.msra.mxu0 %v3137
        %3183 = vmatprep.subr.mxu0 0.0
        %3184 = vmatpush1.msra.mxu0 %v3138
        %3185 = vmatprep.subr.mxu0 0.0
        %3186 = vmatpush1.msra.mxu0 %v3139
        %3187 = vmatprep.subr.mxu0 0.0
        %3188 = vmatpush1.msra.mxu0 %v3140
        %3189 = vmatprep.subr.mxu0 0.0
        %3190 = vmatpush1.msra.mxu0 %v3141
        %3191 = vmatprep.subr.mxu0 0.0
        %3192 = vmatpush1.msra.mxu0 %v3142
        %3193 = vmatprep.subr.mxu0 0.0
        %3194 = vmatpush1.msra.mxu0 %v3143
        %3195 = vmatprep.subr.mxu0 0.0
        %3196 = vmatpush1.msra.mxu0 %v3144
        %3197 = vmatprep.subr.mxu0 0.0
        %3198 = vmatpush1.msra.mxu0 %v3145
        %3199 = vmatprep.subr.mxu0 0.0
        %3200 = vmatpush1.msra.mxu0 %v3146
        %3201 = vmatprep.subr.mxu0 0.0
        %3202 = vmatpush1.msra.mxu0 %v3147
        %3203 = vmatprep.subr.mxu0 0.0
        %3204 = vmatpush1.msra.mxu0 %v3148
        %3205 = vmatprep.subr.mxu0 0.0
        %3206 = vmatpush1.msra.mxu0 %v3149
        %3207 = vmatprep.subr.mxu0 0.0
        %3208 = vmatpush1.msra.mxu0 %v3150
        %3209 = vmatprep.subr.mxu0 0.0
        %3210 = vmatpush1.msra.mxu0 %v3151
        %3211 = vmatprep.subr.mxu0 0.0
        %3212 = vmatpush1.msra.mxu0 %v3152
        %3213 = vmatprep.subr.mxu0 0.0
        %3214 = vmatpush1.msra.mxu0 %v3153
        %3215 = vmatprep.subr.mxu0 0.0
        %3216 = vmatpush1.msra.mxu0 %v3154
        %3217 = vmatprep.subr.mxu0 0.0
        %3218 = vmatpush1.msra.mxu0 %v3155
        %3219 = vmatprep.subr.mxu0 0.0
        %3220 = vmatpush1.msra.mxu0 %v3156
        %3221 = vmatprep.mubr.f32.mxu0 %v520
        %3222 = vmatmul.mubr.f32.gmra.mrb[0].mxu0 %v293
        %v3223 = vpop.f32.mrb[0].mxu0
        %v3224 = vadd.f32 0.0, %v3223
        %v3225 = vpop.f32.mrb[0].mxu0
        %3226 = vdwg.mxu0
        %v3227 = vlaneseq
        %v3228 = vshrl.u32 %v3227, 7
        %v3229 = vsub.s32 4, %v3228
        %v3230 = vrot.slane %v359, %v3229
        %v3231 = vmul.f32 %v3224, %v3230
        %v3232 = vlaneseq
        %v3233 = vshrl.u32 %v3232, 7
        %v3234 = vsub.s32 4, %v3233
        %v3235 = vrot.slane %v615, %v3234
        %vm3236 = vcmp.eq.s32.totalorder %v391, %v3235
        %vm3237 = vcmp.eq.s32.totalorder %v392, %v3235
        %vm3238 = vcmp.eq.s32.totalorder %v393, %v3235
        %vm3239 = vcmp.eq.s32.totalorder %v394, %v3235
        %vm3240 = vcmp.eq.s32.totalorder %v395, %v3235
        %vm3241 = vcmp.eq.s32.totalorder %v396, %v3235
        %vm3242 = vcmp.eq.s32.totalorder %v397, %v3235
        %vm3243 = vcmp.eq.s32.totalorder %v398, %v3235
        %vm3244 = vcmp.eq.s32.totalorder %v399, %v3235
        %vm3245 = vcmp.eq.s32.totalorder %v400, %v3235
        %vm3246 = vcmp.eq.s32.totalorder %v401, %v3235
        %vm3247 = vcmp.eq.s32.totalorder %v402, %v3235
        %vm3248 = vcmp.eq.s32.totalorder %v403, %v3235
        %vm3249 = vcmp.eq.s32.totalorder %v404, %v3235
        %vm3250 = vcmp.eq.s32.totalorder %v405, %v3235
        %vm3251 = vcmp.eq.s32.totalorder %v406, %v3235
        %vm3252 = vcmp.eq.s32.totalorder %v407, %v3235
        %vm3253 = vcmp.eq.s32.totalorder %v408, %v3235
        %vm3254 = vcmp.eq.s32.totalorder %v409, %v3235
        %vm3255 = vcmp.eq.s32.totalorder %v410, %v3235
        %vm3256 = vcmp.eq.s32.totalorder %v411, %v3235
        %vm3257 = vcmp.eq.s32.totalorder %v412, %v3235
        %vm3258 = vcmp.eq.s32.totalorder %v413, %v3235
        %vm3259 = vcmp.eq.s32.totalorder %v414, %v3235
        %vm3260 = vcmp.eq.s32.totalorder %v415, %v3235
        %vm3261 = vcmp.eq.s32.totalorder %v416, %v3235
        %vm3262 = vcmp.eq.s32.totalorder %v417, %v3235
        %vm3263 = vcmp.eq.s32.totalorder %v418, %v3235
        %vm3264 = vcmp.eq.s32.totalorder %v419, %v3235
        %vm3265 = vcmp.eq.s32.totalorder %v420, %v3235
        %vm3266 = vcmp.eq.s32.totalorder %v421, %v3235
        %vm3267 = vcmp.eq.s32.totalorder %v422, %v3235
        %v3268 = vsel %vm3236, 1.0, 0.0
        %v3269 = vsel %vm3237, 1.0, 0.0
        %v3270 = vsel %vm3238, 1.0, 0.0
        %v3271 = vsel %vm3239, 1.0, 0.0
        %v3272 = vsel %vm3240, 1.0, 0.0
        %v3273 = vsel %vm3241, 1.0, 0.0
        %v3274 = vsel %vm3242, 1.0, 0.0
        %v3275 = vsel %vm3243, 1.0, 0.0
        %v3276 = vsel %vm3244, 1.0, 0.0
        %v3277 = vsel %vm3245, 1.0, 0.0
        %v3278 = vsel %vm3246, 1.0, 0.0
        %v3279 = vsel %vm3247, 1.0, 0.0
        %v3280 = vsel %vm3248, 1.0, 0.0
        %v3281 = vsel %vm3249, 1.0, 0.0
        %v3282 = vsel %vm3250, 1.0, 0.0
        %v3283 = vsel %vm3251, 1.0, 0.0
        %v3284 = vsel %vm3252, 1.0, 0.0
        %v3285 = vsel %vm3253, 1.0, 0.0
        %v3286 = vsel %vm3254, 1.0, 0.0
        %v3287 = vsel %vm3255, 1.0, 0.0
        %v3288 = vsel %vm3256, 1.0, 0.0
        %v3289 = vsel %vm3257, 1.0, 0.0
        %v3290 = vsel %vm3258, 1.0, 0.0
        %v3291 = vsel %vm3259, 1.0, 0.0
        %v3292 = vsel %vm3260, 1.0, 0.0
        %v3293 = vsel %vm3261, 1.0, 0.0
        %v3294 = vsel %vm3262, 1.0, 0.0
        %v3295 = vsel %vm3263, 1.0, 0.0
        %v3296 = vsel %vm3264, 1.0, 0.0
        %v3297 = vsel %vm3265, 1.0, 0.0
        %v3298 = vsel %vm3266, 1.0, 0.0
        %v3299 = vsel %vm3267, 1.0, 0.0
        %3300 = vmatprep.subr.mxu0 0.0
        %3301 = vmatpush1.msra.mxu0 %v3268
        %3302 = vmatprep.subr.mxu0 0.0
        %3303 = vmatpush1.msra.mxu0 %v3269
        %3304 = vmatprep.subr.mxu0 0.0
        %3305 = vmatpush1.msra.mxu0 %v3270
        %3306 = vmatprep.subr.mxu0 0.0
        %3307 = vmatpush1.msra.mxu0 %v3271
        %3308 = vmatprep.subr.mxu0 0.0
        %3309 = vmatpush1.msra.mxu0 %v3272
        %3310 = vmatprep.subr.mxu0 0.0
        %3311 = vmatpush1.msra.mxu0 %v3273
        %3312 = vmatprep.subr.mxu0 0.0
        %3313 = vmatpush1.msra.mxu0 %v3274
        %3314 = vmatprep.subr.mxu0 0.0
        %3315 = vmatpush1.msra.mxu0 %v3275
        %3316 = vmatprep.subr.mxu0 0.0
        %3317 = vmatpush1.msra.mxu0 %v3276
        %3318 = vmatprep.subr.mxu0 0.0
        %3319 = vmatpush1.msra.mxu0 %v3277
        %3320 = vmatprep.subr.mxu0 0.0
        %3321 = vmatpush1.msra.mxu0 %v3278
        %3322 = vmatprep.subr.mxu0 0.0
        %3323 = vmatpush1.msra.mxu0 %v3279
        %3324 = vmatprep.subr.mxu0 0.0
        %3325 = vmatpush1.msra.mxu0 %v3280
        %3326 = vmatprep.subr.mxu0 0.0
        %3327 = vmatpush1.msra.mxu0 %v3281
        %3328 = vmatprep.subr.mxu0 0.0
        %3329 = vmatpush1.msra.mxu0 %v3282
        %3330 = vmatprep.subr.mxu0 0.0
        %3331 = vmatpush1.msra.mxu0 %v3283
        %3332 = vmatprep.subr.mxu0 0.0
        %3333 = vmatpush1.msra.mxu0 %v3284
        %3334 = vmatprep.subr.mxu0 0.0
        %3335 = vmatpush1.msra.mxu0 %v3285
        %3336 = vmatprep.subr.mxu0 0.0
        %3337 = vmatpush1.msra.mxu0 %v3286
        %3338 = vmatprep.subr.mxu0 0.0
        %3339 = vmatpush1.msra.mxu0 %v3287
        %3340 = vmatprep.subr.mxu0 0.0
        %3341 = vmatpush1.msra.mxu0 %v3288
        %3342 = vmatprep.subr.mxu0 0.0
        %3343 = vmatpush1.msra.mxu0 %v3289
        %3344 = vmatprep.subr.mxu0 0.0
        %3345 = vmatpush1.msra.mxu0 %v3290
        %3346 = vmatprep.subr.mxu0 0.0
        %3347 = vmatpush1.msra.mxu0 %v3291
        %3348 = vmatprep.subr.mxu0 0.0
        %3349 = vmatpush1.msra.mxu0 %v3292
        %3350 = vmatprep.subr.mxu0 0.0
        %3351 = vmatpush1.msra.mxu0 %v3293
        %3352 = vmatprep.subr.mxu0 0.0
        %3353 = vmatpush1.msra.mxu0 %v3294
        %3354 = vmatprep.subr.mxu0 0.0
        %3355 = vmatpush1.msra.mxu0 %v3295
        %3356 = vmatprep.subr.mxu0 0.0
        %3357 = vmatpush1.msra.mxu0 %v3296
        %3358 = vmatprep.subr.mxu0 0.0
        %3359 = vmatpush1.msra.mxu0 %v3297
        %3360 = vmatprep.subr.mxu0 0.0
        %3361 = vmatpush1.msra.mxu0 %v3298
        %3362 = vmatprep.subr.mxu0 0.0
        %3363 = vmatpush1.msra.mxu0 %v3299
        %3364 = vmatprep.mubr.f32.mxu0 %v520
        %3365 = vmatmul.mubr.f32.gmra.mrb[0].mxu0 %v293
        %v3366 = vpop.f32.mrb[0].mxu0
        %v3367 = vadd.f32 0.0, %v3366
        %v3368 = vpop.f32.mrb[0].mxu0
        %3369 = vdwg.mxu0
        %v3370 = vlaneseq
        %v3371 = vshrl.u32 %v3370, 7
        %v3372 = vsub.s32 4, %v3371
        %v3373 = vrot.slane %v376, %v3372
        %v3374 = vmul.f32 %v3367, %v3373
        %v3375 = vadd.f32 %v3231, %v3374
        %v3376 = vlaneseq
        %v3377 = vshrl.u32 %v3376, 7
        %v3378 = vsub.s32 4, %v3377
        %v3379 = vrot.slane %v763, %v3378
        %vm3380 = vcmp.eq.s32.totalorder %v391, %v3379
        %vm3381 = vcmp.eq.s32.totalorder %v392, %v3379
        %vm3382 = vcmp.eq.s32.totalorder %v393, %v3379
        %vm3383 = vcmp.eq.s32.totalorder %v394, %v3379
        %vm3384 = vcmp.eq.s32.totalorder %v395, %v3379
        %vm3385 = vcmp.eq.s32.totalorder %v396, %v3379
        %vm3386 = vcmp.eq.s32.totalorder %v397, %v3379
        %vm3387 = vcmp.eq.s32.totalorder %v398, %v3379
        %vm3388 = vcmp.eq.s32.totalorder %v399, %v3379
        %vm3389 = vcmp.eq.s32.totalorder %v400, %v3379
        %vm3390 = vcmp.eq.s32.totalorder %v401, %v3379
        %vm3391 = vcmp.eq.s32.totalorder %v402, %v3379
        %vm3392 = vcmp.eq.s32.totalorder %v403, %v3379
        %vm3393 = vcmp.eq.s32.totalorder %v404, %v3379
        %vm3394 = vcmp.eq.s32.totalorder %v405, %v3379
        %vm3395 = vcmp.eq.s32.totalorder %v406, %v3379
        %vm3396 = vcmp.eq.s32.totalorder %v407, %v3379
        %vm3397 = vcmp.eq.s32.totalorder %v408, %v3379
        %vm3398 = vcmp.eq.s32.totalorder %v409, %v3379
        %vm3399 = vcmp.eq.s32.totalorder %v410, %v3379
        %vm3400 = vcmp.eq.s32.totalorder %v411, %v3379
        %vm3401 = vcmp.eq.s32.totalorder %v412, %v3379
        %vm3402 = vcmp.eq.s32.totalorder %v413, %v3379
        %vm3403 = vcmp.eq.s32.totalorder %v414, %v3379
        %vm3404 = vcmp.eq.s32.totalorder %v415, %v3379
        %vm3405 = vcmp.eq.s32.totalorder %v416, %v3379
        %vm3406 = vcmp.eq.s32.totalorder %v417, %v3379
        %vm3407 = vcmp.eq.s32.totalorder %v418, %v3379
        %vm3408 = vcmp.eq.s32.totalorder %v419, %v3379
        %vm3409 = vcmp.eq.s32.totalorder %v420, %v3379
        %vm3410 = vcmp.eq.s32.totalorder %v421, %v3379
        %vm3411 = vcmp.eq.s32.totalorder %v422, %v3379
        %v3412 = vsel %vm3380, 1.0, 0.0
        %v3413 = vsel %vm3381, 1.0, 0.0
        %v3414 = vsel %vm3382, 1.0, 0.0
        %v3415 = vsel %vm3383, 1.0, 0.0
        %v3416 = vsel %vm3384, 1.0, 0.0
        %v3417 = vsel %vm3385, 1.0, 0.0
        %v3418 = vsel %vm3386, 1.0, 0.0
        %v3419 = vsel %vm3387, 1.0, 0.0
        %v3420 = vsel %vm3388, 1.0, 0.0
        %v3421 = vsel %vm3389, 1.0, 0.0
        %v3422 = vsel %vm3390, 1.0, 0.0
        %v3423 = vsel %vm3391, 1.0, 0.0
        %v3424 = vsel %vm3392, 1.0, 0.0
        %v3425 = vsel %vm3393, 1.0, 0.0
        %v3426 = vsel %vm3394, 1.0, 0.0
        %v3427 = vsel %vm3395, 1.0, 0.0
        %v3428 = vsel %vm3396, 1.0, 0.0
        %v3429 = vsel %vm3397, 1.0, 0.0
        %v3430 = vsel %vm3398, 1.0, 0.0
        %v3431 = vsel %vm3399, 1.0, 0.0
        %v3432 = vsel %vm3400, 1.0, 0.0
        %v3433 = vsel %vm3401, 1.0, 0.0
        %v3434 = vsel %vm3402, 1.0, 0.0
        %v3435 = vsel %vm3403, 1.0, 0.0
        %v3436 = vsel %vm3404, 1.0, 0.0
        %v3437 = vsel %vm3405, 1.0, 0.0
        %v3438 = vsel %vm3406, 1.0, 0.0
        %v3439 = vsel %vm3407, 1.0, 0.0
        %v3440 = vsel %vm3408, 1.0, 0.0
        %v3441 = vsel %vm3409, 1.0, 0.0
        %v3442 = vsel %vm3410, 1.0, 0.0
        %v3443 = vsel %vm3411, 1.0, 0.0
        %3444 = vmatprep.subr.mxu0 0.0
        %3445 = vmatpush1.msra.mxu0 %v3412
        %3446 = vmatprep.subr.mxu0 0.0
        %3447 = vmatpush1.msra.mxu0 %v3413
        %3448 = vmatprep.subr.mxu0 0.0
        %3449 = vmatpush1.msra.mxu0 %v3414
        %3450 = vmatprep.subr.mxu0 0.0
        %3451 = vmatpush1.msra.mxu0 %v3415
        %3452 = vmatprep.subr.mxu0 0.0
        %3453 = vmatpush1.msra.mxu0 %v3416
        %3454 = vmatprep.subr.mxu0 0.0
        %3455 = vmatpush1.msra.mxu0 %v3417
        %3456 = vmatprep.subr.mxu0 0.0
        %3457 = vmatpush1.msra.mxu0 %v3418
        %3458 = vmatprep.subr.mxu0 0.0
        %3459 = vmatpush1.msra.mxu0 %v3419
        %3460 = vmatprep.subr.mxu0 0.0
        %3461 = vmatpush1.msra.mxu0 %v3420
        %3462 = vmatprep.subr.mxu0 0.0
        %3463 = vmatpush1.msra.mxu0 %v3421
        %3464 = vmatprep.subr.mxu0 0.0
        %3465 = vmatpush1.msra.mxu0 %v3422
        %3466 = vmatprep.subr.mxu0 0.0
        %3467 = vmatpush1.msra.mxu0 %v3423
        %3468 = vmatprep.subr.mxu0 0.0
        %3469 = vmatpush1.msra.mxu0 %v3424
        %3470 = vmatprep.subr.mxu0 0.0
        %3471 = vmatpush1.msra.mxu0 %v3425
        %3472 = vmatprep.subr.mxu0 0.0
        %3473 = vmatpush1.msra.mxu0 %v3426
        %3474 = vmatprep.subr.mxu0 0.0
        %3475 = vmatpush1.msra.mxu0 %v3427
        %3476 = vmatprep.subr.mxu0 0.0
        %3477 = vmatpush1.msra.mxu0 %v3428
        %3478 = vmatprep.subr.mxu0 0.0
        %3479 = vmatpush1.msra.mxu0 %v3429
        %3480 = vmatprep.subr.mxu0 0.0
        %3481 = vmatpush1.msra.mxu0 %v3430
        %3482 = vmatprep.subr.mxu0 0.0
        %3483 = vmatpush1.msra.mxu0 %v3431
        %3484 = vmatprep.subr.mxu0 0.0
        %3485 = vmatpush1.msra.mxu0 %v3432
        %3486 = vmatprep.subr.mxu0 0.0
        %3487 = vmatpush1.msra.mxu0 %v3433
        %3488 = vmatprep.subr.mxu0 0.0
        %3489 = vmatpush1.msra.mxu0 %v3434
        %3490 = vmatprep.subr.mxu0 0.0
        %3491 = vmatpush1.msra.mxu0 %v3435
        %3492 = vmatprep.subr.mxu0 0.0
        %3493 = vmatpush1.msra.mxu0 %v3436
        %3494 = vmatprep.subr.mxu0 0.0
        %3495 = vmatpush1.msra.mxu0 %v3437
        %3496 = vmatprep.subr.mxu0 0.0
        %3497 = vmatpush1.msra.mxu0 %v3438
        %3498 = vmatprep.subr.mxu0 0.0
        %3499 = vmatpush1.msra.mxu0 %v3439
        %3500 = vmatprep.subr.mxu0 0.0
        %3501 = vmatpush1.msra.mxu0 %v3440
        %3502 = vmatprep.subr.mxu0 0.0
        %3503 = vmatpush1.msra.mxu0 %v3441
        %3504 = vmatprep.subr.mxu0 0.0
        %3505 = vmatpush1.msra.mxu0 %v3442
        %3506 = vmatprep.subr.mxu0 0.0
        %3507 = vmatpush1.msra.mxu0 %v3443
        %3508 = vmatprep.mubr.f32.mxu0 %v520
        %3509 = vmatmul.mubr.f32.gmra.mrb[0].mxu0 %v293
        %v3510 = vpop.f32.mrb[0].mxu0
        %v3511 = vadd.f32 0.0, %v3510
        %v3512 = vpop.f32.mrb[0].mxu0
        %3513 = vdwg.mxu0
        %v3514 = vlaneseq
        %v3515 = vshrl.u32 %v3514, 7
        %v3516 = vsub.s32 4, %v3515
        %v3517 = vrot.slane %v378, %v3516
        %v3518 = vmul.f32 %v3511, %v3517
        %v3519 = vadd.f32 %v3375, %v3518
        %v3520 = vlaneseq
        %v3521 = vshrl.u32 %v3520, 7
        %v3522 = vsub.s32 4, %v3521
        %v3523 = vrot.slane %v911, %v3522
        %vm3524 = vcmp.eq.s32.totalorder %v391, %v3523
        %vm3525 = vcmp.eq.s32.totalorder %v392, %v3523
        %vm3526 = vcmp.eq.s32.totalorder %v393, %v3523
        %vm3527 = vcmp.eq.s32.totalorder %v394, %v3523
        %vm3528 = vcmp.eq.s32.totalorder %v395, %v3523
        %vm3529 = vcmp.eq.s32.totalorder %v396, %v3523
        %vm3530 = vcmp.eq.s32.totalorder %v397, %v3523
        %vm3531 = vcmp.eq.s32.totalorder %v398, %v3523
        %vm3532 = vcmp.eq.s32.totalorder %v399, %v3523
        %vm3533 = vcmp.eq.s32.totalorder %v400, %v3523
        %vm3534 = vcmp.eq.s32.totalorder %v401, %v3523
        %vm3535 = vcmp.eq.s32.totalorder %v402, %v3523
        %vm3536 = vcmp.eq.s32.totalorder %v403, %v3523
        %vm3537 = vcmp.eq.s32.totalorder %v404, %v3523
        %vm3538 = vcmp.eq.s32.totalorder %v405, %v3523
        %vm3539 = vcmp.eq.s32.totalorder %v406, %v3523
        %vm3540 = vcmp.eq.s32.totalorder %v407, %v3523
        %vm3541 = vcmp.eq.s32.totalorder %v408, %v3523
        %vm3542 = vcmp.eq.s32.totalorder %v409, %v3523
        %vm3543 = vcmp.eq.s32.totalorder %v410, %v3523
        %vm3544 = vcmp.eq.s32.totalorder %v411, %v3523
        %vm3545 = vcmp.eq.s32.totalorder %v412, %v3523
        %vm3546 = vcmp.eq.s32.totalorder %v413, %v3523
        %vm3547 = vcmp.eq.s32.totalorder %v414, %v3523
        %vm3548 = vcmp.eq.s32.totalorder %v415, %v3523
        %vm3549 = vcmp.eq.s32.totalorder %v416, %v3523
        %vm3550 = vcmp.eq.s32.totalorder %v417, %v3523
        %vm3551 = vcmp.eq.s32.totalorder %v418, %v3523
        %vm3552 = vcmp.eq.s32.totalorder %v419, %v3523
        %vm3553 = vcmp.eq.s32.totalorder %v420, %v3523
        %vm3554 = vcmp.eq.s32.totalorder %v421, %v3523
        %vm3555 = vcmp.eq.s32.totalorder %v422, %v3523
        %v3556 = vsel %vm3524, 1.0, 0.0
        %v3557 = vsel %vm3525, 1.0, 0.0
        %v3558 = vsel %vm3526, 1.0, 0.0
        %v3559 = vsel %vm3527, 1.0, 0.0
        %v3560 = vsel %vm3528, 1.0, 0.0
        %v3561 = vsel %vm3529, 1.0, 0.0
        %v3562 = vsel %vm3530, 1.0, 0.0
        %v3563 = vsel %vm3531, 1.0, 0.0
        %v3564 = vsel %vm3532, 1.0, 0.0
        %v3565 = vsel %vm3533, 1.0, 0.0
        %v3566 = vsel %vm3534, 1.0, 0.0
        %v3567 = vsel %vm3535, 1.0, 0.0
        %v3568 = vsel %vm3536, 1.0, 0.0
        %v3569 = vsel %vm3537, 1.0, 0.0
        %v3570 = vsel %vm3538, 1.0, 0.0
        %v3571 = vsel %vm3539, 1.0, 0.0
        %v3572 = vsel %vm3540, 1.0, 0.0
        %v3573 = vsel %vm3541, 1.0, 0.0
        %v3574 = vsel %vm3542, 1.0, 0.0
        %v3575 = vsel %vm3543, 1.0, 0.0
        %v3576 = vsel %vm3544, 1.0, 0.0
        %v3577 = vsel %vm3545, 1.0, 0.0
        %v3578 = vsel %vm3546, 1.0, 0.0
        %v3579 = vsel %vm3547, 1.0, 0.0
        %v3580 = vsel %vm3548, 1.0, 0.0
        %v3581 = vsel %vm3549, 1.0, 0.0
        %v3582 = vsel %vm3550, 1.0, 0.0
        %v3583 = vsel %vm3551, 1.0, 0.0
        %v3584 = vsel %vm3552, 1.0, 0.0
        %v3585 = vsel %vm3553, 1.0, 0.0
        %v3586 = vsel %vm3554, 1.0, 0.0
        %v3587 = vsel %vm3555, 1.0, 0.0
        %3588 = vmatprep.subr.mxu0 0.0
        %3589 = vmatpush1.msra.mxu0 %v3556
        %3590 = vmatprep.subr.mxu0 0.0
        %3591 = vmatpush1.msra.mxu0 %v3557
        %3592 = vmatprep.subr.mxu0 0.0
        %3593 = vmatpush1.msra.mxu0 %v3558
        %3594 = vmatprep.subr.mxu0 0.0
        %3595 = vmatpush1.msra.mxu0 %v3559
        %3596 = vmatprep.subr.mxu0 0.0
        %3597 = vmatpush1.msra.mxu0 %v3560
        %3598 = vmatprep.subr.mxu0 0.0
        %3599 = vmatpush1.msra.mxu0 %v3561
        %3600 = vmatprep.subr.mxu0 0.0
        %3601 = vmatpush1.msra.mxu0 %v3562
        %3602 = vmatprep.subr.mxu0 0.0
        %3603 = vmatpush1.msra.mxu0 %v3563
        %3604 = vmatprep.subr.mxu0 0.0
        %3605 = vmatpush1.msra.mxu0 %v3564
        %3606 = vmatprep.subr.mxu0 0.0
        %3607 = vmatpush1.msra.mxu0 %v3565
        %3608 = vmatprep.subr.mxu0 0.0
        %3609 = vmatpush1.msra.mxu0 %v3566
        %3610 = vmatprep.subr.mxu0 0.0
        %3611 = vmatpush1.msra.mxu0 %v3567
        %3612 = vmatprep.subr.mxu0 0.0
        %3613 = vmatpush1.msra.mxu0 %v3568
        %3614 = vmatprep.subr.mxu0 0.0
        %3615 = vmatpush1.msra.mxu0 %v3569
        %3616 = vmatprep.subr.mxu0 0.0
        %3617 = vmatpush1.msra.mxu0 %v3570
        %3618 = vmatprep.subr.mxu0 0.0
        %3619 = vmatpush1.msra.mxu0 %v3571
        %3620 = vmatprep.subr.mxu0 0.0
        %3621 = vmatpush1.msra.mxu0 %v3572
        %3622 = vmatprep.subr.mxu0 0.0
        %3623 = vmatpush1.msra.mxu0 %v3573
        %3624 = vmatprep.subr.mxu0 0.0
        %3625 = vmatpush1.msra.mxu0 %v3574
        %3626 = vmatprep.subr.mxu0 0.0
        %3627 = vmatpush1.msra.mxu0 %v3575
        %3628 = vmatprep.subr.mxu0 0.0
        %3629 = vmatpush1.msra.mxu0 %v3576
        %3630 = vmatprep.subr.mxu0 0.0
        %3631 = vmatpush1.msra.mxu0 %v3577
        %3632 = vmatprep.subr.mxu0 0.0
        %3633 = vmatpush1.msra.mxu0 %v3578
        %3634 = vmatprep.subr.mxu0 0.0
        %3635 = vmatpush1.msra.mxu0 %v3579
        %3636 = vmatprep.subr.mxu0 0.0
        %3637 = vmatpush1.msra.mxu0 %v3580
        %3638 = vmatprep.subr.mxu0 0.0
        %3639 = vmatpush1.msra.mxu0 %v3581
        %3640 = vmatprep.subr.mxu0 0.0
        %3641 = vmatpush1.msra.mxu0 %v3582
        %3642 = vmatprep.subr.mxu0 0.0
        %3643 = vmatpush1.msra.mxu0 %v3583
        %3644 = vmatprep.subr.mxu0 0.0
        %3645 = vmatpush1.msra.mxu0 %v3584
        %3646 = vmatprep.subr.mxu0 0.0
        %3647 = vmatpush1.msra.mxu0 %v3585
        %3648 = vmatprep.subr.mxu0 0.0
        %3649 = vmatpush1.msra.mxu0 %v3586
        %3650 = vmatprep.subr.mxu0 0.0
        %3651 = vmatpush1.msra.mxu0 %v3587
        %3652 = vmatprep.mubr.f32.mxu0 %v520
        %3653 = vmatmul.mubr.f32.gmra.mrb[0].mxu0 %v293
        %v3654 = vpop.f32.mrb[0].mxu0
        %v3655 = vadd.f32 0.0, %v3654
        %v3656 = vpop.f32.mrb[0].mxu0
        %3657 = vdwg.mxu0
        %v3658 = vlaneseq
        %v3659 = vshrl.u32 %v3658, 7
        %v3660 = vsub.s32 4, %v3659
        %v3661 = vrot.slane %v380, %v3660
        %v3662 = vmul.f32 %v3655, %v3661
        %v3663 = vadd.f32 %v3519, %v3662
        %v3665 = vsel %vm1631, %v427, 0
        %v3668 = vsel %vm1635, %v3663, 0
        %3670 = vmatprep.subr.mxu0 0.0
        %3671 = vmatpush1.msra.mxu0 %v3668
        %3672 = vmatprep.subr.mxu0 0.0
        %3673 = vmatpush1.msra.mxu0 0.0
        %3674 = vmatprep.subr.mxu0 0.0
        %3675 = vmatpush1.msra.mxu0 0.0
        %3676 = vmatprep.subr.mxu0 0.0
        %3677 = vmatpush1.msra.mxu0 0.0
        %3678 = vmatprep.subr.mxu0 0.0
        %3679 = vmatpush1.msra.mxu0 0.0
        %3680 = vmatprep.subr.mxu0 0.0
        %3681 = vmatpush1.msra.mxu0 0.0
        %3682 = vmatprep.subr.mxu0 0.0
        %3683 = vmatpush1.msra.mxu0 0.0
        %3684 = vmatprep.subr.mxu0 0.0
        %3685 = vmatpush1.msra.mxu0 0.0
        %3686 = vmatprep.subr.mxu0 0.0
        %3687 = vmatpush1.msra.mxu0 0.0
        %3688 = vmatprep.subr.mxu0 0.0
        %3689 = vmatpush1.msra.mxu0 0.0
        %3690 = vmatprep.subr.mxu0 0.0
        %3691 = vmatpush1.msra.mxu0 0.0
        %3692 = vmatprep.subr.mxu0 0.0
        %3693 = vmatpush1.msra.mxu0 0.0
        %3694 = vmatprep.subr.mxu0 0.0
        %3695 = vmatpush1.msra.mxu0 0.0
        %3696 = vmatprep.subr.mxu0 0.0
        %3697 = vmatpush1.msra.mxu0 0.0
        %3698 = vmatprep.subr.mxu0 0.0
        %3699 = vmatpush1.msra.mxu0 0.0
        %3700 = vmatprep.subr.mxu0 0.0
        %3701 = vmatpush1.msra.mxu0 0.0
        %3702 = vmatprep.subr.mxu0 0.0
        %3703 = vmatpush1.msra.mxu0 0.0
        %3704 = vmatprep.subr.mxu0 0.0
        %3705 = vmatpush1.msra.mxu0 0.0
        %3706 = vmatprep.subr.mxu0 0.0
        %3707 = vmatpush1.msra.mxu0 0.0
        %3708 = vmatprep.subr.mxu0 0.0
        %3709 = vmatpush1.msra.mxu0 0.0
        %3710 = vmatprep.subr.mxu0 0.0
        %3711 = vmatpush1.msra.mxu0 0.0
        %3712 = vmatprep.subr.mxu0 0.0
        %3713 = vmatpush1.msra.mxu0 0.0
        %3714 = vmatprep.subr.mxu0 0.0
        %3715 = vmatpush1.msra.mxu0 0.0
        %3716 = vmatprep.subr.mxu0 0.0
        %3717 = vmatpush1.msra.mxu0 0.0
        %3718 = vmatprep.subr.mxu0 0.0
        %3719 = vmatpush1.msra.mxu0 0.0
        %3720 = vmatprep.subr.mxu0 0.0
        %3721 = vmatpush1.msra.mxu0 0.0
        %3722 = vmatprep.subr.mxu0 0.0
        %3723 = vmatpush1.msra.mxu0 0.0
        %3724 = vmatprep.subr.mxu0 0.0
        %3725 = vmatpush1.msra.mxu0 0.0
        %3726 = vmatprep.subr.mxu0 0.0
        %3727 = vmatpush1.msra.mxu0 0.0
        %3728 = vmatprep.subr.mxu0 0.0
        %3729 = vmatpush1.msra.mxu0 0.0
        %3730 = vmatprep.subr.mxu0 0.0
        %3731 = vmatpush1.msra.mxu0 0.0
        %3732 = vmatprep.subr.mxu0 0.0
        %3733 = vmatpush1.msra.mxu0 0.0
        %3734 = vmatprep.mubr.f32.mxu0 0.0
        %3735 = vmatmul.mubr.f32.gmra.mrb[0].mxu0 %v3665
        %v3736 = vpop.f32.mrb[0].mxu0
        %v3737 = vadd.f32 0.0, %v3736
        %v3738 = vpop.f32.mrb[0].mxu0
        %3739 = vdwg.mxu0
        %v3740 = vadd.f32 %v3088, %v3737
        %v3741 = vlaneseq
        %v3742 = vshrl.u32 %v3741, 7
        %v3743 = vsub.s32 5, %v3742
        %v3744 = vrot.slane %v450, %v3743
        %vm3745 = vcmp.eq.s32.totalorder %v391, %v3744
        %vm3746 = vcmp.eq.s32.totalorder %v392, %v3744
        %vm3747 = vcmp.eq.s32.totalorder %v393, %v3744
        %vm3748 = vcmp.eq.s32.totalorder %v394, %v3744
        %vm3749 = vcmp.eq.s32.totalorder %v395, %v3744
        %vm3750 = vcmp.eq.s32.totalorder %v396, %v3744
        %vm3751 = vcmp.eq.s32.totalorder %v397, %v3744
        %vm3752 = vcmp.eq.s32.totalorder %v398, %v3744
        %vm3753 = vcmp.eq.s32.totalorder %v399, %v3744
        %vm3754 = vcmp.eq.s32.totalorder %v400, %v3744
        %vm3755 = vcmp.eq.s32.totalorder %v401, %v3744
        %vm3756 = vcmp.eq.s32.totalorder %v402, %v3744
        %vm3757 = vcmp.eq.s32.totalorder %v403, %v3744
        %vm3758 = vcmp.eq.s32.totalorder %v404, %v3744
        %vm3759 = vcmp.eq.s32.totalorder %v405, %v3744
        %vm3760 = vcmp.eq.s32.totalorder %v406, %v3744
        %vm3761 = vcmp.eq.s32.totalorder %v407, %v3744
        %vm3762 = vcmp.eq.s32.totalorder %v408, %v3744
        %vm3763 = vcmp.eq.s32.totalorder %v409, %v3744
        %vm3764 = vcmp.eq.s32.totalorder %v410, %v3744
        %vm3765 = vcmp.eq.s32.totalorder %v411, %v3744
        %vm3766 = vcmp.eq.s32.totalorder %v412, %v3744
        %vm3767 = vcmp.eq.s32.totalorder %v413, %v3744
        %vm3768 = vcmp.eq.s32.totalorder %v414, %v3744
        %vm3769 = vcmp.eq.s32.totalorder %v415, %v3744
        %vm3770 = vcmp.eq.s32.totalorder %v416, %v3744
        %vm3771 = vcmp.eq.s32.totalorder %v417, %v3744
        %vm3772 = vcmp.eq.s32.totalorder %v418, %v3744
        %vm3773 = vcmp.eq.s32.totalorder %v419, %v3744
        %vm3774 = vcmp.eq.s32.totalorder %v420, %v3744
        %vm3775 = vcmp.eq.s32.totalorder %v421, %v3744
        %vm3776 = vcmp.eq.s32.totalorder %v422, %v3744
        %v3777 = vsel %vm3745, 1.0, 0.0
        %v3778 = vsel %vm3746, 1.0, 0.0
        %v3779 = vsel %vm3747, 1.0, 0.0
        %v3780 = vsel %vm3748, 1.0, 0.0
        %v3781 = vsel %vm3749, 1.0, 0.0
        %v3782 = vsel %vm3750, 1.0, 0.0
        %v3783 = vsel %vm3751, 1.0, 0.0
        %v3784 = vsel %vm3752, 1.0, 0.0
        %v3785 = vsel %vm3753, 1.0, 0.0
        %v3786 = vsel %vm3754, 1.0, 0.0
        %v3787 = vsel %vm3755, 1.0, 0.0
        %v3788 = vsel %vm3756, 1.0, 0.0
        %v3789 = vsel %vm3757, 1.0, 0.0
        %v3790 = vsel %vm3758, 1.0, 0.0
        %v3791 = vsel %vm3759, 1.0, 0.0
        %v3792 = vsel %vm3760, 1.0, 0.0
        %v3793 = vsel %vm3761, 1.0, 0.0
        %v3794 = vsel %vm3762, 1.0, 0.0
        %v3795 = vsel %vm3763, 1.0, 0.0
        %v3796 = vsel %vm3764, 1.0, 0.0
        %v3797 = vsel %vm3765, 1.0, 0.0
        %v3798 = vsel %vm3766, 1.0, 0.0
        %v3799 = vsel %vm3767, 1.0, 0.0
        %v3800 = vsel %vm3768, 1.0, 0.0
        %v3801 = vsel %vm3769, 1.0, 0.0
        %v3802 = vsel %vm3770, 1.0, 0.0
        %v3803 = vsel %vm3771, 1.0, 0.0
        %v3804 = vsel %vm3772, 1.0, 0.0
        %v3805 = vsel %vm3773, 1.0, 0.0
        %v3806 = vsel %vm3774, 1.0, 0.0
        %v3807 = vsel %vm3775, 1.0, 0.0
        %v3808 = vsel %vm3776, 1.0, 0.0
        %3809 = vmatprep.subr.mxu0 0.0
        %3810 = vmatpush1.msra.mxu0 %v3777
        %3811 = vmatprep.subr.mxu0 0.0
        %3812 = vmatpush1.msra.mxu0 %v3778
        %3813 = vmatprep.subr.mxu0 0.0
        %3814 = vmatpush1.msra.mxu0 %v3779
        %3815 = vmatprep.subr.mxu0 0.0
        %3816 = vmatpush1.msra.mxu0 %v3780
        %3817 = vmatprep.subr.mxu0 0.0
        %3818 = vmatpush1.msra.mxu0 %v3781
        %3819 = vmatprep.subr.mxu0 0.0
        %3820 = vmatpush1.msra.mxu0 %v3782
        %3821 = vmatprep.subr.mxu0 0.0
        %3822 = vmatpush1.msra.mxu0 %v3783
        %3823 = vmatprep.subr.mxu0 0.0
        %3824 = vmatpush1.msra.mxu0 %v3784
        %3825 = vmatprep.subr.mxu0 0.0
        %3826 = vmatpush1.msra.mxu0 %v3785
        %3827 = vmatprep.subr.mxu0 0.0
        %3828 = vmatpush1.msra.mxu0 %v3786
        %3829 = vmatprep.subr.mxu0 0.0
        %3830 = vmatpush1.msra.mxu0 %v3787
        %3831 = vmatprep.subr.mxu0 0.0
        %3832 = vmatpush1.msra.mxu0 %v3788
        %3833 = vmatprep.subr.mxu0 0.0
        %3834 = vmatpush1.msra.mxu0 %v3789
        %3835 = vmatprep.subr.mxu0 0.0
        %3836 = vmatpush1.msra.mxu0 %v3790
        %3837 = vmatprep.subr.mxu0 0.0
        %3838 = vmatpush1.msra.mxu0 %v3791
        %3839 = vmatprep.subr.mxu0 0.0
        %3840 = vmatpush1.msra.mxu0 %v3792
        %3841 = vmatprep.subr.mxu0 0.0
        %3842 = vmatpush1.msra.mxu0 %v3793
        %3843 = vmatprep.subr.mxu0 0.0
        %3844 = vmatpush1.msra.mxu0 %v3794
        %3845 = vmatprep.subr.mxu0 0.0
        %3846 = vmatpush1.msra.mxu0 %v3795
        %3847 = vmatprep.subr.mxu0 0.0
        %3848 = vmatpush1.msra.mxu0 %v3796
        %3849 = vmatprep.subr.mxu0 0.0
        %3850 = vmatpush1.msra.mxu0 %v3797
        %3851 = vmatprep.subr.mxu0 0.0
        %3852 = vmatpush1.msra.mxu0 %v3798
        %3853 = vmatprep.subr.mxu0 0.0
        %3854 = vmatpush1.msra.mxu0 %v3799
        %3855 = vmatprep.subr.mxu0 0.0
        %3856 = vmatpush1.msra.mxu0 %v3800
        %3857 = vmatprep.subr.mxu0 0.0
        %3858 = vmatpush1.msra.mxu0 %v3801
        %3859 = vmatprep.subr.mxu0 0.0
        %3860 = vmatpush1.msra.mxu0 %v3802
        %3861 = vmatprep.subr.mxu0 0.0
        %3862 = vmatpush1.msra.mxu0 %v3803
        %3863 = vmatprep.subr.mxu0 0.0
        %3864 = vmatpush1.msra.mxu0 %v3804
        %3865 = vmatprep.subr.mxu0 0.0
        %3866 = vmatpush1.msra.mxu0 %v3805
        %3867 = vmatprep.subr.mxu0 0.0
        %3868 = vmatpush1.msra.mxu0 %v3806
        %3869 = vmatprep.subr.mxu0 0.0
        %3870 = vmatpush1.msra.mxu0 %v3807
        %3871 = vmatprep.subr.mxu0 0.0
        %3872 = vmatpush1.msra.mxu0 %v3808
        %3873 = vmatprep.mubr.f32.mxu0 %v520
        %3874 = vmatmul.mubr.f32.gmra.mrb[0].mxu0 %v293
        %v3875 = vpop.f32.mrb[0].mxu0
        %v3876 = vadd.f32 0.0, %v3875
        %v3877 = vpop.f32.mrb[0].mxu0
        %3878 = vdwg.mxu0
        %v3879 = vlaneseq
        %v3880 = vshrl.u32 %v3879, 7
        %v3881 = vsub.s32 5, %v3880
        %v3882 = vrot.slane %v359, %v3881
        %v3883 = vmul.f32 %v3876, %v3882
        %v3884 = vlaneseq
        %v3885 = vshrl.u32 %v3884, 7
        %v3886 = vsub.s32 5, %v3885
        %v3887 = vrot.slane %v615, %v3886
        %vm3888 = vcmp.eq.s32.totalorder %v391, %v3887
        %vm3889 = vcmp.eq.s32.totalorder %v392, %v3887
        %vm3890 = vcmp.eq.s32.totalorder %v393, %v3887
        %vm3891 = vcmp.eq.s32.totalorder %v394, %v3887
        %vm3892 = vcmp.eq.s32.totalorder %v395, %v3887
        %vm3893 = vcmp.eq.s32.totalorder %v396, %v3887
        %vm3894 = vcmp.eq.s32.totalorder %v397, %v3887
        %vm3895 = vcmp.eq.s32.totalorder %v398, %v3887
        %vm3896 = vcmp.eq.s32.totalorder %v399, %v3887
        %vm3897 = vcmp.eq.s32.totalorder %v400, %v3887
        %vm3898 = vcmp.eq.s32.totalorder %v401, %v3887
        %vm3899 = vcmp.eq.s32.totalorder %v402, %v3887
        %vm3900 = vcmp.eq.s32.totalorder %v403, %v3887
        %vm3901 = vcmp.eq.s32.totalorder %v404, %v3887
        %vm3902 = vcmp.eq.s32.totalorder %v405, %v3887
        %vm3903 = vcmp.eq.s32.totalorder %v406, %v3887
        %vm3904 = vcmp.eq.s32.totalorder %v407, %v3887
        %vm3905 = vcmp.eq.s32.totalorder %v408, %v3887
        %vm3906 = vcmp.eq.s32.totalorder %v409, %v3887
        %vm3907 = vcmp.eq.s32.totalorder %v410, %v3887
        %vm3908 = vcmp.eq.s32.totalorder %v411, %v3887
        %vm3909 = vcmp.eq.s32.totalorder %v412, %v3887
        %vm3910 = vcmp.eq.s32.totalorder %v413, %v3887
        %vm3911 = vcmp.eq.s32.totalorder %v414, %v3887
        %vm3912 = vcmp.eq.s32.totalorder %v415, %v3887
        %vm3913 = vcmp.eq.s32.totalorder %v416, %v3887
        %vm3914 = vcmp.eq.s32.totalorder %v417, %v3887
        %vm3915 = vcmp.eq.s32.totalorder %v418, %v3887
        %vm3916 = vcmp.eq.s32.totalorder %v419, %v3887
        %vm3917 = vcmp.eq.s32.totalorder %v420, %v3887
        %vm3918 = vcmp.eq.s32.totalorder %v421, %v3887
        %vm3919 = vcmp.eq.s32.totalorder %v422, %v3887
        %v3920 = vsel %vm3888, 1.0, 0.0
        %v3921 = vsel %vm3889, 1.0, 0.0
        %v3922 = vsel %vm3890, 1.0, 0.0
        %v3923 = vsel %vm3891, 1.0, 0.0
        %v3924 = vsel %vm3892, 1.0, 0.0
        %v3925 = vsel %vm3893, 1.0, 0.0
        %v3926 = vsel %vm3894, 1.0, 0.0
        %v3927 = vsel %vm3895, 1.0, 0.0
        %v3928 = vsel %vm3896, 1.0, 0.0
        %v3929 = vsel %vm3897, 1.0, 0.0
        %v3930 = vsel %vm3898, 1.0, 0.0
        %v3931 = vsel %vm3899, 1.0, 0.0
        %v3932 = vsel %vm3900, 1.0, 0.0
        %v3933 = vsel %vm3901, 1.0, 0.0
        %v3934 = vsel %vm3902, 1.0, 0.0
        %v3935 = vsel %vm3903, 1.0, 0.0
        %v3936 = vsel %vm3904, 1.0, 0.0
        %v3937 = vsel %vm3905, 1.0, 0.0
        %v3938 = vsel %vm3906, 1.0, 0.0
        %v3939 = vsel %vm3907, 1.0, 0.0
        %v3940 = vsel %vm3908, 1.0, 0.0
        %v3941 = vsel %vm3909, 1.0, 0.0
        %v3942 = vsel %vm3910, 1.0, 0.0
        %v3943 = vsel %vm3911, 1.0, 0.0
        %v3944 = vsel %vm3912, 1.0, 0.0
        %v3945 = vsel %vm3913, 1.0, 0.0
        %v3946 = vsel %vm3914, 1.0, 0.0
        %v3947 = vsel %vm3915, 1.0, 0.0
        %v3948 = vsel %vm3916, 1.0, 0.0
        %v3949 = vsel %vm3917, 1.0, 0.0
        %v3950 = vsel %vm3918, 1.0, 0.0
        %v3951 = vsel %vm3919, 1.0, 0.0
        %3952 = vmatprep.subr.mxu0 0.0
        %3953 = vmatpush1.msra.mxu0 %v3920
        %3954 = vmatprep.subr.mxu0 0.0
        %3955 = vmatpush1.msra.mxu0 %v3921
        %3956 = vmatprep.subr.mxu0 0.0
        %3957 = vmatpush1.msra.mxu0 %v3922
        %3958 = vmatprep.subr.mxu0 0.0
        %3959 = vmatpush1.msra.mxu0 %v3923
        %3960 = vmatprep.subr.mxu0 0.0
        %3961 = vmatpush1.msra.mxu0 %v3924
        %3962 = vmatprep.subr.mxu0 0.0
        %3963 = vmatpush1.msra.mxu0 %v3925
        %3964 = vmatprep.subr.mxu0 0.0
        %3965 = vmatpush1.msra.mxu0 %v3926
        %3966 = vmatprep.subr.mxu0 0.0
        %3967 = vmatpush1.msra.mxu0 %v3927
        %3968 = vmatprep.subr.mxu0 0.0
        %3969 = vmatpush1.msra.mxu0 %v3928
        %3970 = vmatprep.subr.mxu0 0.0
        %3971 = vmatpush1.msra.mxu0 %v3929
        %3972 = vmatprep.subr.mxu0 0.0
        %3973 = vmatpush1.msra.mxu0 %v3930
        %3974 = vmatprep.subr.mxu0 0.0
        %3975 = vmatpush1.msra.mxu0 %v3931
        %3976 = vmatprep.subr.mxu0 0.0
        %3977 = vmatpush1.msra.mxu0 %v3932
        %3978 = vmatprep.subr.mxu0 0.0
        %3979 = vmatpush1.msra.mxu0 %v3933
        %3980 = vmatprep.subr.mxu0 0.0
        %3981 = vmatpush1.msra.mxu0 %v3934
        %3982 = vmatprep.subr.mxu0 0.0
        %3983 = vmatpush1.msra.mxu0 %v3935
        %3984 = vmatprep.subr.mxu0 0.0
        %3985 = vmatpush1.msra.mxu0 %v3936
        %3986 = vmatprep.subr.mxu0 0.0
        %3987 = vmatpush1.msra.mxu0 %v3937
        %3988 = vmatprep.subr.mxu0 0.0
        %3989 = vmatpush1.msra.mxu0 %v3938
        %3990 = vmatprep.subr.mxu0 0.0
        %3991 = vmatpush1.msra.mxu0 %v3939
        %3992 = vmatprep.subr.mxu0 0.0
        %3993 = vmatpush1.msra.mxu0 %v3940
        %3994 = vmatprep.subr.mxu0 0.0
        %3995 = vmatpush1.msra.mxu0 %v3941
        %3996 = vmatprep.subr.mxu0 0.0
        %3997 = vmatpush1.msra.mxu0 %v3942
        %3998 = vmatprep.subr.mxu0 0.0
        %3999 = vmatpush1.msra.mxu0 %v3943
        %4000 = vmatprep.subr.mxu0 0.0
        %4001 = vmatpush1.msra.mxu0 %v3944
        %4002 = vmatprep.subr.mxu0 0.0
        %4003 = vmatpush1.msra.mxu0 %v3945
        %4004 = vmatprep.subr.mxu0 0.0
        %4005 = vmatpush1.msra.mxu0 %v3946
        %4006 = vmatprep.subr.mxu0 0.0
        %4007 = vmatpush1.msra.mxu0 %v3947
        %4008 = vmatprep.subr.mxu0 0.0
        %4009 = vmatpush1.msra.mxu0 %v3948
        %4010 = vmatprep.subr.mxu0 0.0
        %4011 = vmatpush1.msra.mxu0 %v3949
        %4012 = vmatprep.subr.mxu0 0.0
        %4013 = vmatpush1.msra.mxu0 %v3950
        %4014 = vmatprep.subr.mxu0 0.0
        %4015 = vmatpush1.msra.mxu0 %v3951
        %4016 = vmatprep.mubr.f32.mxu0 %v520
        %4017 = vmatmul.mubr.f32.gmra.mrb[0].mxu0 %v293
        %v4018 = vpop.f32.mrb[0].mxu0
        %v4019 = vadd.f32 0.0, %v4018
        %v4020 = vpop.f32.mrb[0].mxu0
        %4021 = vdwg.mxu0
        %v4022 = vlaneseq
        %v4023 = vshrl.u32 %v4022, 7
        %v4024 = vsub.s32 5, %v4023
        %v4025 = vrot.slane %v376, %v4024
        %v4026 = vmul.f32 %v4019, %v4025
        %v4027 = vadd.f32 %v3883, %v4026
        %v4028 = vlaneseq
        %v4029 = vshrl.u32 %v4028, 7
        %v4030 = vsub.s32 5, %v4029
        %v4031 = vrot.slane %v763, %v4030
        %vm4032 = vcmp.eq.s32.totalorder %v391, %v4031
        %vm4033 = vcmp.eq.s32.totalorder %v392, %v4031
        %vm4034 = vcmp.eq.s32.totalorder %v393, %v4031
        %vm4035 = vcmp.eq.s32.totalorder %v394, %v4031
        %vm4036 = vcmp.eq.s32.totalorder %v395, %v4031
        %vm4037 = vcmp.eq.s32.totalorder %v396, %v4031
        %vm4038 = vcmp.eq.s32.totalorder %v397, %v4031
        %vm4039 = vcmp.eq.s32.totalorder %v398, %v4031
        %vm4040 = vcmp.eq.s32.totalorder %v399, %v4031
        %vm4041 = vcmp.eq.s32.totalorder %v400, %v4031
        %vm4042 = vcmp.eq.s32.totalorder %v401, %v4031
        %vm4043 = vcmp.eq.s32.totalorder %v402, %v4031
        %vm4044 = vcmp.eq.s32.totalorder %v403, %v4031
        %vm4045 = vcmp.eq.s32.totalorder %v404, %v4031
        %vm4046 = vcmp.eq.s32.totalorder %v405, %v4031
        %vm4047 = vcmp.eq.s32.totalorder %v406, %v4031
        %vm4048 = vcmp.eq.s32.totalorder %v407, %v4031
        %vm4049 = vcmp.eq.s32.totalorder %v408, %v4031
        %vm4050 = vcmp.eq.s32.totalorder %v409, %v4031
        %vm4051 = vcmp.eq.s32.totalorder %v410, %v4031
        %vm4052 = vcmp.eq.s32.totalorder %v411, %v4031
        %vm4053 = vcmp.eq.s32.totalorder %v412, %v4031
        %vm4054 = vcmp.eq.s32.totalorder %v413, %v4031
        %vm4055 = vcmp.eq.s32.totalorder %v414, %v4031
        %vm4056 = vcmp.eq.s32.totalorder %v415, %v4031
        %vm4057 = vcmp.eq.s32.totalorder %v416, %v4031
        %vm4058 = vcmp.eq.s32.totalorder %v417, %v4031
        %vm4059 = vcmp.eq.s32.totalorder %v418, %v4031
        %vm4060 = vcmp.eq.s32.totalorder %v419, %v4031
        %vm4061 = vcmp.eq.s32.totalorder %v420, %v4031
        %vm4062 = vcmp.eq.s32.totalorder %v421, %v4031
        %vm4063 = vcmp.eq.s32.totalorder %v422, %v4031
        %v4064 = vsel %vm4032, 1.0, 0.0
        %v4065 = vsel %vm4033, 1.0, 0.0
        %v4066 = vsel %vm4034, 1.0, 0.0
        %v4067 = vsel %vm4035, 1.0, 0.0
        %v4068 = vsel %vm4036, 1.0, 0.0
        %v4069 = vsel %vm4037, 1.0, 0.0
        %v4070 = vsel %vm4038, 1.0, 0.0
        %v4071 = vsel %vm4039, 1.0, 0.0
        %v4072 = vsel %vm4040, 1.0, 0.0
        %v4073 = vsel %vm4041, 1.0, 0.0
        %v4074 = vsel %vm4042, 1.0, 0.0
        %v4075 = vsel %vm4043, 1.0, 0.0
        %v4076 = vsel %vm4044, 1.0, 0.0
        %v4077 = vsel %vm4045, 1.0, 0.0
        %v4078 = vsel %vm4046, 1.0, 0.0
        %v4079 = vsel %vm4047, 1.0, 0.0
        %v4080 = vsel %vm4048, 1.0, 0.0
        %v4081 = vsel %vm4049, 1.0, 0.0
        %v4082 = vsel %vm4050, 1.0, 0.0
        %v4083 = vsel %vm4051, 1.0, 0.0
        %v4084 = vsel %vm4052, 1.0, 0.0
        %v4085 = vsel %vm4053, 1.0, 0.0
        %v4086 = vsel %vm4054, 1.0, 0.0
        %v4087 = vsel %vm4055, 1.0, 0.0
        %v4088 = vsel %vm4056, 1.0, 0.0
        %v4089 = vsel %vm4057, 1.0, 0.0
        %v4090 = vsel %vm4058, 1.0, 0.0
        %v4091 = vsel %vm4059, 1.0, 0.0
        %v4092 = vsel %vm4060, 1.0, 0.0
        %v4093 = vsel %vm4061, 1.0, 0.0
        %v4094 = vsel %vm4062, 1.0, 0.0
        %v4095 = vsel %vm4063, 1.0, 0.0
        %4096 = vmatprep.subr.mxu0 0.0
        %4097 = vmatpush1.msra.mxu0 %v4064
        %4098 = vmatprep.subr.mxu0 0.0
        %4099 = vmatpush1.msra.mxu0 %v4065
        %4100 = vmatprep.subr.mxu0 0.0
        %4101 = vmatpush1.msra.mxu0 %v4066
        %4102 = vmatprep.subr.mxu0 0.0
        %4103 = vmatpush1.msra.mxu0 %v4067
        %4104 = vmatprep.subr.mxu0 0.0
        %4105 = vmatpush1.msra.mxu0 %v4068
        %4106 = vmatprep.subr.mxu0 0.0
        %4107 = vmatpush1.msra.mxu0 %v4069
        %4108 = vmatprep.subr.mxu0 0.0
        %4109 = vmatpush1.msra.mxu0 %v4070
        %4110 = vmatprep.subr.mxu0 0.0
        %4111 = vmatpush1.msra.mxu0 %v4071
        %4112 = vmatprep.subr.mxu0 0.0
        %4113 = vmatpush1.msra.mxu0 %v4072
        %4114 = vmatprep.subr.mxu0 0.0
        %4115 = vmatpush1.msra.mxu0 %v4073
        %4116 = vmatprep.subr.mxu0 0.0
        %4117 = vmatpush1.msra.mxu0 %v4074
        %4118 = vmatprep.subr.mxu0 0.0
        %4119 = vmatpush1.msra.mxu0 %v4075
        %4120 = vmatprep.subr.mxu0 0.0
        %4121 = vmatpush1.msra.mxu0 %v4076
        %4122 = vmatprep.subr.mxu0 0.0
        %4123 = vmatpush1.msra.mxu0 %v4077
        %4124 = vmatprep.subr.mxu0 0.0
        %4125 = vmatpush1.msra.mxu0 %v4078
        %4126 = vmatprep.subr.mxu0 0.0
        %4127 = vmatpush1.msra.mxu0 %v4079
        %4128 = vmatprep.subr.mxu0 0.0
        %4129 = vmatpush1.msra.mxu0 %v4080
        %4130 = vmatprep.subr.mxu0 0.0
        %4131 = vmatpush1.msra.mxu0 %v4081
        %4132 = vmatprep.subr.mxu0 0.0
        %4133 = vmatpush1.msra.mxu0 %v4082
        %4134 = vmatprep.subr.mxu0 0.0
        %4135 = vmatpush1.msra.mxu0 %v4083
        %4136 = vmatprep.subr.mxu0 0.0
        %4137 = vmatpush1.msra.mxu0 %v4084
        %4138 = vmatprep.subr.mxu0 0.0
        %4139 = vmatpush1.msra.mxu0 %v4085
        %4140 = vmatprep.subr.mxu0 0.0
        %4141 = vmatpush1.msra.mxu0 %v4086
        %4142 = vmatprep.subr.mxu0 0.0
        %4143 = vmatpush1.msra.mxu0 %v4087
        %4144 = vmatprep.subr.mxu0 0.0
        %4145 = vmatpush1.msra.mxu0 %v4088
        %4146 = vmatprep.subr.mxu0 0.0
        %4147 = vmatpush1.msra.mxu0 %v4089
        %4148 = vmatprep.subr.mxu0 0.0
        %4149 = vmatpush1.msra.mxu0 %v4090
        %4150 = vmatprep.subr.mxu0 0.0
        %4151 = vmatpush1.msra.mxu0 %v4091
        %4152 = vmatprep.subr.mxu0 0.0
        %4153 = vmatpush1.msra.mxu0 %v4092
        %4154 = vmatprep.subr.mxu0 0.0
        %4155 = vmatpush1.msra.mxu0 %v4093
        %4156 = vmatprep.subr.mxu0 0.0
        %4157 = vmatpush1.msra.mxu0 %v4094
        %4158 = vmatprep.subr.mxu0 0.0
        %4159 = vmatpush1.msra.mxu0 %v4095
        %4160 = vmatprep.mubr.f32.mxu0 %v520
        %4161 = vmatmul.mubr.f32.gmra.mrb[0].mxu0 %v293
        %v4162 = vpop.f32.mrb[0].mxu0
        %v4163 = vadd.f32 0.0, %v4162
        %v4164 = vpop.f32.mrb[0].mxu0
        %4165 = vdwg.mxu0
        %v4166 = vlaneseq
        %v4167 = vshrl.u32 %v4166, 7
        %v4168 = vsub.s32 5, %v4167
        %v4169 = vrot.slane %v378, %v4168
        %v4170 = vmul.f32 %v4163, %v4169
        %v4171 = vadd.f32 %v4027, %v4170
        %v4172 = vlaneseq
        %v4173 = vshrl.u32 %v4172, 7
        %v4174 = vsub.s32 5, %v4173
        %v4175 = vrot.slane %v911, %v4174
        %vm4176 = vcmp.eq.s32.totalorder %v391, %v4175
        %vm4177 = vcmp.eq.s32.totalorder %v392, %v4175
        %vm4178 = vcmp.eq.s32.totalorder %v393, %v4175
        %vm4179 = vcmp.eq.s32.totalorder %v394, %v4175
        %vm4180 = vcmp.eq.s32.totalorder %v395, %v4175
        %vm4181 = vcmp.eq.s32.totalorder %v396, %v4175
        %vm4182 = vcmp.eq.s32.totalorder %v397, %v4175
        %vm4183 = vcmp.eq.s32.totalorder %v398, %v4175
        %vm4184 = vcmp.eq.s32.totalorder %v399, %v4175
        %vm4185 = vcmp.eq.s32.totalorder %v400, %v4175
        %vm4186 = vcmp.eq.s32.totalorder %v401, %v4175
        %vm4187 = vcmp.eq.s32.totalorder %v402, %v4175
        %vm4188 = vcmp.eq.s32.totalorder %v403, %v4175
        %vm4189 = vcmp.eq.s32.totalorder %v404, %v4175
        %vm4190 = vcmp.eq.s32.totalorder %v405, %v4175
        %vm4191 = vcmp.eq.s32.totalorder %v406, %v4175
        %vm4192 = vcmp.eq.s32.totalorder %v407, %v4175
        %vm4193 = vcmp.eq.s32.totalorder %v408, %v4175
        %vm4194 = vcmp.eq.s32.totalorder %v409, %v4175
        %vm4195 = vcmp.eq.s32.totalorder %v410, %v4175
        %vm4196 = vcmp.eq.s32.totalorder %v411, %v4175
        %vm4197 = vcmp.eq.s32.totalorder %v412, %v4175
        %vm4198 = vcmp.eq.s32.totalorder %v413, %v4175
        %vm4199 = vcmp.eq.s32.totalorder %v414, %v4175
        %vm4200 = vcmp.eq.s32.totalorder %v415, %v4175
        %vm4201 = vcmp.eq.s32.totalorder %v416, %v4175
        %vm4202 = vcmp.eq.s32.totalorder %v417, %v4175
        %vm4203 = vcmp.eq.s32.totalorder %v418, %v4175
        %vm4204 = vcmp.eq.s32.totalorder %v419, %v4175
        %vm4205 = vcmp.eq.s32.totalorder %v420, %v4175
        %vm4206 = vcmp.eq.s32.totalorder %v421, %v4175
        %vm4207 = vcmp.eq.s32.totalorder %v422, %v4175
        %v4208 = vsel %vm4176, 1.0, 0.0
        %v4209 = vsel %vm4177, 1.0, 0.0
        %v4210 = vsel %vm4178, 1.0, 0.0
        %v4211 = vsel %vm4179, 1.0, 0.0
        %v4212 = vsel %vm4180, 1.0, 0.0
        %v4213 = vsel %vm4181, 1.0, 0.0
        %v4214 = vsel %vm4182, 1.0, 0.0
        %v4215 = vsel %vm4183, 1.0, 0.0
        %v4216 = vsel %vm4184, 1.0, 0.0
        %v4217 = vsel %vm4185, 1.0, 0.0
        %v4218 = vsel %vm4186, 1.0, 0.0
        %v4219 = vsel %vm4187, 1.0, 0.0
        %v4220 = vsel %vm4188, 1.0, 0.0
        %v4221 = vsel %vm4189, 1.0, 0.0
        %v4222 = vsel %vm4190, 1.0, 0.0
        %v4223 = vsel %vm4191, 1.0, 0.0
        %v4224 = vsel %vm4192, 1.0, 0.0
        %v4225 = vsel %vm4193, 1.0, 0.0
        %v4226 = vsel %vm4194, 1.0, 0.0
        %v4227 = vsel %vm4195, 1.0, 0.0
        %v4228 = vsel %vm4196, 1.0, 0.0
        %v4229 = vsel %vm4197, 1.0, 0.0
        %v4230 = vsel %vm4198, 1.0, 0.0
        %v4231 = vsel %vm4199, 1.0, 0.0
        %v4232 = vsel %vm4200, 1.0, 0.0
        %v4233 = vsel %vm4201, 1.0, 0.0
        %v4234 = vsel %vm4202, 1.0, 0.0
        %v4235 = vsel %vm4203, 1.0, 0.0
        %v4236 = vsel %vm4204, 1.0, 0.0
        %v4237 = vsel %vm4205, 1.0, 0.0
        %v4238 = vsel %vm4206, 1.0, 0.0
        %v4239 = vsel %vm4207, 1.0, 0.0
        %4240 = vmatprep.subr.mxu0 0.0
        %4241 = vmatpush1.msra.mxu0 %v4208
        %4242 = vmatprep.subr.mxu0 0.0
        %4243 = vmatpush1.msra.mxu0 %v4209
        %4244 = vmatprep.subr.mxu0 0.0
        %4245 = vmatpush1.msra.mxu0 %v4210
        %4246 = vmatprep.subr.mxu0 0.0
        %4247 = vmatpush1.msra.mxu0 %v4211
        %4248 = vmatprep.subr.mxu0 0.0
        %4249 = vmatpush1.msra.mxu0 %v4212
        %4250 = vmatprep.subr.mxu0 0.0
        %4251 = vmatpush1.msra.mxu0 %v4213
        %4252 = vmatprep.subr.mxu0 0.0
        %4253 = vmatpush1.msra.mxu0 %v4214
        %4254 = vmatprep.subr.mxu0 0.0
        %4255 = vmatpush1.msra.mxu0 %v4215
        %4256 = vmatprep.subr.mxu0 0.0
        %4257 = vmatpush1.msra.mxu0 %v4216
        %4258 = vmatprep.subr.mxu0 0.0
        %4259 = vmatpush1.msra.mxu0 %v4217
        %4260 = vmatprep.subr.mxu0 0.0
        %4261 = vmatpush1.msra.mxu0 %v4218
        %4262 = vmatprep.subr.mxu0 0.0
        %4263 = vmatpush1.msra.mxu0 %v4219
        %4264 = vmatprep.subr.mxu0 0.0
        %4265 = vmatpush1.msra.mxu0 %v4220
        %4266 = vmatprep.subr.mxu0 0.0
        %4267 = vmatpush1.msra.mxu0 %v4221
        %4268 = vmatprep.subr.mxu0 0.0
        %4269 = vmatpush1.msra.mxu0 %v4222
        %4270 = vmatprep.subr.mxu0 0.0
        %4271 = vmatpush1.msra.mxu0 %v4223
        %4272 = vmatprep.subr.mxu0 0.0
        %4273 = vmatpush1.msra.mxu0 %v4224
        %4274 = vmatprep.subr.mxu0 0.0
        %4275 = vmatpush1.msra.mxu0 %v4225
        %4276 = vmatprep.subr.mxu0 0.0
        %4277 = vmatpush1.msra.mxu0 %v4226
        %4278 = vmatprep.subr.mxu0 0.0
        %4279 = vmatpush1.msra.mxu0 %v4227
        %4280 = vmatprep.subr.mxu0 0.0
        %4281 = vmatpush1.msra.mxu0 %v4228
        %4282 = vmatprep.subr.mxu0 0.0
        %4283 = vmatpush1.msra.mxu0 %v4229
        %4284 = vmatprep.subr.mxu0 0.0
        %4285 = vmatpush1.msra.mxu0 %v4230
        %4286 = vmatprep.subr.mxu0 0.0
        %4287 = vmatpush1.msra.mxu0 %v4231
        %4288 = vmatprep.subr.mxu0 0.0
        %4289 = vmatpush1.msra.mxu0 %v4232
        %4290 = vmatprep.subr.mxu0 0.0
        %4291 = vmatpush1.msra.mxu0 %v4233
        %4292 = vmatprep.subr.mxu0 0.0
        %4293 = vmatpush1.msra.mxu0 %v4234
        %4294 = vmatprep.subr.mxu0 0.0
        %4295 = vmatpush1.msra.mxu0 %v4235
        %4296 = vmatprep.subr.mxu0 0.0
        %4297 = vmatpush1.msra.mxu0 %v4236
        %4298 = vmatprep.subr.mxu0 0.0
        %4299 = vmatpush1.msra.mxu0 %v4237
        %4300 = vmatprep.subr.mxu0 0.0
        %4301 = vmatpush1.msra.mxu0 %v4238
        %4302 = vmatprep.subr.mxu0 0.0
        %4303 = vmatpush1.msra.mxu0 %v4239
        %4304 = vmatprep.mubr.f32.mxu0 %v520
        %4305 = vmatmul.mubr.f32.gmra.mrb[0].mxu0 %v293
        %v4306 = vpop.f32.mrb[0].mxu0
        %v4307 = vadd.f32 0.0, %v4306
        %v4308 = vpop.f32.mrb[0].mxu0
        %4309 = vdwg.mxu0
        %v4310 = vlaneseq
        %v4311 = vshrl.u32 %v4310, 7
        %v4312 = vsub.s32 5, %v4311
        %v4313 = vrot.slane %v380, %v4312
        %v4314 = vmul.f32 %v4307, %v4313
        %v4315 = vadd.f32 %v4171, %v4314
        %v4317 = vsel %vm1631, %v428, 0
        %v4320 = vsel %vm1635, %v4315, 0
        %4322 = vmatprep.subr.mxu0 0.0
        %4323 = vmatpush1.msra.mxu0 %v4320
        %4324 = vmatprep.subr.mxu0 0.0
        %4325 = vmatpush1.msra.mxu0 0.0
        %4326 = vmatprep.subr.mxu0 0.0
        %4327 = vmatpush1.msra.mxu0 0.0
        %4328 = vmatprep.subr.mxu0 0.0
        %4329 = vmatpush1.msra.mxu0 0.0
        %4330 = vmatprep.subr.mxu0 0.0
        %4331 = vmatpush1.msra.mxu0 0.0
        %4332 = vmatprep.subr.mxu0 0.0
        %4333 = vmatpush1.msra.mxu0 0.0
        %4334 = vmatprep.subr.mxu0 0.0
        %4335 = vmatpush1.msra.mxu0 0.0
        %4336 = vmatprep.subr.mxu0 0.0
        %4337 = vmatpush1.msra.mxu0 0.0
        %4338 = vmatprep.subr.mxu0 0.0
        %4339 = vmatpush1.msra.mxu0 0.0
        %4340 = vmatprep.subr.mxu0 0.0
        %4341 = vmatpush1.msra.mxu0 0.0
        %4342 = vmatprep.subr.mxu0 0.0
        %4343 = vmatpush1.msra.mxu0 0.0
        %4344 = vmatprep.subr.mxu0 0.0
        %4345 = vmatpush1.msra.mxu0 0.0
        %4346 = vmatprep.subr.mxu0 0.0
        %4347 = vmatpush1.msra.mxu0 0.0
        %4348 = vmatprep.subr.mxu0 0.0
        %4349 = vmatpush1.msra.mxu0 0.0
        %4350 = vmatprep.subr.mxu0 0.0
        %4351 = vmatpush1.msra.mxu0 0.0
        %4352 = vmatprep.subr.mxu0 0.0
        %4353 = vmatpush1.msra.mxu0 0.0
        %4354 = vmatprep.subr.mxu0 0.0
        %4355 = vmatpush1.msra.mxu0 0.0
        %4356 = vmatprep.subr.mxu0 0.0
        %4357 = vmatpush1.msra.mxu0 0.0
        %4358 = vmatprep.subr.mxu0 0.0
        %4359 = vmatpush1.msra.mxu0 0.0
        %4360 = vmatprep.subr.mxu0 0.0
        %4361 = vmatpush1.msra.mxu0 0.0
        %4362 = vmatprep.subr.mxu0 0.0
        %4363 = vmatpush1.msra.mxu0 0.0
        %4364 = vmatprep.subr.mxu0 0.0
        %4365 = vmatpush1.msra.mxu0 0.0
        %4366 = vmatprep.subr.mxu0 0.0
        %4367 = vmatpush1.msra.mxu0 0.0
        %4368 = vmatprep.subr.mxu0 0.0
        %4369 = vmatpush1.msra.mxu0 0.0
        %4370 = vmatprep.subr.mxu0 0.0
        %4371 = vmatpush1.msra.mxu0 0.0
        %4372 = vmatprep.subr.mxu0 0.0
        %4373 = vmatpush1.msra.mxu0 0.0
        %4374 = vmatprep.subr.mxu0 0.0
        %4375 = vmatpush1.msra.mxu0 0.0
        %4376 = vmatprep.subr.mxu0 0.0
        %4377 = vmatpush1.msra.mxu0 0.0
        %4378 = vmatprep.subr.mxu0 0.0
        %4379 = vmatpush1.msra.mxu0 0.0
        %4380 = vmatprep.subr.mxu0 0.0
        %4381 = vmatpush1.msra.mxu0 0.0
        %4382 = vmatprep.subr.mxu0 0.0
        %4383 = vmatpush1.msra.mxu0 0.0
        %4384 = vmatprep.subr.mxu0 0.0
        %4385 = vmatpush1.msra.mxu0 0.0
        %4386 = vmatprep.mubr.f32.mxu0 0.0
        %4387 = vmatmul.mubr.f32.gmra.mrb[0].mxu0 %v4317
        %v4388 = vpop.f32.mrb[0].mxu0
        %v4389 = vadd.f32 0.0, %v4388
        %v4390 = vpop.f32.mrb[0].mxu0
        %4391 = vdwg.mxu0
        %v4392 = vadd.f32 %v3740, %v4389
        %v4393 = vlaneseq
        %v4394 = vshrl.u32 %v4393, 7
        %v4395 = vsub.s32 6, %v4394
        %v4396 = vrot.slane %v450, %v4395
        %vm4397 = vcmp.eq.s32.totalorder %v391, %v4396
        %vm4398 = vcmp.eq.s32.totalorder %v392, %v4396
        %vm4399 = vcmp.eq.s32.totalorder %v393, %v4396
        %vm4400 = vcmp.eq.s32.totalorder %v394, %v4396
        %vm4401 = vcmp.eq.s32.totalorder %v395, %v4396
        %vm4402 = vcmp.eq.s32.totalorder %v396, %v4396
        %vm4403 = vcmp.eq.s32.totalorder %v397, %v4396
        %vm4404 = vcmp.eq.s32.totalorder %v398, %v4396
        %vm4405 = vcmp.eq.s32.totalorder %v399, %v4396
        %vm4406 = vcmp.eq.s32.totalorder %v400, %v4396
        %vm4407 = vcmp.eq.s32.totalorder %v401, %v4396
        %vm4408 = vcmp.eq.s32.totalorder %v402, %v4396
        %vm4409 = vcmp.eq.s32.totalorder %v403, %v4396
        %vm4410 = vcmp.eq.s32.totalorder %v404, %v4396
        %vm4411 = vcmp.eq.s32.totalorder %v405, %v4396
        %vm4412 = vcmp.eq.s32.totalorder %v406, %v4396
        %vm4413 = vcmp.eq.s32.totalorder %v407, %v4396
        %vm4414 = vcmp.eq.s32.totalorder %v408, %v4396
        %vm4415 = vcmp.eq.s32.totalorder %v409, %v4396
        %vm4416 = vcmp.eq.s32.totalorder %v410, %v4396
        %vm4417 = vcmp.eq.s32.totalorder %v411, %v4396
        %vm4418 = vcmp.eq.s32.totalorder %v412, %v4396
        %vm4419 = vcmp.eq.s32.totalorder %v413, %v4396
        %vm4420 = vcmp.eq.s32.totalorder %v414, %v4396
        %vm4421 = vcmp.eq.s32.totalorder %v415, %v4396
        %vm4422 = vcmp.eq.s32.totalorder %v416, %v4396
        %vm4423 = vcmp.eq.s32.totalorder %v417, %v4396
        %vm4424 = vcmp.eq.s32.totalorder %v418, %v4396
        %vm4425 = vcmp.eq.s32.totalorder %v419, %v4396
        %vm4426 = vcmp.eq.s32.totalorder %v420, %v4396
        %vm4427 = vcmp.eq.s32.totalorder %v421, %v4396
        %vm4428 = vcmp.eq.s32.totalorder %v422, %v4396
        %v4429 = vsel %vm4397, 1.0, 0.0
        %v4430 = vsel %vm4398, 1.0, 0.0
        %v4431 = vsel %vm4399, 1.0, 0.0
        %v4432 = vsel %vm4400, 1.0, 0.0
        %v4433 = vsel %vm4401, 1.0, 0.0
        %v4434 = vsel %vm4402, 1.0, 0.0
        %v4435 = vsel %vm4403, 1.0, 0.0
        %v4436 = vsel %vm4404, 1.0, 0.0
        %v4437 = vsel %vm4405, 1.0, 0.0
        %v4438 = vsel %vm4406, 1.0, 0.0
        %v4439 = vsel %vm4407, 1.0, 0.0
        %v4440 = vsel %vm4408, 1.0, 0.0
        %v4441 = vsel %vm4409, 1.0, 0.0
        %v4442 = vsel %vm4410, 1.0, 0.0
        %v4443 = vsel %vm4411, 1.0, 0.0
        %v4444 = vsel %vm4412, 1.0, 0.0
        %v4445 = vsel %vm4413, 1.0, 0.0
        %v4446 = vsel %vm4414, 1.0, 0.0
        %v4447 = vsel %vm4415, 1.0, 0.0
        %v4448 = vsel %vm4416, 1.0, 0.0
        %v4449 = vsel %vm4417, 1.0, 0.0
        %v4450 = vsel %vm4418, 1.0, 0.0
        %v4451 = vsel %vm4419, 1.0, 0.0
        %v4452 = vsel %vm4420, 1.0, 0.0
        %v4453 = vsel %vm4421, 1.0, 0.0
        %v4454 = vsel %vm4422, 1.0, 0.0
        %v4455 = vsel %vm4423, 1.0, 0.0
        %v4456 = vsel %vm4424, 1.0, 0.0
        %v4457 = vsel %vm4425, 1.0, 0.0
        %v4458 = vsel %vm4426, 1.0, 0.0
        %v4459 = vsel %vm4427, 1.0, 0.0
        %v4460 = vsel %vm4428, 1.0, 0.0
        %4461 = vmatprep.subr.mxu0 0.0
        %4462 = vmatpush1.msra.mxu0 %v4429
        %4463 = vmatprep.subr.mxu0 0.0
        %4464 = vmatpush1.msra.mxu0 %v4430
        %4465 = vmatprep.subr.mxu0 0.0
        %4466 = vmatpush1.msra.mxu0 %v4431
        %4467 = vmatprep.subr.mxu0 0.0
        %4468 = vmatpush1.msra.mxu0 %v4432
        %4469 = vmatprep.subr.mxu0 0.0
        %4470 = vmatpush1.msra.mxu0 %v4433
        %4471 = vmatprep.subr.mxu0 0.0
        %4472 = vmatpush1.msra.mxu0 %v4434
        %4473 = vmatprep.subr.mxu0 0.0
        %4474 = vmatpush1.msra.mxu0 %v4435
        %4475 = vmatprep.subr.mxu0 0.0
        %4476 = vmatpush1.msra.mxu0 %v4436
        %4477 = vmatprep.subr.mxu0 0.0
        %4478 = vmatpush1.msra.mxu0 %v4437
        %4479 = vmatprep.subr.mxu0 0.0
        %4480 = vmatpush1.msra.mxu0 %v4438
        %4481 = vmatprep.subr.mxu0 0.0
        %4482 = vmatpush1.msra.mxu0 %v4439
        %4483 = vmatprep.subr.mxu0 0.0
        %4484 = vmatpush1.msra.mxu0 %v4440
        %4485 = vmatprep.subr.mxu0 0.0
        %4486 = vmatpush1.msra.mxu0 %v4441
        %4487 = vmatprep.subr.mxu0 0.0
        %4488 = vmatpush1.msra.mxu0 %v4442
        %4489 = vmatprep.subr.mxu0 0.0
        %4490 = vmatpush1.msra.mxu0 %v4443
        %4491 = vmatprep.subr.mxu0 0.0
        %4492 = vmatpush1.msra.mxu0 %v4444
        %4493 = vmatprep.subr.mxu0 0.0
        %4494 = vmatpush1.msra.mxu0 %v4445
        %4495 = vmatprep.subr.mxu0 0.0
        %4496 = vmatpush1.msra.mxu0 %v4446
        %4497 = vmatprep.subr.mxu0 0.0
        %4498 = vmatpush1.msra.mxu0 %v4447
        %4499 = vmatprep.subr.mxu0 0.0
        %4500 = vmatpush1.msra.mxu0 %v4448
        %4501 = vmatprep.subr.mxu0 0.0
        %4502 = vmatpush1.msra.mxu0 %v4449
        %4503 = vmatprep.subr.mxu0 0.0
        %4504 = vmatpush1.msra.mxu0 %v4450
        %4505 = vmatprep.subr.mxu0 0.0
        %4506 = vmatpush1.msra.mxu0 %v4451
        %4507 = vmatprep.subr.mxu0 0.0
        %4508 = vmatpush1.msra.mxu0 %v4452
        %4509 = vmatprep.subr.mxu0 0.0
        %4510 = vmatpush1.msra.mxu0 %v4453
        %4511 = vmatprep.subr.mxu0 0.0
        %4512 = vmatpush1.msra.mxu0 %v4454
        %4513 = vmatprep.subr.mxu0 0.0
        %4514 = vmatpush1.msra.mxu0 %v4455
        %4515 = vmatprep.subr.mxu0 0.0
        %4516 = vmatpush1.msra.mxu0 %v4456
        %4517 = vmatprep.subr.mxu0 0.0
        %4518 = vmatpush1.msra.mxu0 %v4457
        %4519 = vmatprep.subr.mxu0 0.0
        %4520 = vmatpush1.msra.mxu0 %v4458
        %4521 = vmatprep.subr.mxu0 0.0
        %4522 = vmatpush1.msra.mxu0 %v4459
        %4523 = vmatprep.subr.mxu0 0.0
        %4524 = vmatpush1.msra.mxu0 %v4460
        %4525 = vmatprep.mubr.f32.mxu0 %v520
        %4526 = vmatmul.mubr.f32.gmra.mrb[0].mxu0 %v293
        %v4527 = vpop.f32.mrb[0].mxu0
        %v4528 = vadd.f32 0.0, %v4527
        %v4529 = vpop.f32.mrb[0].mxu0
        %4530 = vdwg.mxu0
        %v4531 = vlaneseq
        %v4532 = vshrl.u32 %v4531, 7
        %v4533 = vsub.s32 6, %v4532
        %v4534 = vrot.slane %v359, %v4533
        %v4535 = vmul.f32 %v4528, %v4534
        %v4536 = vlaneseq
        %v4537 = vshrl.u32 %v4536, 7
        %v4538 = vsub.s32 6, %v4537
        %v4539 = vrot.slane %v615, %v4538
        %vm4540 = vcmp.eq.s32.totalorder %v391, %v4539
        %vm4541 = vcmp.eq.s32.totalorder %v392, %v4539
        %vm4542 = vcmp.eq.s32.totalorder %v393, %v4539
        %vm4543 = vcmp.eq.s32.totalorder %v394, %v4539
        %vm4544 = vcmp.eq.s32.totalorder %v395, %v4539
        %vm4545 = vcmp.eq.s32.totalorder %v396, %v4539
        %vm4546 = vcmp.eq.s32.totalorder %v397, %v4539
        %vm4547 = vcmp.eq.s32.totalorder %v398, %v4539
        %vm4548 = vcmp.eq.s32.totalorder %v399, %v4539
        %vm4549 = vcmp.eq.s32.totalorder %v400, %v4539
        %vm4550 = vcmp.eq.s32.totalorder %v401, %v4539
        %vm4551 = vcmp.eq.s32.totalorder %v402, %v4539
        %vm4552 = vcmp.eq.s32.totalorder %v403, %v4539
        %vm4553 = vcmp.eq.s32.totalorder %v404, %v4539
        %vm4554 = vcmp.eq.s32.totalorder %v405, %v4539
        %vm4555 = vcmp.eq.s32.totalorder %v406, %v4539
        %vm4556 = vcmp.eq.s32.totalorder %v407, %v4539
        %vm4557 = vcmp.eq.s32.totalorder %v408, %v4539
        %vm4558 = vcmp.eq.s32.totalorder %v409, %v4539
        %vm4559 = vcmp.eq.s32.totalorder %v410, %v4539
        %vm4560 = vcmp.eq.s32.totalorder %v411, %v4539
        %vm4561 = vcmp.eq.s32.totalorder %v412, %v4539
        %vm4562 = vcmp.eq.s32.totalorder %v413, %v4539
        %vm4563 = vcmp.eq.s32.totalorder %v414, %v4539
        %vm4564 = vcmp.eq.s32.totalorder %v415, %v4539
        %vm4565 = vcmp.eq.s32.totalorder %v416, %v4539
        %vm4566 = vcmp.eq.s32.totalorder %v417, %v4539
        %vm4567 = vcmp.eq.s32.totalorder %v418, %v4539
        %vm4568 = vcmp.eq.s32.totalorder %v419, %v4539
        %vm4569 = vcmp.eq.s32.totalorder %v420, %v4539
        %vm4570 = vcmp.eq.s32.totalorder %v421, %v4539
        %vm4571 = vcmp.eq.s32.totalorder %v422, %v4539
        %v4572 = vsel %vm4540, 1.0, 0.0
        %v4573 = vsel %vm4541, 1.0, 0.0
        %v4574 = vsel %vm4542, 1.0, 0.0
        %v4575 = vsel %vm4543, 1.0, 0.0
        %v4576 = vsel %vm4544, 1.0, 0.0
        %v4577 = vsel %vm4545, 1.0, 0.0
        %v4578 = vsel %vm4546, 1.0, 0.0
        %v4579 = vsel %vm4547, 1.0, 0.0
        %v4580 = vsel %vm4548, 1.0, 0.0
        %v4581 = vsel %vm4549, 1.0, 0.0
        %v4582 = vsel %vm4550, 1.0, 0.0
        %v4583 = vsel %vm4551, 1.0, 0.0
        %v4584 = vsel %vm4552, 1.0, 0.0
        %v4585 = vsel %vm4553, 1.0, 0.0
        %v4586 = vsel %vm4554, 1.0, 0.0
        %v4587 = vsel %vm4555, 1.0, 0.0
        %v4588 = vsel %vm4556, 1.0, 0.0
        %v4589 = vsel %vm4557, 1.0, 0.0
        %v4590 = vsel %vm4558, 1.0, 0.0
        %v4591 = vsel %vm4559, 1.0, 0.0
        %v4592 = vsel %vm4560, 1.0, 0.0
        %v4593 = vsel %vm4561, 1.0, 0.0
        %v4594 = vsel %vm4562, 1.0, 0.0
        %v4595 = vsel %vm4563, 1.0, 0.0
        %v4596 = vsel %vm4564, 1.0, 0.0
        %v4597 = vsel %vm4565, 1.0, 0.0
        %v4598 = vsel %vm4566, 1.0, 0.0
        %v4599 = vsel %vm4567, 1.0, 0.0
        %v4600 = vsel %vm4568, 1.0, 0.0
        %v4601 = vsel %vm4569, 1.0, 0.0
        %v4602 = vsel %vm4570, 1.0, 0.0
        %v4603 = vsel %vm4571, 1.0, 0.0
        %4604 = vmatprep.subr.mxu0 0.0
        %4605 = vmatpush1.msra.mxu0 %v4572
        %4606 = vmatprep.subr.mxu0 0.0
        %4607 = vmatpush1.msra.mxu0 %v4573
        %4608 = vmatprep.subr.mxu0 0.0
        %4609 = vmatpush1.msra.mxu0 %v4574
        %4610 = vmatprep.subr.mxu0 0.0
        %4611 = vmatpush1.msra.mxu0 %v4575
        %4612 = vmatprep.subr.mxu0 0.0
        %4613 = vmatpush1.msra.mxu0 %v4576
        %4614 = vmatprep.subr.mxu0 0.0
        %4615 = vmatpush1.msra.mxu0 %v4577
        %4616 = vmatprep.subr.mxu0 0.0
        %4617 = vmatpush1.msra.mxu0 %v4578
        %4618 = vmatprep.subr.mxu0 0.0
        %4619 = vmatpush1.msra.mxu0 %v4579
        %4620 = vmatprep.subr.mxu0 0.0
        %4621 = vmatpush1.msra.mxu0 %v4580
        %4622 = vmatprep.subr.mxu0 0.0
        %4623 = vmatpush1.msra.mxu0 %v4581
        %4624 = vmatprep.subr.mxu0 0.0
        %4625 = vmatpush1.msra.mxu0 %v4582
        %4626 = vmatprep.subr.mxu0 0.0
        %4627 = vmatpush1.msra.mxu0 %v4583
        %4628 = vmatprep.subr.mxu0 0.0
        %4629 = vmatpush1.msra.mxu0 %v4584
        %4630 = vmatprep.subr.mxu0 0.0
        %4631 = vmatpush1.msra.mxu0 %v4585
        %4632 = vmatprep.subr.mxu0 0.0
        %4633 = vmatpush1.msra.mxu0 %v4586
        %4634 = vmatprep.subr.mxu0 0.0
        %4635 = vmatpush1.msra.mxu0 %v4587
        %4636 = vmatprep.subr.mxu0 0.0
        %4637 = vmatpush1.msra.mxu0 %v4588
        %4638 = vmatprep.subr.mxu0 0.0
        %4639 = vmatpush1.msra.mxu0 %v4589
        %4640 = vmatprep.subr.mxu0 0.0
        %4641 = vmatpush1.msra.mxu0 %v4590
        %4642 = vmatprep.subr.mxu0 0.0
        %4643 = vmatpush1.msra.mxu0 %v4591
        %4644 = vmatprep.subr.mxu0 0.0
        %4645 = vmatpush1.msra.mxu0 %v4592
        %4646 = vmatprep.subr.mxu0 0.0
        %4647 = vmatpush1.msra.mxu0 %v4593
        %4648 = vmatprep.subr.mxu0 0.0
        %4649 = vmatpush1.msra.mxu0 %v4594
        %4650 = vmatprep.subr.mxu0 0.0
        %4651 = vmatpush1.msra.mxu0 %v4595
        %4652 = vmatprep.subr.mxu0 0.0
        %4653 = vmatpush1.msra.mxu0 %v4596
        %4654 = vmatprep.subr.mxu0 0.0
        %4655 = vmatpush1.msra.mxu0 %v4597
        %4656 = vmatprep.subr.mxu0 0.0
        %4657 = vmatpush1.msra.mxu0 %v4598
        %4658 = vmatprep.subr.mxu0 0.0
        %4659 = vmatpush1.msra.mxu0 %v4599
        %4660 = vmatprep.subr.mxu0 0.0
        %4661 = vmatpush1.msra.mxu0 %v4600
        %4662 = vmatprep.subr.mxu0 0.0
        %4663 = vmatpush1.msra.mxu0 %v4601
        %4664 = vmatprep.subr.mxu0 0.0
        %4665 = vmatpush1.msra.mxu0 %v4602
        %4666 = vmatprep.subr.mxu0 0.0
        %4667 = vmatpush1.msra.mxu0 %v4603
        %4668 = vmatprep.mubr.f32.mxu0 %v520
        %4669 = vmatmul.mubr.f32.gmra.mrb[0].mxu0 %v293
        %v4670 = vpop.f32.mrb[0].mxu0
        %v4671 = vadd.f32 0.0, %v4670
        %v4672 = vpop.f32.mrb[0].mxu0
        %4673 = vdwg.mxu0
        %v4674 = vlaneseq
        %v4675 = vshrl.u32 %v4674, 7
        %v4676 = vsub.s32 6, %v4675
        %v4677 = vrot.slane %v376, %v4676
        %v4678 = vmul.f32 %v4671, %v4677
        %v4679 = vadd.f32 %v4535, %v4678
        %v4680 = vlaneseq
        %v4681 = vshrl.u32 %v4680, 7
        %v4682 = vsub.s32 6, %v4681
        %v4683 = vrot.slane %v763, %v4682
        %vm4684 = vcmp.eq.s32.totalorder %v391, %v4683
        %vm4685 = vcmp.eq.s32.totalorder %v392, %v4683
        %vm4686 = vcmp.eq.s32.totalorder %v393, %v4683
        %vm4687 = vcmp.eq.s32.totalorder %v394, %v4683
        %vm4688 = vcmp.eq.s32.totalorder %v395, %v4683
        %vm4689 = vcmp.eq.s32.totalorder %v396, %v4683
        %vm4690 = vcmp.eq.s32.totalorder %v397, %v4683
        %vm4691 = vcmp.eq.s32.totalorder %v398, %v4683
        %vm4692 = vcmp.eq.s32.totalorder %v399, %v4683
        %vm4693 = vcmp.eq.s32.totalorder %v400, %v4683
        %vm4694 = vcmp.eq.s32.totalorder %v401, %v4683
        %vm4695 = vcmp.eq.s32.totalorder %v402, %v4683
        %vm4696 = vcmp.eq.s32.totalorder %v403, %v4683
        %vm4697 = vcmp.eq.s32.totalorder %v404, %v4683
        %vm4698 = vcmp.eq.s32.totalorder %v405, %v4683
        %vm4699 = vcmp.eq.s32.totalorder %v406, %v4683
        %vm4700 = vcmp.eq.s32.totalorder %v407, %v4683
        %vm4701 = vcmp.eq.s32.totalorder %v408, %v4683
        %vm4702 = vcmp.eq.s32.totalorder %v409, %v4683
        %vm4703 = vcmp.eq.s32.totalorder %v410, %v4683
        %vm4704 = vcmp.eq.s32.totalorder %v411, %v4683
        %vm4705 = vcmp.eq.s32.totalorder %v412, %v4683
        %vm4706 = vcmp.eq.s32.totalorder %v413, %v4683
        %vm4707 = vcmp.eq.s32.totalorder %v414, %v4683
        %vm4708 = vcmp.eq.s32.totalorder %v415, %v4683
        %vm4709 = vcmp.eq.s32.totalorder %v416, %v4683
        %vm4710 = vcmp.eq.s32.totalorder %v417, %v4683
        %vm4711 = vcmp.eq.s32.totalorder %v418, %v4683
        %vm4712 = vcmp.eq.s32.totalorder %v419, %v4683
        %vm4713 = vcmp.eq.s32.totalorder %v420, %v4683
        %vm4714 = vcmp.eq.s32.totalorder %v421, %v4683
        %vm4715 = vcmp.eq.s32.totalorder %v422, %v4683
        %v4716 = vsel %vm4684, 1.0, 0.0
        %v4717 = vsel %vm4685, 1.0, 0.0
        %v4718 = vsel %vm4686, 1.0, 0.0
        %v4719 = vsel %vm4687, 1.0, 0.0
        %v4720 = vsel %vm4688, 1.0, 0.0
        %v4721 = vsel %vm4689, 1.0, 0.0
        %v4722 = vsel %vm4690, 1.0, 0.0
        %v4723 = vsel %vm4691, 1.0, 0.0
        %v4724 = vsel %vm4692, 1.0, 0.0
        %v4725 = vsel %vm4693, 1.0, 0.0
        %v4726 = vsel %vm4694, 1.0, 0.0
        %v4727 = vsel %vm4695, 1.0, 0.0
        %v4728 = vsel %vm4696, 1.0, 0.0
        %v4729 = vsel %vm4697, 1.0, 0.0
        %v4730 = vsel %vm4698, 1.0, 0.0
        %v4731 = vsel %vm4699, 1.0, 0.0
        %v4732 = vsel %vm4700, 1.0, 0.0
        %v4733 = vsel %vm4701, 1.0, 0.0
        %v4734 = vsel %vm4702, 1.0, 0.0
        %v4735 = vsel %vm4703, 1.0, 0.0
        %v4736 = vsel %vm4704, 1.0, 0.0
        %v4737 = vsel %vm4705, 1.0, 0.0
        %v4738 = vsel %vm4706, 1.0, 0.0
        %v4739 = vsel %vm4707, 1.0, 0.0
        %v4740 = vsel %vm4708, 1.0, 0.0
        %v4741 = vsel %vm4709, 1.0, 0.0
        %v4742 = vsel %vm4710, 1.0, 0.0
        %v4743 = vsel %vm4711, 1.0, 0.0
        %v4744 = vsel %vm4712, 1.0, 0.0
        %v4745 = vsel %vm4713, 1.0, 0.0
        %v4746 = vsel %vm4714, 1.0, 0.0
        %v4747 = vsel %vm4715, 1.0, 0.0
        %4748 = vmatprep.subr.mxu0 0.0
        %4749 = vmatpush1.msra.mxu0 %v4716
        %4750 = vmatprep.subr.mxu0 0.0
        %4751 = vmatpush1.msra.mxu0 %v4717
        %4752 = vmatprep.subr.mxu0 0.0
        %4753 = vmatpush1.msra.mxu0 %v4718
        %4754 = vmatprep.subr.mxu0 0.0
        %4755 = vmatpush1.msra.mxu0 %v4719
        %4756 = vmatprep.subr.mxu0 0.0
        %4757 = vmatpush1.msra.mxu0 %v4720
        %4758 = vmatprep.subr.mxu0 0.0
        %4759 = vmatpush1.msra.mxu0 %v4721
        %4760 = vmatprep.subr.mxu0 0.0
        %4761 = vmatpush1.msra.mxu0 %v4722
        %4762 = vmatprep.subr.mxu0 0.0
        %4763 = vmatpush1.msra.mxu0 %v4723
        %4764 = vmatprep.subr.mxu0 0.0
        %4765 = vmatpush1.msra.mxu0 %v4724
        %4766 = vmatprep.subr.mxu0 0.0
        %4767 = vmatpush1.msra.mxu0 %v4725
        %4768 = vmatprep.subr.mxu0 0.0
        %4769 = vmatpush1.msra.mxu0 %v4726
        %4770 = vmatprep.subr.mxu0 0.0
        %4771 = vmatpush1.msra.mxu0 %v4727
        %4772 = vmatprep.subr.mxu0 0.0
        %4773 = vmatpush1.msra.mxu0 %v4728
        %4774 = vmatprep.subr.mxu0 0.0
        %4775 = vmatpush1.msra.mxu0 %v4729
        %4776 = vmatprep.subr.mxu0 0.0
        %4777 = vmatpush1.msra.mxu0 %v4730
        %4778 = vmatprep.subr.mxu0 0.0
        %4779 = vmatpush1.msra.mxu0 %v4731
        %4780 = vmatprep.subr.mxu0 0.0
        %4781 = vmatpush1.msra.mxu0 %v4732
        %4782 = vmatprep.subr.mxu0 0.0
        %4783 = vmatpush1.msra.mxu0 %v4733
        %4784 = vmatprep.subr.mxu0 0.0
        %4785 = vmatpush1.msra.mxu0 %v4734
        %4786 = vmatprep.subr.mxu0 0.0
        %4787 = vmatpush1.msra.mxu0 %v4735
        %4788 = vmatprep.subr.mxu0 0.0
        %4789 = vmatpush1.msra.mxu0 %v4736
        %4790 = vmatprep.subr.mxu0 0.0
        %4791 = vmatpush1.msra.mxu0 %v4737
        %4792 = vmatprep.subr.mxu0 0.0
        %4793 = vmatpush1.msra.mxu0 %v4738
        %4794 = vmatprep.subr.mxu0 0.0
        %4795 = vmatpush1.msra.mxu0 %v4739
        %4796 = vmatprep.subr.mxu0 0.0
        %4797 = vmatpush1.msra.mxu0 %v4740
        %4798 = vmatprep.subr.mxu0 0.0
        %4799 = vmatpush1.msra.mxu0 %v4741
        %4800 = vmatprep.subr.mxu0 0.0
        %4801 = vmatpush1.msra.mxu0 %v4742
        %4802 = vmatprep.subr.mxu0 0.0
        %4803 = vmatpush1.msra.mxu0 %v4743
        %4804 = vmatprep.subr.mxu0 0.0
        %4805 = vmatpush1.msra.mxu0 %v4744
        %4806 = vmatprep.subr.mxu0 0.0
        %4807 = vmatpush1.msra.mxu0 %v4745
        %4808 = vmatprep.subr.mxu0 0.0
        %4809 = vmatpush1.msra.mxu0 %v4746
        %4810 = vmatprep.subr.mxu0 0.0
        %4811 = vmatpush1.msra.mxu0 %v4747
        %4812 = vmatprep.mubr.f32.mxu0 %v520
        %4813 = vmatmul.mubr.f32.gmra.mrb[0].mxu0 %v293
        %v4814 = vpop.f32.mrb[0].mxu0
        %v4815 = vadd.f32 0.0, %v4814
        %v4816 = vpop.f32.mrb[0].mxu0
        %4817 = vdwg.mxu0
        %v4818 = vlaneseq
        %v4819 = vshrl.u32 %v4818, 7
        %v4820 = vsub.s32 6, %v4819
        %v4821 = vrot.slane %v378, %v4820
        %v4822 = vmul.f32 %v4815, %v4821
        %v4823 = vadd.f32 %v4679, %v4822
        %v4824 = vlaneseq
        %v4825 = vshrl.u32 %v4824, 7
        %v4826 = vsub.s32 6, %v4825
        %v4827 = vrot.slane %v911, %v4826
        %vm4828 = vcmp.eq.s32.totalorder %v391, %v4827
        %vm4829 = vcmp.eq.s32.totalorder %v392, %v4827
        %vm4830 = vcmp.eq.s32.totalorder %v393, %v4827
        %vm4831 = vcmp.eq.s32.totalorder %v394, %v4827
        %vm4832 = vcmp.eq.s32.totalorder %v395, %v4827
        %vm4833 = vcmp.eq.s32.totalorder %v396, %v4827
        %vm4834 = vcmp.eq.s32.totalorder %v397, %v4827
        %vm4835 = vcmp.eq.s32.totalorder %v398, %v4827
        %vm4836 = vcmp.eq.s32.totalorder %v399, %v4827
        %vm4837 = vcmp.eq.s32.totalorder %v400, %v4827
        %vm4838 = vcmp.eq.s32.totalorder %v401, %v4827
        %vm4839 = vcmp.eq.s32.totalorder %v402, %v4827
        %vm4840 = vcmp.eq.s32.totalorder %v403, %v4827
        %vm4841 = vcmp.eq.s32.totalorder %v404, %v4827
        %vm4842 = vcmp.eq.s32.totalorder %v405, %v4827
        %vm4843 = vcmp.eq.s32.totalorder %v406, %v4827
        %vm4844 = vcmp.eq.s32.totalorder %v407, %v4827
        %vm4845 = vcmp.eq.s32.totalorder %v408, %v4827
        %vm4846 = vcmp.eq.s32.totalorder %v409, %v4827
        %vm4847 = vcmp.eq.s32.totalorder %v410, %v4827
        %vm4848 = vcmp.eq.s32.totalorder %v411, %v4827
        %vm4849 = vcmp.eq.s32.totalorder %v412, %v4827
        %vm4850 = vcmp.eq.s32.totalorder %v413, %v4827
        %vm4851 = vcmp.eq.s32.totalorder %v414, %v4827
        %vm4852 = vcmp.eq.s32.totalorder %v415, %v4827
        %vm4853 = vcmp.eq.s32.totalorder %v416, %v4827
        %vm4854 = vcmp.eq.s32.totalorder %v417, %v4827
        %vm4855 = vcmp.eq.s32.totalorder %v418, %v4827
        %vm4856 = vcmp.eq.s32.totalorder %v419, %v4827
        %vm4857 = vcmp.eq.s32.totalorder %v420, %v4827
        %vm4858 = vcmp.eq.s32.totalorder %v421, %v4827
        %vm4859 = vcmp.eq.s32.totalorder %v422, %v4827
        %v4860 = vsel %vm4828, 1.0, 0.0
        %v4861 = vsel %vm4829, 1.0, 0.0
        %v4862 = vsel %vm4830, 1.0, 0.0
        %v4863 = vsel %vm4831, 1.0, 0.0
        %v4864 = vsel %vm4832, 1.0, 0.0
        %v4865 = vsel %vm4833, 1.0, 0.0
        %v4866 = vsel %vm4834, 1.0, 0.0
        %v4867 = vsel %vm4835, 1.0, 0.0
        %v4868 = vsel %vm4836, 1.0, 0.0
        %v4869 = vsel %vm4837, 1.0, 0.0
        %v4870 = vsel %vm4838, 1.0, 0.0
        %v4871 = vsel %vm4839, 1.0, 0.0
        %v4872 = vsel %vm4840, 1.0, 0.0
        %v4873 = vsel %vm4841, 1.0, 0.0
        %v4874 = vsel %vm4842, 1.0, 0.0
        %v4875 = vsel %vm4843, 1.0, 0.0
        %v4876 = vsel %vm4844, 1.0, 0.0
        %v4877 = vsel %vm4845, 1.0, 0.0
        %v4878 = vsel %vm4846, 1.0, 0.0
        %v4879 = vsel %vm4847, 1.0, 0.0
        %v4880 = vsel %vm4848, 1.0, 0.0
        %v4881 = vsel %vm4849, 1.0, 0.0
        %v4882 = vsel %vm4850, 1.0, 0.0
        %v4883 = vsel %vm4851, 1.0, 0.0
        %v4884 = vsel %vm4852, 1.0, 0.0
        %v4885 = vsel %vm4853, 1.0, 0.0
        %v4886 = vsel %vm4854, 1.0, 0.0
        %v4887 = vsel %vm4855, 1.0, 0.0
        %v4888 = vsel %vm4856, 1.0, 0.0
        %v4889 = vsel %vm4857, 1.0, 0.0
        %v4890 = vsel %vm4858, 1.0, 0.0
        %v4891 = vsel %vm4859, 1.0, 0.0
        %4892 = vmatprep.subr.mxu0 0.0
        %4893 = vmatpush1.msra.mxu0 %v4860
        %4894 = vmatprep.subr.mxu0 0.0
        %4895 = vmatpush1.msra.mxu0 %v4861
        %4896 = vmatprep.subr.mxu0 0.0
        %4897 = vmatpush1.msra.mxu0 %v4862
        %4898 = vmatprep.subr.mxu0 0.0
        %4899 = vmatpush1.msra.mxu0 %v4863
        %4900 = vmatprep.subr.mxu0 0.0
        %4901 = vmatpush1.msra.mxu0 %v4864
        %4902 = vmatprep.subr.mxu0 0.0
        %4903 = vmatpush1.msra.mxu0 %v4865
        %4904 = vmatprep.subr.mxu0 0.0
        %4905 = vmatpush1.msra.mxu0 %v4866
        %4906 = vmatprep.subr.mxu0 0.0
        %4907 = vmatpush1.msra.mxu0 %v4867
        %4908 = vmatprep.subr.mxu0 0.0
        %4909 = vmatpush1.msra.mxu0 %v4868
        %4910 = vmatprep.subr.mxu0 0.0
        %4911 = vmatpush1.msra.mxu0 %v4869
        %4912 = vmatprep.subr.mxu0 0.0
        %4913 = vmatpush1.msra.mxu0 %v4870
        %4914 = vmatprep.subr.mxu0 0.0
        %4915 = vmatpush1.msra.mxu0 %v4871
        %4916 = vmatprep.subr.mxu0 0.0
        %4917 = vmatpush1.msra.mxu0 %v4872
        %4918 = vmatprep.subr.mxu0 0.0
        %4919 = vmatpush1.msra.mxu0 %v4873
        %4920 = vmatprep.subr.mxu0 0.0
        %4921 = vmatpush1.msra.mxu0 %v4874
        %4922 = vmatprep.subr.mxu0 0.0
        %4923 = vmatpush1.msra.mxu0 %v4875
        %4924 = vmatprep.subr.mxu0 0.0
        %4925 = vmatpush1.msra.mxu0 %v4876
        %4926 = vmatprep.subr.mxu0 0.0
        %4927 = vmatpush1.msra.mxu0 %v4877
        %4928 = vmatprep.subr.mxu0 0.0
        %4929 = vmatpush1.msra.mxu0 %v4878
        %4930 = vmatprep.subr.mxu0 0.0
        %4931 = vmatpush1.msra.mxu0 %v4879
        %4932 = vmatprep.subr.mxu0 0.0
        %4933 = vmatpush1.msra.mxu0 %v4880
        %4934 = vmatprep.subr.mxu0 0.0
        %4935 = vmatpush1.msra.mxu0 %v4881
        %4936 = vmatprep.subr.mxu0 0.0
        %4937 = vmatpush1.msra.mxu0 %v4882
        %4938 = vmatprep.subr.mxu0 0.0
        %4939 = vmatpush1.msra.mxu0 %v4883
        %4940 = vmatprep.subr.mxu0 0.0
        %4941 = vmatpush1.msra.mxu0 %v4884
        %4942 = vmatprep.subr.mxu0 0.0
        %4943 = vmatpush1.msra.mxu0 %v4885
        %4944 = vmatprep.subr.mxu0 0.0
        %4945 = vmatpush1.msra.mxu0 %v4886
        %4946 = vmatprep.subr.mxu0 0.0
        %4947 = vmatpush1.msra.mxu0 %v4887
        %4948 = vmatprep.subr.mxu0 0.0
        %4949 = vmatpush1.msra.mxu0 %v4888
        %4950 = vmatprep.subr.mxu0 0.0
        %4951 = vmatpush1.msra.mxu0 %v4889
        %4952 = vmatprep.subr.mxu0 0.0
        %4953 = vmatpush1.msra.mxu0 %v4890
        %4954 = vmatprep.subr.mxu0 0.0
        %4955 = vmatpush1.msra.mxu0 %v4891
        %4956 = vmatprep.mubr.f32.mxu0 %v520
        %4957 = vmatmul.mubr.f32.gmra.mrb[0].mxu0 %v293
        %v4958 = vpop.f32.mrb[0].mxu0
        %v4959 = vadd.f32 0.0, %v4958
        %v4960 = vpop.f32.mrb[0].mxu0
        %4961 = vdwg.mxu0
        %v4962 = vlaneseq
        %v4963 = vshrl.u32 %v4962, 7
        %v4964 = vsub.s32 6, %v4963
        %v4965 = vrot.slane %v380, %v4964
        %v4966 = vmul.f32 %v4959, %v4965
        %v4967 = vadd.f32 %v4823, %v4966
        %v4969 = vsel %vm1631, %v429, 0
        %v4972 = vsel %vm1635, %v4967, 0
        %4974 = vmatprep.subr.mxu0 0.0
        %4975 = vmatpush1.msra.mxu0 %v4972
        %4976 = vmatprep.subr.mxu0 0.0
        %4977 = vmatpush1.msra.mxu0 0.0
        %4978 = vmatprep.subr.mxu0 0.0
        %4979 = vmatpush1.msra.mxu0 0.0
        %4980 = vmatprep.subr.mxu0 0.0
        %4981 = vmatpush1.msra.mxu0 0.0
        %4982 = vmatprep.subr.mxu0 0.0
        %4983 = vmatpush1.msra.mxu0 0.0
        %4984 = vmatprep.subr.mxu0 0.0
        %4985 = vmatpush1.msra.mxu0 0.0
        %4986 = vmatprep.subr.mxu0 0.0
        %4987 = vmatpush1.msra.mxu0 0.0
        %4988 = vmatprep.subr.mxu0 0.0
        %4989 = vmatpush1.msra.mxu0 0.0
        %4990 = vmatprep.subr.mxu0 0.0
        %4991 = vmatpush1.msra.mxu0 0.0
        %4992 = vmatprep.subr.mxu0 0.0
        %4993 = vmatpush1.msra.mxu0 0.0
        %4994 = vmatprep.subr.mxu0 0.0
        %4995 = vmatpush1.msra.mxu0 0.0
        %4996 = vmatprep.subr.mxu0 0.0
        %4997 = vmatpush1.msra.mxu0 0.0
        %4998 = vmatprep.subr.mxu0 0.0
        %4999 = vmatpush1.msra.mxu0 0.0
        %5000 = vmatprep.subr.mxu0 0.0
        %5001 = vmatpush1.msra.mxu0 0.0
        %5002 = vmatprep.subr.mxu0 0.0
        %5003 = vmatpush1.msra.mxu0 0.0
        %5004 = vmatprep.subr.mxu0 0.0
        %5005 = vmatpush1.msra.mxu0 0.0
        %5006 = vmatprep.subr.mxu0 0.0
        %5007 = vmatpush1.msra.mxu0 0.0
        %5008 = vmatprep.subr.mxu0 0.0
        %5009 = vmatpush1.msra.mxu0 0.0
        %5010 = vmatprep.subr.mxu0 0.0
        %5011 = vmatpush1.msra.mxu0 0.0
        %5012 = vmatprep.subr.mxu0 0.0
        %5013 = vmatpush1.msra.mxu0 0.0
        %5014 = vmatprep.subr.mxu0 0.0
        %5015 = vmatpush1.msra.mxu0 0.0
        %5016 = vmatprep.subr.mxu0 0.0
        %5017 = vmatpush1.msra.mxu0 0.0
        %5018 = vmatprep.subr.mxu0 0.0
        %5019 = vmatpush1.msra.mxu0 0.0
        %5020 = vmatprep.subr.mxu0 0.0
        %5021 = vmatpush1.msra.mxu0 0.0
        %5022 = vmatprep.subr.mxu0 0.0
        %5023 = vmatpush1.msra.mxu0 0.0
        %5024 = vmatprep.subr.mxu0 0.0
        %5025 = vmatpush1.msra.mxu0 0.0
        %5026 = vmatprep.subr.mxu0 0.0
        %5027 = vmatpush1.msra.mxu0 0.0
        %5028 = vmatprep.subr.mxu0 0.0
        %5029 = vmatpush1.msra.mxu0 0.0
        %5030 = vmatprep.subr.mxu0 0.0
        %5031 = vmatpush1.msra.mxu0 0.0
        %5032 = vmatprep.subr.mxu0 0.0
        %5033 = vmatpush1.msra.mxu0 0.0
        %5034 = vmatprep.subr.mxu0 0.0
        %5035 = vmatpush1.msra.mxu0 0.0
        %5036 = vmatprep.subr.mxu0 0.0
        %5037 = vmatpush1.msra.mxu0 0.0
        %5038 = vmatprep.mubr.f32.mxu0 0.0
        %5039 = vmatmul.mubr.f32.gmra.mrb[0].mxu0 %v4969
        %v5040 = vpop.f32.mrb[0].mxu0
        %v5041 = vadd.f32 0.0, %v5040
        %v5042 = vpop.f32.mrb[0].mxu0
        %5043 = vdwg.mxu0
        %v5044 = vadd.f32 %v4392, %v5041
        %v5045 = vsub.s32 %v385, 1
        %vm5046 = vcmp.ge.s32.totalorder %v5045, 0
        %v5047 = vsel %vm5046, 1, 0
        %v5048 = vrot.slane %v5047, 1
        %vm5049 = vcmp.ne.s32.totalorder %v5048, 0
        %vm5050 = vmand %vm436, %vm5049
        %vm5051 = vcmp.lt.s32.totalorder %v5045, 16
        %v5052 = vsel %vm5051, 1, 0
        %v5053 = vrot.slane %v5052, 1
        %vm5054 = vcmp.ne.s32.totalorder %v5053, 0
        %vm5055 = vmand %vm5050, %vm5054
        %v5056 = vrot.slane %v5045, 1
        %v5057 = vadd.s32 %v447, %v5056
        %v5058 = vsel %vm5055, %v5057, 4294967295
        %v5059 = vlaneseq
        %v5060 = vshrl.u32 %v5059, 7
        %v5061 = vsub.s32 7, %v5060
        %v5062 = vrot.slane %v5058, %v5061
        %vm5063 = vcmp.eq.s32.totalorder %v391, %v5062
        %vm5064 = vcmp.eq.s32.totalorder %v392, %v5062
        %vm5065 = vcmp.eq.s32.totalorder %v393, %v5062
        %vm5066 = vcmp.eq.s32.totalorder %v394, %v5062
        %vm5067 = vcmp.eq.s32.totalorder %v395, %v5062
        %vm5068 = vcmp.eq.s32.totalorder %v396, %v5062
        %vm5069 = vcmp.eq.s32.totalorder %v397, %v5062
        %vm5070 = vcmp.eq.s32.totalorder %v398, %v5062
        %vm5071 = vcmp.eq.s32.totalorder %v399, %v5062
        %vm5072 = vcmp.eq.s32.totalorder %v400, %v5062
        %vm5073 = vcmp.eq.s32.totalorder %v401, %v5062
        %vm5074 = vcmp.eq.s32.totalorder %v402, %v5062
        %vm5075 = vcmp.eq.s32.totalorder %v403, %v5062
        %vm5076 = vcmp.eq.s32.totalorder %v404, %v5062
        %vm5077 = vcmp.eq.s32.totalorder %v405, %v5062
        %vm5078 = vcmp.eq.s32.totalorder %v406, %v5062
        %vm5079 = vcmp.eq.s32.totalorder %v407, %v5062
        %vm5080 = vcmp.eq.s32.totalorder %v408, %v5062
        %vm5081 = vcmp.eq.s32.totalorder %v409, %v5062
        %vm5082 = vcmp.eq.s32.totalorder %v410, %v5062
        %vm5083 = vcmp.eq.s32.totalorder %v411, %v5062
        %vm5084 = vcmp.eq.s32.totalorder %v412, %v5062
        %vm5085 = vcmp.eq.s32.totalorder %v413, %v5062
        %vm5086 = vcmp.eq.s32.totalorder %v414, %v5062
        %vm5087 = vcmp.eq.s32.totalorder %v415, %v5062
        %vm5088 = vcmp.eq.s32.totalorder %v416, %v5062
        %vm5089 = vcmp.eq.s32.totalorder %v417, %v5062
        %vm5090 = vcmp.eq.s32.totalorder %v418, %v5062
        %vm5091 = vcmp.eq.s32.totalorder %v419, %v5062
        %vm5092 = vcmp.eq.s32.totalorder %v420, %v5062
        %vm5093 = vcmp.eq.s32.totalorder %v421, %v5062
        %vm5094 = vcmp.eq.s32.totalorder %v422, %v5062
        %v5095 = vsel %vm5063, 1.0, 0.0
        %v5096 = vsel %vm5064, 1.0, 0.0
        %v5097 = vsel %vm5065, 1.0, 0.0
        %v5098 = vsel %vm5066, 1.0, 0.0
        %v5099 = vsel %vm5067, 1.0, 0.0
        %v5100 = vsel %vm5068, 1.0, 0.0
        %v5101 = vsel %vm5069, 1.0, 0.0
        %v5102 = vsel %vm5070, 1.0, 0.0
        %v5103 = vsel %vm5071, 1.0, 0.0
        %v5104 = vsel %vm5072, 1.0, 0.0
        %v5105 = vsel %vm5073, 1.0, 0.0
        %v5106 = vsel %vm5074, 1.0, 0.0
        %v5107 = vsel %vm5075, 1.0, 0.0
        %v5108 = vsel %vm5076, 1.0, 0.0
        %v5109 = vsel %vm5077, 1.0, 0.0
        %v5110 = vsel %vm5078, 1.0, 0.0
        %v5111 = vsel %vm5079, 1.0, 0.0
        %v5112 = vsel %vm5080, 1.0, 0.0
        %v5113 = vsel %vm5081, 1.0, 0.0
        %v5114 = vsel %vm5082, 1.0, 0.0
        %v5115 = vsel %vm5083, 1.0, 0.0
        %v5116 = vsel %vm5084, 1.0, 0.0
        %v5117 = vsel %vm5085, 1.0, 0.0
        %v5118 = vsel %vm5086, 1.0, 0.0
        %v5119 = vsel %vm5087, 1.0, 0.0
        %v5120 = vsel %vm5088, 1.0, 0.0
        %v5121 = vsel %vm5089, 1.0, 0.0
        %v5122 = vsel %vm5090, 1.0, 0.0
        %v5123 = vsel %vm5091, 1.0, 0.0
        %v5124 = vsel %vm5092, 1.0, 0.0
        %v5125 = vsel %vm5093, 1.0, 0.0
        %v5126 = vsel %vm5094, 1.0, 0.0
        %5127 = vmatprep.subr.mxu0 0.0
        %5128 = vmatpush1.msra.mxu0 %v5095
        %5129 = vmatprep.subr.mxu0 0.0
        %5130 = vmatpush1.msra.mxu0 %v5096
        %5131 = vmatprep.subr.mxu0 0.0
        %5132 = vmatpush1.msra.mxu0 %v5097
        %5133 = vmatprep.subr.mxu0 0.0
        %5134 = vmatpush1.msra.mxu0 %v5098
        %5135 = vmatprep.subr.mxu0 0.0
        %5136 = vmatpush1.msra.mxu0 %v5099
        %5137 = vmatprep.subr.mxu0 0.0
        %5138 = vmatpush1.msra.mxu0 %v5100
        %5139 = vmatprep.subr.mxu0 0.0
        %5140 = vmatpush1.msra.mxu0 %v5101
        %5141 = vmatprep.subr.mxu0 0.0
        %5142 = vmatpush1.msra.mxu0 %v5102
        %5143 = vmatprep.subr.mxu0 0.0
        %5144 = vmatpush1.msra.mxu0 %v5103
        %5145 = vmatprep.subr.mxu0 0.0
        %5146 = vmatpush1.msra.mxu0 %v5104
        %5147 = vmatprep.subr.mxu0 0.0
        %5148 = vmatpush1.msra.mxu0 %v5105
        %5149 = vmatprep.subr.mxu0 0.0
        %5150 = vmatpush1.msra.mxu0 %v5106
        %5151 = vmatprep.subr.mxu0 0.0
        %5152 = vmatpush1.msra.mxu0 %v5107
        %5153 = vmatprep.subr.mxu0 0.0
        %5154 = vmatpush1.msra.mxu0 %v5108
        %5155 = vmatprep.subr.mxu0 0.0
        %5156 = vmatpush1.msra.mxu0 %v5109
        %5157 = vmatprep.subr.mxu0 0.0
        %5158 = vmatpush1.msra.mxu0 %v5110
        %5159 = vmatprep.subr.mxu0 0.0
        %5160 = vmatpush1.msra.mxu0 %v5111
        %5161 = vmatprep.subr.mxu0 0.0
        %5162 = vmatpush1.msra.mxu0 %v5112
        %5163 = vmatprep.subr.mxu0 0.0
        %5164 = vmatpush1.msra.mxu0 %v5113
        %5165 = vmatprep.subr.mxu0 0.0
        %5166 = vmatpush1.msra.mxu0 %v5114
        %5167 = vmatprep.subr.mxu0 0.0
        %5168 = vmatpush1.msra.mxu0 %v5115
        %5169 = vmatprep.subr.mxu0 0.0
        %5170 = vmatpush1.msra.mxu0 %v5116
        %5171 = vmatprep.subr.mxu0 0.0
        %5172 = vmatpush1.msra.mxu0 %v5117
        %5173 = vmatprep.subr.mxu0 0.0
        %5174 = vmatpush1.msra.mxu0 %v5118
        %5175 = vmatprep.subr.mxu0 0.0
        %5176 = vmatpush1.msra.mxu0 %v5119
        %5177 = vmatprep.subr.mxu0 0.0
        %5178 = vmatpush1.msra.mxu0 %v5120
        %5179 = vmatprep.subr.mxu0 0.0
        %5180 = vmatpush1.msra.mxu0 %v5121
        %5181 = vmatprep.subr.mxu0 0.0
        %5182 = vmatpush1.msra.mxu0 %v5122
        %5183 = vmatprep.subr.mxu0 0.0
        %5184 = vmatpush1.msra.mxu0 %v5123
        %5185 = vmatprep.subr.mxu0 0.0
        %5186 = vmatpush1.msra.mxu0 %v5124
        %5187 = vmatprep.subr.mxu0 0.0
        %5188 = vmatpush1.msra.mxu0 %v5125
        %5189 = vmatprep.subr.mxu0 0.0
        %5190 = vmatpush1.msra.mxu0 %v5126
        %5191 = vmatprep.mubr.f32.mxu0 %v520
        %5192 = vmatmul.mubr.f32.gmra.mrb[0].mxu0 %v293
        %v5193 = vpop.f32.mrb[0].mxu0
        %v5194 = vadd.f32 0.0, %v5193
        %v5195 = vpop.f32.mrb[0].mxu0
        %5196 = vdwg.mxu0
        %v5197 = vlaneseq
        %v5198 = vshrl.u32 %v5197, 7
        %v5199 = vsub.s32 7, %v5198
        %v5200 = vrot.slane %v359, %v5199
        %v5201 = vmul.f32 %v5194, %v5200
        %v5202 = vsub.s32 %v389, 1
        %vm5203 = vcmp.ge.s32.totalorder %v5202, 0
        %v5204 = vsel %vm5203, 1, 0
        %v5205 = vrot.slane %v5204, 1
        %vm5206 = vcmp.ne.s32.totalorder %v5205, 0
        %vm5207 = vmand %vm601, %vm5206
        %vm5208 = vcmp.lt.s32.totalorder %v5202, 16
        %v5209 = vsel %vm5208, 1, 0
        %v5210 = vrot.slane %v5209, 1
        %vm5211 = vcmp.ne.s32.totalorder %v5210, 0
        %vm5212 = vmand %vm5207, %vm5211
        %v5213 = vrot.slane %v5202, 1
        %v5214 = vadd.s32 %v612, %v5213
        %v5215 = vsel %vm5212, %v5214, 4294967295
        %v5216 = vlaneseq
        %v5217 = vshrl.u32 %v5216, 7
        %v5218 = vsub.s32 7, %v5217
        %v5219 = vrot.slane %v5215, %v5218
        %vm5220 = vcmp.eq.s32.totalorder %v391, %v5219
        %vm5221 = vcmp.eq.s32.totalorder %v392, %v5219
        %vm5222 = vcmp.eq.s32.totalorder %v393, %v5219
        %vm5223 = vcmp.eq.s32.totalorder %v394, %v5219
        %vm5224 = vcmp.eq.s32.totalorder %v395, %v5219
        %vm5225 = vcmp.eq.s32.totalorder %v396, %v5219
        %vm5226 = vcmp.eq.s32.totalorder %v397, %v5219
        %vm5227 = vcmp.eq.s32.totalorder %v398, %v5219
        %vm5228 = vcmp.eq.s32.totalorder %v399, %v5219
        %vm5229 = vcmp.eq.s32.totalorder %v400, %v5219
        %vm5230 = vcmp.eq.s32.totalorder %v401, %v5219
        %vm5231 = vcmp.eq.s32.totalorder %v402, %v5219
        %vm5232 = vcmp.eq.s32.totalorder %v403, %v5219
        %vm5233 = vcmp.eq.s32.totalorder %v404, %v5219
        %vm5234 = vcmp.eq.s32.totalorder %v405, %v5219
        %vm5235 = vcmp.eq.s32.totalorder %v406, %v5219
        %vm5236 = vcmp.eq.s32.totalorder %v407, %v5219
        %vm5237 = vcmp.eq.s32.totalorder %v408, %v5219
        %vm5238 = vcmp.eq.s32.totalorder %v409, %v5219
        %vm5239 = vcmp.eq.s32.totalorder %v410, %v5219
        %vm5240 = vcmp.eq.s32.totalorder %v411, %v5219
        %vm5241 = vcmp.eq.s32.totalorder %v412, %v5219
        %vm5242 = vcmp.eq.s32.totalorder %v413, %v5219
        %vm5243 = vcmp.eq.s32.totalorder %v414, %v5219
        %vm5244 = vcmp.eq.s32.totalorder %v415, %v5219
        %vm5245 = vcmp.eq.s32.totalorder %v416, %v5219
        %vm5246 = vcmp.eq.s32.totalorder %v417, %v5219
        %vm5247 = vcmp.eq.s32.totalorder %v418, %v5219
        %vm5248 = vcmp.eq.s32.totalorder %v419, %v5219
        %vm5249 = vcmp.eq.s32.totalorder %v420, %v5219
        %vm5250 = vcmp.eq.s32.totalorder %v421, %v5219
        %vm5251 = vcmp.eq.s32.totalorder %v422, %v5219
        %v5252 = vsel %vm5220, 1.0, 0.0
        %v5253 = vsel %vm5221, 1.0, 0.0
        %v5254 = vsel %vm5222, 1.0, 0.0
        %v5255 = vsel %vm5223, 1.0, 0.0
        %v5256 = vsel %vm5224, 1.0, 0.0
        %v5257 = vsel %vm5225, 1.0, 0.0
        %v5258 = vsel %vm5226, 1.0, 0.0
        %v5259 = vsel %vm5227, 1.0, 0.0
        %v5260 = vsel %vm5228, 1.0, 0.0
        %v5261 = vsel %vm5229, 1.0, 0.0
        %v5262 = vsel %vm5230, 1.0, 0.0
        %v5263 = vsel %vm5231, 1.0, 0.0
        %v5264 = vsel %vm5232, 1.0, 0.0
        %v5265 = vsel %vm5233, 1.0, 0.0
        %v5266 = vsel %vm5234, 1.0, 0.0
        %v5267 = vsel %vm5235, 1.0, 0.0
        %v5268 = vsel %vm5236, 1.0, 0.0
        %v5269 = vsel %vm5237, 1.0, 0.0
        %v5270 = vsel %vm5238, 1.0, 0.0
        %v5271 = vsel %vm5239, 1.0, 0.0
        %v5272 = vsel %vm5240, 1.0, 0.0
        %v5273 = vsel %vm5241, 1.0, 0.0
        %v5274 = vsel %vm5242, 1.0, 0.0
        %v5275 = vsel %vm5243, 1.0, 0.0
        %v5276 = vsel %vm5244, 1.0, 0.0
        %v5277 = vsel %vm5245, 1.0, 0.0
        %v5278 = vsel %vm5246, 1.0, 0.0
        %v5279 = vsel %vm5247, 1.0, 0.0
        %v5280 = vsel %vm5248, 1.0, 0.0
        %v5281 = vsel %vm5249, 1.0, 0.0
        %v5282 = vsel %vm5250, 1.0, 0.0
        %v5283 = vsel %vm5251, 1.0, 0.0
        %5284 = vmatprep.subr.mxu0 0.0
        %5285 = vmatpush1.msra.mxu0 %v5252
        %5286 = vmatprep.subr.mxu0 0.0
        %5287 = vmatpush1.msra.mxu0 %v5253
        %5288 = vmatprep.subr.mxu0 0.0
        %5289 = vmatpush1.msra.mxu0 %v5254
        %5290 = vmatprep.subr.mxu0 0.0
        %5291 = vmatpush1.msra.mxu0 %v5255
        %5292 = vmatprep.subr.mxu0 0.0
        %5293 = vmatpush1.msra.mxu0 %v5256
        %5294 = vmatprep.subr.mxu0 0.0
        %5295 = vmatpush1.msra.mxu0 %v5257
        %5296 = vmatprep.subr.mxu0 0.0
        %5297 = vmatpush1.msra.mxu0 %v5258
        %5298 = vmatprep.subr.mxu0 0.0
        %5299 = vmatpush1.msra.mxu0 %v5259
        %5300 = vmatprep.subr.mxu0 0.0
        %5301 = vmatpush1.msra.mxu0 %v5260
        %5302 = vmatprep.subr.mxu0 0.0
        %5303 = vmatpush1.msra.mxu0 %v5261
        %5304 = vmatprep.subr.mxu0 0.0
        %5305 = vmatpush1.msra.mxu0 %v5262
        %5306 = vmatprep.subr.mxu0 0.0
        %5307 = vmatpush1.msra.mxu0 %v5263
        %5308 = vmatprep.subr.mxu0 0.0
        %5309 = vmatpush1.msra.mxu0 %v5264
        %5310 = vmatprep.subr.mxu0 0.0
        %5311 = vmatpush1.msra.mxu0 %v5265
        %5312 = vmatprep.subr.mxu0 0.0
        %5313 = vmatpush1.msra.mxu0 %v5266
        %5314 = vmatprep.subr.mxu0 0.0
        %5315 = vmatpush1.msra.mxu0 %v5267
        %5316 = vmatprep.subr.mxu0 0.0
        %5317 = vmatpush1.msra.mxu0 %v5268
        %5318 = vmatprep.subr.mxu0 0.0
        %5319 = vmatpush1.msra.mxu0 %v5269
        %5320 = vmatprep.subr.mxu0 0.0
        %5321 = vmatpush1.msra.mxu0 %v5270
        %5322 = vmatprep.subr.mxu0 0.0
        %5323 = vmatpush1.msra.mxu0 %v5271
        %5324 = vmatprep.subr.mxu0 0.0
        %5325 = vmatpush1.msra.mxu0 %v5272
        %5326 = vmatprep.subr.mxu0 0.0
        %5327 = vmatpush1.msra.mxu0 %v5273
        %5328 = vmatprep.subr.mxu0 0.0
        %5329 = vmatpush1.msra.mxu0 %v5274
        %5330 = vmatprep.subr.mxu0 0.0
        %5331 = vmatpush1.msra.mxu0 %v5275
        %5332 = vmatprep.subr.mxu0 0.0
        %5333 = vmatpush1.msra.mxu0 %v5276
        %5334 = vmatprep.subr.mxu0 0.0
        %5335 = vmatpush1.msra.mxu0 %v5277
        %5336 = vmatprep.subr.mxu0 0.0
        %5337 = vmatpush1.msra.mxu0 %v5278
        %5338 = vmatprep.subr.mxu0 0.0
        %5339 = vmatpush1.msra.mxu0 %v5279
        %5340 = vmatprep.subr.mxu0 0.0
        %5341 = vmatpush1.msra.mxu0 %v5280
        %5342 = vmatprep.subr.mxu0 0.0
        %5343 = vmatpush1.msra.mxu0 %v5281
        %5344 = vmatprep.subr.mxu0 0.0
        %5345 = vmatpush1.msra.mxu0 %v5282
        %5346 = vmatprep.subr.mxu0 0.0
        %5347 = vmatpush1.msra.mxu0 %v5283
        %5348 = vmatprep.mubr.f32.mxu0 %v520
        %5349 = vmatmul.mubr.f32.gmra.mrb[0].mxu0 %v293
        %v5350 = vpop.f32.mrb[0].mxu0
        %v5351 = vadd.f32 0.0, %v5350
        %v5352 = vpop.f32.mrb[0].mxu0
        %5353 = vdwg.mxu0
        %v5354 = vlaneseq
        %v5355 = vshrl.u32 %v5354, 7
        %v5356 = vsub.s32 7, %v5355
        %v5357 = vrot.slane %v376, %v5356
        %v5358 = vmul.f32 %v5351, %v5357
        %v5359 = vadd.f32 %v5201, %v5358
        %vm5360 = vmand %vm436, %vm5206
        %vm5361 = vmand %vm5360, %vm5211
        %v5362 = vadd.s32 %v447, %v5213
        %v5363 = vsel %vm5361, %v5362, 4294967295
        %v5364 = vlaneseq
        %v5365 = vshrl.u32 %v5364, 7
        %v5366 = vsub.s32 7, %v5365
        %v5367 = vrot.slane %v5363, %v5366
        %vm5368 = vcmp.eq.s32.totalorder %v391, %v5367
        %vm5369 = vcmp.eq.s32.totalorder %v392, %v5367
        %vm5370 = vcmp.eq.s32.totalorder %v393, %v5367
        %vm5371 = vcmp.eq.s32.totalorder %v394, %v5367
        %vm5372 = vcmp.eq.s32.totalorder %v395, %v5367
        %vm5373 = vcmp.eq.s32.totalorder %v396, %v5367
        %vm5374 = vcmp.eq.s32.totalorder %v397, %v5367
        %vm5375 = vcmp.eq.s32.totalorder %v398, %v5367
        %vm5376 = vcmp.eq.s32.totalorder %v399, %v5367
        %vm5377 = vcmp.eq.s32.totalorder %v400, %v5367
        %vm5378 = vcmp.eq.s32.totalorder %v401, %v5367
        %vm5379 = vcmp.eq.s32.totalorder %v402, %v5367
        %vm5380 = vcmp.eq.s32.totalorder %v403, %v5367
        %vm5381 = vcmp.eq.s32.totalorder %v404, %v5367
        %vm5382 = vcmp.eq.s32.totalorder %v405, %v5367
        %vm5383 = vcmp.eq.s32.totalorder %v406, %v5367
        %vm5384 = vcmp.eq.s32.totalorder %v407, %v5367
        %vm5385 = vcmp.eq.s32.totalorder %v408, %v5367
        %vm5386 = vcmp.eq.s32.totalorder %v409, %v5367
        %vm5387 = vcmp.eq.s32.totalorder %v410, %v5367
        %vm5388 = vcmp.eq.s32.totalorder %v411, %v5367
        %vm5389 = vcmp.eq.s32.totalorder %v412, %v5367
        %vm5390 = vcmp.eq.s32.totalorder %v413, %v5367
        %vm5391 = vcmp.eq.s32.totalorder %v414, %v5367
        %vm5392 = vcmp.eq.s32.totalorder %v415, %v5367
        %vm5393 = vcmp.eq.s32.totalorder %v416, %v5367
        %vm5394 = vcmp.eq.s32.totalorder %v417, %v5367
        %vm5395 = vcmp.eq.s32.totalorder %v418, %v5367
        %vm5396 = vcmp.eq.s32.totalorder %v419, %v5367
        %vm5397 = vcmp.eq.s32.totalorder %v420, %v5367
        %vm5398 = vcmp.eq.s32.totalorder %v421, %v5367
        %vm5399 = vcmp.eq.s32.totalorder %v422, %v5367
        %v5400 = vsel %vm5368, 1.0, 0.0
        %v5401 = vsel %vm5369, 1.0, 0.0
        %v5402 = vsel %vm5370, 1.0, 0.0
        %v5403 = vsel %vm5371, 1.0, 0.0
        %v5404 = vsel %vm5372, 1.0, 0.0
        %v5405 = vsel %vm5373, 1.0, 0.0
        %v5406 = vsel %vm5374, 1.0, 0.0
        %v5407 = vsel %vm5375, 1.0, 0.0
        %v5408 = vsel %vm5376, 1.0, 0.0
        %v5409 = vsel %vm5377, 1.0, 0.0
        %v5410 = vsel %vm5378, 1.0, 0.0
        %v5411 = vsel %vm5379, 1.0, 0.0
        %v5412 = vsel %vm5380, 1.0, 0.0
        %v5413 = vsel %vm5381, 1.0, 0.0
        %v5414 = vsel %vm5382, 1.0, 0.0
        %v5415 = vsel %vm5383, 1.0, 0.0
        %v5416 = vsel %vm5384, 1.0, 0.0
        %v5417 = vsel %vm5385, 1.0, 0.0
        %v5418 = vsel %vm5386, 1.0, 0.0
        %v5419 = vsel %vm5387, 1.0, 0.0
        %v5420 = vsel %vm5388, 1.0, 0.0
        %v5421 = vsel %vm5389, 1.0, 0.0
        %v5422 = vsel %vm5390, 1.0, 0.0
        %v5423 = vsel %vm5391, 1.0, 0.0
        %v5424 = vsel %vm5392, 1.0, 0.0
        %v5425 = vsel %vm5393, 1.0, 0.0
        %v5426 = vsel %vm5394, 1.0, 0.0
        %v5427 = vsel %vm5395, 1.0, 0.0
        %v5428 = vsel %vm5396, 1.0, 0.0
        %v5429 = vsel %vm5397, 1.0, 0.0
        %v5430 = vsel %vm5398, 1.0, 0.0
        %v5431 = vsel %vm5399, 1.0, 0.0
        %5432 = vmatprep.subr.mxu0 0.0
        %5433 = vmatpush1.msra.mxu0 %v5400
        %5434 = vmatprep.subr.mxu0 0.0
        %5435 = vmatpush1.msra.mxu0 %v5401
        %5436 = vmatprep.subr.mxu0 0.0
        %5437 = vmatpush1.msra.mxu0 %v5402
        %5438 = vmatprep.subr.mxu0 0.0
        %5439 = vmatpush1.msra.mxu0 %v5403
        %5440 = vmatprep.subr.mxu0 0.0
        %5441 = vmatpush1.msra.mxu0 %v5404
        %5442 = vmatprep.subr.mxu0 0.0
        %5443 = vmatpush1.msra.mxu0 %v5405
        %5444 = vmatprep.subr.mxu0 0.0
        %5445 = vmatpush1.msra.mxu0 %v5406
        %5446 = vmatprep.subr.mxu0 0.0
        %5447 = vmatpush1.msra.mxu0 %v5407
        %5448 = vmatprep.subr.mxu0 0.0
        %5449 = vmatpush1.msra.mxu0 %v5408
        %5450 = vmatprep.subr.mxu0 0.0
        %5451 = vmatpush1.msra.mxu0 %v5409
        %5452 = vmatprep.subr.mxu0 0.0
        %5453 = vmatpush1.msra.mxu0 %v5410
        %5454 = vmatprep.subr.mxu0 0.0
        %5455 = vmatpush1.msra.mxu0 %v5411
        %5456 = vmatprep.subr.mxu0 0.0
        %5457 = vmatpush1.msra.mxu0 %v5412
        %5458 = vmatprep.subr.mxu0 0.0
        %5459 = vmatpush1.msra.mxu0 %v5413
        %5460 = vmatprep.subr.mxu0 0.0
        %5461 = vmatpush1.msra.mxu0 %v5414
        %5462 = vmatprep.subr.mxu0 0.0
        %5463 = vmatpush1.msra.mxu0 %v5415
        %5464 = vmatprep.subr.mxu0 0.0
        %5465 = vmatpush1.msra.mxu0 %v5416
        %5466 = vmatprep.subr.mxu0 0.0
        %5467 = vmatpush1.msra.mxu0 %v5417
        %5468 = vmatprep.subr.mxu0 0.0
        %5469 = vmatpush1.msra.mxu0 %v5418
        %5470 = vmatprep.subr.mxu0 0.0
        %5471 = vmatpush1.msra.mxu0 %v5419
        %5472 = vmatprep.subr.mxu0 0.0
        %5473 = vmatpush1.msra.mxu0 %v5420
        %5474 = vmatprep.subr.mxu0 0.0
        %5475 = vmatpush1.msra.mxu0 %v5421
        %5476 = vmatprep.subr.mxu0 0.0
        %5477 = vmatpush1.msra.mxu0 %v5422
        %5478 = vmatprep.subr.mxu0 0.0
        %5479 = vmatpush1.msra.mxu0 %v5423
        %5480 = vmatprep.subr.mxu0 0.0
        %5481 = vmatpush1.msra.mxu0 %v5424
        %5482 = vmatprep.subr.mxu0 0.0
        %5483 = vmatpush1.msra.mxu0 %v5425
        %5484 = vmatprep.subr.mxu0 0.0
        %5485 = vmatpush1.msra.mxu0 %v5426
        %5486 = vmatprep.subr.mxu0 0.0
        %5487 = vmatpush1.msra.mxu0 %v5427
        %5488 = vmatprep.subr.mxu0 0.0
        %5489 = vmatpush1.msra.mxu0 %v5428
        %5490 = vmatprep.subr.mxu0 0.0
        %5491 = vmatpush1.msra.mxu0 %v5429
        %5492 = vmatprep.subr.mxu0 0.0
        %5493 = vmatpush1.msra.mxu0 %v5430
        %5494 = vmatprep.subr.mxu0 0.0
        %5495 = vmatpush1.msra.mxu0 %v5431
        %5496 = vmatprep.mubr.f32.mxu0 %v520
        %5497 = vmatmul.mubr.f32.gmra.mrb[0].mxu0 %v293
        %v5498 = vpop.f32.mrb[0].mxu0
        %v5499 = vadd.f32 0.0, %v5498
        %v5500 = vpop.f32.mrb[0].mxu0
        %5501 = vdwg.mxu0
        %v5502 = vlaneseq
        %v5503 = vshrl.u32 %v5502, 7
        %v5504 = vsub.s32 7, %v5503
        %v5505 = vrot.slane %v378, %v5504
        %v5506 = vmul.f32 %v5499, %v5505
        %v5507 = vadd.f32 %v5359, %v5506
        %vm5508 = vmand %vm601, %vm5049
        %vm5509 = vmand %vm5508, %vm5054
        %v5510 = vadd.s32 %v612, %v5056
        %v5511 = vsel %vm5509, %v5510, 4294967295
        %v5512 = vlaneseq
        %v5513 = vshrl.u32 %v5512, 7
        %v5514 = vsub.s32 7, %v5513
        %v5515 = vrot.slane %v5511, %v5514
        %vm5516 = vcmp.eq.s32.totalorder %v391, %v5515
        %vm5517 = vcmp.eq.s32.totalorder %v392, %v5515
        %vm5518 = vcmp.eq.s32.totalorder %v393, %v5515
        %vm5519 = vcmp.eq.s32.totalorder %v394, %v5515
        %vm5520 = vcmp.eq.s32.totalorder %v395, %v5515
        %vm5521 = vcmp.eq.s32.totalorder %v396, %v5515
        %vm5522 = vcmp.eq.s32.totalorder %v397, %v5515
        %vm5523 = vcmp.eq.s32.totalorder %v398, %v5515
        %vm5524 = vcmp.eq.s32.totalorder %v399, %v5515
        %vm5525 = vcmp.eq.s32.totalorder %v400, %v5515
        %vm5526 = vcmp.eq.s32.totalorder %v401, %v5515
        %vm5527 = vcmp.eq.s32.totalorder %v402, %v5515
        %vm5528 = vcmp.eq.s32.totalorder %v403, %v5515
        %vm5529 = vcmp.eq.s32.totalorder %v404, %v5515
        %vm5530 = vcmp.eq.s32.totalorder %v405, %v5515
        %vm5531 = vcmp.eq.s32.totalorder %v406, %v5515
        %vm5532 = vcmp.eq.s32.totalorder %v407, %v5515
        %vm5533 = vcmp.eq.s32.totalorder %v408, %v5515
        %vm5534 = vcmp.eq.s32.totalorder %v409, %v5515
        %vm5535 = vcmp.eq.s32.totalorder %v410, %v5515
        %vm5536 = vcmp.eq.s32.totalorder %v411, %v5515
        %vm5537 = vcmp.eq.s32.totalorder %v412, %v5515
        %vm5538 = vcmp.eq.s32.totalorder %v413, %v5515
        %vm5539 = vcmp.eq.s32.totalorder %v414, %v5515
        %vm5540 = vcmp.eq.s32.totalorder %v415, %v5515
        %vm5541 = vcmp.eq.s32.totalorder %v416, %v5515
        %vm5542 = vcmp.eq.s32.totalorder %v417, %v5515
        %vm5543 = vcmp.eq.s32.totalorder %v418, %v5515
        %vm5544 = vcmp.eq.s32.totalorder %v419, %v5515
        %vm5545 = vcmp.eq.s32.totalorder %v420, %v5515
        %vm5546 = vcmp.eq.s32.totalorder %v421, %v5515
        %vm5547 = vcmp.eq.s32.totalorder %v422, %v5515
        %v5548 = vsel %vm5516, 1.0, 0.0
        %v5549 = vsel %vm5517, 1.0, 0.0
        %v5550 = vsel %vm5518, 1.0, 0.0
        %v5551 = vsel %vm5519, 1.0, 0.0
        %v5552 = vsel %vm5520, 1.0, 0.0
        %v5553 = vsel %vm5521, 1.0, 0.0
        %v5554 = vsel %vm5522, 1.0, 0.0
        %v5555 = vsel %vm5523, 1.0, 0.0
        %v5556 = vsel %vm5524, 1.0, 0.0
        %v5557 = vsel %vm5525, 1.0, 0.0
        %v5558 = vsel %vm5526, 1.0, 0.0
        %v5559 = vsel %vm5527, 1.0, 0.0
        %v5560 = vsel %vm5528, 1.0, 0.0
        %v5561 = vsel %vm5529, 1.0, 0.0
        %v5562 = vsel %vm5530, 1.0, 0.0
        %v5563 = vsel %vm5531, 1.0, 0.0
        %v5564 = vsel %vm5532, 1.0, 0.0
        %v5565 = vsel %vm5533, 1.0, 0.0
        %v5566 = vsel %vm5534, 1.0, 0.0
        %v5567 = vsel %vm5535, 1.0, 0.0
        %v5568 = vsel %vm5536, 1.0, 0.0
        %v5569 = vsel %vm5537, 1.0, 0.0
        %v5570 = vsel %vm5538, 1.0, 0.0
        %v5571 = vsel %vm5539, 1.0, 0.0
        %v5572 = vsel %vm5540, 1.0, 0.0
        %v5573 = vsel %vm5541, 1.0, 0.0
        %v5574 = vsel %vm5542, 1.0, 0.0
        %v5575 = vsel %vm5543, 1.0, 0.0
        %v5576 = vsel %vm5544, 1.0, 0.0
        %v5577 = vsel %vm5545, 1.0, 0.0
        %v5578 = vsel %vm5546, 1.0, 0.0
        %v5579 = vsel %vm5547, 1.0, 0.0
        %5580 = vmatprep.subr.mxu0 0.0
        %5581 = vmatpush1.msra.mxu0 %v5548
        %5582 = vmatprep.subr.mxu0 0.0
        %5583 = vmatpush1.msra.mxu0 %v5549
        %5584 = vmatprep.subr.mxu0 0.0
        %5585 = vmatpush1.msra.mxu0 %v5550
        %5586 = vmatprep.subr.mxu0 0.0
        %5587 = vmatpush1.msra.mxu0 %v5551
        %5588 = vmatprep.subr.mxu0 0.0
        %5589 = vmatpush1.msra.mxu0 %v5552
        %5590 = vmatprep.subr.mxu0 0.0
        %5591 = vmatpush1.msra.mxu0 %v5553
        %5592 = vmatprep.subr.mxu0 0.0
        %5593 = vmatpush1.msra.mxu0 %v5554
        %5594 = vmatprep.subr.mxu0 0.0
        %5595 = vmatpush1.msra.mxu0 %v5555
        %5596 = vmatprep.subr.mxu0 0.0
        %5597 = vmatpush1.msra.mxu0 %v5556
        %5598 = vmatprep.subr.mxu0 0.0
        %5599 = vmatpush1.msra.mxu0 %v5557
        %5600 = vmatprep.subr.mxu0 0.0
        %5601 = vmatpush1.msra.mxu0 %v5558
        %5602 = vmatprep.subr.mxu0 0.0
        %5603 = vmatpush1.msra.mxu0 %v5559
        %5604 = vmatprep.subr.mxu0 0.0
        %5605 = vmatpush1.msra.mxu0 %v5560
        %5606 = vmatprep.subr.mxu0 0.0
        %5607 = vmatpush1.msra.mxu0 %v5561
        %5608 = vmatprep.subr.mxu0 0.0
        %5609 = vmatpush1.msra.mxu0 %v5562
        %5610 = vmatprep.subr.mxu0 0.0
        %5611 = vmatpush1.msra.mxu0 %v5563
        %5612 = vmatprep.subr.mxu0 0.0
        %5613 = vmatpush1.msra.mxu0 %v5564
        %5614 = vmatprep.subr.mxu0 0.0
        %5615 = vmatpush1.msra.mxu0 %v5565
        %5616 = vmatprep.subr.mxu0 0.0
        %5617 = vmatpush1.msra.mxu0 %v5566
        %5618 = vmatprep.subr.mxu0 0.0
        %5619 = vmatpush1.msra.mxu0 %v5567
        %5620 = vmatprep.subr.mxu0 0.0
        %5621 = vmatpush1.msra.mxu0 %v5568
        %5622 = vmatprep.subr.mxu0 0.0
        %5623 = vmatpush1.msra.mxu0 %v5569
        %5624 = vmatprep.subr.mxu0 0.0
        %5625 = vmatpush1.msra.mxu0 %v5570
        %5626 = vmatprep.subr.mxu0 0.0
        %5627 = vmatpush1.msra.mxu0 %v5571
        %5628 = vmatprep.subr.mxu0 0.0
        %5629 = vmatpush1.msra.mxu0 %v5572
        %5630 = vmatprep.subr.mxu0 0.0
        %5631 = vmatpush1.msra.mxu0 %v5573
        %5632 = vmatprep.subr.mxu0 0.0
        %5633 = vmatpush1.msra.mxu0 %v5574
        %5634 = vmatprep.subr.mxu0 0.0
        %5635 = vmatpush1.msra.mxu0 %v5575
        %5636 = vmatprep.subr.mxu0 0.0
        %5637 = vmatpush1.msra.mxu0 %v5576
        %5638 = vmatprep.subr.mxu0 0.0
        %5639 = vmatpush1.msra.mxu0 %v5577
        %5640 = vmatprep.subr.mxu0 0.0
        %5641 = vmatpush1.msra.mxu0 %v5578
        %5642 = vmatprep.subr.mxu0 0.0
        %5643 = vmatpush1.msra.mxu0 %v5579
        %5644 = vmatprep.mubr.f32.mxu0 %v520
        %5645 = vmatmul.mubr.f32.gmra.mrb[0].mxu0 %v293
        %v5646 = vpop.f32.mrb[0].mxu0
        %v5647 = vadd.f32 0.0, %v5646
        %v5648 = vpop.f32.mrb[0].mxu0
        %5649 = vdwg.mxu0
        %v5650 = vlaneseq
        %v5651 = vshrl.u32 %v5650, 7
        %v5652 = vsub.s32 7, %v5651
        %v5653 = vrot.slane %v380, %v5652
        %v5654 = vmul.f32 %v5647, %v5653
        %v5655 = vadd.f32 %v5507, %v5654
        %v5657 = vsel %vm1631, %v430, 0
        %v5660 = vsel %vm1635, %v5655, 0
        %5662 = vmatprep.subr.mxu0 0.0
        %5663 = vmatpush1.msra.mxu0 %v5660
        %5664 = vmatprep.subr.mxu0 0.0
        %5665 = vmatpush1.msra.mxu0 0.0
        %5666 = vmatprep.subr.mxu0 0.0
        %5667 = vmatpush1.msra.mxu0 0.0
        %5668 = vmatprep.subr.mxu0 0.0
        %5669 = vmatpush1.msra.mxu0 0.0
        %5670 = vmatprep.subr.mxu0 0.0
        %5671 = vmatpush1.msra.mxu0 0.0
        %5672 = vmatprep.subr.mxu0 0.0
        %5673 = vmatpush1.msra.mxu0 0.0
        %5674 = vmatprep.subr.mxu0 0.0
        %5675 = vmatpush1.msra.mxu0 0.0
        %5676 = vmatprep.subr.mxu0 0.0
        %5677 = vmatpush1.msra.mxu0 0.0
        %5678 = vmatprep.subr.mxu0 0.0
        %5679 = vmatpush1.msra.mxu0 0.0
        %5680 = vmatprep.subr.mxu0 0.0
        %5681 = vmatpush1.msra.mxu0 0.0
        %5682 = vmatprep.subr.mxu0 0.0
        %5683 = vmatpush1.msra.mxu0 0.0
        %5684 = vmatprep.subr.mxu0 0.0
        %5685 = vmatpush1.msra.mxu0 0.0
        %5686 = vmatprep.subr.mxu0 0.0
        %5687 = vmatpush1.msra.mxu0 0.0
        %5688 = vmatprep.subr.mxu0 0.0
        %5689 = vmatpush1.msra.mxu0 0.0
        %5690 = vmatprep.subr.mxu0 0.0
        %5691 = vmatpush1.msra.mxu0 0.0
        %5692 = vmatprep.subr.mxu0 0.0
        %5693 = vmatpush1.msra.mxu0 0.0
        %5694 = vmatprep.subr.mxu0 0.0
        %5695 = vmatpush1.msra.mxu0 0.0
        %5696 = vmatprep.subr.mxu0 0.0
        %5697 = vmatpush1.msra.mxu0 0.0
        %5698 = vmatprep.subr.mxu0 0.0
        %5699 = vmatpush1.msra.mxu0 0.0
        %5700 = vmatprep.subr.mxu0 0.0
        %5701 = vmatpush1.msra.mxu0 0.0
        %5702 = vmatprep.subr.mxu0 0.0
        %5703 = vmatpush1.msra.mxu0 0.0
        %5704 = vmatprep.subr.mxu0 0.0
        %5705 = vmatpush1.msra.mxu0 0.0
        %5706 = vmatprep.subr.mxu0 0.0
        %5707 = vmatpush1.msra.mxu0 0.0
        %5708 = vmatprep.subr.mxu0 0.0
        %5709 = vmatpush1.msra.mxu0 0.0
        %5710 = vmatprep.subr.mxu0 0.0
        %5711 = vmatpush1.msra.mxu0 0.0
        %5712 = vmatprep.subr.mxu0 0.0
        %5713 = vmatpush1.msra.mxu0 0.0
        %5714 = vmatprep.subr.mxu0 0.0
        %5715 = vmatpush1.msra.mxu0 0.0
        %5716 = vmatprep.subr.mxu0 0.0
        %5717 = vmatpush1.msra.mxu0 0.0
        %5718 = vmatprep.subr.mxu0 0.0
        %5719 = vmatpush1.msra.mxu0 0.0
        %5720 = vmatprep.subr.mxu0 0.0
        %5721 = vmatpush1.msra.mxu0 0.0
        %5722 = vmatprep.subr.mxu0 0.0
        %5723 = vmatpush1.msra.mxu0 0.0
        %5724 = vmatprep.subr.mxu0 0.0
        %5725 = vmatpush1.msra.mxu0 0.0
        %5726 = vmatprep.mubr.f32.mxu0 0.0
        %5727 = vmatmul.mubr.f32.gmra.mrb[0].mxu0 %v5657
        %v5728 = vpop.f32.mrb[0].mxu0
        %v5729 = vadd.f32 0.0, %v5728
        %v5730 = vpop.f32.mrb[0].mxu0
        %5731 = vdwg.mxu0
        %v5732 = vadd.f32 %v5044, %v5729
        %v5733 = vsub.s32 %v383, 1
        %vm5734 = vcmp.ge.s32.totalorder %v5733, 0
        %vm5735 = vcmp.lt.s32.totalorder %v5733, 16
        %vm5736 = vmand %vm5734, %vm5735
        %vm5737 = vmand %vm5736, %vm5049
        %vm5738 = vmand %vm5737, %vm5054
        %v5739 = vmul.u32 %v5733, 16
        %v5740 = vadd.s32 %v5739, %v5056
        %v5741 = vsel %vm5738, %v5740, 4294967295
        %v5742 = vlaneseq
        %v5743 = vshrl.u32 %v5742, 7
        %v5744 = vsub.s32 0, %v5743
        %v5745 = vrot.slane %v5741, %v5744
        %vm5746 = vcmp.eq.s32.totalorder %v391, %v5745
        %vm5747 = vcmp.eq.s32.totalorder %v392, %v5745
        %vm5748 = vcmp.eq.s32.totalorder %v393, %v5745
        %vm5749 = vcmp.eq.s32.totalorder %v394, %v5745
        %vm5750 = vcmp.eq.s32.totalorder %v395, %v5745
        %vm5751 = vcmp.eq.s32.totalorder %v396, %v5745
        %vm5752 = vcmp.eq.s32.totalorder %v397, %v5745
        %vm5753 = vcmp.eq.s32.totalorder %v398, %v5745
        %vm5754 = vcmp.eq.s32.totalorder %v399, %v5745
        %vm5755 = vcmp.eq.s32.totalorder %v400, %v5745
        %vm5756 = vcmp.eq.s32.totalorder %v401, %v5745
        %vm5757 = vcmp.eq.s32.totalorder %v402, %v5745
        %vm5758 = vcmp.eq.s32.totalorder %v403, %v5745
        %vm5759 = vcmp.eq.s32.totalorder %v404, %v5745
        %vm5760 = vcmp.eq.s32.totalorder %v405, %v5745
        %vm5761 = vcmp.eq.s32.totalorder %v406, %v5745
        %vm5762 = vcmp.eq.s32.totalorder %v407, %v5745
        %vm5763 = vcmp.eq.s32.totalorder %v408, %v5745
        %vm5764 = vcmp.eq.s32.totalorder %v409, %v5745
        %vm5765 = vcmp.eq.s32.totalorder %v410, %v5745
        %vm5766 = vcmp.eq.s32.totalorder %v411, %v5745
        %vm5767 = vcmp.eq.s32.totalorder %v412, %v5745
        %vm5768 = vcmp.eq.s32.totalorder %v413, %v5745
        %vm5769 = vcmp.eq.s32.totalorder %v414, %v5745
        %vm5770 = vcmp.eq.s32.totalorder %v415, %v5745
        %vm5771 = vcmp.eq.s32.totalorder %v416, %v5745
        %vm5772 = vcmp.eq.s32.totalorder %v417, %v5745
        %vm5773 = vcmp.eq.s32.totalorder %v418, %v5745
        %vm5774 = vcmp.eq.s32.totalorder %v419, %v5745
        %vm5775 = vcmp.eq.s32.totalorder %v420, %v5745
        %vm5776 = vcmp.eq.s32.totalorder %v421, %v5745
        %vm5777 = vcmp.eq.s32.totalorder %v422, %v5745
        %v5778 = vsel %vm5746, 1.0, 0.0
        %v5779 = vsel %vm5747, 1.0, 0.0
        %v5780 = vsel %vm5748, 1.0, 0.0
        %v5781 = vsel %vm5749, 1.0, 0.0
        %v5782 = vsel %vm5750, 1.0, 0.0
        %v5783 = vsel %vm5751, 1.0, 0.0
        %v5784 = vsel %vm5752, 1.0, 0.0
        %v5785 = vsel %vm5753, 1.0, 0.0
        %v5786 = vsel %vm5754, 1.0, 0.0
        %v5787 = vsel %vm5755, 1.0, 0.0
        %v5788 = vsel %vm5756, 1.0, 0.0
        %v5789 = vsel %vm5757, 1.0, 0.0
        %v5790 = vsel %vm5758, 1.0, 0.0
        %v5791 = vsel %vm5759, 1.0, 0.0
        %v5792 = vsel %vm5760, 1.0, 0.0
        %v5793 = vsel %vm5761, 1.0, 0.0
        %v5794 = vsel %vm5762, 1.0, 0.0
        %v5795 = vsel %vm5763, 1.0, 0.0
        %v5796 = vsel %vm5764, 1.0, 0.0
        %v5797 = vsel %vm5765, 1.0, 0.0
        %v5798 = vsel %vm5766, 1.0, 0.0
        %v5799 = vsel %vm5767, 1.0, 0.0
        %v5800 = vsel %vm5768, 1.0, 0.0
        %v5801 = vsel %vm5769, 1.0, 0.0
        %v5802 = vsel %vm5770, 1.0, 0.0
        %v5803 = vsel %vm5771, 1.0, 0.0
        %v5804 = vsel %vm5772, 1.0, 0.0
        %v5805 = vsel %vm5773, 1.0, 0.0
        %v5806 = vsel %vm5774, 1.0, 0.0
        %v5807 = vsel %vm5775, 1.0, 0.0
        %v5808 = vsel %vm5776, 1.0, 0.0
        %v5809 = vsel %vm5777, 1.0, 0.0
        %5810 = vmatprep.subr.mxu0 0.0
        %5811 = vmatpush1.msra.mxu0 %v5778
        %5812 = vmatprep.subr.mxu0 0.0
        %5813 = vmatpush1.msra.mxu0 %v5779
        %5814 = vmatprep.subr.mxu0 0.0
        %5815 = vmatpush1.msra.mxu0 %v5780
        %5816 = vmatprep.subr.mxu0 0.0
        %5817 = vmatpush1.msra.mxu0 %v5781
        %5818 = vmatprep.subr.mxu0 0.0
        %5819 = vmatpush1.msra.mxu0 %v5782
        %5820 = vmatprep.subr.mxu0 0.0
        %5821 = vmatpush1.msra.mxu0 %v5783
        %5822 = vmatprep.subr.mxu0 0.0
        %5823 = vmatpush1.msra.mxu0 %v5784
        %5824 = vmatprep.subr.mxu0 0.0
        %5825 = vmatpush1.msra.mxu0 %v5785
        %5826 = vmatprep.subr.mxu0 0.0
        %5827 = vmatpush1.msra.mxu0 %v5786
        %5828 = vmatprep.subr.mxu0 0.0
        %5829 = vmatpush1.msra.mxu0 %v5787
        %5830 = vmatprep.subr.mxu0 0.0
        %5831 = vmatpush1.msra.mxu0 %v5788
        %5832 = vmatprep.subr.mxu0 0.0
        %5833 = vmatpush1.msra.mxu0 %v5789
        %5834 = vmatprep.subr.mxu0 0.0
        %5835 = vmatpush1.msra.mxu0 %v5790
        %5836 = vmatprep.subr.mxu0 0.0
        %5837 = vmatpush1.msra.mxu0 %v5791
        %5838 = vmatprep.subr.mxu0 0.0
        %5839 = vmatpush1.msra.mxu0 %v5792
        %5840 = vmatprep.subr.mxu0 0.0
        %5841 = vmatpush1.msra.mxu0 %v5793
        %5842 = vmatprep.subr.mxu0 0.0
        %5843 = vmatpush1.msra.mxu0 %v5794
        %5844 = vmatprep.subr.mxu0 0.0
        %5845 = vmatpush1.msra.mxu0 %v5795
        %5846 = vmatprep.subr.mxu0 0.0
        %5847 = vmatpush1.msra.mxu0 %v5796
        %5848 = vmatprep.subr.mxu0 0.0
        %5849 = vmatpush1.msra.mxu0 %v5797
        %5850 = vmatprep.subr.mxu0 0.0
        %5851 = vmatpush1.msra.mxu0 %v5798
        %5852 = vmatprep.subr.mxu0 0.0
        %5853 = vmatpush1.msra.mxu0 %v5799
        %5854 = vmatprep.subr.mxu0 0.0
        %5855 = vmatpush1.msra.mxu0 %v5800
        %5856 = vmatprep.subr.mxu0 0.0
        %5857 = vmatpush1.msra.mxu0 %v5801
        %5858 = vmatprep.subr.mxu0 0.0
        %5859 = vmatpush1.msra.mxu0 %v5802
        %5860 = vmatprep.subr.mxu0 0.0
        %5861 = vmatpush1.msra.mxu0 %v5803
        %5862 = vmatprep.subr.mxu0 0.0
        %5863 = vmatpush1.msra.mxu0 %v5804
        %5864 = vmatprep.subr.mxu0 0.0
        %5865 = vmatpush1.msra.mxu0 %v5805
        %5866 = vmatprep.subr.mxu0 0.0
        %5867 = vmatpush1.msra.mxu0 %v5806
        %5868 = vmatprep.subr.mxu0 0.0
        %5869 = vmatpush1.msra.mxu0 %v5807
        %5870 = vmatprep.subr.mxu0 0.0
        %5871 = vmatpush1.msra.mxu0 %v5808
        %5872 = vmatprep.subr.mxu0 0.0
        %5873 = vmatpush1.msra.mxu0 %v5809
        %5874 = vmatprep.mubr.f32.mxu0 %v520
        %5875 = vmatmul.mubr.f32.gmra.mrb[0].mxu0 %v293
        %v5876 = vpop.f32.mrb[0].mxu0
        %v5877 = vadd.f32 0.0, %v5876
        %v5878 = vpop.f32.mrb[0].mxu0
        %5879 = vdwg.mxu0
        %v5880 = vlaneseq
        %v5881 = vshrl.u32 %v5880, 7
        %v5882 = vsub.s32 0, %v5881
        %v5883 = vrot.slane %v360, %v5882
        %v5884 = vmul.f32 %v5877, %v5883
        %v5885 = vsub.s32 %v387, 1
        %vm5886 = vcmp.ge.s32.totalorder %v5885, 0
        %vm5887 = vcmp.lt.s32.totalorder %v5885, 16
        %vm5888 = vmand %vm5886, %vm5887
        %vm5889 = vmand %vm5888, %vm5206
        %vm5890 = vmand %vm5889, %vm5211
        %v5891 = vmul.u32 %v5885, 16
        %v5892 = vadd.s32 %v5891, %v5213
        %v5893 = vsel %vm5890, %v5892, 4294967295
        %v5894 = vlaneseq
        %v5895 = vshrl.u32 %v5894, 7
        %v5896 = vsub.s32 0, %v5895
        %v5897 = vrot.slane %v5893, %v5896
        %vm5898 = vcmp.eq.s32.totalorder %v391, %v5897
        %vm5899 = vcmp.eq.s32.totalorder %v392, %v5897
        %vm5900 = vcmp.eq.s32.totalorder %v393, %v5897
        %vm5901 = vcmp.eq.s32.totalorder %v394, %v5897
        %vm5902 = vcmp.eq.s32.totalorder %v395, %v5897
        %vm5903 = vcmp.eq.s32.totalorder %v396, %v5897
        %vm5904 = vcmp.eq.s32.totalorder %v397, %v5897
        %vm5905 = vcmp.eq.s32.totalorder %v398, %v5897
        %vm5906 = vcmp.eq.s32.totalorder %v399, %v5897
        %vm5907 = vcmp.eq.s32.totalorder %v400, %v5897
        %vm5908 = vcmp.eq.s32.totalorder %v401, %v5897
        %vm5909 = vcmp.eq.s32.totalorder %v402, %v5897
        %vm5910 = vcmp.eq.s32.totalorder %v403, %v5897
        %vm5911 = vcmp.eq.s32.totalorder %v404, %v5897
        %vm5912 = vcmp.eq.s32.totalorder %v405, %v5897
        %vm5913 = vcmp.eq.s32.totalorder %v406, %v5897
        %vm5914 = vcmp.eq.s32.totalorder %v407, %v5897
        %vm5915 = vcmp.eq.s32.totalorder %v408, %v5897
        %vm5916 = vcmp.eq.s32.totalorder %v409, %v5897
        %vm5917 = vcmp.eq.s32.totalorder %v410, %v5897
        %vm5918 = vcmp.eq.s32.totalorder %v411, %v5897
        %vm5919 = vcmp.eq.s32.totalorder %v412, %v5897
        %vm5920 = vcmp.eq.s32.totalorder %v413, %v5897
        %vm5921 = vcmp.eq.s32.totalorder %v414, %v5897
        %vm5922 = vcmp.eq.s32.totalorder %v415, %v5897
        %vm5923 = vcmp.eq.s32.totalorder %v416, %v5897
        %vm5924 = vcmp.eq.s32.totalorder %v417, %v5897
        %vm5925 = vcmp.eq.s32.totalorder %v418, %v5897
        %vm5926 = vcmp.eq.s32.totalorder %v419, %v5897
        %vm5927 = vcmp.eq.s32.totalorder %v420, %v5897
        %vm5928 = vcmp.eq.s32.totalorder %v421, %v5897
        %vm5929 = vcmp.eq.s32.totalorder %v422, %v5897
        %v5930 = vsel %vm5898, 1.0, 0.0
        %v5931 = vsel %vm5899, 1.0, 0.0
        %v5932 = vsel %vm5900, 1.0, 0.0
        %v5933 = vsel %vm5901, 1.0, 0.0
        %v5934 = vsel %vm5902, 1.0, 0.0
        %v5935 = vsel %vm5903, 1.0, 0.0
        %v5936 = vsel %vm5904, 1.0, 0.0
        %v5937 = vsel %vm5905, 1.0, 0.0
        %v5938 = vsel %vm5906, 1.0, 0.0
        %v5939 = vsel %vm5907, 1.0, 0.0
        %v5940 = vsel %vm5908, 1.0, 0.0
        %v5941 = vsel %vm5909, 1.0, 0.0
        %v5942 = vsel %vm5910, 1.0, 0.0
        %v5943 = vsel %vm5911, 1.0, 0.0
        %v5944 = vsel %vm5912, 1.0, 0.0
        %v5945 = vsel %vm5913, 1.0, 0.0
        %v5946 = vsel %vm5914, 1.0, 0.0
        %v5947 = vsel %vm5915, 1.0, 0.0
        %v5948 = vsel %vm5916, 1.0, 0.0
        %v5949 = vsel %vm5917, 1.0, 0.0
        %v5950 = vsel %vm5918, 1.0, 0.0
        %v5951 = vsel %vm5919, 1.0, 0.0
        %v5952 = vsel %vm5920, 1.0, 0.0
        %v5953 = vsel %vm5921, 1.0, 0.0
        %v5954 = vsel %vm5922, 1.0, 0.0
        %v5955 = vsel %vm5923, 1.0, 0.0
        %v5956 = vsel %vm5924, 1.0, 0.0
        %v5957 = vsel %vm5925, 1.0, 0.0
        %v5958 = vsel %vm5926, 1.0, 0.0
        %v5959 = vsel %vm5927, 1.0, 0.0
        %v5960 = vsel %vm5928, 1.0, 0.0
        %v5961 = vsel %vm5929, 1.0, 0.0
        %5962 = vmatprep.subr.mxu0 0.0
        %5963 = vmatpush1.msra.mxu0 %v5930
        %5964 = vmatprep.subr.mxu0 0.0
        %5965 = vmatpush1.msra.mxu0 %v5931
        %5966 = vmatprep.subr.mxu0 0.0
        %5967 = vmatpush1.msra.mxu0 %v5932
        %5968 = vmatprep.subr.mxu0 0.0
        %5969 = vmatpush1.msra.mxu0 %v5933
        %5970 = vmatprep.subr.mxu0 0.0
        %5971 = vmatpush1.msra.mxu0 %v5934
        %5972 = vmatprep.subr.mxu0 0.0
        %5973 = vmatpush1.msra.mxu0 %v5935
        %5974 = vmatprep.subr.mxu0 0.0
        %5975 = vmatpush1.msra.mxu0 %v5936
        %5976 = vmatprep.subr.mxu0 0.0
        %5977 = vmatpush1.msra.mxu0 %v5937
        %5978 = vmatprep.subr.mxu0 0.0
        %5979 = vmatpush1.msra.mxu0 %v5938
        %5980 = vmatprep.subr.mxu0 0.0
        %5981 = vmatpush1.msra.mxu0 %v5939
        %5982 = vmatprep.subr.mxu0 0.0
        %5983 = vmatpush1.msra.mxu0 %v5940
        %5984 = vmatprep.subr.mxu0 0.0
        %5985 = vmatpush1.msra.mxu0 %v5941
        %5986 = vmatprep.subr.mxu0 0.0
        %5987 = vmatpush1.msra.mxu0 %v5942
        %5988 = vmatprep.subr.mxu0 0.0
        %5989 = vmatpush1.msra.mxu0 %v5943
        %5990 = vmatprep.subr.mxu0 0.0
        %5991 = vmatpush1.msra.mxu0 %v5944
        %5992 = vmatprep.subr.mxu0 0.0
        %5993 = vmatpush1.msra.mxu0 %v5945
        %5994 = vmatprep.subr.mxu0 0.0
        %5995 = vmatpush1.msra.mxu0 %v5946
        %5996 = vmatprep.subr.mxu0 0.0
        %5997 = vmatpush1.msra.mxu0 %v5947
        %5998 = vmatprep.subr.mxu0 0.0
        %5999 = vmatpush1.msra.mxu0 %v5948
        %6000 = vmatprep.subr.mxu0 0.0
        %6001 = vmatpush1.msra.mxu0 %v5949
        %6002 = vmatprep.subr.mxu0 0.0
        %6003 = vmatpush1.msra.mxu0 %v5950
        %6004 = vmatprep.subr.mxu0 0.0
        %6005 = vmatpush1.msra.mxu0 %v5951
        %6006 = vmatprep.subr.mxu0 0.0
        %6007 = vmatpush1.msra.mxu0 %v5952
        %6008 = vmatprep.subr.mxu0 0.0
        %6009 = vmatpush1.msra.mxu0 %v5953
        %6010 = vmatprep.subr.mxu0 0.0
        %6011 = vmatpush1.msra.mxu0 %v5954
        %6012 = vmatprep.subr.mxu0 0.0
        %6013 = vmatpush1.msra.mxu0 %v5955
        %6014 = vmatprep.subr.mxu0 0.0
        %6015 = vmatpush1.msra.mxu0 %v5956
        %6016 = vmatprep.subr.mxu0 0.0
        %6017 = vmatpush1.msra.mxu0 %v5957
        %6018 = vmatprep.subr.mxu0 0.0
        %6019 = vmatpush1.msra.mxu0 %v5958
        %6020 = vmatprep.subr.mxu0 0.0
        %6021 = vmatpush1.msra.mxu0 %v5959
        %6022 = vmatprep.subr.mxu0 0.0
        %6023 = vmatpush1.msra.mxu0 %v5960
        %6024 = vmatprep.subr.mxu0 0.0
        %6025 = vmatpush1.msra.mxu0 %v5961
        %6026 = vmatprep.mubr.f32.mxu0 %v520
        %6027 = vmatmul.mubr.f32.gmra.mrb[0].mxu0 %v293
        %v6028 = vpop.f32.mrb[0].mxu0
        %v6029 = vadd.f32 0.0, %v6028
        %v6030 = vpop.f32.mrb[0].mxu0
        %6031 = vdwg.mxu0
        %v6032 = vlaneseq
        %v6033 = vshrl.u32 %v6032, 7
        %v6034 = vsub.s32 0, %v6033
        %v6035 = vrot.slane %v377, %v6034
        %v6036 = vmul.f32 %v6029, %v6035
        %v6037 = vadd.f32 %v5884, %v6036
        %vm6038 = vmand %vm5736, %vm5206
        %vm6039 = vmand %vm6038, %vm5211
        %v6040 = vadd.s32 %v5739, %v5213
        %v6041 = vsel %vm6039, %v6040, 4294967295
        %v6042 = vlaneseq
        %v6043 = vshrl.u32 %v6042, 7
        %v6044 = vsub.s32 0, %v6043
        %v6045 = vrot.slane %v6041, %v6044
        %vm6046 = vcmp.eq.s32.totalorder %v391, %v6045
        %vm6047 = vcmp.eq.s32.totalorder %v392, %v6045
        %vm6048 = vcmp.eq.s32.totalorder %v393, %v6045
        %vm6049 = vcmp.eq.s32.totalorder %v394, %v6045
        %vm6050 = vcmp.eq.s32.totalorder %v395, %v6045
        %vm6051 = vcmp.eq.s32.totalorder %v396, %v6045
        %vm6052 = vcmp.eq.s32.totalorder %v397, %v6045
        %vm6053 = vcmp.eq.s32.totalorder %v398, %v6045
        %vm6054 = vcmp.eq.s32.totalorder %v399, %v6045
        %vm6055 = vcmp.eq.s32.totalorder %v400, %v6045
        %vm6056 = vcmp.eq.s32.totalorder %v401, %v6045
        %vm6057 = vcmp.eq.s32.totalorder %v402, %v6045
        %vm6058 = vcmp.eq.s32.totalorder %v403, %v6045
        %vm6059 = vcmp.eq.s32.totalorder %v404, %v6045
        %vm6060 = vcmp.eq.s32.totalorder %v405, %v6045
        %vm6061 = vcmp.eq.s32.totalorder %v406, %v6045
        %vm6062 = vcmp.eq.s32.totalorder %v407, %v6045
        %vm6063 = vcmp.eq.s32.totalorder %v408, %v6045
        %vm6064 = vcmp.eq.s32.totalorder %v409, %v6045
        %vm6065 = vcmp.eq.s32.totalorder %v410, %v6045
        %vm6066 = vcmp.eq.s32.totalorder %v411, %v6045
        %vm6067 = vcmp.eq.s32.totalorder %v412, %v6045
        %vm6068 = vcmp.eq.s32.totalorder %v413, %v6045
        %vm6069 = vcmp.eq.s32.totalorder %v414, %v6045
        %vm6070 = vcmp.eq.s32.totalorder %v415, %v6045
        %vm6071 = vcmp.eq.s32.totalorder %v416, %v6045
        %vm6072 = vcmp.eq.s32.totalorder %v417, %v6045
        %vm6073 = vcmp.eq.s32.totalorder %v418, %v6045
        %vm6074 = vcmp.eq.s32.totalorder %v419, %v6045
        %vm6075 = vcmp.eq.s32.totalorder %v420, %v6045
        %vm6076 = vcmp.eq.s32.totalorder %v421, %v6045
        %vm6077 = vcmp.eq.s32.totalorder %v422, %v6045
        %v6078 = vsel %vm6046, 1.0, 0.0
        %v6079 = vsel %vm6047, 1.0, 0.0
        %v6080 = vsel %vm6048, 1.0, 0.0
        %v6081 = vsel %vm6049, 1.0, 0.0
        %v6082 = vsel %vm6050, 1.0, 0.0
        %v6083 = vsel %vm6051, 1.0, 0.0
        %v6084 = vsel %vm6052, 1.0, 0.0
        %v6085 = vsel %vm6053, 1.0, 0.0
        %v6086 = vsel %vm6054, 1.0, 0.0
        %v6087 = vsel %vm6055, 1.0, 0.0
        %v6088 = vsel %vm6056, 1.0, 0.0
        %v6089 = vsel %vm6057, 1.0, 0.0
        %v6090 = vsel %vm6058, 1.0, 0.0
        %v6091 = vsel %vm6059, 1.0, 0.0
        %v6092 = vsel %vm6060, 1.0, 0.0
        %v6093 = vsel %vm6061, 1.0, 0.0
        %v6094 = vsel %vm6062, 1.0, 0.0
        %v6095 = vsel %vm6063, 1.0, 0.0
        %v6096 = vsel %vm6064, 1.0, 0.0
        %v6097 = vsel %vm6065, 1.0, 0.0
        %v6098 = vsel %vm6066, 1.0, 0.0
        %v6099 = vsel %vm6067, 1.0, 0.0
        %v6100 = vsel %vm6068, 1.0, 0.0
        %v6101 = vsel %vm6069, 1.0, 0.0
        %v6102 = vsel %vm6070, 1.0, 0.0
        %v6103 = vsel %vm6071, 1.0, 0.0
        %v6104 = vsel %vm6072, 1.0, 0.0
        %v6105 = vsel %vm6073, 1.0, 0.0
        %v6106 = vsel %vm6074, 1.0, 0.0
        %v6107 = vsel %vm6075, 1.0, 0.0
        %v6108 = vsel %vm6076, 1.0, 0.0
        %v6109 = vsel %vm6077, 1.0, 0.0
        %6110 = vmatprep.subr.mxu0 0.0
        %6111 = vmatpush1.msra.mxu0 %v6078
        %6112 = vmatprep.subr.mxu0 0.0
        %6113 = vmatpush1.msra.mxu0 %v6079
        %6114 = vmatprep.subr.mxu0 0.0
        %6115 = vmatpush1.msra.mxu0 %v6080
        %6116 = vmatprep.subr.mxu0 0.0
        %6117 = vmatpush1.msra.mxu0 %v6081
        %6118 = vmatprep.subr.mxu0 0.0
        %6119 = vmatpush1.msra.mxu0 %v6082
        %6120 = vmatprep.subr.mxu0 0.0
        %6121 = vmatpush1.msra.mxu0 %v6083
        %6122 = vmatprep.subr.mxu0 0.0
        %6123 = vmatpush1.msra.mxu0 %v6084
        %6124 = vmatprep.subr.mxu0 0.0
        %6125 = vmatpush1.msra.mxu0 %v6085
        %6126 = vmatprep.subr.mxu0 0.0
        %6127 = vmatpush1.msra.mxu0 %v6086
        %6128 = vmatprep.subr.mxu0 0.0
        %6129 = vmatpush1.msra.mxu0 %v6087
        %6130 = vmatprep.subr.mxu0 0.0
        %6131 = vmatpush1.msra.mxu0 %v6088
        %6132 = vmatprep.subr.mxu0 0.0
        %6133 = vmatpush1.msra.mxu0 %v6089
        %6134 = vmatprep.subr.mxu0 0.0
        %6135 = vmatpush1.msra.mxu0 %v6090
        %6136 = vmatprep.subr.mxu0 0.0
        %6137 = vmatpush1.msra.mxu0 %v6091
        %6138 = vmatprep.subr.mxu0 0.0
        %6139 = vmatpush1.msra.mxu0 %v6092
        %6140 = vmatprep.subr.mxu0 0.0
        %6141 = vmatpush1.msra.mxu0 %v6093
        %6142 = vmatprep.subr.mxu0 0.0
        %6143 = vmatpush1.msra.mxu0 %v6094
        %6144 = vmatprep.subr.mxu0 0.0
        %6145 = vmatpush1.msra.mxu0 %v6095
        %6146 = vmatprep.subr.mxu0 0.0
        %6147 = vmatpush1.msra.mxu0 %v6096
        %6148 = vmatprep.subr.mxu0 0.0
        %6149 = vmatpush1.msra.mxu0 %v6097
        %6150 = vmatprep.subr.mxu0 0.0
        %6151 = vmatpush1.msra.mxu0 %v6098
        %6152 = vmatprep.subr.mxu0 0.0
        %6153 = vmatpush1.msra.mxu0 %v6099
        %6154 = vmatprep.subr.mxu0 0.0
        %6155 = vmatpush1.msra.mxu0 %v6100
        %6156 = vmatprep.subr.mxu0 0.0
        %6157 = vmatpush1.msra.mxu0 %v6101
        %6158 = vmatprep.subr.mxu0 0.0
        %6159 = vmatpush1.msra.mxu0 %v6102
        %6160 = vmatprep.subr.mxu0 0.0
        %6161 = vmatpush1.msra.mxu0 %v6103
        %6162 = vmatprep.subr.mxu0 0.0
        %6163 = vmatpush1.msra.mxu0 %v6104
        %6164 = vmatprep.subr.mxu0 0.0
        %6165 = vmatpush1.msra.mxu0 %v6105
        %6166 = vmatprep.subr.mxu0 0.0
        %6167 = vmatpush1.msra.mxu0 %v6106
        %6168 = vmatprep.subr.mxu0 0.0
        %6169 = vmatpush1.msra.mxu0 %v6107
        %6170 = vmatprep.subr.mxu0 0.0
        %6171 = vmatpush1.msra.mxu0 %v6108
        %6172 = vmatprep.subr.mxu0 0.0
        %6173 = vmatpush1.msra.mxu0 %v6109
        %6174 = vmatprep.mubr.f32.mxu0 %v520
        %6175 = vmatmul.mubr.f32.gmra.mrb[0].mxu0 %v293
        %v6176 = vpop.f32.mrb[0].mxu0
        %v6177 = vadd.f32 0.0, %v6176
        %v6178 = vpop.f32.mrb[0].mxu0
        %6179 = vdwg.mxu0
        %v6180 = vlaneseq
        %v6181 = vshrl.u32 %v6180, 7
        %v6182 = vsub.s32 0, %v6181
        %v6183 = vrot.slane %v379, %v6182
        %v6184 = vmul.f32 %v6177, %v6183
        %v6185 = vadd.f32 %v6037, %v6184
        %vm6186 = vmand %vm5888, %vm5049
        %vm6187 = vmand %vm6186, %vm5054
        %v6188 = vadd.s32 %v5891, %v5056
        %v6189 = vsel %vm6187, %v6188, 4294967295
        %v6190 = vlaneseq
        %v6191 = vshrl.u32 %v6190, 7
        %v6192 = vsub.s32 0, %v6191
        %v6193 = vrot.slane %v6189, %v6192
        %vm6194 = vcmp.eq.s32.totalorder %v391, %v6193
        %vm6195 = vcmp.eq.s32.totalorder %v392, %v6193
        %vm6196 = vcmp.eq.s32.totalorder %v393, %v6193
        %vm6197 = vcmp.eq.s32.totalorder %v394, %v6193
        %vm6198 = vcmp.eq.s32.totalorder %v395, %v6193
        %vm6199 = vcmp.eq.s32.totalorder %v396, %v6193
        %vm6200 = vcmp.eq.s32.totalorder %v397, %v6193
        %vm6201 = vcmp.eq.s32.totalorder %v398, %v6193
        %vm6202 = vcmp.eq.s32.totalorder %v399, %v6193
        %vm6203 = vcmp.eq.s32.totalorder %v400, %v6193
        %vm6204 = vcmp.eq.s32.totalorder %v401, %v6193
        %vm6205 = vcmp.eq.s32.totalorder %v402, %v6193
        %vm6206 = vcmp.eq.s32.totalorder %v403, %v6193
        %vm6207 = vcmp.eq.s32.totalorder %v404, %v6193
        %vm6208 = vcmp.eq.s32.totalorder %v405, %v6193
        %vm6209 = vcmp.eq.s32.totalorder %v406, %v6193
        %vm6210 = vcmp.eq.s32.totalorder %v407, %v6193
        %vm6211 = vcmp.eq.s32.totalorder %v408, %v6193
        %vm6212 = vcmp.eq.s32.totalorder %v409, %v6193
        %vm6213 = vcmp.eq.s32.totalorder %v410, %v6193
        %vm6214 = vcmp.eq.s32.totalorder %v411, %v6193
        %vm6215 = vcmp.eq.s32.totalorder %v412, %v6193
        %vm6216 = vcmp.eq.s32.totalorder %v413, %v6193
        %vm6217 = vcmp.eq.s32.totalorder %v414, %v6193
        %vm6218 = vcmp.eq.s32.totalorder %v415, %v6193
        %vm6219 = vcmp.eq.s32.totalorder %v416, %v6193
        %vm6220 = vcmp.eq.s32.totalorder %v417, %v6193
        %vm6221 = vcmp.eq.s32.totalorder %v418, %v6193
        %vm6222 = vcmp.eq.s32.totalorder %v419, %v6193
        %vm6223 = vcmp.eq.s32.totalorder %v420, %v6193
        %vm6224 = vcmp.eq.s32.totalorder %v421, %v6193
        %vm6225 = vcmp.eq.s32.totalorder %v422, %v6193
        %v6226 = vsel %vm6194, 1.0, 0.0
        %v6227 = vsel %vm6195, 1.0, 0.0
        %v6228 = vsel %vm6196, 1.0, 0.0
        %v6229 = vsel %vm6197, 1.0, 0.0
        %v6230 = vsel %vm6198, 1.0, 0.0
        %v6231 = vsel %vm6199, 1.0, 0.0
        %v6232 = vsel %vm6200, 1.0, 0.0
        %v6233 = vsel %vm6201, 1.0, 0.0
        %v6234 = vsel %vm6202, 1.0, 0.0
        %v6235 = vsel %vm6203, 1.0, 0.0
        %v6236 = vsel %vm6204, 1.0, 0.0
        %v6237 = vsel %vm6205, 1.0, 0.0
        %v6238 = vsel %vm6206, 1.0, 0.0
        %v6239 = vsel %vm6207, 1.0, 0.0
        %v6240 = vsel %vm6208, 1.0, 0.0
        %v6241 = vsel %vm6209, 1.0, 0.0
        %v6242 = vsel %vm6210, 1.0, 0.0
        %v6243 = vsel %vm6211, 1.0, 0.0
        %v6244 = vsel %vm6212, 1.0, 0.0
        %v6245 = vsel %vm6213, 1.0, 0.0
        %v6246 = vsel %vm6214, 1.0, 0.0
        %v6247 = vsel %vm6215, 1.0, 0.0
        %v6248 = vsel %vm6216, 1.0, 0.0
        %v6249 = vsel %vm6217, 1.0, 0.0
        %v6250 = vsel %vm6218, 1.0, 0.0
        %v6251 = vsel %vm6219, 1.0, 0.0
        %v6252 = vsel %vm6220, 1.0, 0.0
        %v6253 = vsel %vm6221, 1.0, 0.0
        %v6254 = vsel %vm6222, 1.0, 0.0
        %v6255 = vsel %vm6223, 1.0, 0.0
        %v6256 = vsel %vm6224, 1.0, 0.0
        %v6257 = vsel %vm6225, 1.0, 0.0
        %6258 = vmatprep.subr.mxu0 0.0
        %6259 = vmatpush1.msra.mxu0 %v6226
        %6260 = vmatprep.subr.mxu0 0.0
        %6261 = vmatpush1.msra.mxu0 %v6227
        %6262 = vmatprep.subr.mxu0 0.0
        %6263 = vmatpush1.msra.mxu0 %v6228
        %6264 = vmatprep.subr.mxu0 0.0
        %6265 = vmatpush1.msra.mxu0 %v6229
        %6266 = vmatprep.subr.mxu0 0.0
        %6267 = vmatpush1.msra.mxu0 %v6230
        %6268 = vmatprep.subr.mxu0 0.0
        %6269 = vmatpush1.msra.mxu0 %v6231
        %6270 = vmatprep.subr.mxu0 0.0
        %6271 = vmatpush1.msra.mxu0 %v6232
        %6272 = vmatprep.subr.mxu0 0.0
        %6273 = vmatpush1.msra.mxu0 %v6233
        %6274 = vmatprep.subr.mxu0 0.0
        %6275 = vmatpush1.msra.mxu0 %v6234
        %6276 = vmatprep.subr.mxu0 0.0
        %6277 = vmatpush1.msra.mxu0 %v6235
        %6278 = vmatprep.subr.mxu0 0.0
        %6279 = vmatpush1.msra.mxu0 %v6236
        %6280 = vmatprep.subr.mxu0 0.0
        %6281 = vmatpush1.msra.mxu0 %v6237
        %6282 = vmatprep.subr.mxu0 0.0
        %6283 = vmatpush1.msra.mxu0 %v6238
        %6284 = vmatprep.subr.mxu0 0.0
        %6285 = vmatpush1.msra.mxu0 %v6239
        %6286 = vmatprep.subr.mxu0 0.0
        %6287 = vmatpush1.msra.mxu0 %v6240
        %6288 = vmatprep.subr.mxu0 0.0
        %6289 = vmatpush1.msra.mxu0 %v6241
        %6290 = vmatprep.subr.mxu0 0.0
        %6291 = vmatpush1.msra.mxu0 %v6242
        %6292 = vmatprep.subr.mxu0 0.0
        %6293 = vmatpush1.msra.mxu0 %v6243
        %6294 = vmatprep.subr.mxu0 0.0
        %6295 = vmatpush1.msra.mxu0 %v6244
        %6296 = vmatprep.subr.mxu0 0.0
        %6297 = vmatpush1.msra.mxu0 %v6245
        %6298 = vmatprep.subr.mxu0 0.0
        %6299 = vmatpush1.msra.mxu0 %v6246
        %6300 = vmatprep.subr.mxu0 0.0
        %6301 = vmatpush1.msra.mxu0 %v6247
        %6302 = vmatprep.subr.mxu0 0.0
        %6303 = vmatpush1.msra.mxu0 %v6248
        %6304 = vmatprep.subr.mxu0 0.0
        %6305 = vmatpush1.msra.mxu0 %v6249
        %6306 = vmatprep.subr.mxu0 0.0
        %6307 = vmatpush1.msra.mxu0 %v6250
        %6308 = vmatprep.subr.mxu0 0.0
        %6309 = vmatpush1.msra.mxu0 %v6251
        %6310 = vmatprep.subr.mxu0 0.0
        %6311 = vmatpush1.msra.mxu0 %v6252
        %6312 = vmatprep.subr.mxu0 0.0
        %6313 = vmatpush1.msra.mxu0 %v6253
        %6314 = vmatprep.subr.mxu0 0.0
        %6315 = vmatpush1.msra.mxu0 %v6254
        %6316 = vmatprep.subr.mxu0 0.0
        %6317 = vmatpush1.msra.mxu0 %v6255
        %6318 = vmatprep.subr.mxu0 0.0
        %6319 = vmatpush1.msra.mxu0 %v6256
        %6320 = vmatprep.subr.mxu0 0.0
        %6321 = vmatpush1.msra.mxu0 %v6257
        %6322 = vmatprep.mubr.f32.mxu0 %v520
        %6323 = vmatmul.mubr.f32.gmra.mrb[0].mxu0 %v293
        %v6324 = vpop.f32.mrb[0].mxu0
        %v6325 = vadd.f32 0.0, %v6324
        %v6326 = vpop.f32.mrb[0].mxu0
        %6327 = vdwg.mxu0
        %v6328 = vlaneseq
        %v6329 = vshrl.u32 %v6328, 7
        %v6330 = vsub.s32 0, %v6329
        %v6331 = vrot.slane %v381, %v6330
        %v6332 = vmul.f32 %v6325, %v6331
        %v6333 = vadd.f32 %v6185, %v6332
        %v6335 = vsel %vm1631, %v431, 0
        %v6338 = vsel %vm1635, %v6333, 0
        %6340 = vmatprep.subr.mxu0 0.0
        %6341 = vmatpush1.msra.mxu0 %v6338
        %6342 = vmatprep.subr.mxu0 0.0
        %6343 = vmatpush1.msra.mxu0 0.0
        %6344 = vmatprep.subr.mxu0 0.0
        %6345 = vmatpush1.msra.mxu0 0.0
        %6346 = vmatprep.subr.mxu0 0.0
        %6347 = vmatpush1.msra.mxu0 0.0
        %6348 = vmatprep.subr.mxu0 0.0
        %6349 = vmatpush1.msra.mxu0 0.0
        %6350 = vmatprep.subr.mxu0 0.0
        %6351 = vmatpush1.msra.mxu0 0.0
        %6352 = vmatprep.subr.mxu0 0.0
        %6353 = vmatpush1.msra.mxu0 0.0
        %6354 = vmatprep.subr.mxu0 0.0
        %6355 = vmatpush1.msra.mxu0 0.0
        %6356 = vmatprep.subr.mxu0 0.0
        %6357 = vmatpush1.msra.mxu0 0.0
        %6358 = vmatprep.subr.mxu0 0.0
        %6359 = vmatpush1.msra.mxu0 0.0
        %6360 = vmatprep.subr.mxu0 0.0
        %6361 = vmatpush1.msra.mxu0 0.0
        %6362 = vmatprep.subr.mxu0 0.0
        %6363 = vmatpush1.msra.mxu0 0.0
        %6364 = vmatprep.subr.mxu0 0.0
        %6365 = vmatpush1.msra.mxu0 0.0
        %6366 = vmatprep.subr.mxu0 0.0
        %6367 = vmatpush1.msra.mxu0 0.0
        %6368 = vmatprep.subr.mxu0 0.0
        %6369 = vmatpush1.msra.mxu0 0.0
        %6370 = vmatprep.subr.mxu0 0.0
        %6371 = vmatpush1.msra.mxu0 0.0
        %6372 = vmatprep.subr.mxu0 0.0
        %6373 = vmatpush1.msra.mxu0 0.0
        %6374 = vmatprep.subr.mxu0 0.0
        %6375 = vmatpush1.msra.mxu0 0.0
        %6376 = vmatprep.subr.mxu0 0.0
        %6377 = vmatpush1.msra.mxu0 0.0
        %6378 = vmatprep.subr.mxu0 0.0
        %6379 = vmatpush1.msra.mxu0 0.0
        %6380 = vmatprep.subr.mxu0 0.0
        %6381 = vmatpush1.msra.mxu0 0.0
        %6382 = vmatprep.subr.mxu0 0.0
        %6383 = vmatpush1.msra.mxu0 0.0
        %6384 = vmatprep.subr.mxu0 0.0
        %6385 = vmatpush1.msra.mxu0 0.0
        %6386 = vmatprep.subr.mxu0 0.0
        %6387 = vmatpush1.msra.mxu0 0.0
        %6388 = vmatprep.subr.mxu0 0.0
        %6389 = vmatpush1.msra.mxu0 0.0
        %6390 = vmatprep.subr.mxu0 0.0
        %6391 = vmatpush1.msra.mxu0 0.0
        %6392 = vmatprep.subr.mxu0 0.0
        %6393 = vmatpush1.msra.mxu0 0.0
        %6394 = vmatprep.subr.mxu0 0.0
        %6395 = vmatpush1.msra.mxu0 0.0
        %6396 = vmatprep.subr.mxu0 0.0
        %6397 = vmatpush1.msra.mxu0 0.0
        %6398 = vmatprep.subr.mxu0 0.0
        %6399 = vmatpush1.msra.mxu0 0.0
        %6400 = vmatprep.subr.mxu0 0.0
        %6401 = vmatpush1.msra.mxu0 0.0
        %6402 = vmatprep.subr.mxu0 0.0
        %6403 = vmatpush1.msra.mxu0 0.0
        %6404 = vmatprep.mubr.f32.mxu0 0.0
        %6405 = vmatmul.mubr.f32.gmra.mrb[0].mxu0 %v6335
        %v6406 = vpop.f32.mrb[0].mxu0
        %v6407 = vadd.f32 0.0, %v6406
        %v6408 = vpop.f32.mrb[0].mxu0
        %6409 = vdwg.mxu0
        %v6410 = vadd.f32 %v5732, %v6407
        %6411 = vst [vmem:[%s283] sm:$0xf] %v6410
        %s6412 = sand.u32 %s141, 1
        %s6413 = scalar_lea.sflag [#allocation4], %s6412
        %s6414 = sand.u32 %s141, 1
        %s6415 = smul.addr %s6414, 4
        %s6416 = scalar_lea.vmem [#allocation3], %s6415
        // Predicated region
        $region75: #{tpu_custom_call.1} parent=69 // pred_check
          %p6417 = pneg %p151
        $region76: #{tpu_custom_call.1} parent=69 // pred_check_branch
          %6419 = sbr.rel (%p6417) target = $region78
        $region77: #{tpu_custom_call.1} parent=69 // pred_region
          %s6421 = ssub.s32 64, 64
          %6422 = vsyncadd %s6413, %s6421
          %s6423 = smul.addr %s22, 2
          %s6424 = sadd.s32 %s23, %s6423
          %s6425 = smul.addr %s6424, 64
          %s6426 = scalar_lea.hbm %s4, %s6425
          %s6428 = sshll.u32 %s6416, 4
          %s6429 = int_to_ptr.vmem [resolvable:$true] %s6428
          %6431 = dma.vmem_to_hbm [thread:$0]  %s6429, 64, %s6426, %s6413
        $region78: #{tpu_custom_call.1} parent=69 // pred_fallthru
          _
      $region70: #{tpu_custom_call.1} parent=5 // pred_fallthru
        _
      %p6432 = scmp.le.s32.totalorder 2, %s13
      // Predicated region
      $region79: #{tpu_custom_call.1} parent=5 // pred_check
        %p6433 = pneg %p6432
      $region80: #{tpu_custom_call.1} parent=5 // pred_check_branch
        %6435 = sbr.rel (%p6433) target = $region82
      $region81: #{tpu_custom_call.1} parent=5 // pred_region
        %s6436 = ssub.s32 %s13, 2
        // Predicated region
        $region83: #{tpu_custom_call.1} parent=81 // pred_check
          %p6437 = pneg %p157
        $region84: #{tpu_custom_call.1} parent=81 // pred_check_branch
          %6439 = sbr.rel (%p6437) target = $region86
        $region85: #{tpu_custom_call.1} parent=81 // pred_region
          %s6440 = sand.u32 %s142, 1
          %s6441 = scalar_lea.sflag [#allocation4], %s6440
          %s6442 = sand.u32 %s142, 1
          %s6443 = smul.addr %s6442, 4
          %s6444 = scalar_lea.vmem [#allocation3], %s6443
          %6445 = dma.done %s6441, 64
        $region86: #{tpu_custom_call.1} parent=81 // pred_fallthru
          _
      $region82: #{tpu_custom_call.1} parent=5 // pred_fallthru
        _
    $region6: #{tpu_custom_call.1} parent=1 // loop_footer
      %s17 = sadd.s32 1, %s13
    $region7: #{tpu_custom_call.1} parent=1 // loop_footer_branch
      %12 = sbr.rel target = $region3
    $region8: #{tpu_custom_call.1} parent=1 // loop_exit
      _
    %6446 = vsyncpa [#allocation4], 1
    %s6447 = scalar_lea.sflag [#allocation4], 1
    %6448 = vsyncpa %s6447, 1

</llo_original>
